<compile_context>
chip_gen: v7x
topology: tpu7x:2x2x1
jax: 0.10.0
libtpu: 0.0.40
codegen_flags: <defaults>
</compile_context>

<pallas_src>
import functools

import jax
import jax.numpy as jnp
from jax.experimental import pallas as pl
from jax.experimental.pallas import tpu as pltpu

# (in_features, out_features) for the 10 layers, in forward order.
LAYER_DIMS = [
    (784, 256), (256, 128), (128, 64), (64, 32), (32, 16),   # encoder
    (16, 32), (32, 64), (64, 128), (128, 256), (256, 784),   # decoder
]
N_LAYERS = len(LAYER_DIMS)
IN_DIM = LAYER_DIMS[0][0]
OUT_DIM = LAYER_DIMS[-1][1]


def _round_up(x, m):
    return ((x + m - 1) // m) * m


def _autoencoder_kernel(x_ref, *refs):
    """refs = (w1..w10, b1..b10, out_ref). Fused 10x (Linear + ReLU).

    x_ref is f32 (cast to bf16 here, not in the wrapper); weights are bf16;
    matmuls accumulate in f32 on the MXU; bias-add and ReLU happen on the f32
    accumulator; activations are rounded back to bf16 for the next matmul.
    The final store casts to out_ref.dtype (bf16 by default).
    """
    w_refs = refs[:N_LAYERS]
    b_refs = refs[N_LAYERS:2 * N_LAYERS]
    out_ref = refs[2 * N_LAYERS]

    h = x_ref[...].astype(jnp.bfloat16)                      # in-kernel cast (VPU)
    for l in range(N_LAYERS):
        acc = jnp.dot(h, w_refs[l][...],
                      preferred_element_type=jnp.float32)    # f32 [TB, out_l]
        acc = jnp.maximum(acc + b_refs[l][...], 0.0)         # bias + ReLU (f32)
        if l < N_LAYERS - 1:
            h = acc.astype(jnp.bfloat16)
        else:
            out_ref[...] = acc.astype(out_ref.dtype)


@functools.partial(jax.jit, static_argnames=("tb", "out_dtype"))
def autoencoder_forward(x, weights, biases, *, tb=512, out_dtype=jnp.bfloat16):
    """x: [B, 784] (f32); weights[l]: [in_l, out_l] (bf16); biases[l]: [1, out_l] (f32).

    Numerically: y = relu(x @ W + b) per layer (== PyTorch relu(x @ W.T + b)
    with W stored transposed), computed in bf16 with f32 accumulation.
    `tb` should be a multiple of 256.
    """
    B = x.shape[0]
    # Clamp the batch tile for tiny batches; no wrapper-side padding — the
    # ragged last block is handled by Pallas (masked output stores; garbage
    # input rows only affect their own, never-stored output rows).
    tb_eff = min(tb, _round_up(B, 256))
    n_blocks = pl.cdiv(B, tb_eff)

    # No-op casts when params are already stored in their kernel dtypes
    # (init_params does that); kept only as a safety net.
    w_bf = [w.astype(jnp.bfloat16) for w in weights]
    b_f32 = [b.astype(jnp.float32) for b in biases]

    # Batch-tiled x/out; weights & biases use a constant index_map so they are
    # loaded once and stay VMEM-resident across grid steps.
    x_spec = pl.BlockSpec((tb_eff, IN_DIM), lambda i: (i, 0))
    out_spec = pl.BlockSpec((tb_eff, OUT_DIM), lambda i: (i, 0))
    w_specs = [pl.BlockSpec(w.shape, lambda i: (0, 0)) for w in w_bf]
    b_specs = [pl.BlockSpec(b.shape, lambda i: (0, 0)) for b in b_f32]

    out = pl.pallas_call(
        _autoencoder_kernel,
        out_shape=jax.ShapeDtypeStruct((B, OUT_DIM), out_dtype),
        grid=(n_blocks,),
        in_specs=[x_spec] + w_specs + b_specs,
        out_specs=out_spec,
        compiler_params=pltpu.CompilerParams(
            dimension_semantics=("parallel",),   # shard batch tiles over TCs (v7x)
            vmem_limit_bytes=32 * 1024 * 1024,   # headroom for tb=1024 sweeps (v5e)
        ),
    )(x, *w_bf, *b_f32)

    return out


def init_params(key):
    """Deterministic init matching PyTorch nn.Linear default:
    U(-1/sqrt(fan_in), 1/sqrt(fan_in)) for both weight and bias.
    Weights are stored in bf16, biases in f32 (the kernel dtypes), so the
    forward wrapper never re-casts them."""
    weights, biases = [], []
    for (fan_in, fan_out) in LAYER_DIMS:
        key, kw, kb = jax.random.split(key, 3)
        bound = 1.0 / jnp.sqrt(jnp.float32(fan_in))
        w = jax.random.uniform(kw, (fan_in, fan_out), jnp.float32,
                               minval=-bound, maxval=bound)
        b = jax.random.uniform(kb, (1, fan_out), jnp.float32,
                               minval=-bound, maxval=bound)
        weights.append(w.astype(jnp.bfloat16))
        biases.append(b)
    return weights, biases


def reference_forward_bf16(x, weights, biases):
    """Pure-JAX reference with the SAME precision recipe as the kernel
    (bf16 inputs/weights, f32 accumulation, f32 bias+ReLU); returns f32."""
    h = x.astype(jnp.bfloat16)
    for l, (w, b) in enumerate(zip(weights, biases)):
        acc = jnp.dot(h, w.astype(jnp.bfloat16),
                      preferred_element_type=jnp.float32)
        acc = jnp.maximum(acc + b.astype(jnp.float32), 0.0)
        h = acc.astype(jnp.bfloat16) if l < N_LAYERS - 1 else acc
    return h


def reference_forward_f32(x, weights, biases):
    h = x
    for w, b in zip(weights, biases):
        h = jnp.maximum(jnp.dot(h, w.astype(jnp.float32))
                        + b.astype(jnp.float32), 0.0)
    return h


if __name__ == "__main__":
    key = jax.random.PRNGKey(0)
    key, kx1, kx2 = jax.random.split(key, 3)
    weights, biases = init_params(key)

    # Small batch (single ragged tile: tb clamps to 256, only 8 valid rows).
    B_small = 8
    x_small = jax.random.normal(kx1, (B_small, IN_DIM), jnp.float32)
    out_small = jax.block_until_ready(
        autoencoder_forward(x_small, weights, biases))
    assert out_small.shape == (B_small, OUT_DIM)
    assert out_small.dtype == jnp.bfloat16
    ref_small = reference_forward_bf16(x_small, weights, biases)
    assert jnp.allclose(out_small.astype(jnp.float32),
                        ref_small.astype(jnp.bfloat16).astype(jnp.float32),
                        atol=3e-2, rtol=3e-2), \
        "mismatch vs bf16-precision reference (small batch)"

    # Larger, non-tile-multiple batch (multi-step grid + ragged last block).
    B_big = 1100
    x_big = jax.random.normal(kx2, (B_big, IN_DIM), jnp.float32)
    out_big = jax.block_until_ready(
        autoencoder_forward(x_big, weights, biases))
    assert out_big.shape == (B_big, OUT_DIM)
    ref_big = reference_forward_bf16(x_big, weights, biases)
    assert jnp.allclose(out_big.astype(jnp.float32),
                        ref_big.astype(jnp.bfloat16).astype(jnp.float32),
                        atol=3e-2, rtol=3e-2), \
        "mismatch vs bf16-precision reference (large batch)"

    # f32-output path (for downstream consumers that need f32, like the
    # PyTorch reference's return dtype).
    out_f32 = jax.block_until_ready(
        autoencoder_forward(x_small, weights, biases, out_dtype=jnp.float32))
    assert out_f32.dtype == jnp.float32
    assert jnp.allclose(out_f32, ref_small, atol=2e-3, rtol=2e-2), \
        "mismatch vs bf16-precision reference (f32 output path)"

    # Loose sanity check against the full-f32 reference (bf16 rounding only).
    ref_f32 = reference_forward_f32(x_small, weights, biases)
    max_abs_err = float(jnp.max(jnp.abs(out_small.astype(jnp.float32) - ref_f32)))
    assert max_abs_err < 0.1, f"bf16 vs f32 drift too large: {max_abs_err}"

    print("KERNEL_OK")
</pallas_src>

<mosaic_0001>
module attributes {stable_mosaic.version = 11 : i64} {
  func.func @_autoencoder_kernel(%arg0: i32, %arg1: memref<256x784xf32, #tpu.memory_space<vmem>>, %arg2: memref<784x256xbf16, #tpu.memory_space<vmem>>, %arg3: memref<256x128xbf16, #tpu.memory_space<vmem>>, %arg4: memref<128x64xbf16, #tpu.memory_space<vmem>>, %arg5: memref<64x32xbf16, #tpu.memory_space<vmem>>, %arg6: memref<32x16xbf16, #tpu.memory_space<vmem>>, %arg7: memref<16x32xbf16, #tpu.memory_space<vmem>>, %arg8: memref<32x64xbf16, #tpu.memory_space<vmem>>, %arg9: memref<64x128xbf16, #tpu.memory_space<vmem>>, %arg10: memref<128x256xbf16, #tpu.memory_space<vmem>>, %arg11: memref<256x784xbf16, #tpu.memory_space<vmem>>, %arg12: memref<1x256xf32, #tpu.memory_space<vmem>>, %arg13: memref<1x128xf32, #tpu.memory_space<vmem>>, %arg14: memref<1x64xf32, #tpu.memory_space<vmem>>, %arg15: memref<1x32xf32, #tpu.memory_space<vmem>>, %arg16: memref<1x16xf32, #tpu.memory_space<vmem>>, %arg17: memref<1x32xf32, #tpu.memory_space<vmem>>, %arg18: memref<1x64xf32, #tpu.memory_space<vmem>>, %arg19: memref<1x128xf32, #tpu.memory_space<vmem>>, %arg20: memref<1x256xf32, #tpu.memory_space<vmem>>, %arg21: memref<1x784xf32, #tpu.memory_space<vmem>>, %arg22: memref<256x784xbf16, #tpu.memory_space<vmem>>) attributes {dimension_semantics = [#tpu.dimension_semantics<parallel>], iteration_bounds = array<i64: 1>, scalar_prefetch = 0 : i64, scratch_operands = 0 : i64, tpu.core_type = #tpu.core_type<tc>, window_params = [{transform_indices = @transform_0, window_bounds = array<i64: 256, 784>}, {pipeline_mode = #tpu.pipeline_mode<synchronous>, transform_indices = @transform_1, window_bounds = array<i64: 784, 256>}, {pipeline_mode = #tpu.pipeline_mode<synchronous>, transform_indices = @transform_2, window_bounds = array<i64: 256, 128>}, {pipeline_mode = #tpu.pipeline_mode<synchronous>, transform_indices = @transform_3, window_bounds = array<i64: 128, 64>}, {pipeline_mode = #tpu.pipeline_mode<synchronous>, transform_indices = @transform_4, window_bounds = array<i64: 64, 32>}, {pipeline_mode = #tpu.pipeline_mode<synchronous>, transform_indices = @transform_5, window_bounds = array<i64: 32, 16>}, {pipeline_mode = #tpu.pipeline_mode<synchronous>, transform_indices = @transform_6, window_bounds = array<i64: 16, 32>}, {pipeline_mode = #tpu.pipeline_mode<synchronous>, transform_indices = @transform_7, window_bounds = array<i64: 32, 64>}, {pipeline_mode = #tpu.pipeline_mode<synchronous>, transform_indices = @transform_8, window_bounds = array<i64: 64, 128>}, {pipeline_mode = #tpu.pipeline_mode<synchronous>, transform_indices = @transform_9, window_bounds = array<i64: 128, 256>}, {pipeline_mode = #tpu.pipeline_mode<synchronous>, transform_indices = @transform_10, window_bounds = array<i64: 256, 784>}, {pipeline_mode = #tpu.pipeline_mode<synchronous>, transform_indices = @transform_11, window_bounds = array<i64: 1, 256>}, {pipeline_mode = #tpu.pipeline_mode<synchronous>, transform_indices = @transform_12, window_bounds = array<i64: 1, 128>}, {pipeline_mode = #tpu.pipeline_mode<synchronous>, transform_indices = @transform_13, window_bounds = array<i64: 1, 64>}, {pipeline_mode = #tpu.pipeline_mode<synchronous>, transform_indices = @transform_14, window_bounds = array<i64: 1, 32>}, {pipeline_mode = #tpu.pipeline_mode<synchronous>, transform_indices = @transform_15, window_bounds = array<i64: 1, 16>}, {pipeline_mode = #tpu.pipeline_mode<synchronous>, transform_indices = @transform_16, window_bounds = array<i64: 1, 32>}, {pipeline_mode = #tpu.pipeline_mode<synchronous>, transform_indices = @transform_17, window_bounds = array<i64: 1, 64>}, {pipeline_mode = #tpu.pipeline_mode<synchronous>, transform_indices = @transform_18, window_bounds = array<i64: 1, 128>}, {pipeline_mode = #tpu.pipeline_mode<synchronous>, transform_indices = @transform_19, window_bounds = array<i64: 1, 256>}, {pipeline_mode = #tpu.pipeline_mode<synchronous>, transform_indices = @transform_20, window_bounds = array<i64: 1, 784>}, {transform_indices = @transform_21, window_bounds = array<i64: 256, 784>}]} {
    %c0 = arith.constant 0 : index
    %c0_0 = arith.constant 0 : index
    %0 = vector.load %arg1[%c0, %c0_0] : memref<256x784xf32, #tpu.memory_space<vmem>>, vector<256x784xf32>
    %1 = arith.truncf %0 : vector<256x784xf32> to vector<256x784xbf16>
    %c0_1 = arith.constant 0 : index
    %c0_2 = arith.constant 0 : index
    %2 = vector.load %arg2[%c0_1, %c0_2] : memref<784x256xbf16, #tpu.memory_space<vmem>>, vector<784x256xbf16>
    %cst = arith.constant dense<0.000000e+00> : vector<256x256xf32>
    %3 = tpu.matmul %1, %2, %cst {dimension_numbers = #tpu.dot_dimension_numbers<[1], [0], [0], [1], [0, 0, 1, 1], [], []>} : vector<256x784xbf16>, vector<784x256xbf16>, vector<256x256xf32> -> vector<256x256xf32>
    %c0_3 = arith.constant 0 : index
    %c0_4 = arith.constant 0 : index
    %4 = vector.load %arg12[%c0_3, %c0_4] : memref<1x256xf32, #tpu.memory_space<vmem>>, vector<1x256xf32>
    %5 = vector.broadcast %4 : vector<1x256xf32> to vector<256x256xf32>
    %6 = arith.addf %3, %5 : vector<256x256xf32>
    %cst_5 = arith.constant 0.000000e+00 : f32
    %7 = vector.broadcast %cst_5 : f32 to vector<256x256xf32>
    %8 = arith.maximumf %6, %7 : vector<256x256xf32>
    %9 = arith.truncf %8 : vector<256x256xf32> to vector<256x256xbf16>
    %c0_6 = arith.constant 0 : index
    %c0_7 = arith.constant 0 : index
    %10 = vector.load %arg3[%c0_6, %c0_7] : memref<256x128xbf16, #tpu.memory_space<vmem>>, vector<256x128xbf16>
    %cst_8 = arith.constant dense<0.000000e+00> : vector<256x128xf32>
    %11 = tpu.matmul %9, %10, %cst_8 {dimension_numbers = #tpu.dot_dimension_numbers<[1], [0], [0], [1], [0, 0, 1, 1], [], []>} : vector<256x256xbf16>, vector<256x128xbf16>, vector<256x128xf32> -> vector<256x128xf32>
    %c0_9 = arith.constant 0 : index
    %c0_10 = arith.constant 0 : index
    %12 = vector.load %arg13[%c0_9, %c0_10] : memref<1x128xf32, #tpu.memory_space<vmem>>, vector<1x128xf32>
    %13 = vector.broadcast %12 : vector<1x128xf32> to vector<256x128xf32>
    %14 = arith.addf %11, %13 : vector<256x128xf32>
    %cst_11 = arith.constant 0.000000e+00 : f32
    %15 = vector.broadcast %cst_11 : f32 to vector<256x128xf32>
    %16 = arith.maximumf %14, %15 : vector<256x128xf32>
    %17 = arith.truncf %16 : vector<256x128xf32> to vector<256x128xbf16>
    %c0_12 = arith.constant 0 : index
    %c0_13 = arith.constant 0 : index
    %18 = vector.load %arg4[%c0_12, %c0_13] : memref<128x64xbf16, #tpu.memory_space<vmem>>, vector<128x64xbf16>
    %cst_14 = arith.constant dense<0.000000e+00> : vector<256x64xf32>
    %19 = tpu.matmul %17, %18, %cst_14 {dimension_numbers = #tpu.dot_dimension_numbers<[1], [0], [0], [1], [0, 0, 1, 1], [], []>} : vector<256x128xbf16>, vector<128x64xbf16>, vector<256x64xf32> -> vector<256x64xf32>
    %c0_15 = arith.constant 0 : index
    %c0_16 = arith.constant 0 : index
    %20 = vector.load %arg14[%c0_15, %c0_16] : memref<1x64xf32, #tpu.memory_space<vmem>>, vector<1x64xf32>
    %21 = vector.broadcast %20 : vector<1x64xf32> to vector<256x64xf32>
    %22 = arith.addf %19, %21 : vector<256x64xf32>
    %cst_17 = arith.constant 0.000000e+00 : f32
    %23 = vector.broadcast %cst_17 : f32 to vector<256x64xf32>
    %24 = arith.maximumf %22, %23 : vector<256x64xf32>
    %25 = arith.truncf %24 : vector<256x64xf32> to vector<256x64xbf16>
    %c0_18 = arith.constant 0 : index
    %c0_19 = arith.constant 0 : index
    %26 = vector.load %arg5[%c0_18, %c0_19] : memref<64x32xbf16, #tpu.memory_space<vmem>>, vector<64x32xbf16>
    %cst_20 = arith.constant dense<0.000000e+00> : vector<256x32xf32>
    %27 = tpu.matmul %25, %26, %cst_20 {dimension_numbers = #tpu.dot_dimension_numbers<[1], [0], [0], [1], [0, 0, 1, 1], [], []>} : vector<256x64xbf16>, vector<64x32xbf16>, vector<256x32xf32> -> vector<256x32xf32>
    %c0_21 = arith.constant 0 : index
    %c0_22 = arith.constant 0 : index
    %28 = vector.load %arg15[%c0_21, %c0_22] : memref<1x32xf32, #tpu.memory_space<vmem>>, vector<1x32xf32>
    %29 = vector.broadcast %28 : vector<1x32xf32> to vector<256x32xf32>
    %30 = arith.addf %27, %29 : vector<256x32xf32>
    %cst_23 = arith.constant 0.000000e+00 : f32
    %31 = vector.broadcast %cst_23 : f32 to vector<256x32xf32>
    %32 = arith.maximumf %30, %31 : vector<256x32xf32>
    %33 = arith.truncf %32 : vector<256x32xf32> to vector<256x32xbf16>
    %c0_24 = arith.constant 0 : index
    %c0_25 = arith.constant 0 : index
    %34 = vector.load %arg6[%c0_24, %c0_25] : memref<32x16xbf16, #tpu.memory_space<vmem>>, vector<32x16xbf16>
    %cst_26 = arith.constant dense<0.000000e+00> : vector<256x16xf32>
    %35 = tpu.matmul %33, %34, %cst_26 {dimension_numbers = #tpu.dot_dimension_numbers<[1], [0], [0], [1], [0, 0, 1, 1], [], []>} : vector<256x32xbf16>, vector<32x16xbf16>, vector<256x16xf32> -> vector<256x16xf32>
    %c0_27 = arith.constant 0 : index
    %c0_28 = arith.constant 0 : index
    %36 = vector.load %arg16[%c0_27, %c0_28] : memref<1x16xf32, #tpu.memory_space<vmem>>, vector<1x16xf32>
    %37 = vector.broadcast %36 : vector<1x16xf32> to vector<256x16xf32>
    %38 = arith.addf %35, %37 : vector<256x16xf32>
    %cst_29 = arith.constant 0.000000e+00 : f32
    %39 = vector.broadcast %cst_29 : f32 to vector<256x16xf32>
    %40 = arith.maximumf %38, %39 : vector<256x16xf32>
    %41 = arith.truncf %40 : vector<256x16xf32> to vector<256x16xbf16>
    %c0_30 = arith.constant 0 : index
    %c0_31 = arith.constant 0 : index
    %42 = vector.load %arg7[%c0_30, %c0_31] : memref<16x32xbf16, #tpu.memory_space<vmem>>, vector<16x32xbf16>
    %cst_32 = arith.constant dense<0.000000e+00> : vector<256x32xf32>
    %43 = tpu.matmul %41, %42, %cst_32 {dimension_numbers = #tpu.dot_dimension_numbers<[1], [0], [0], [1], [0, 0, 1, 1], [], []>} : vector<256x16xbf16>, vector<16x32xbf16>, vector<256x32xf32> -> vector<256x32xf32>
    %c0_33 = arith.constant 0 : index
    %c0_34 = arith.constant 0 : index
    %44 = vector.load %arg17[%c0_33, %c0_34] : memref<1x32xf32, #tpu.memory_space<vmem>>, vector<1x32xf32>
    %45 = vector.broadcast %44 : vector<1x32xf32> to vector<256x32xf32>
    %46 = arith.addf %43, %45 : vector<256x32xf32>
    %cst_35 = arith.constant 0.000000e+00 : f32
    %47 = vector.broadcast %cst_35 : f32 to vector<256x32xf32>
    %48 = arith.maximumf %46, %47 : vector<256x32xf32>
    %49 = arith.truncf %48 : vector<256x32xf32> to vector<256x32xbf16>
    %c0_36 = arith.constant 0 : index
    %c0_37 = arith.constant 0 : index
    %50 = vector.load %arg8[%c0_36, %c0_37] : memref<32x64xbf16, #tpu.memory_space<vmem>>, vector<32x64xbf16>
    %cst_38 = arith.constant dense<0.000000e+00> : vector<256x64xf32>
    %51 = tpu.matmul %49, %50, %cst_38 {dimension_numbers = #tpu.dot_dimension_numbers<[1], [0], [0], [1], [0, 0, 1, 1], [], []>} : vector<256x32xbf16>, vector<32x64xbf16>, vector<256x64xf32> -> vector<256x64xf32>
    %c0_39 = arith.constant 0 : index
    %c0_40 = arith.constant 0 : index
    %52 = vector.load %arg18[%c0_39, %c0_40] : memref<1x64xf32, #tpu.memory_space<vmem>>, vector<1x64xf32>
    %53 = vector.broadcast %52 : vector<1x64xf32> to vector<256x64xf32>
    %54 = arith.addf %51, %53 : vector<256x64xf32>
    %cst_41 = arith.constant 0.000000e+00 : f32
    %55 = vector.broadcast %cst_41 : f32 to vector<256x64xf32>
    %56 = arith.maximumf %54, %55 : vector<256x64xf32>
    %57 = arith.truncf %56 : vector<256x64xf32> to vector<256x64xbf16>
    %c0_42 = arith.constant 0 : index
    %c0_43 = arith.constant 0 : index
    %58 = vector.load %arg9[%c0_42, %c0_43] : memref<64x128xbf16, #tpu.memory_space<vmem>>, vector<64x128xbf16>
    %cst_44 = arith.constant dense<0.000000e+00> : vector<256x128xf32>
    %59 = tpu.matmul %57, %58, %cst_44 {dimension_numbers = #tpu.dot_dimension_numbers<[1], [0], [0], [1], [0, 0, 1, 1], [], []>} : vector<256x64xbf16>, vector<64x128xbf16>, vector<256x128xf32> -> vector<256x128xf32>
    %c0_45 = arith.constant 0 : index
    %c0_46 = arith.constant 0 : index
    %60 = vector.load %arg19[%c0_45, %c0_46] : memref<1x128xf32, #tpu.memory_space<vmem>>, vector<1x128xf32>
    %61 = vector.broadcast %60 : vector<1x128xf32> to vector<256x128xf32>
    %62 = arith.addf %59, %61 : vector<256x128xf32>
    %cst_47 = arith.constant 0.000000e+00 : f32
    %63 = vector.broadcast %cst_47 : f32 to vector<256x128xf32>
    %64 = arith.maximumf %62, %63 : vector<256x128xf32>
    %65 = arith.truncf %64 : vector<256x128xf32> to vector<256x128xbf16>
    %c0_48 = arith.constant 0 : index
    %c0_49 = arith.constant 0 : index
    %66 = vector.load %arg10[%c0_48, %c0_49] : memref<128x256xbf16, #tpu.memory_space<vmem>>, vector<128x256xbf16>
    %cst_50 = arith.constant dense<0.000000e+00> : vector<256x256xf32>
    %67 = tpu.matmul %65, %66, %cst_50 {dimension_numbers = #tpu.dot_dimension_numbers<[1], [0], [0], [1], [0, 0, 1, 1], [], []>} : vector<256x128xbf16>, vector<128x256xbf16>, vector<256x256xf32> -> vector<256x256xf32>
    %c0_51 = arith.constant 0 : index
    %c0_52 = arith.constant 0 : index
    %68 = vector.load %arg20[%c0_51, %c0_52] : memref<1x256xf32, #tpu.memory_space<vmem>>, vector<1x256xf32>
    %69 = vector.broadcast %68 : vector<1x256xf32> to vector<256x256xf32>
    %70 = arith.addf %67, %69 : vector<256x256xf32>
    %cst_53 = arith.constant 0.000000e+00 : f32
    %71 = vector.broadcast %cst_53 : f32 to vector<256x256xf32>
    %72 = arith.maximumf %70, %71 : vector<256x256xf32>
    %73 = arith.truncf %72 : vector<256x256xf32> to vector<256x256xbf16>
    %c0_54 = arith.constant 0 : index
    %c0_55 = arith.constant 0 : index
    %74 = vector.load %arg11[%c0_54, %c0_55] : memref<256x784xbf16, #tpu.memory_space<vmem>>, vector<256x784xbf16>
    %cst_56 = arith.constant dense<0.000000e+00> : vector<256x784xf32>
    %75 = tpu.matmul %73, %74, %cst_56 {dimension_numbers = #tpu.dot_dimension_numbers<[1], [0], [0], [1], [0, 0, 1, 1], [], []>} : vector<256x256xbf16>, vector<256x784xbf16>, vector<256x784xf32> -> vector<256x784xf32>
    %c0_57 = arith.constant 0 : index
    %c0_58 = arith.constant 0 : index
    %76 = vector.load %arg21[%c0_57, %c0_58] : memref<1x784xf32, #tpu.memory_space<vmem>>, vector<1x784xf32>
    %77 = vector.broadcast %76 : vector<1x784xf32> to vector<256x784xf32>
    %78 = arith.addf %75, %77 : vector<256x784xf32>
    %cst_59 = arith.constant 0.000000e+00 : f32
    %79 = vector.broadcast %cst_59 : f32 to vector<256x784xf32>
    %80 = arith.maximumf %78, %79 : vector<256x784xf32>
    %81 = arith.truncf %80 : vector<256x784xf32> to vector<256x784xbf16>
    %c0_60 = arith.constant 0 : index
    %c0_61 = arith.constant 0 : index
    %82 = vector.load %arg22[%c0_60, %c0_61] : memref<256x784xbf16, #tpu.memory_space<vmem>>, vector<256x784xbf16>
    tpu.vector_store %arg22[%c0_60, %c0_61], %81 {strides = array<i32>} : memref<256x784xbf16, #tpu.memory_space<vmem>>, vector<256x784xbf16>,
    return
  }
  func.func @transform_0(%arg0: i32) -> (i32, i32) {
    %c0_i32 = arith.constant 0 : i32
    %c0_i32_0 = arith.constant 0 : i32
    return %arg0, %c0_i32 : i32, i32
  }
  func.func @transform_1(%arg0: i32) -> (i32, i32) {
    %c0_i32 = arith.constant 0 : i32
    %c0_i32_0 = arith.constant 0 : i32
    %c0_i32_1 = arith.constant 0 : i32
    return %c0_i32, %c0_i32_0 : i32, i32
  }
  func.func @transform_2(%arg0: i32) -> (i32, i32) {
    %c0_i32 = arith.constant 0 : i32
    %c0_i32_0 = arith.constant 0 : i32
    %c0_i32_1 = arith.constant 0 : i32
    return %c0_i32, %c0_i32_0 : i32, i32
  }
  func.func @transform_3(%arg0: i32) -> (i32, i32) {
    %c0_i32 = arith.constant 0 : i32
    %c0_i32_0 = arith.constant 0 : i32
    %c0_i32_1 = arith.constant 0 : i32
    return %c0_i32, %c0_i32_0 : i32, i32
  }
  func.func @transform_4(%arg0: i32) -> (i32, i32) {
    %c0_i32 = arith.constant 0 : i32
    %c0_i32_0 = arith.constant 0 : i32
    %c0_i32_1 = arith.constant 0 : i32
    return %c0_i32, %c0_i32_0 : i32, i32
  }
  func.func @transform_5(%arg0: i32) -> (i32, i32) {
    %c0_i32 = arith.constant 0 : i32
    %c0_i32_0 = arith.constant 0 : i32
    %c0_i32_1 = arith.constant 0 : i32
    return %c0_i32, %c0_i32_0 : i32, i32
  }
  func.func @transform_6(%arg0: i32) -> (i32, i32) {
    %c0_i32 = arith.constant 0 : i32
    %c0_i32_0 = arith.constant 0 : i32
    %c0_i32_1 = arith.constant 0 : i32
    return %c0_i32, %c0_i32_0 : i32, i32
  }
  func.func @transform_7(%arg0: i32) -> (i32, i32) {
    %c0_i32 = arith.constant 0 : i32
    %c0_i32_0 = arith.constant 0 : i32
    %c0_i32_1 = arith.constant 0 : i32
    return %c0_i32, %c0_i32_0 : i32, i32
  }
  func.func @transform_8(%arg0: i32) -> (i32, i32) {
    %c0_i32 = arith.constant 0 : i32
    %c0_i32_0 = arith.constant 0 : i32
    %c0_i32_1 = arith.constant 0 : i32
    return %c0_i32, %c0_i32_0 : i32, i32
  }
  func.func @transform_9(%arg0: i32) -> (i32, i32) {
    %c0_i32 = arith.constant 0 : i32
    %c0_i32_0 = arith.constant 0 : i32
    %c0_i32_1 = arith.constant 0 : i32
    return %c0_i32, %c0_i32_0 : i32, i32
  }
  func.func @transform_10(%arg0: i32) -> (i32, i32) {
    %c0_i32 = arith.constant 0 : i32
    %c0_i32_0 = arith.constant 0 : i32
    %c0_i32_1 = arith.constant 0 : i32
    return %c0_i32, %c0_i32_0 : i32, i32
  }
  func.func @transform_11(%arg0: i32) -> (i32, i32) {
    %c0_i32 = arith.constant 0 : i32
    %c0_i32_0 = arith.constant 0 : i32
    %c0_i32_1 = arith.constant 0 : i32
    return %c0_i32, %c0_i32_0 : i32, i32
  }
  func.func @transform_12(%arg0: i32) -> (i32, i32) {
    %c0_i32 = arith.constant 0 : i32
    %c0_i32_0 = arith.constant 0 : i32
    %c0_i32_1 = arith.constant 0 : i32
    return %c0_i32, %c0_i32_0 : i32, i32
  }
  func.func @transform_13(%arg0: i32) -> (i32, i32) {
    %c0_i32 = arith.constant 0 : i32
    %c0_i32_0 = arith.constant 0 : i32
    %c0_i32_1 = arith.constant 0 : i32
    return %c0_i32, %c0_i32_0 : i32, i32
  }
  func.func @transform_14(%arg0: i32) -> (i32, i32) {
    %c0_i32 = arith.constant 0 : i32
    %c0_i32_0 = arith.constant 0 : i32
    %c0_i32_1 = arith.constant 0 : i32
    return %c0_i32, %c0_i32_0 : i32, i32
  }
  func.func @transform_15(%arg0: i32) -> (i32, i32) {
    %c0_i32 = arith.constant 0 : i32
    %c0_i32_0 = arith.constant 0 : i32
    %c0_i32_1 = arith.constant 0 : i32
    return %c0_i32, %c0_i32_0 : i32, i32
  }
  func.func @transform_16(%arg0: i32) -> (i32, i32) {
    %c0_i32 = arith.constant 0 : i32
    %c0_i32_0 = arith.constant 0 : i32
    %c0_i32_1 = arith.constant 0 : i32
    return %c0_i32, %c0_i32_0 : i32, i32
  }
  func.func @transform_17(%arg0: i32) -> (i32, i32) {
    %c0_i32 = arith.constant 0 : i32
    %c0_i32_0 = arith.constant 0 : i32
    %c0_i32_1 = arith.constant 0 : i32
    return %c0_i32, %c0_i32_0 : i32, i32
  }
  func.func @transform_18(%arg0: i32) -> (i32, i32) {
    %c0_i32 = arith.constant 0 : i32
    %c0_i32_0 = arith.constant 0 : i32
    %c0_i32_1 = arith.constant 0 : i32
    return %c0_i32, %c0_i32_0 : i32, i32
  }
  func.func @transform_19(%arg0: i32) -> (i32, i32) {
    %c0_i32 = arith.constant 0 : i32
    %c0_i32_0 = arith.constant 0 : i32
    %c0_i32_1 = arith.constant 0 : i32
    return %c0_i32, %c0_i32_0 : i32, i32
  }
  func.func @transform_20(%arg0: i32) -> (i32, i32) {
    %c0_i32 = arith.constant 0 : i32
    %c0_i32_0 = arith.constant 0 : i32
    %c0_i32_1 = arith.constant 0 : i32
    return %c0_i32, %c0_i32_0 : i32, i32
  }
  func.func @transform_21(%arg0: i32) -> (i32, i32) {
    %c0_i32 = arith.constant 0 : i32
    %c0_i32_0 = arith.constant 0 : i32
    return %arg0, %c0_i32 : i32, i32
  }
}

</mosaic_0001>

<llo_original>
// kernel: autoencoder_forward.1
$region0: #{autoencoder_forward.1}
  #allocation0 [shape = 'u32[]', space=smem, size = 0x4, offset = 0x4, fixed_abs, tag = 'smem constant byte address 0x4 - core index']
  #allocation1 [shape = 'u32[144,128]{1,0:T(1,128)}', space=vmem, size = 0x12000, scoped, tag = 'internal scratch']
  %s0 = inlined_call_operand.vmem [shape: f32[8,784], index: 0, kind: input, shape index: {}]
  %s1 = inlined_call_operand.vmem [shape: bf16[784,256], index: 1, kind: input, shape index: {}]
  %s2 = inlined_call_operand.vmem [shape: bf16[256,128], index: 2, kind: input, shape index: {}]
  %s3 = inlined_call_operand.vmem [shape: bf16[128,64], index: 3, kind: input, shape index: {}]
  %s4 = inlined_call_operand.vmem [shape: bf16[64,32], index: 4, kind: input, shape index: {}]
  %s5 = inlined_call_operand.vmem [shape: bf16[32,16], index: 5, kind: input, shape index: {}]
  %s6 = inlined_call_operand.vmem [shape: bf16[16,32], index: 6, kind: input, shape index: {}]
  %s7 = inlined_call_operand.vmem [shape: bf16[32,64], index: 7, kind: input, shape index: {}]
  %s8 = inlined_call_operand.vmem [shape: bf16[64,128], index: 8, kind: input, shape index: {}]
  %s9 = inlined_call_operand.vmem [shape: bf16[128,256], index: 9, kind: input, shape index: {}]
  %s10 = inlined_call_operand.vmem [shape: bf16[256,784], index: 10, kind: input, shape index: {}]
  %s11 = inlined_call_operand.vmem [shape: f32[1,256], index: 11, kind: input, shape index: {}]
  %s12 = inlined_call_operand.vmem [shape: f32[1,128], index: 12, kind: input, shape index: {}]
  %s13 = inlined_call_operand.vmem [shape: f32[1,64], index: 13, kind: input, shape index: {}]
  %s14 = inlined_call_operand.vmem [shape: f32[1,32], index: 14, kind: input, shape index: {}]
  %s15 = inlined_call_operand.vmem [shape: f32[1,16], index: 15, kind: input, shape index: {}]
  %s16 = inlined_call_operand.vmem [shape: f32[1,32], index: 16, kind: input, shape index: {}]
  %s17 = inlined_call_operand.vmem [shape: f32[1,64], index: 17, kind: input, shape index: {}]
  %s18 = inlined_call_operand.vmem [shape: f32[1,128], index: 18, kind: input, shape index: {}]
  %s19 = inlined_call_operand.vmem [shape: f32[1,256], index: 19, kind: input, shape index: {}]
  %s20 = inlined_call_operand.vmem [shape: f32[1,784], index: 20, kind: input, shape index: {}]
  %s21 = inlined_call_operand.hbm [shape: bf16[8,784], index: 21, kind: output, shape index: {}]
  %s22 = sld [smem:[#allocation0]]
  $region94: #{autoencoder_forward.1} parent=0
    _
  %s24 = ssub.s32 1, %s22
  %s25 = scalar_select 0, %s24, %s22
  $region1: #{autoencoder_forward.1} parent=0
    #allocation2 [shape = 'u8[458752]{0}', space=vmem, size = 0x70000, scoped, tag = 'output window, operand 0, single buffered']
    #allocation3 [shape = 's32[1]{0}', space=sflag, size = 0x4, scoped, tag = 'scoped memory for autoencoder_forward.1']
    %26 = vsyncpa [#allocation3], 0
    // Predicated region
    $region2: #{autoencoder_forward.1} parent=1 // pred_check
      _
    $region3: #{autoencoder_forward.1} parent=1 // pred_check_branch
      %28 = sbr.rel (0) target = $region5
    $region4: #{autoencoder_forward.1} parent=1 // pred_region
      _
    $region5: #{autoencoder_forward.1} parent=1 // pred_fallthru
      _
    // Predicated region
    $region6: #{autoencoder_forward.1} parent=1 // pred_check
      _
    $region7: #{autoencoder_forward.1} parent=1 // pred_check_branch
      %30 = sbr.rel (0) target = $region9
    $region8: #{autoencoder_forward.1} parent=1 // pred_region
      _
    $region9: #{autoencoder_forward.1} parent=1 // pred_fallthru
      _
    // Predicated region
    $region10: #{autoencoder_forward.1} parent=1 // pred_check
      _
    $region11: #{autoencoder_forward.1} parent=1 // pred_check_branch
      %32 = sbr.rel (0) target = $region13
    $region12: #{autoencoder_forward.1} parent=1 // pred_region
      _
    $region13: #{autoencoder_forward.1} parent=1 // pred_fallthru
      _
    // Predicated region
    $region14: #{autoencoder_forward.1} parent=1 // pred_check
      _
    $region15: #{autoencoder_forward.1} parent=1 // pred_check_branch
      %34 = sbr.rel (0) target = $region17
    $region16: #{autoencoder_forward.1} parent=1 // pred_region
      _
    $region17: #{autoencoder_forward.1} parent=1 // pred_fallthru
      _
    // Predicated region
    $region18: #{autoencoder_forward.1} parent=1 // pred_check
      _
    $region19: #{autoencoder_forward.1} parent=1 // pred_check_branch
      %36 = sbr.rel (0) target = $region21
    $region20: #{autoencoder_forward.1} parent=1 // pred_region
      _
    $region21: #{autoencoder_forward.1} parent=1 // pred_fallthru
      _
    // Predicated region
    $region22: #{autoencoder_forward.1} parent=1 // pred_check
      _
    $region23: #{autoencoder_forward.1} parent=1 // pred_check_branch
      %38 = sbr.rel (0) target = $region25
    $region24: #{autoencoder_forward.1} parent=1 // pred_region
      _
    $region25: #{autoencoder_forward.1} parent=1 // pred_fallthru
      _
    // Predicated region
    $region26: #{autoencoder_forward.1} parent=1 // pred_check
      _
    $region27: #{autoencoder_forward.1} parent=1 // pred_check_branch
      %40 = sbr.rel (0) target = $region29
    $region28: #{autoencoder_forward.1} parent=1 // pred_region
      _
    $region29: #{autoencoder_forward.1} parent=1 // pred_fallthru
      _
    // Predicated region
    $region30: #{autoencoder_forward.1} parent=1 // pred_check
      _
    $region31: #{autoencoder_forward.1} parent=1 // pred_check_branch
      %42 = sbr.rel (0) target = $region33
    $region32: #{autoencoder_forward.1} parent=1 // pred_region
      _
    $region33: #{autoencoder_forward.1} parent=1 // pred_fallthru
      _
    // Predicated region
    $region34: #{autoencoder_forward.1} parent=1 // pred_check
      _
    $region35: #{autoencoder_forward.1} parent=1 // pred_check_branch
      %44 = sbr.rel (0) target = $region37
    $region36: #{autoencoder_forward.1} parent=1 // pred_region
      _
    $region37: #{autoencoder_forward.1} parent=1 // pred_fallthru
      _
    // Predicated region
    $region38: #{autoencoder_forward.1} parent=1 // pred_check
      _
    $region39: #{autoencoder_forward.1} parent=1 // pred_check_branch
      %46 = sbr.rel (0) target = $region41
    $region40: #{autoencoder_forward.1} parent=1 // pred_region
      _
    $region41: #{autoencoder_forward.1} parent=1 // pred_fallthru
      _
    // Predicated region
    $region42: #{autoencoder_forward.1} parent=1 // pred_check
      _
    $region43: #{autoencoder_forward.1} parent=1 // pred_check_branch
      %48 = sbr.rel (0) target = $region45
    $region44: #{autoencoder_forward.1} parent=1 // pred_region
      _
    $region45: #{autoencoder_forward.1} parent=1 // pred_fallthru
      _
    // Predicated region
    $region46: #{autoencoder_forward.1} parent=1 // pred_check
      _
    $region47: #{autoencoder_forward.1} parent=1 // pred_check_branch
      %50 = sbr.rel (0) target = $region49
    $region48: #{autoencoder_forward.1} parent=1 // pred_region
      _
    $region49: #{autoencoder_forward.1} parent=1 // pred_fallthru
      _
    // Predicated region
    $region50: #{autoencoder_forward.1} parent=1 // pred_check
      _
    $region51: #{autoencoder_forward.1} parent=1 // pred_check_branch
      %52 = sbr.rel (0) target = $region53
    $region52: #{autoencoder_forward.1} parent=1 // pred_region
      _
    $region53: #{autoencoder_forward.1} parent=1 // pred_fallthru
      _
    // Predicated region
    $region54: #{autoencoder_forward.1} parent=1 // pred_check
      _
    $region55: #{autoencoder_forward.1} parent=1 // pred_check_branch
      %54 = sbr.rel (0) target = $region57
    $region56: #{autoencoder_forward.1} parent=1 // pred_region
      _
    $region57: #{autoencoder_forward.1} parent=1 // pred_fallthru
      _
    // Predicated region
    $region58: #{autoencoder_forward.1} parent=1 // pred_check
      _
    $region59: #{autoencoder_forward.1} parent=1 // pred_check_branch
      %56 = sbr.rel (0) target = $region61
    $region60: #{autoencoder_forward.1} parent=1 // pred_region
      _
    $region61: #{autoencoder_forward.1} parent=1 // pred_fallthru
      _
    // Predicated region
    $region62: #{autoencoder_forward.1} parent=1 // pred_check
      _
    $region63: #{autoencoder_forward.1} parent=1 // pred_check_branch
      %58 = sbr.rel (0) target = $region65
    $region64: #{autoencoder_forward.1} parent=1 // pred_region
      _
    $region65: #{autoencoder_forward.1} parent=1 // pred_fallthru
      _
    // Predicated region
    $region66: #{autoencoder_forward.1} parent=1 // pred_check
      _
    $region67: #{autoencoder_forward.1} parent=1 // pred_check_branch
      %60 = sbr.rel (0) target = $region69
    $region68: #{autoencoder_forward.1} parent=1 // pred_region
      _
    $region69: #{autoencoder_forward.1} parent=1 // pred_fallthru
      _
    // Predicated region
    $region70: #{autoencoder_forward.1} parent=1 // pred_check
      _
    $region71: #{autoencoder_forward.1} parent=1 // pred_check_branch
      %62 = sbr.rel (0) target = $region73
    $region72: #{autoencoder_forward.1} parent=1 // pred_region
      _
    $region73: #{autoencoder_forward.1} parent=1 // pred_fallthru
      _
    // Predicated region
    $region74: #{autoencoder_forward.1} parent=1 // pred_check
      _
    $region75: #{autoencoder_forward.1} parent=1 // pred_check_branch
      %64 = sbr.rel (0) target = $region77
    $region76: #{autoencoder_forward.1} parent=1 // pred_region
      _
    $region77: #{autoencoder_forward.1} parent=1 // pred_fallthru
      _
    // Predicated region
    $region78: #{autoencoder_forward.1} parent=1 // pred_check
      _
    $region79: #{autoencoder_forward.1} parent=1 // pred_check_branch
      %66 = sbr.rel (0) target = $region81
    $region80: #{autoencoder_forward.1} parent=1 // pred_region
      _
    $region81: #{autoencoder_forward.1} parent=1 // pred_fallthru
      _
    // Predicated region
    $region82: #{autoencoder_forward.1} parent=1 // pred_check
      _
    $region83: #{autoencoder_forward.1} parent=1 // pred_check_branch
      %68 = sbr.rel (0) target = $region85
    $region84: #{autoencoder_forward.1} parent=1 // pred_region
      _
    $region85: #{autoencoder_forward.1} parent=1 // pred_fallthru
      _
    %v70 = vld [vmem:[%s0] sm:$0xff]
    %v71 = vld [vmem:[%s0 + $0x8] sm:$0xff]
    %v72 = vld [vmem:[%s0 + $0x10] sm:$0xff]
    %v73 = vld [vmem:[%s0 + $0x18] sm:$0xff]
    %v74 = vld [vmem:[%s0 + $0x20] sm:$0xff]
    %v75 = vld [vmem:[%s0 + $0x28] sm:$0xff]
    %v76 = vld [vmem:[%s0 + $0x30] sm:$0xff]
    %v77 = vld [vmem:[%s0 + $0x38] sm:$0xff]
    %v78 = vld [vmem:[%s0 + $0x40] sm:$0xff]
    %v79 = vld [vmem:[%s0 + $0x48] sm:$0xff]
    %v80 = vld [vmem:[%s0 + $0x50] sm:$0xff]
    %v81 = vld [vmem:[%s0 + $0x58] sm:$0xff]
    %v82 = vld [vmem:[%s0 + $0x60] sm:$0xff]
    %v83 = vld [vmem:[%s0 + $0x68] sm:$0xff]
    %v84 = vld [vmem:[%s0 + $0x70] sm:$0xff]
    %v85 = vld [vmem:[%s0 + $0x78] sm:$0xff]
    %v86 = vld [vmem:[%s0 + $0x80] sm:$0xff]
    %v87 = vld [vmem:[%s0 + $0x88] sm:$0xff]
    %v88 = vld [vmem:[%s0 + $0x90] sm:$0xff]
    %v89 = vld [vmem:[%s0 + $0x98] sm:$0xff]
    %v90 = vld [vmem:[%s0 + $0xa0] sm:$0xff]
    %v91 = vld [vmem:[%s0 + $0xa8] sm:$0xff]
    %v92 = vld [vmem:[%s0 + $0xb0] sm:$0xff]
    %v93 = vld [vmem:[%s0 + $0xb8] sm:$0xff]
    %v94 = vld [vmem:[%s0 + $0xc0] sm:$0xff]
    %v95 = vld [vmem:[%s0 + $0xc8] sm:$0xff]
    %v96 = vld [vmem:[%s0 + $0xd0] sm:$0xff]
    %v97 = vld [vmem:[%s0 + $0xd8] sm:$0xff]
    %v98 = vld [vmem:[%s0 + $0xe0] sm:$0xff]
    %v99 = vld [vmem:[%s0 + $0xe8] sm:$0xff]
    %v100 = vld [vmem:[%s0 + $0xf0] sm:$0xff]
    %v101 = vld [vmem:[%s0 + $0xf8] sm:$0xff]
    %v102 = vld [vmem:[%s0 + $0x100] sm:$0xff]
    %v103 = vld [vmem:[%s0 + $0x108] sm:$0xff]
    %v104 = vld [vmem:[%s0 + $0x110] sm:$0xff]
    %v105 = vld [vmem:[%s0 + $0x118] sm:$0xff]
    %v106 = vld [vmem:[%s0 + $0x120] sm:$0xff]
    %v107 = vld [vmem:[%s0 + $0x128] sm:$0xff]
    %v108 = vld [vmem:[%s0 + $0x130] sm:$0xff]
    %v109 = vld [vmem:[%s0 + $0x138] sm:$0xff]
    %v110 = vld [vmem:[%s0 + $0x140] sm:$0xff]
    %v111 = vld [vmem:[%s0 + $0x148] sm:$0xff]
    %v112 = vld [vmem:[%s0 + $0x150] sm:$0xff]
    %v113 = vld [vmem:[%s0 + $0x158] sm:$0xff]
    %v114 = vld [vmem:[%s0 + $0x160] sm:$0xff]
    %v115 = vld [vmem:[%s0 + $0x168] sm:$0xff]
    %v116 = vld [vmem:[%s0 + $0x170] sm:$0xff]
    %v117 = vld [vmem:[%s0 + $0x178] sm:$0xff]
    %v118 = vld [vmem:[%s0 + $0x180] sm:$0xff]
    %v119 = vld [vmem:[%s0 + $0x188] sm:$0xff]
    %v120 = vld [vmem:[%s0 + $0x190] sm:$0xff]
    %v121 = vld [vmem:[%s0 + $0x198] sm:$0xff]
    %v122 = vld [vmem:[%s0 + $0x1a0] sm:$0xff]
    %v123 = vld [vmem:[%s0 + $0x1a8] sm:$0xff]
    %v124 = vld [vmem:[%s0 + $0x1b0] sm:$0xff]
    %v125 = vld [vmem:[%s0 + $0x1b8] sm:$0xff]
    %v126 = vld [vmem:[%s0 + $0x1c0] sm:$0xff]
    %v127 = vld [vmem:[%s0 + $0x1c8] sm:$0xff]
    %v128 = vld [vmem:[%s0 + $0x1d0] sm:$0xff]
    %v129 = vld [vmem:[%s0 + $0x1d8] sm:$0xff]
    %v130 = vld [vmem:[%s0 + $0x1e0] sm:$0xff]
    %v131 = vld [vmem:[%s0 + $0x1e8] sm:$0xff]
    %v132 = vld [vmem:[%s0 + $0x1f0] sm:$0xff]
    %v133 = vld [vmem:[%s0 + $0x1f8] sm:$0xff]
    %v134 = vld [vmem:[%s0 + $0x200] sm:$0xff]
    %v135 = vld [vmem:[%s0 + $0x208] sm:$0xff]
    %v136 = vld [vmem:[%s0 + $0x210] sm:$0xff]
    %v137 = vld [vmem:[%s0 + $0x218] sm:$0xff]
    %v138 = vld [vmem:[%s0 + $0x220] sm:$0xff]
    %v139 = vld [vmem:[%s0 + $0x228] sm:$0xff]
    %v140 = vld [vmem:[%s0 + $0x230] sm:$0xff]
    %v141 = vld [vmem:[%s0 + $0x238] sm:$0xff]
    %v142 = vld [vmem:[%s0 + $0x240] sm:$0xff]
    %v143 = vld [vmem:[%s0 + $0x248] sm:$0xff]
    %v144 = vld [vmem:[%s0 + $0x250] sm:$0xff]
    %v145 = vld [vmem:[%s0 + $0x258] sm:$0xff]
    %v146 = vld [vmem:[%s0 + $0x260] sm:$0xff]
    %v147 = vld [vmem:[%s0 + $0x268] sm:$0xff]
    %v148 = vld [vmem:[%s0 + $0x270] sm:$0xff]
    %v149 = vld [vmem:[%s0 + $0x278] sm:$0xff]
    %v150 = vld [vmem:[%s0 + $0x280] sm:$0xff]
    %v151 = vld [vmem:[%s0 + $0x288] sm:$0xff]
    %v152 = vld [vmem:[%s0 + $0x290] sm:$0xff]
    %v153 = vld [vmem:[%s0 + $0x298] sm:$0xff]
    %v154 = vld [vmem:[%s0 + $0x2a0] sm:$0xff]
    %v155 = vld [vmem:[%s0 + $0x2a8] sm:$0xff]
    %v156 = vld [vmem:[%s0 + $0x2b0] sm:$0xff]
    %v157 = vld [vmem:[%s0 + $0x2b8] sm:$0xff]
    %v158 = vld [vmem:[%s0 + $0x2c0] sm:$0xff]
    %v159 = vld [vmem:[%s0 + $0x2c8] sm:$0xff]
    %v160 = vld [vmem:[%s0 + $0x2d0] sm:$0xff]
    %v161 = vld [vmem:[%s0 + $0x2d8] sm:$0xff]
    %v162 = vld [vmem:[%s0 + $0x2e0] sm:$0xff]
    %v163 = vld [vmem:[%s0 + $0x2e8] sm:$0xff]
    %v164 = vld [vmem:[%s0 + $0x2f0] sm:$0xff]
    %v165 = vld [vmem:[%s0 + $0x2f8] sm:$0xff]
    %v166 = vld [vmem:[%s0 + $0x300] sm:$0xff]
    %v167 = vld [vmem:[%s0 + $0x308] sm:$0xff]
    %v168 = vld [vmem:[%s0 + $0x310] sm:$0xff]
    %v169 = vld [vmem:[%s0 + $0x318] sm:$0xff]
    %v170 = vld [vmem:[%s0 + $0x320] sm:$0xff]
    %v171 = vld [vmem:[%s0 + $0x328] sm:$0xff]
    %v172 = vld [vmem:[%s0 + $0x330] sm:$0xff]
    %v173 = vld [vmem:[%s0 + $0x338] sm:$0xff]
    %v174 = vld [vmem:[%s0 + $0x340] sm:$0xff]
    %v175 = vld [vmem:[%s0 + $0x348] sm:$0xff]
    %v176 = vld [vmem:[%s0 + $0x350] sm:$0xff]
    %v177 = vld [vmem:[%s0 + $0x358] sm:$0xff]
    %v178 = vld [vmem:[%s0 + $0x360] sm:$0xff]
    %v179 = vld [vmem:[%s0 + $0x368] sm:$0xff]
    %v180 = vld [vmem:[%s0 + $0x370] sm:$0xff]
    %v181 = vld [vmem:[%s0 + $0x378] sm:$0xff]
    %v182 = vld [vmem:[%s0 + $0x380] sm:$0xff]
    %v183 = vld [vmem:[%s0 + $0x388] sm:$0xff]
    %v184 = vld [vmem:[%s0 + $0x390] sm:$0xff]
    %v185 = vld [vmem:[%s0 + $0x398] sm:$0xff]
    %v186 = vld [vmem:[%s0 + $0x3a0] sm:$0xff]
    %v187 = vld [vmem:[%s0 + $0x3a8] sm:$0xff]
    %v188 = vld [vmem:[%s0 + $0x3b0] sm:$0xff]
    %v189 = vld [vmem:[%s0 + $0x3b8] sm:$0xff]
    %v190 = vld [vmem:[%s0 + $0x3c0] sm:$0xff]
    %v191 = vld [vmem:[%s0 + $0x3c8] sm:$0xff]
    %v192 = vld [vmem:[%s0 + $0x3d0] sm:$0xff]
    %v193 = vld [vmem:[%s0 + $0x3d8] sm:$0xff]
    %v194 = vld [vmem:[%s0 + $0x3e0] sm:$0xff]
    %v195 = vld [vmem:[%s0 + $0x3e8] sm:$0xff]
    %v196 = vld [vmem:[%s0 + $0x3f0] sm:$0xff]
    %v197 = vld [vmem:[%s0 + $0x3f8] sm:$0xff]
    %v198 = vld [vmem:[%s0 + $0x400] sm:$0xff]
    %v199 = vld [vmem:[%s0 + $0x408] sm:$0xff]
    %v200 = vld [vmem:[%s0 + $0x410] sm:$0xff]
    %v201 = vld [vmem:[%s0 + $0x418] sm:$0xff]
    %v202 = vld [vmem:[%s0 + $0x420] sm:$0xff]
    %v203 = vld [vmem:[%s0 + $0x428] sm:$0xff]
    %v204 = vld [vmem:[%s0 + $0x430] sm:$0xff]
    %v205 = vld [vmem:[%s0 + $0x438] sm:$0xff]
    %v206 = vld [vmem:[%s0 + $0x440] sm:$0xff]
    %v207 = vld [vmem:[%s0 + $0x448] sm:$0xff]
    %v208 = vld [vmem:[%s0 + $0x450] sm:$0xff]
    %v209 = vld [vmem:[%s0 + $0x458] sm:$0xff]
    %v210 = vld [vmem:[%s0 + $0x460] sm:$0xff]
    %v211 = vld [vmem:[%s0 + $0x468] sm:$0xff]
    %v212 = vld [vmem:[%s0 + $0x470] sm:$0xff]
    %v213 = vld [vmem:[%s0 + $0x478] sm:$0xff]
    %v214 = vld [vmem:[%s0 + $0x480] sm:$0xff]
    %v215 = vld [vmem:[%s0 + $0x488] sm:$0xff]
    %v216 = vld [vmem:[%s0 + $0x490] sm:$0xff]
    %v217 = vld [vmem:[%s0 + $0x498] sm:$0xff]
    %v218 = vld [vmem:[%s0 + $0x4a0] sm:$0xff]
    %v219 = vld [vmem:[%s0 + $0x4a8] sm:$0xff]
    %v220 = vld [vmem:[%s0 + $0x4b0] sm:$0xff]
    %v221 = vld [vmem:[%s0 + $0x4b8] sm:$0xff]
    %v222 = vld [vmem:[%s0 + $0x4c0] sm:$0xff]
    %v223 = vld [vmem:[%s0 + $0x4c8] sm:$0xff]
    %v224 = vld [vmem:[%s0 + $0x4d0] sm:$0xff]
    %v225 = vld [vmem:[%s0 + $0x4d8] sm:$0xff]
    %v226 = vld [vmem:[%s0 + $0x4e0] sm:$0xff]
    %v227 = vld [vmem:[%s0 + $0x4e8] sm:$0xff]
    %v228 = vld [vmem:[%s0 + $0x4f0] sm:$0xff]
    %v229 = vld [vmem:[%s0 + $0x4f8] sm:$0xff]
    %v230 = vld [vmem:[%s0 + $0x500] sm:$0xff]
    %v231 = vld [vmem:[%s0 + $0x508] sm:$0xff]
    %v232 = vld [vmem:[%s0 + $0x510] sm:$0xff]
    %v233 = vld [vmem:[%s0 + $0x518] sm:$0xff]
    %v234 = vld [vmem:[%s0 + $0x520] sm:$0xff]
    %v235 = vld [vmem:[%s0 + $0x528] sm:$0xff]
    %v236 = vld [vmem:[%s0 + $0x530] sm:$0xff]
    %v237 = vld [vmem:[%s0 + $0x538] sm:$0xff]
    %v238 = vld [vmem:[%s0 + $0x540] sm:$0xff]
    %v239 = vld [vmem:[%s0 + $0x548] sm:$0xff]
    %v240 = vld [vmem:[%s0 + $0x550] sm:$0xff]
    %v241 = vld [vmem:[%s0 + $0x558] sm:$0xff]
    %v242 = vld [vmem:[%s0 + $0x560] sm:$0xff]
    %v243 = vld [vmem:[%s0 + $0x568] sm:$0xff]
    %v244 = vld [vmem:[%s0 + $0x570] sm:$0xff]
    %v245 = vld [vmem:[%s0 + $0x578] sm:$0xff]
    %v246 = vld [vmem:[%s0 + $0x580] sm:$0xff]
    %v247 = vld [vmem:[%s0 + $0x588] sm:$0xff]
    %v248 = vld [vmem:[%s0 + $0x590] sm:$0xff]
    %v249 = vld [vmem:[%s0 + $0x598] sm:$0xff]
    %v250 = vld [vmem:[%s0 + $0x5a0] sm:$0xff]
    %v251 = vld [vmem:[%s0 + $0x5a8] sm:$0xff]
    %v252 = vld [vmem:[%s0 + $0x5b0] sm:$0xff]
    %v253 = vld [vmem:[%s0 + $0x5b8] sm:$0xff]
    %v254 = vld [vmem:[%s0 + $0x5c0] sm:$0xff]
    %v255 = vld [vmem:[%s0 + $0x5c8] sm:$0xff]
    %v256 = vld [vmem:[%s0 + $0x5d0] sm:$0xff]
    %v257 = vld [vmem:[%s0 + $0x5d8] sm:$0xff]
    %v258 = vld [vmem:[%s0 + $0x5e0] sm:$0xff]
    %v259 = vld [vmem:[%s0 + $0x5e8] sm:$0xff]
    %v260 = vld [vmem:[%s0 + $0x5f0] sm:$0xff]
    %v261 = vld [vmem:[%s0 + $0x5f8] sm:$0xff]
    %v262 = vld [vmem:[%s0 + $0x600] sm:$0xff]
    %v263 = vld [vmem:[%s0 + $0x608] sm:$0xff]
    %v264 = vld [vmem:[%s0 + $0x610] sm:$0xff]
    %v265 = vld [vmem:[%s0 + $0x618] sm:$0xff]
    %v266 = vld [vmem:[%s0 + $0x620] sm:$0xff]
    %v267 = vld [vmem:[%s0 + $0x628] sm:$0xff]
    %v268 = vld [vmem:[%s0 + $0x630] sm:$0xff]
    %v269 = vld [vmem:[%s0 + $0x638] sm:$0xff]
    %v270 = vld [vmem:[%s0 + $0x640] sm:$0xff]
    %v271 = vld [vmem:[%s0 + $0x648] sm:$0xff]
    %v272 = vld [vmem:[%s0 + $0x650] sm:$0xff]
    %v273 = vld [vmem:[%s0 + $0x658] sm:$0xff]
    %v274 = vld [vmem:[%s0 + $0x660] sm:$0xff]
    %v275 = vld [vmem:[%s0 + $0x668] sm:$0xff]
    %v276 = vld [vmem:[%s0 + $0x670] sm:$0xff]
    %v277 = vld [vmem:[%s0 + $0x678] sm:$0xff]
    %v278 = vld [vmem:[%s0 + $0x680] sm:$0xff]
    %v279 = vld [vmem:[%s0 + $0x688] sm:$0xff]
    %v280 = vld [vmem:[%s0 + $0x690] sm:$0xff]
    %v281 = vld [vmem:[%s0 + $0x698] sm:$0xff]
    %v282 = vld [vmem:[%s0 + $0x6a0] sm:$0xff]
    %v283 = vld [vmem:[%s0 + $0x6a8] sm:$0xff]
    %v284 = vld [vmem:[%s0 + $0x6b0] sm:$0xff]
    %v285 = vld [vmem:[%s0 + $0x6b8] sm:$0xff]
    %v286 = vld [vmem:[%s0 + $0x6c0] sm:$0xff]
    %v287 = vld [vmem:[%s0 + $0x6c8] sm:$0xff]
    %v288 = vld [vmem:[%s0 + $0x6d0] sm:$0xff]
    %v289 = vld [vmem:[%s0 + $0x6d8] sm:$0xff]
    %v290 = vld [vmem:[%s0 + $0x6e0] sm:$0xff]
    %v291 = vld [vmem:[%s0 + $0x6e8] sm:$0xff]
    %v292 = vld [vmem:[%s0 + $0x6f0] sm:$0xff]
    %v293 = vld [vmem:[%s0 + $0x6f8] sm:$0xff]
    %v294 = vpack.c.bf16 %v77, %v70
    %v295 = vpack.c.bf16 %v78, %v71
    %v296 = vpack.c.bf16 %v79, %v72
    %v297 = vpack.c.bf16 %v80, %v73
    %v298 = vpack.c.bf16 %v81, %v74
    %v299 = vpack.c.bf16 %v82, %v75
    %v300 = vpack.c.bf16 %v83, %v76
    %v301 = vpack.c.bf16 %v91, %v84
    %v302 = vpack.c.bf16 %v92, %v85
    %v303 = vpack.c.bf16 %v93, %v86
    %v304 = vpack.c.bf16 %v94, %v87
    %v305 = vpack.c.bf16 %v95, %v88
    %v306 = vpack.c.bf16 %v96, %v89
    %v307 = vpack.c.bf16 %v97, %v90
    %v308 = vpack.c.bf16 %v105, %v98
    %v309 = vpack.c.bf16 %v106, %v99
    %v310 = vpack.c.bf16 %v107, %v100
    %v311 = vpack.c.bf16 %v108, %v101
    %v312 = vpack.c.bf16 %v109, %v102
    %v313 = vpack.c.bf16 %v110, %v103
    %v314 = vpack.c.bf16 %v111, %v104
    %v315 = vpack.c.bf16 %v119, %v112
    %v316 = vpack.c.bf16 %v120, %v113
    %v317 = vpack.c.bf16 %v121, %v114
    %v318 = vpack.c.bf16 %v122, %v115
    %v319 = vpack.c.bf16 %v123, %v116
    %v320 = vpack.c.bf16 %v124, %v117
    %v321 = vpack.c.bf16 %v125, %v118
    %v322 = vpack.c.bf16 %v133, %v126
    %v323 = vpack.c.bf16 %v134, %v127
    %v324 = vpack.c.bf16 %v135, %v128
    %v325 = vpack.c.bf16 %v136, %v129
    %v326 = vpack.c.bf16 %v137, %v130
    %v327 = vpack.c.bf16 %v138, %v131
    %v328 = vpack.c.bf16 %v139, %v132
    %v329 = vpack.c.bf16 %v147, %v140
    %v330 = vpack.c.bf16 %v148, %v141
    %v331 = vpack.c.bf16 %v149, %v142
    %v332 = vpack.c.bf16 %v150, %v143
    %v333 = vpack.c.bf16 %v151, %v144
    %v334 = vpack.c.bf16 %v152, %v145
    %v335 = vpack.c.bf16 %v153, %v146
    %v336 = vpack.c.bf16 %v161, %v154
    %v337 = vpack.c.bf16 %v162, %v155
    %v338 = vpack.c.bf16 %v163, %v156
    %v339 = vpack.c.bf16 %v164, %v157
    %v340 = vpack.c.bf16 %v165, %v158
    %v341 = vpack.c.bf16 %v166, %v159
    %v342 = vpack.c.bf16 %v167, %v160
    %v343 = vpack.c.bf16 %v175, %v168
    %v344 = vpack.c.bf16 %v176, %v169
    %v345 = vpack.c.bf16 %v177, %v170
    %v346 = vpack.c.bf16 %v178, %v171
    %v347 = vpack.c.bf16 %v179, %v172
    %v348 = vpack.c.bf16 %v180, %v173
    %v349 = vpack.c.bf16 %v181, %v174
    %v350 = vpack.c.bf16 %v189, %v182
    %v351 = vpack.c.bf16 %v190, %v183
    %v352 = vpack.c.bf16 %v191, %v184
    %v353 = vpack.c.bf16 %v192, %v185
    %v354 = vpack.c.bf16 %v193, %v186
    %v355 = vpack.c.bf16 %v194, %v187
    %v356 = vpack.c.bf16 %v195, %v188
    %v357 = vpack.c.bf16 %v203, %v196
    %v358 = vpack.c.bf16 %v204, %v197
    %v359 = vpack.c.bf16 %v205, %v198
    %v360 = vpack.c.bf16 %v206, %v199
    %v361 = vpack.c.bf16 %v207, %v200
    %v362 = vpack.c.bf16 %v208, %v201
    %v363 = vpack.c.bf16 %v209, %v202
    %v364 = vpack.c.bf16 %v217, %v210
    %v365 = vpack.c.bf16 %v218, %v211
    %v366 = vpack.c.bf16 %v219, %v212
    %v367 = vpack.c.bf16 %v220, %v213
    %v368 = vpack.c.bf16 %v221, %v214
    %v369 = vpack.c.bf16 %v222, %v215
    %v370 = vpack.c.bf16 %v223, %v216
    %v371 = vpack.c.bf16 %v231, %v224
    %v372 = vpack.c.bf16 %v232, %v225
    %v373 = vpack.c.bf16 %v233, %v226
    %v374 = vpack.c.bf16 %v234, %v227
    %v375 = vpack.c.bf16 %v235, %v228
    %v376 = vpack.c.bf16 %v236, %v229
    %v377 = vpack.c.bf16 %v237, %v230
    %v378 = vpack.c.bf16 %v245, %v238
    %v379 = vpack.c.bf16 %v246, %v239
    %v380 = vpack.c.bf16 %v247, %v240
    %v381 = vpack.c.bf16 %v248, %v241
    %v382 = vpack.c.bf16 %v249, %v242
    %v383 = vpack.c.bf16 %v250, %v243
    %v384 = vpack.c.bf16 %v251, %v244
    %v385 = vpack.c.bf16 %v259, %v252
    %v386 = vpack.c.bf16 %v260, %v253
    %v387 = vpack.c.bf16 %v261, %v254
    %v388 = vpack.c.bf16 %v262, %v255
    %v389 = vpack.c.bf16 %v263, %v256
    %v390 = vpack.c.bf16 %v264, %v257
    %v391 = vpack.c.bf16 %v265, %v258
    %v392 = vpack.c.bf16 %v273, %v266
    %v393 = vpack.c.bf16 %v274, %v267
    %v394 = vpack.c.bf16 %v275, %v268
    %v395 = vpack.c.bf16 %v276, %v269
    %v396 = vpack.c.bf16 %v277, %v270
    %v397 = vpack.c.bf16 %v278, %v271
    %v398 = vpack.c.bf16 %v279, %v272
    %v399 = vpack.c.bf16 %v287, %v280
    %v400 = vpack.c.bf16 %v288, %v281
    %v401 = vpack.c.bf16 %v289, %v282
    %v402 = vpack.c.bf16 %v290, %v283
    %v403 = vpack.c.bf16 %v291, %v284
    %v404 = vpack.c.bf16 %v292, %v285
    %v405 = vpack.c.bf16 %v293, %v286
    %v406 = vld [vmem:[%s1] sm:$0xff]
    %v407 = vld [vmem:[%s1 + $0x8] sm:$0xff]
    %v408 = vld [vmem:[%s1 + $0x10] sm:$0xff]
    %v409 = vld [vmem:[%s1 + $0x18] sm:$0xff]
    %v410 = vld [vmem:[%s1 + $0x20] sm:$0xff]
    %v411 = vld [vmem:[%s1 + $0x28] sm:$0xff]
    %v412 = vld [vmem:[%s1 + $0x30] sm:$0xff]
    %v413 = vld [vmem:[%s1 + $0x38] sm:$0xff]
    %v414 = vld [vmem:[%s1 + $0x40] sm:$0xff]
    %v415 = vld [vmem:[%s1 + $0x48] sm:$0xff]
    %v416 = vld [vmem:[%s1 + $0x50] sm:$0xff]
    %v417 = vld [vmem:[%s1 + $0x58] sm:$0xff]
    %v418 = vld [vmem:[%s1 + $0x60] sm:$0xff]
    %v419 = vld [vmem:[%s1 + $0x68] sm:$0xff]
    %v420 = vld [vmem:[%s1 + $0x70] sm:$0xff]
    %v421 = vld [vmem:[%s1 + $0x78] sm:$0xff]
    %v422 = vld [vmem:[%s1 + $0x80] sm:$0xff]
    %v423 = vld [vmem:[%s1 + $0x88] sm:$0xff]
    %v424 = vld [vmem:[%s1 + $0x90] sm:$0xff]
    %v425 = vld [vmem:[%s1 + $0x98] sm:$0xff]
    %v426 = vld [vmem:[%s1 + $0xa0] sm:$0xff]
    %v427 = vld [vmem:[%s1 + $0xa8] sm:$0xff]
    %v428 = vld [vmem:[%s1 + $0xb0] sm:$0xff]
    %v429 = vld [vmem:[%s1 + $0xb8] sm:$0xff]
    %v430 = vld [vmem:[%s1 + $0xc0] sm:$0xff]
    %v431 = vld [vmem:[%s1 + $0xc8] sm:$0xff]
    %v432 = vld [vmem:[%s1 + $0xd0] sm:$0xff]
    %v433 = vld [vmem:[%s1 + $0xd8] sm:$0xff]
    %v434 = vld [vmem:[%s1 + $0xe0] sm:$0xff]
    %v435 = vld [vmem:[%s1 + $0xe8] sm:$0xff]
    %v436 = vld [vmem:[%s1 + $0xf0] sm:$0xff]
    %v437 = vld [vmem:[%s1 + $0xf8] sm:$0xff]
    %v438 = vld [vmem:[%s1 + $0x100] sm:$0xff]
    %v439 = vld [vmem:[%s1 + $0x108] sm:$0xff]
    %v440 = vld [vmem:[%s1 + $0x110] sm:$0xff]
    %v441 = vld [vmem:[%s1 + $0x118] sm:$0xff]
    %v442 = vld [vmem:[%s1 + $0x120] sm:$0xff]
    %v443 = vld [vmem:[%s1 + $0x128] sm:$0xff]
    %v444 = vld [vmem:[%s1 + $0x130] sm:$0xff]
    %v445 = vld [vmem:[%s1 + $0x138] sm:$0xff]
    %v446 = vld [vmem:[%s1 + $0x140] sm:$0xff]
    %v447 = vld [vmem:[%s1 + $0x148] sm:$0xff]
    %v448 = vld [vmem:[%s1 + $0x150] sm:$0xff]
    %v449 = vld [vmem:[%s1 + $0x158] sm:$0xff]
    %v450 = vld [vmem:[%s1 + $0x160] sm:$0xff]
    %v451 = vld [vmem:[%s1 + $0x168] sm:$0xff]
    %v452 = vld [vmem:[%s1 + $0x170] sm:$0xff]
    %v453 = vld [vmem:[%s1 + $0x178] sm:$0xff]
    %v454 = vld [vmem:[%s1 + $0x180] sm:$0xff]
    %v455 = vld [vmem:[%s1 + $0x188] sm:$0xff]
    %v456 = vld [vmem:[%s1 + $0x190] sm:$0xff]
    %v457 = vld [vmem:[%s1 + $0x198] sm:$0xff]
    %v458 = vld [vmem:[%s1 + $0x1a0] sm:$0xff]
    %v459 = vld [vmem:[%s1 + $0x1a8] sm:$0xff]
    %v460 = vld [vmem:[%s1 + $0x1b0] sm:$0xff]
    %v461 = vld [vmem:[%s1 + $0x1b8] sm:$0xff]
    %v462 = vld [vmem:[%s1 + $0x1c0] sm:$0xff]
    %v463 = vld [vmem:[%s1 + $0x1c8] sm:$0xff]
    %v464 = vld [vmem:[%s1 + $0x1d0] sm:$0xff]
    %v465 = vld [vmem:[%s1 + $0x1d8] sm:$0xff]
    %v466 = vld [vmem:[%s1 + $0x1e0] sm:$0xff]
    %v467 = vld [vmem:[%s1 + $0x1e8] sm:$0xff]
    %v468 = vld [vmem:[%s1 + $0x1f0] sm:$0xff]
    %v469 = vld [vmem:[%s1 + $0x1f8] sm:$0xff]
    %v470 = vld [vmem:[%s1 + $0x200] sm:$0xff]
    %v471 = vld [vmem:[%s1 + $0x208] sm:$0xff]
    %v472 = vld [vmem:[%s1 + $0x210] sm:$0xff]
    %v473 = vld [vmem:[%s1 + $0x218] sm:$0xff]
    %v474 = vld [vmem:[%s1 + $0x220] sm:$0xff]
    %v475 = vld [vmem:[%s1 + $0x228] sm:$0xff]
    %v476 = vld [vmem:[%s1 + $0x230] sm:$0xff]
    %v477 = vld [vmem:[%s1 + $0x238] sm:$0xff]
    %v478 = vld [vmem:[%s1 + $0x240] sm:$0xff]
    %v479 = vld [vmem:[%s1 + $0x248] sm:$0xff]
    %v480 = vld [vmem:[%s1 + $0x250] sm:$0xff]
    %v481 = vld [vmem:[%s1 + $0x258] sm:$0xff]
    %v482 = vld [vmem:[%s1 + $0x260] sm:$0xff]
    %v483 = vld [vmem:[%s1 + $0x268] sm:$0xff]
    %v484 = vld [vmem:[%s1 + $0x270] sm:$0xff]
    %v485 = vld [vmem:[%s1 + $0x278] sm:$0xff]
    %v486 = vld [vmem:[%s1 + $0x280] sm:$0xff]
    %v487 = vld [vmem:[%s1 + $0x288] sm:$0xff]
    %v488 = vld [vmem:[%s1 + $0x290] sm:$0xff]
    %v489 = vld [vmem:[%s1 + $0x298] sm:$0xff]
    %v490 = vld [vmem:[%s1 + $0x2a0] sm:$0xff]
    %v491 = vld [vmem:[%s1 + $0x2a8] sm:$0xff]
    %v492 = vld [vmem:[%s1 + $0x2b0] sm:$0xff]
    %v493 = vld [vmem:[%s1 + $0x2b8] sm:$0xff]
    %v494 = vld [vmem:[%s1 + $0x2c0] sm:$0xff]
    %v495 = vld [vmem:[%s1 + $0x2c8] sm:$0xff]
    %v496 = vld [vmem:[%s1 + $0x2d0] sm:$0xff]
    %v497 = vld [vmem:[%s1 + $0x2d8] sm:$0xff]
    %v498 = vld [vmem:[%s1 + $0x2e0] sm:$0xff]
    %v499 = vld [vmem:[%s1 + $0x2e8] sm:$0xff]
    %v500 = vld [vmem:[%s1 + $0x2f0] sm:$0xff]
    %v501 = vld [vmem:[%s1 + $0x2f8] sm:$0xff]
    %v502 = vld [vmem:[%s1 + $0x300] sm:$0xff]
    %v503 = vld [vmem:[%s1 + $0x308] sm:$0xff]
    %v504 = vld [vmem:[%s11] sm:$0x3]
    %v506 = vlaneseq
    %v507 = vshrl.u32 %v506, 7
    %v508 = vsub.s32 0, %v507
    %v509 = vrot.slane %v504, %v508
    %v510 = vlaneseq
    %v511 = vshrl.u32 %v510, 7
    %v512 = vsub.s32 1, %v511
    %v513 = vrot.slane %v504, %v512
    %v614 = vunpack.c.l.b16 %v406
    %v615 = vunpack.c.h.b16 %v406
    %v616 = vunpack.c.l.b16 %v407
    %v617 = vunpack.c.h.b16 %v407
    %v618 = vunpack.c.l.b16 %v408
    %v619 = vunpack.c.h.b16 %v408
    %v620 = vunpack.c.l.b16 %v409
    %v621 = vunpack.c.h.b16 %v409
    %v622 = vunpack.c.l.b16 %v410
    %v623 = vunpack.c.h.b16 %v410
    %v624 = vunpack.c.l.b16 %v411
    %v625 = vunpack.c.h.b16 %v411
    %v626 = vunpack.c.l.b16 %v412
    %v627 = vunpack.c.h.b16 %v412
    %v628 = vunpack.c.l.b16 %v413
    %v629 = vunpack.c.h.b16 %v413
    %v630 = vunpack.c.l.b16 %v414
    %v631 = vunpack.c.h.b16 %v414
    %v632 = vunpack.c.l.b16 %v415
    %v633 = vunpack.c.h.b16 %v415
    %v634 = vunpack.c.l.b16 %v416
    %v635 = vunpack.c.h.b16 %v416
    %v636 = vunpack.c.l.b16 %v417
    %v637 = vunpack.c.h.b16 %v417
    %v638 = vunpack.c.l.b16 %v418
    %v639 = vunpack.c.h.b16 %v418
    %v640 = vunpack.c.l.b16 %v419
    %v641 = vunpack.c.h.b16 %v419
    %v642 = vunpack.c.l.b16 %v420
    %v643 = vunpack.c.h.b16 %v420
    %v644 = vunpack.c.l.b16 %v421
    %v645 = vunpack.c.h.b16 %v421
    %v646 = vunpack.c.l.b16 %v422
    %v647 = vunpack.c.h.b16 %v422
    %v648 = vunpack.c.l.b16 %v423
    %v649 = vunpack.c.h.b16 %v423
    %v650 = vunpack.c.l.b16 %v424
    %v651 = vunpack.c.h.b16 %v424
    %v652 = vunpack.c.l.b16 %v425
    %v653 = vunpack.c.h.b16 %v425
    %v654 = vunpack.c.l.b16 %v426
    %v655 = vunpack.c.h.b16 %v426
    %v656 = vunpack.c.l.b16 %v427
    %v657 = vunpack.c.h.b16 %v427
    %v658 = vunpack.c.l.b16 %v428
    %v659 = vunpack.c.h.b16 %v428
    %v660 = vunpack.c.l.b16 %v429
    %v661 = vunpack.c.h.b16 %v429
    %v662 = vunpack.c.l.b16 %v430
    %v663 = vunpack.c.h.b16 %v430
    %v664 = vunpack.c.l.b16 %v431
    %v665 = vunpack.c.h.b16 %v431
    %v666 = vunpack.c.l.b16 %v432
    %v667 = vunpack.c.h.b16 %v432
    %v668 = vunpack.c.l.b16 %v433
    %v669 = vunpack.c.h.b16 %v433
    %v670 = vunpack.c.l.b16 %v434
    %v671 = vunpack.c.h.b16 %v434
    %v672 = vunpack.c.l.b16 %v435
    %v673 = vunpack.c.h.b16 %v435
    %v674 = vunpack.c.l.b16 %v436
    %v675 = vunpack.c.h.b16 %v436
    %v676 = vunpack.c.l.b16 %v437
    %v677 = vunpack.c.h.b16 %v437
    %v678 = vunpack.c.l.b16 %v438
    %v679 = vunpack.c.h.b16 %v438
    %v680 = vunpack.c.l.b16 %v439
    %v681 = vunpack.c.h.b16 %v439
    %v682 = vunpack.c.l.b16 %v440
    %v683 = vunpack.c.h.b16 %v440
    %v684 = vunpack.c.l.b16 %v441
    %v685 = vunpack.c.h.b16 %v441
    %v686 = vunpack.c.l.b16 %v442
    %v687 = vunpack.c.h.b16 %v442
    %v688 = vunpack.c.l.b16 %v443
    %v689 = vunpack.c.h.b16 %v443
    %v690 = vunpack.c.l.b16 %v444
    %v691 = vunpack.c.h.b16 %v444
    %v692 = vunpack.c.l.b16 %v445
    %v693 = vunpack.c.h.b16 %v445
    %v694 = vunpack.c.l.b16 %v446
    %v695 = vunpack.c.h.b16 %v446
    %v696 = vunpack.c.l.b16 %v447
    %v697 = vunpack.c.h.b16 %v447
    %v698 = vunpack.c.l.b16 %v448
    %v699 = vunpack.c.h.b16 %v448
    %v700 = vunpack.c.l.b16 %v449
    %v701 = vunpack.c.h.b16 %v449
    %v702 = vunpack.c.l.b16 %v450
    %v703 = vunpack.c.h.b16 %v450
    %v704 = vunpack.c.l.b16 %v451
    %v705 = vunpack.c.h.b16 %v451
    %v706 = vunpack.c.l.b16 %v452
    %v707 = vunpack.c.h.b16 %v452
    %v708 = vunpack.c.l.b16 %v453
    %v709 = vunpack.c.h.b16 %v453
    %v710 = vunpack.c.l.b16 %v454
    %v711 = vunpack.c.h.b16 %v454
    %v712 = vunpack.c.l.b16 %v455
    %v713 = vunpack.c.h.b16 %v455
    %v714 = vunpack.c.l.b16 %v456
    %v715 = vunpack.c.h.b16 %v456
    %v716 = vunpack.c.l.b16 %v457
    %v717 = vunpack.c.h.b16 %v457
    %v718 = vunpack.c.l.b16 %v458
    %v719 = vunpack.c.h.b16 %v458
    %v720 = vunpack.c.l.b16 %v459
    %v721 = vunpack.c.h.b16 %v459
    %v722 = vunpack.c.l.b16 %v460
    %v723 = vunpack.c.h.b16 %v460
    %v724 = vunpack.c.l.b16 %v461
    %v725 = vunpack.c.h.b16 %v461
    %v726 = vunpack.c.l.b16 %v462
    %v727 = vunpack.c.h.b16 %v462
    %v728 = vunpack.c.l.b16 %v463
    %v729 = vunpack.c.h.b16 %v463
    %v730 = vunpack.c.l.b16 %v464
    %v731 = vunpack.c.h.b16 %v464
    %v732 = vunpack.c.l.b16 %v465
    %v733 = vunpack.c.h.b16 %v465
    %v734 = vunpack.c.l.b16 %v466
    %v735 = vunpack.c.h.b16 %v466
    %v736 = vunpack.c.l.b16 %v467
    %v737 = vunpack.c.h.b16 %v467
    %v738 = vunpack.c.l.b16 %v468
    %v739 = vunpack.c.h.b16 %v468
    %v740 = vunpack.c.l.b16 %v469
    %v741 = vunpack.c.h.b16 %v469
    %v742 = vunpack.c.l.b16 %v470
    %v743 = vunpack.c.h.b16 %v470
    %v744 = vunpack.c.l.b16 %v471
    %v745 = vunpack.c.h.b16 %v471
    %v746 = vunpack.c.l.b16 %v472
    %v747 = vunpack.c.h.b16 %v472
    %v748 = vunpack.c.l.b16 %v473
    %v749 = vunpack.c.h.b16 %v473
    %v750 = vunpack.c.l.b16 %v474
    %v751 = vunpack.c.h.b16 %v474
    %v752 = vunpack.c.l.b16 %v475
    %v753 = vunpack.c.h.b16 %v475
    %v754 = vunpack.c.l.b16 %v476
    %v755 = vunpack.c.h.b16 %v476
    %v756 = vunpack.c.l.b16 %v477
    %v757 = vunpack.c.h.b16 %v477
    %v758 = vunpack.c.l.b16 %v478
    %v759 = vunpack.c.h.b16 %v478
    %v760 = vunpack.c.l.b16 %v479
    %v761 = vunpack.c.h.b16 %v479
    %v762 = vunpack.c.l.b16 %v480
    %v763 = vunpack.c.h.b16 %v480
    %v764 = vunpack.c.l.b16 %v481
    %v765 = vunpack.c.h.b16 %v481
    %v766 = vunpack.c.l.b16 %v482
    %v767 = vunpack.c.h.b16 %v482
    %v768 = vunpack.c.l.b16 %v483
    %v769 = vunpack.c.h.b16 %v483
    %v770 = vunpack.c.l.b16 %v484
    %v771 = vunpack.c.h.b16 %v484
    %v772 = vunpack.c.l.b16 %v485
    %v773 = vunpack.c.h.b16 %v485
    %v774 = vunpack.c.l.b16 %v486
    %v775 = vunpack.c.h.b16 %v486
    %v776 = vunpack.c.l.b16 %v487
    %v777 = vunpack.c.h.b16 %v487
    %v778 = vunpack.c.l.b16 %v488
    %v779 = vunpack.c.h.b16 %v488
    %v780 = vunpack.c.l.b16 %v489
    %v781 = vunpack.c.h.b16 %v489
    %v782 = vunpack.c.l.b16 %v490
    %v783 = vunpack.c.h.b16 %v490
    %v784 = vunpack.c.l.b16 %v491
    %v785 = vunpack.c.h.b16 %v491
    %v786 = vunpack.c.l.b16 %v492
    %v787 = vunpack.c.h.b16 %v492
    %v788 = vunpack.c.l.b16 %v493
    %v789 = vunpack.c.h.b16 %v493
    %v790 = vunpack.c.l.b16 %v494
    %v791 = vunpack.c.h.b16 %v494
    %v792 = vunpack.c.l.b16 %v495
    %v793 = vunpack.c.h.b16 %v495
    %v794 = vunpack.c.l.b16 %v496
    %v795 = vunpack.c.h.b16 %v496
    %v796 = vunpack.c.l.b16 %v497
    %v797 = vunpack.c.h.b16 %v497
    %v798 = vunpack.c.l.b16 %v498
    %v799 = vunpack.c.h.b16 %v498
    %v800 = vunpack.c.l.b16 %v499
    %v801 = vunpack.c.h.b16 %v499
    %v802 = vunpack.c.l.b16 %v500
    %v803 = vunpack.c.h.b16 %v500
    %v804 = vunpack.c.l.b16 %v501
    %v805 = vunpack.c.h.b16 %v501
    %v806 = vunpack.c.l.b16 %v502
    %v807 = vunpack.c.h.b16 %v502
    %v808 = vunpack.c.l.b16 %v503
    %v809 = vunpack.c.h.b16 %v503
    %v810 = vpack.c.b16 %v616, %v614
    %v811 = vpack.c.b16 %v617, %v615
    %v812 = vpack.c.b16 %v620, %v618
    %v813 = vpack.c.b16 %v621, %v619
    %v814 = vpack.c.b16 %v624, %v622
    %v815 = vpack.c.b16 %v625, %v623
    %v816 = vpack.c.b16 %v628, %v626
    %v817 = vpack.c.b16 %v629, %v627
    %v818 = vpack.c.b16 %v632, %v630
    %v819 = vpack.c.b16 %v633, %v631
    %v820 = vpack.c.b16 %v636, %v634
    %v821 = vpack.c.b16 %v637, %v635
    %v822 = vpack.c.b16 %v640, %v638
    %v823 = vpack.c.b16 %v641, %v639
    %v824 = vpack.c.b16 %v644, %v642
    %v825 = vpack.c.b16 %v645, %v643
    %v826 = vpack.c.b16 %v648, %v646
    %v827 = vpack.c.b16 %v649, %v647
    %v828 = vpack.c.b16 %v652, %v650
    %v829 = vpack.c.b16 %v653, %v651
    %v830 = vpack.c.b16 %v656, %v654
    %v831 = vpack.c.b16 %v657, %v655
    %v832 = vpack.c.b16 %v660, %v658
    %v833 = vpack.c.b16 %v661, %v659
    %v834 = vpack.c.b16 %v664, %v662
    %v835 = vpack.c.b16 %v665, %v663
    %v836 = vpack.c.b16 %v668, %v666
    %v837 = vpack.c.b16 %v669, %v667
    %v838 = vpack.c.b16 %v672, %v670
    %v839 = vpack.c.b16 %v673, %v671
    %v840 = vpack.c.b16 %v676, %v674
    %v841 = vpack.c.b16 %v677, %v675
    %v842 = vpack.c.b16 %v680, %v678
    %v843 = vpack.c.b16 %v681, %v679
    %v844 = vpack.c.b16 %v684, %v682
    %v845 = vpack.c.b16 %v685, %v683
    %v846 = vpack.c.b16 %v688, %v686
    %v847 = vpack.c.b16 %v689, %v687
    %v848 = vpack.c.b16 %v692, %v690
    %v849 = vpack.c.b16 %v693, %v691
    %v850 = vpack.c.b16 %v696, %v694
    %v851 = vpack.c.b16 %v697, %v695
    %v852 = vpack.c.b16 %v700, %v698
    %v853 = vpack.c.b16 %v701, %v699
    %v854 = vpack.c.b16 %v704, %v702
    %v855 = vpack.c.b16 %v705, %v703
    %v856 = vpack.c.b16 %v708, %v706
    %v857 = vpack.c.b16 %v709, %v707
    %v858 = vpack.c.b16 %v712, %v710
    %v859 = vpack.c.b16 %v713, %v711
    %v860 = vpack.c.b16 %v716, %v714
    %v861 = vpack.c.b16 %v717, %v715
    %v862 = vpack.c.b16 %v720, %v718
    %v863 = vpack.c.b16 %v721, %v719
    %v864 = vpack.c.b16 %v724, %v722
    %v865 = vpack.c.b16 %v725, %v723
    %v866 = vpack.c.b16 %v728, %v726
    %v867 = vpack.c.b16 %v729, %v727
    %v868 = vpack.c.b16 %v732, %v730
    %v869 = vpack.c.b16 %v733, %v731
    %v870 = vpack.c.b16 %v736, %v734
    %v871 = vpack.c.b16 %v737, %v735
    %v872 = vpack.c.b16 %v740, %v738
    %v873 = vpack.c.b16 %v741, %v739
    %v874 = vpack.c.b16 %v744, %v742
    %v875 = vpack.c.b16 %v745, %v743
    %v876 = vpack.c.b16 %v748, %v746
    %v877 = vpack.c.b16 %v749, %v747
    %v878 = vpack.c.b16 %v752, %v750
    %v879 = vpack.c.b16 %v753, %v751
    %v880 = vpack.c.b16 %v756, %v754
    %v881 = vpack.c.b16 %v757, %v755
    %v882 = vpack.c.b16 %v760, %v758
    %v883 = vpack.c.b16 %v761, %v759
    %v884 = vpack.c.b16 %v764, %v762
    %v885 = vpack.c.b16 %v765, %v763
    %v886 = vpack.c.b16 %v768, %v766
    %v887 = vpack.c.b16 %v769, %v767
    %v888 = vpack.c.b16 %v772, %v770
    %v889 = vpack.c.b16 %v773, %v771
    %v890 = vpack.c.b16 %v776, %v774
    %v891 = vpack.c.b16 %v777, %v775
    %v892 = vpack.c.b16 %v780, %v778
    %v893 = vpack.c.b16 %v781, %v779
    %v894 = vpack.c.b16 %v784, %v782
    %v895 = vpack.c.b16 %v785, %v783
    %v896 = vpack.c.b16 %v788, %v786
    %v897 = vpack.c.b16 %v789, %v787
    %v898 = vpack.c.b16 %v792, %v790
    %v899 = vpack.c.b16 %v793, %v791
    %v900 = vpack.c.b16 %v796, %v794
    %v901 = vpack.c.b16 %v797, %v795
    %v902 = vpack.c.b16 %v800, %v798
    %v903 = vpack.c.b16 %v801, %v799
    %v904 = vpack.c.b16 %v804, %v802
    %v905 = vpack.c.b16 %v805, %v803
    %v906 = vpack.c.b16 %v808, %v806
    %v907 = vpack.c.b16 %v809, %v807
    %vm1006 = vcmask 130048
    %v1008 = vsel %vm1006, %v300, 0
    %v1011 = vsel %vm1006, %v307, 0
    %v1014 = vsel %vm1006, %v314, 0
    %v1017 = vsel %vm1006, %v321, 0
    %v1020 = vsel %vm1006, %v328, 0
    %v1023 = vsel %vm1006, %v335, 0
    %v1026 = vsel %vm1006, %v342, 0
    %v1029 = vsel %vm1006, %v349, 0
    %v1032 = vsel %vm1006, %v356, 0
    %v1035 = vsel %vm1006, %v363, 0
    %v1038 = vsel %vm1006, %v370, 0
    %v1041 = vsel %vm1006, %v377, 0
    %v1044 = vsel %vm1006, %v384, 0
    %v1047 = vsel %vm1006, %v391, 0
    %v1050 = vsel %vm1006, %v398, 0
    %v1053 = vsel %vm1006, %v405, 0
    %1055 = vmatprep.subr.bf16.mxu0 %v811
    %1056 = vmatpush1.bf16.msra.mxu0 %v810
    %1057 = vmatprep.subr.bf16.mxu0 %v813
    %1058 = vmatpush1.bf16.msra.mxu0 %v812
    %1059 = vmatprep.subr.bf16.mxu0 %v815
    %1060 = vmatpush1.bf16.msra.mxu0 %v814
    %1061 = vmatprep.subr.bf16.mxu0 %v817
    %1062 = vmatpush1.bf16.msra.mxu0 %v816
    %1063 = vmatprep.subr.bf16.mxu0 %v819
    %1064 = vmatpush1.bf16.msra.mxu0 %v818
    %1065 = vmatprep.subr.bf16.mxu0 %v821
    %1066 = vmatpush1.bf16.msra.mxu0 %v820
    %1067 = vmatprep.subr.bf16.mxu0 %v823
    %1068 = vmatpush1.bf16.msra.mxu0 %v822
    %1069 = vmatprep.subr.bf16.mxu0 %v825
    %1070 = vmatpush1.bf16.msra.mxu0 %v824
    %1071 = vmatprep.subr.bf16.mxu0 %v827
    %1072 = vmatpush1.bf16.msra.mxu0 %v826
    %1073 = vmatprep.subr.bf16.mxu0 %v829
    %1074 = vmatpush1.bf16.msra.mxu0 %v828
    %1075 = vmatprep.subr.bf16.mxu0 %v831
    %1076 = vmatpush1.bf16.msra.mxu0 %v830
    %1077 = vmatprep.subr.bf16.mxu0 %v833
    %1078 = vmatpush1.bf16.msra.mxu0 %v832
    %1079 = vmatprep.subr.bf16.mxu0 %v835
    %1080 = vmatpush1.bf16.msra.mxu0 %v834
    %1081 = vmatprep.subr.bf16.mxu0 %v837
    %1082 = vmatpush1.bf16.msra.mxu0 %v836
    %1083 = vmatprep.subr.bf16.mxu0 %v839
    %1084 = vmatpush1.bf16.msra.mxu0 %v838
    %1085 = vmatprep.subr.bf16.mxu0 %v841
    %1086 = vmatpush1.bf16.msra.mxu0 %v840
    %1087 = vmatprep.mubr.bf16.mxu0 %v295
    %1088 = vmatmul.mubr.bf16.gmra.mrb[0].mxu0 %v294
    %v1089 = vpop.f32.mrb[0].mxu0
    %v1090 = vadd.f32 %v509, %v1089
    %v1091 = vpop.f32.mrb[0].mxu0
    %v1092 = vadd.f32 %v513, %v1091
    %v1093 = vpop.f32.mrb[0].mxu0
    %v1094 = vadd.f32 %v509, %v1093
    %v1095 = vpop.f32.mrb[0].mxu0
    %v1096 = vadd.f32 %v513, %v1095
    %1097 = vmatprep.mubr.bf16.mxu0 %v302
    %1098 = vmatmul.mubr.bf16.gmra.mrb[0].mxu0 %v301
    %v1099 = vpop.f32.mrb[0].mxu0
    %v1100 = vadd.f32 %v509, %v1099
    %v1101 = vpop.f32.mrb[0].mxu0
    %v1102 = vadd.f32 %v513, %v1101
    %v1103 = vpop.f32.mrb[0].mxu0
    %v1104 = vadd.f32 %v509, %v1103
    %v1105 = vpop.f32.mrb[0].mxu0
    %v1106 = vadd.f32 %v513, %v1105
    %1107 = vmatprep.mubr.bf16.mxu0 %v309
    %1108 = vmatmul.mubr.bf16.gmra.mrb[0].mxu0 %v308
    %v1109 = vpop.f32.mrb[0].mxu0
    %v1110 = vadd.f32 %v509, %v1109
    %v1111 = vpop.f32.mrb[0].mxu0
    %v1112 = vadd.f32 %v513, %v1111
    %v1113 = vpop.f32.mrb[0].mxu0
    %v1114 = vadd.f32 %v509, %v1113
    %v1115 = vpop.f32.mrb[0].mxu0
    %v1116 = vadd.f32 %v513, %v1115
    %1117 = vmatprep.mubr.bf16.mxu0 %v316
    %1118 = vmatmul.mubr.bf16.gmra.mrb[0].mxu0 %v315
    %v1119 = vpop.f32.mrb[0].mxu0
    %v1120 = vadd.f32 %v509, %v1119
    %v1121 = vpop.f32.mrb[0].mxu0
    %v1122 = vadd.f32 %v513, %v1121
    %v1123 = vpop.f32.mrb[0].mxu0
    %v1124 = vadd.f32 %v509, %v1123
    %v1125 = vpop.f32.mrb[0].mxu0
    %v1126 = vadd.f32 %v513, %v1125
    %1127 = vmatprep.mubr.bf16.mxu0 %v323
    %1128 = vmatmul.mubr.bf16.gmra.mrb[0].mxu0 %v322
    %v1129 = vpop.f32.mrb[0].mxu0
    %v1130 = vadd.f32 %v509, %v1129
    %v1131 = vpop.f32.mrb[0].mxu0
    %v1132 = vadd.f32 %v513, %v1131
    %v1133 = vpop.f32.mrb[0].mxu0
    %v1134 = vadd.f32 %v509, %v1133
    %v1135 = vpop.f32.mrb[0].mxu0
    %v1136 = vadd.f32 %v513, %v1135
    %1137 = vmatprep.mubr.bf16.mxu0 %v330
    %1138 = vmatmul.mubr.bf16.gmra.mrb[0].mxu0 %v329
    %v1139 = vpop.f32.mrb[0].mxu0
    %v1140 = vadd.f32 %v509, %v1139
    %v1141 = vpop.f32.mrb[0].mxu0
    %v1142 = vadd.f32 %v513, %v1141
    %v1143 = vpop.f32.mrb[0].mxu0
    %v1144 = vadd.f32 %v509, %v1143
    %v1145 = vpop.f32.mrb[0].mxu0
    %v1146 = vadd.f32 %v513, %v1145
    %1147 = vmatprep.mubr.bf16.mxu0 %v337
    %1148 = vmatmul.mubr.bf16.gmra.mrb[0].mxu0 %v336
    %v1149 = vpop.f32.mrb[0].mxu0
    %v1150 = vadd.f32 %v509, %v1149
    %v1151 = vpop.f32.mrb[0].mxu0
    %v1152 = vadd.f32 %v513, %v1151
    %v1153 = vpop.f32.mrb[0].mxu0
    %v1154 = vadd.f32 %v509, %v1153
    %v1155 = vpop.f32.mrb[0].mxu0
    %v1156 = vadd.f32 %v513, %v1155
    %1157 = vmatprep.mubr.bf16.mxu0 %v344
    %1158 = vmatmul.mubr.bf16.gmra.mrb[0].mxu0 %v343
    %v1159 = vpop.f32.mrb[0].mxu0
    %v1160 = vadd.f32 %v509, %v1159
    %v1161 = vpop.f32.mrb[0].mxu0
    %v1162 = vadd.f32 %v513, %v1161
    %v1163 = vpop.f32.mrb[0].mxu0
    %v1164 = vadd.f32 %v509, %v1163
    %v1165 = vpop.f32.mrb[0].mxu0
    %v1166 = vadd.f32 %v513, %v1165
    %1167 = vmatprep.mubr.bf16.mxu0 %v351
    %1168 = vmatmul.mubr.bf16.gmra.mrb[0].mxu0 %v350
    %v1169 = vpop.f32.mrb[0].mxu0
    %v1170 = vadd.f32 %v509, %v1169
    %v1171 = vpop.f32.mrb[0].mxu0
    %v1172 = vadd.f32 %v513, %v1171
    %v1173 = vpop.f32.mrb[0].mxu0
    %v1174 = vadd.f32 %v509, %v1173
    %v1175 = vpop.f32.mrb[0].mxu0
    %v1176 = vadd.f32 %v513, %v1175
    %1177 = vmatprep.mubr.bf16.mxu0 %v358
    %1178 = vmatmul.mubr.bf16.gmra.mrb[0].mxu0 %v357
    %v1179 = vpop.f32.mrb[0].mxu0
    %v1180 = vadd.f32 %v509, %v1179
    %v1181 = vpop.f32.mrb[0].mxu0
    %v1182 = vadd.f32 %v513, %v1181
    %v1183 = vpop.f32.mrb[0].mxu0
    %v1184 = vadd.f32 %v509, %v1183
    %v1185 = vpop.f32.mrb[0].mxu0
    %v1186 = vadd.f32 %v513, %v1185
    %1187 = vmatprep.mubr.bf16.mxu0 %v365
    %1188 = vmatmul.mubr.bf16.gmra.mrb[0].mxu0 %v364
    %v1189 = vpop.f32.mrb[0].mxu0
    %v1190 = vadd.f32 %v509, %v1189
    %v1191 = vpop.f32.mrb[0].mxu0
    %v1192 = vadd.f32 %v513, %v1191
    %v1193 = vpop.f32.mrb[0].mxu0
    %v1194 = vadd.f32 %v509, %v1193
    %v1195 = vpop.f32.mrb[0].mxu0
    %v1196 = vadd.f32 %v513, %v1195
    %1197 = vmatprep.mubr.bf16.mxu0 %v372
    %1198 = vmatmul.mubr.bf16.gmra.mrb[0].mxu0 %v371
    %v1199 = vpop.f32.mrb[0].mxu0
    %v1200 = vadd.f32 %v509, %v1199
    %v1201 = vpop.f32.mrb[0].mxu0
    %v1202 = vadd.f32 %v513, %v1201
    %v1203 = vpop.f32.mrb[0].mxu0
    %v1204 = vadd.f32 %v509, %v1203
    %v1205 = vpop.f32.mrb[0].mxu0
    %v1206 = vadd.f32 %v513, %v1205
    %1207 = vmatprep.mubr.bf16.mxu0 %v379
    %1208 = vmatmul.mubr.bf16.gmra.mrb[0].mxu0 %v378
    %v1209 = vpop.f32.mrb[0].mxu0
    %v1210 = vadd.f32 %v509, %v1209
    %v1211 = vpop.f32.mrb[0].mxu0
    %v1212 = vadd.f32 %v513, %v1211
    %v1213 = vpop.f32.mrb[0].mxu0
    %v1214 = vadd.f32 %v509, %v1213
    %v1215 = vpop.f32.mrb[0].mxu0
    %v1216 = vadd.f32 %v513, %v1215
    %1217 = vmatprep.mubr.bf16.mxu0 %v386
    %1218 = vmatmul.mubr.bf16.gmra.mrb[0].mxu0 %v385
    %v1219 = vpop.f32.mrb[0].mxu0
    %v1220 = vadd.f32 %v509, %v1219
    %v1221 = vpop.f32.mrb[0].mxu0
    %v1222 = vadd.f32 %v513, %v1221
    %v1223 = vpop.f32.mrb[0].mxu0
    %v1224 = vadd.f32 %v509, %v1223
    %v1225 = vpop.f32.mrb[0].mxu0
    %v1226 = vadd.f32 %v513, %v1225
    %1227 = vmatprep.mubr.bf16.mxu0 %v393
    %1228 = vmatmul.mubr.bf16.gmra.mrb[0].mxu0 %v392
    %v1229 = vpop.f32.mrb[0].mxu0
    %v1230 = vadd.f32 %v509, %v1229
    %v1231 = vpop.f32.mrb[0].mxu0
    %v1232 = vadd.f32 %v513, %v1231
    %v1233 = vpop.f32.mrb[0].mxu0
    %v1234 = vadd.f32 %v509, %v1233
    %v1235 = vpop.f32.mrb[0].mxu0
    %v1236 = vadd.f32 %v513, %v1235
    %1237 = vmatprep.mubr.bf16.mxu0 %v400
    %1238 = vmatmul.mubr.bf16.gmra.mrb[0].mxu0 %v399
    %v1239 = vpop.f32.mrb[0].mxu0
    %v1240 = vadd.f32 %v509, %v1239
    %v1241 = vpop.f32.mrb[0].mxu0
    %v1242 = vadd.f32 %v513, %v1241
    %v1243 = vpop.f32.mrb[0].mxu0
    %v1244 = vadd.f32 %v509, %v1243
    %v1245 = vpop.f32.mrb[0].mxu0
    %v1246 = vadd.f32 %v513, %v1245
    %1247 = vdwg.mxu0
    %1248 = vmatprep.subr.bf16.mxu0 %v843
    %1249 = vmatpush1.bf16.msra.mxu0 %v842
    %1250 = vmatprep.subr.bf16.mxu0 %v845
    %1251 = vmatpush1.bf16.msra.mxu0 %v844
    %1252 = vmatprep.subr.bf16.mxu0 %v847
    %1253 = vmatpush1.bf16.msra.mxu0 %v846
    %1254 = vmatprep.subr.bf16.mxu0 %v849
    %1255 = vmatpush1.bf16.msra.mxu0 %v848
    %1256 = vmatprep.subr.bf16.mxu0 %v851
    %1257 = vmatpush1.bf16.msra.mxu0 %v850
    %1258 = vmatprep.subr.bf16.mxu0 %v853
    %1259 = vmatpush1.bf16.msra.mxu0 %v852
    %1260 = vmatprep.subr.bf16.mxu0 %v855
    %1261 = vmatpush1.bf16.msra.mxu0 %v854
    %1262 = vmatprep.subr.bf16.mxu0 %v857
    %1263 = vmatpush1.bf16.msra.mxu0 %v856
    %1264 = vmatprep.subr.bf16.mxu0 %v859
    %1265 = vmatpush1.bf16.msra.mxu0 %v858
    %1266 = vmatprep.subr.bf16.mxu0 %v861
    %1267 = vmatpush1.bf16.msra.mxu0 %v860
    %1268 = vmatprep.subr.bf16.mxu0 %v863
    %1269 = vmatpush1.bf16.msra.mxu0 %v862
    %1270 = vmatprep.subr.bf16.mxu0 %v865
    %1271 = vmatpush1.bf16.msra.mxu0 %v864
    %1272 = vmatprep.subr.bf16.mxu0 %v867
    %1273 = vmatpush1.bf16.msra.mxu0 %v866
    %1274 = vmatprep.subr.bf16.mxu0 %v869
    %1275 = vmatpush1.bf16.msra.mxu0 %v868
    %1276 = vmatprep.subr.bf16.mxu0 %v871
    %1277 = vmatpush1.bf16.msra.mxu0 %v870
    %1278 = vmatprep.subr.bf16.mxu0 %v873
    %1279 = vmatpush1.bf16.msra.mxu0 %v872
    %1280 = vmatprep.mubr.bf16.mxu0 %v297
    %1281 = vmatmul.mubr.bf16.gmra.mrb[0].mxu0 %v296
    %v1282 = vpop.f32.mrb[0].mxu0
    %v1283 = vadd.f32 %v1090, %v1282
    %v1284 = vpop.f32.mrb[0].mxu0
    %v1285 = vadd.f32 %v1092, %v1284
    %v1286 = vpop.f32.mrb[0].mxu0
    %v1287 = vadd.f32 %v1094, %v1286
    %v1288 = vpop.f32.mrb[0].mxu0
    %v1289 = vadd.f32 %v1096, %v1288
    %1290 = vmatprep.mubr.bf16.mxu0 %v304
    %1291 = vmatmul.mubr.bf16.gmra.mrb[0].mxu0 %v303
    %v1292 = vpop.f32.mrb[0].mxu0
    %v1293 = vadd.f32 %v1100, %v1292
    %v1294 = vpop.f32.mrb[0].mxu0
    %v1295 = vadd.f32 %v1102, %v1294
    %v1296 = vpop.f32.mrb[0].mxu0
    %v1297 = vadd.f32 %v1104, %v1296
    %v1298 = vpop.f32.mrb[0].mxu0
    %v1299 = vadd.f32 %v1106, %v1298
    %1300 = vmatprep.mubr.bf16.mxu0 %v311
    %1301 = vmatmul.mubr.bf16.gmra.mrb[0].mxu0 %v310
    %v1302 = vpop.f32.mrb[0].mxu0
    %v1303 = vadd.f32 %v1110, %v1302
    %v1304 = vpop.f32.mrb[0].mxu0
    %v1305 = vadd.f32 %v1112, %v1304
    %v1306 = vpop.f32.mrb[0].mxu0
    %v1307 = vadd.f32 %v1114, %v1306
    %v1308 = vpop.f32.mrb[0].mxu0
    %v1309 = vadd.f32 %v1116, %v1308
    %1310 = vmatprep.mubr.bf16.mxu0 %v318
    %1311 = vmatmul.mubr.bf16.gmra.mrb[0].mxu0 %v317
    %v1312 = vpop.f32.mrb[0].mxu0
    %v1313 = vadd.f32 %v1120, %v1312
    %v1314 = vpop.f32.mrb[0].mxu0
    %v1315 = vadd.f32 %v1122, %v1314
    %v1316 = vpop.f32.mrb[0].mxu0
    %v1317 = vadd.f32 %v1124, %v1316
    %v1318 = vpop.f32.mrb[0].mxu0
    %v1319 = vadd.f32 %v1126, %v1318
    %1320 = vmatprep.mubr.bf16.mxu0 %v325
    %1321 = vmatmul.mubr.bf16.gmra.mrb[0].mxu0 %v324
    %v1322 = vpop.f32.mrb[0].mxu0
    %v1323 = vadd.f32 %v1130, %v1322
    %v1324 = vpop.f32.mrb[0].mxu0
    %v1325 = vadd.f32 %v1132, %v1324
    %v1326 = vpop.f32.mrb[0].mxu0
    %v1327 = vadd.f32 %v1134, %v1326
    %v1328 = vpop.f32.mrb[0].mxu0
    %v1329 = vadd.f32 %v1136, %v1328
    %1330 = vmatprep.mubr.bf16.mxu0 %v332
    %1331 = vmatmul.mubr.bf16.gmra.mrb[0].mxu0 %v331
    %v1332 = vpop.f32.mrb[0].mxu0
    %v1333 = vadd.f32 %v1140, %v1332
    %v1334 = vpop.f32.mrb[0].mxu0
    %v1335 = vadd.f32 %v1142, %v1334
    %v1336 = vpop.f32.mrb[0].mxu0
    %v1337 = vadd.f32 %v1144, %v1336
    %v1338 = vpop.f32.mrb[0].mxu0
    %v1339 = vadd.f32 %v1146, %v1338
    %1340 = vmatprep.mubr.bf16.mxu0 %v339
    %1341 = vmatmul.mubr.bf16.gmra.mrb[0].mxu0 %v338
    %v1342 = vpop.f32.mrb[0].mxu0
    %v1343 = vadd.f32 %v1150, %v1342
    %v1344 = vpop.f32.mrb[0].mxu0
    %v1345 = vadd.f32 %v1152, %v1344
    %v1346 = vpop.f32.mrb[0].mxu0
    %v1347 = vadd.f32 %v1154, %v1346
    %v1348 = vpop.f32.mrb[0].mxu0
    %v1349 = vadd.f32 %v1156, %v1348
    %1350 = vmatprep.mubr.bf16.mxu0 %v346
    %1351 = vmatmul.mubr.bf16.gmra.mrb[0].mxu0 %v345
    %v1352 = vpop.f32.mrb[0].mxu0
    %v1353 = vadd.f32 %v1160, %v1352
    %v1354 = vpop.f32.mrb[0].mxu0
    %v1355 = vadd.f32 %v1162, %v1354
    %v1356 = vpop.f32.mrb[0].mxu0
    %v1357 = vadd.f32 %v1164, %v1356
    %v1358 = vpop.f32.mrb[0].mxu0
    %v1359 = vadd.f32 %v1166, %v1358
    %1360 = vmatprep.mubr.bf16.mxu0 %v353
    %1361 = vmatmul.mubr.bf16.gmra.mrb[0].mxu0 %v352
    %v1362 = vpop.f32.mrb[0].mxu0
    %v1363 = vadd.f32 %v1170, %v1362
    %v1364 = vpop.f32.mrb[0].mxu0
    %v1365 = vadd.f32 %v1172, %v1364
    %v1366 = vpop.f32.mrb[0].mxu0
    %v1367 = vadd.f32 %v1174, %v1366
    %v1368 = vpop.f32.mrb[0].mxu0
    %v1369 = vadd.f32 %v1176, %v1368
    %1370 = vmatprep.mubr.bf16.mxu0 %v360
    %1371 = vmatmul.mubr.bf16.gmra.mrb[0].mxu0 %v359
    %v1372 = vpop.f32.mrb[0].mxu0
    %v1373 = vadd.f32 %v1180, %v1372
    %v1374 = vpop.f32.mrb[0].mxu0
    %v1375 = vadd.f32 %v1182, %v1374
    %v1376 = vpop.f32.mrb[0].mxu0
    %v1377 = vadd.f32 %v1184, %v1376
    %v1378 = vpop.f32.mrb[0].mxu0
    %v1379 = vadd.f32 %v1186, %v1378
    %1380 = vmatprep.mubr.bf16.mxu0 %v367
    %1381 = vmatmul.mubr.bf16.gmra.mrb[0].mxu0 %v366
    %v1382 = vpop.f32.mrb[0].mxu0
    %v1383 = vadd.f32 %v1190, %v1382
    %v1384 = vpop.f32.mrb[0].mxu0
    %v1385 = vadd.f32 %v1192, %v1384
    %v1386 = vpop.f32.mrb[0].mxu0
    %v1387 = vadd.f32 %v1194, %v1386
    %v1388 = vpop.f32.mrb[0].mxu0
    %v1389 = vadd.f32 %v1196, %v1388
    %1390 = vmatprep.mubr.bf16.mxu0 %v374
    %1391 = vmatmul.mubr.bf16.gmra.mrb[0].mxu0 %v373
    %v1392 = vpop.f32.mrb[0].mxu0
    %v1393 = vadd.f32 %v1200, %v1392
    %v1394 = vpop.f32.mrb[0].mxu0
    %v1395 = vadd.f32 %v1202, %v1394
    %v1396 = vpop.f32.mrb[0].mxu0
    %v1397 = vadd.f32 %v1204, %v1396
    %v1398 = vpop.f32.mrb[0].mxu0
    %v1399 = vadd.f32 %v1206, %v1398
    %1400 = vmatprep.mubr.bf16.mxu0 %v381
    %1401 = vmatmul.mubr.bf16.gmra.mrb[0].mxu0 %v380
    %v1402 = vpop.f32.mrb[0].mxu0
    %v1403 = vadd.f32 %v1210, %v1402
    %v1404 = vpop.f32.mrb[0].mxu0
    %v1405 = vadd.f32 %v1212, %v1404
    %v1406 = vpop.f32.mrb[0].mxu0
    %v1407 = vadd.f32 %v1214, %v1406
    %v1408 = vpop.f32.mrb[0].mxu0
    %v1409 = vadd.f32 %v1216, %v1408
    %1410 = vmatprep.mubr.bf16.mxu0 %v388
    %1411 = vmatmul.mubr.bf16.gmra.mrb[0].mxu0 %v387
    %v1412 = vpop.f32.mrb[0].mxu0
    %v1413 = vadd.f32 %v1220, %v1412
    %v1414 = vpop.f32.mrb[0].mxu0
    %v1415 = vadd.f32 %v1222, %v1414
    %v1416 = vpop.f32.mrb[0].mxu0
    %v1417 = vadd.f32 %v1224, %v1416
    %v1418 = vpop.f32.mrb[0].mxu0
    %v1419 = vadd.f32 %v1226, %v1418
    %1420 = vmatprep.mubr.bf16.mxu0 %v395
    %1421 = vmatmul.mubr.bf16.gmra.mrb[0].mxu0 %v394
    %v1422 = vpop.f32.mrb[0].mxu0
    %v1423 = vadd.f32 %v1230, %v1422
    %v1424 = vpop.f32.mrb[0].mxu0
    %v1425 = vadd.f32 %v1232, %v1424
    %v1426 = vpop.f32.mrb[0].mxu0
    %v1427 = vadd.f32 %v1234, %v1426
    %v1428 = vpop.f32.mrb[0].mxu0
    %v1429 = vadd.f32 %v1236, %v1428
    %1430 = vmatprep.mubr.bf16.mxu0 %v402
    %1431 = vmatmul.mubr.bf16.gmra.mrb[0].mxu0 %v401
    %v1432 = vpop.f32.mrb[0].mxu0
    %v1433 = vadd.f32 %v1240, %v1432
    %v1434 = vpop.f32.mrb[0].mxu0
    %v1435 = vadd.f32 %v1242, %v1434
    %v1436 = vpop.f32.mrb[0].mxu0
    %v1437 = vadd.f32 %v1244, %v1436
    %v1438 = vpop.f32.mrb[0].mxu0
    %v1439 = vadd.f32 %v1246, %v1438
    %1440 = vdwg.mxu0
    %1441 = vmatprep.subr.bf16.mxu0 %v875
    %1442 = vmatpush1.bf16.msra.mxu0 %v874
    %1443 = vmatprep.subr.bf16.mxu0 %v877
    %1444 = vmatpush1.bf16.msra.mxu0 %v876
    %1445 = vmatprep.subr.bf16.mxu0 %v879
    %1446 = vmatpush1.bf16.msra.mxu0 %v878
    %1447 = vmatprep.subr.bf16.mxu0 %v881
    %1448 = vmatpush1.bf16.msra.mxu0 %v880
    %1449 = vmatprep.subr.bf16.mxu0 %v883
    %1450 = vmatpush1.bf16.msra.mxu0 %v882
    %1451 = vmatprep.subr.bf16.mxu0 %v885
    %1452 = vmatpush1.bf16.msra.mxu0 %v884
    %1453 = vmatprep.subr.bf16.mxu0 %v887
    %1454 = vmatpush1.bf16.msra.mxu0 %v886
    %1455 = vmatprep.subr.bf16.mxu0 %v889
    %1456 = vmatpush1.bf16.msra.mxu0 %v888
    %1457 = vmatprep.subr.bf16.mxu0 %v891
    %1458 = vmatpush1.bf16.msra.mxu0 %v890
    %1459 = vmatprep.subr.bf16.mxu0 %v893
    %1460 = vmatpush1.bf16.msra.mxu0 %v892
    %1461 = vmatprep.subr.bf16.mxu0 %v895
    %1462 = vmatpush1.bf16.msra.mxu0 %v894
    %1463 = vmatprep.subr.bf16.mxu0 %v897
    %1464 = vmatpush1.bf16.msra.mxu0 %v896
    %1465 = vmatprep.subr.bf16.mxu0 %v899
    %1466 = vmatpush1.bf16.msra.mxu0 %v898
    %1467 = vmatprep.subr.bf16.mxu0 %v901
    %1468 = vmatpush1.bf16.msra.mxu0 %v900
    %1469 = vmatprep.subr.bf16.mxu0 %v903
    %1470 = vmatpush1.bf16.msra.mxu0 %v902
    %1471 = vmatprep.subr.bf16.mxu0 %v905
    %1472 = vmatpush1.bf16.msra.mxu0 %v904
    %1473 = vmatprep.mubr.bf16.mxu0 %v299
    %1474 = vmatmul.mubr.bf16.gmra.mrb[0].mxu0 %v298
    %v1475 = vpop.f32.mrb[0].mxu0
    %v1476 = vadd.f32 %v1283, %v1475
    %v1477 = vpop.f32.mrb[0].mxu0
    %v1478 = vadd.f32 %v1285, %v1477
    %v1479 = vpop.f32.mrb[0].mxu0
    %v1480 = vadd.f32 %v1287, %v1479
    %v1481 = vpop.f32.mrb[0].mxu0
    %v1482 = vadd.f32 %v1289, %v1481
    %1483 = vmatprep.mubr.bf16.mxu0 %v306
    %1484 = vmatmul.mubr.bf16.gmra.mrb[0].mxu0 %v305
    %v1485 = vpop.f32.mrb[0].mxu0
    %v1486 = vadd.f32 %v1293, %v1485
    %v1487 = vpop.f32.mrb[0].mxu0
    %v1488 = vadd.f32 %v1295, %v1487
    %v1489 = vpop.f32.mrb[0].mxu0
    %v1490 = vadd.f32 %v1297, %v1489
    %v1491 = vpop.f32.mrb[0].mxu0
    %v1492 = vadd.f32 %v1299, %v1491
    %1493 = vmatprep.mubr.bf16.mxu0 %v313
    %1494 = vmatmul.mubr.bf16.gmra.mrb[0].mxu0 %v312
    %v1495 = vpop.f32.mrb[0].mxu0
    %v1496 = vadd.f32 %v1303, %v1495
    %v1497 = vpop.f32.mrb[0].mxu0
    %v1498 = vadd.f32 %v1305, %v1497
    %v1499 = vpop.f32.mrb[0].mxu0
    %v1500 = vadd.f32 %v1307, %v1499
    %v1501 = vpop.f32.mrb[0].mxu0
    %v1502 = vadd.f32 %v1309, %v1501
    %1503 = vmatprep.mubr.bf16.mxu0 %v320
    %1504 = vmatmul.mubr.bf16.gmra.mrb[0].mxu0 %v319
    %v1505 = vpop.f32.mrb[0].mxu0
    %v1506 = vadd.f32 %v1313, %v1505
    %v1507 = vpop.f32.mrb[0].mxu0
    %v1508 = vadd.f32 %v1315, %v1507
    %v1509 = vpop.f32.mrb[0].mxu0
    %v1510 = vadd.f32 %v1317, %v1509
    %v1511 = vpop.f32.mrb[0].mxu0
    %v1512 = vadd.f32 %v1319, %v1511
    %1513 = vmatprep.mubr.bf16.mxu0 %v327
    %1514 = vmatmul.mubr.bf16.gmra.mrb[0].mxu0 %v326
    %v1515 = vpop.f32.mrb[0].mxu0
    %v1516 = vadd.f32 %v1323, %v1515
    %v1517 = vpop.f32.mrb[0].mxu0
    %v1518 = vadd.f32 %v1325, %v1517
    %v1519 = vpop.f32.mrb[0].mxu0
    %v1520 = vadd.f32 %v1327, %v1519
    %v1521 = vpop.f32.mrb[0].mxu0
    %v1522 = vadd.f32 %v1329, %v1521
    %1523 = vmatprep.mubr.bf16.mxu0 %v334
    %1524 = vmatmul.mubr.bf16.gmra.mrb[0].mxu0 %v333
    %v1525 = vpop.f32.mrb[0].mxu0
    %v1526 = vadd.f32 %v1333, %v1525
    %v1527 = vpop.f32.mrb[0].mxu0
    %v1528 = vadd.f32 %v1335, %v1527
    %v1529 = vpop.f32.mrb[0].mxu0
    %v1530 = vadd.f32 %v1337, %v1529
    %v1531 = vpop.f32.mrb[0].mxu0
    %v1532 = vadd.f32 %v1339, %v1531
    %1533 = vmatprep.mubr.bf16.mxu0 %v341
    %1534 = vmatmul.mubr.bf16.gmra.mrb[0].mxu0 %v340
    %v1535 = vpop.f32.mrb[0].mxu0
    %v1536 = vadd.f32 %v1343, %v1535
    %v1537 = vpop.f32.mrb[0].mxu0
    %v1538 = vadd.f32 %v1345, %v1537
    %v1539 = vpop.f32.mrb[0].mxu0
    %v1540 = vadd.f32 %v1347, %v1539
    %v1541 = vpop.f32.mrb[0].mxu0
    %v1542 = vadd.f32 %v1349, %v1541
    %1543 = vmatprep.mubr.bf16.mxu0 %v348
    %1544 = vmatmul.mubr.bf16.gmra.mrb[0].mxu0 %v347
    %v1545 = vpop.f32.mrb[0].mxu0
    %v1546 = vadd.f32 %v1353, %v1545
    %v1547 = vpop.f32.mrb[0].mxu0
    %v1548 = vadd.f32 %v1355, %v1547
    %v1549 = vpop.f32.mrb[0].mxu0
    %v1550 = vadd.f32 %v1357, %v1549
    %v1551 = vpop.f32.mrb[0].mxu0
    %v1552 = vadd.f32 %v1359, %v1551
    %1553 = vmatprep.mubr.bf16.mxu0 %v355
    %1554 = vmatmul.mubr.bf16.gmra.mrb[0].mxu0 %v354
    %v1555 = vpop.f32.mrb[0].mxu0
    %v1556 = vadd.f32 %v1363, %v1555
    %v1557 = vpop.f32.mrb[0].mxu0
    %v1558 = vadd.f32 %v1365, %v1557
    %v1559 = vpop.f32.mrb[0].mxu0
    %v1560 = vadd.f32 %v1367, %v1559
    %v1561 = vpop.f32.mrb[0].mxu0
    %v1562 = vadd.f32 %v1369, %v1561
    %1563 = vmatprep.mubr.bf16.mxu0 %v362
    %1564 = vmatmul.mubr.bf16.gmra.mrb[0].mxu0 %v361
    %v1565 = vpop.f32.mrb[0].mxu0
    %v1566 = vadd.f32 %v1373, %v1565
    %v1567 = vpop.f32.mrb[0].mxu0
    %v1568 = vadd.f32 %v1375, %v1567
    %v1569 = vpop.f32.mrb[0].mxu0
    %v1570 = vadd.f32 %v1377, %v1569
    %v1571 = vpop.f32.mrb[0].mxu0
    %v1572 = vadd.f32 %v1379, %v1571
    %1573 = vmatprep.mubr.bf16.mxu0 %v369
    %1574 = vmatmul.mubr.bf16.gmra.mrb[0].mxu0 %v368
    %v1575 = vpop.f32.mrb[0].mxu0
    %v1576 = vadd.f32 %v1383, %v1575
    %v1577 = vpop.f32.mrb[0].mxu0
    %v1578 = vadd.f32 %v1385, %v1577
    %v1579 = vpop.f32.mrb[0].mxu0
    %v1580 = vadd.f32 %v1387, %v1579
    %v1581 = vpop.f32.mrb[0].mxu0
    %v1582 = vadd.f32 %v1389, %v1581
    %1583 = vmatprep.mubr.bf16.mxu0 %v376
    %1584 = vmatmul.mubr.bf16.gmra.mrb[0].mxu0 %v375
    %v1585 = vpop.f32.mrb[0].mxu0
    %v1586 = vadd.f32 %v1393, %v1585
    %v1587 = vpop.f32.mrb[0].mxu0
    %v1588 = vadd.f32 %v1395, %v1587
    %v1589 = vpop.f32.mrb[0].mxu0
    %v1590 = vadd.f32 %v1397, %v1589
    %v1591 = vpop.f32.mrb[0].mxu0
    %v1592 = vadd.f32 %v1399, %v1591
    %1593 = vmatprep.mubr.bf16.mxu0 %v383
    %1594 = vmatmul.mubr.bf16.gmra.mrb[0].mxu0 %v382
    %v1595 = vpop.f32.mrb[0].mxu0
    %v1596 = vadd.f32 %v1403, %v1595
    %v1597 = vpop.f32.mrb[0].mxu0
    %v1598 = vadd.f32 %v1405, %v1597
    %v1599 = vpop.f32.mrb[0].mxu0
    %v1600 = vadd.f32 %v1407, %v1599
    %v1601 = vpop.f32.mrb[0].mxu0
    %v1602 = vadd.f32 %v1409, %v1601
    %1603 = vmatprep.mubr.bf16.mxu0 %v390
    %1604 = vmatmul.mubr.bf16.gmra.mrb[0].mxu0 %v389
    %v1605 = vpop.f32.mrb[0].mxu0
    %v1606 = vadd.f32 %v1413, %v1605
    %v1607 = vpop.f32.mrb[0].mxu0
    %v1608 = vadd.f32 %v1415, %v1607
    %v1609 = vpop.f32.mrb[0].mxu0
    %v1610 = vadd.f32 %v1417, %v1609
    %v1611 = vpop.f32.mrb[0].mxu0
    %v1612 = vadd.f32 %v1419, %v1611
    %1613 = vmatprep.mubr.bf16.mxu0 %v397
    %1614 = vmatmul.mubr.bf16.gmra.mrb[0].mxu0 %v396
    %v1615 = vpop.f32.mrb[0].mxu0
    %v1616 = vadd.f32 %v1423, %v1615
    %v1617 = vpop.f32.mrb[0].mxu0
    %v1618 = vadd.f32 %v1425, %v1617
    %v1619 = vpop.f32.mrb[0].mxu0
    %v1620 = vadd.f32 %v1427, %v1619
    %v1621 = vpop.f32.mrb[0].mxu0
    %v1622 = vadd.f32 %v1429, %v1621
    %1623 = vmatprep.mubr.bf16.mxu0 %v404
    %1624 = vmatmul.mubr.bf16.gmra.mrb[0].mxu0 %v403
    %v1625 = vpop.f32.mrb[0].mxu0
    %v1626 = vadd.f32 %v1433, %v1625
    %v1627 = vpop.f32.mrb[0].mxu0
    %v1628 = vadd.f32 %v1435, %v1627
    %v1629 = vpop.f32.mrb[0].mxu0
    %v1630 = vadd.f32 %v1437, %v1629
    %v1631 = vpop.f32.mrb[0].mxu0
    %v1632 = vadd.f32 %v1439, %v1631
    %1633 = vdwg.mxu0
    %1634 = vmatprep.subr.bf16.mxu0 %v907
    %1635 = vmatpush1.bf16.msra.mxu0 %v906
    %1636 = vmatprep.subr.bf16.mxu0 0
    %1637 = vmatpush1.bf16.msra.mxu0 0
    %1638 = vmatprep.subr.bf16.mxu0 0
    %1639 = vmatpush1.bf16.msra.mxu0 0
    %1640 = vmatprep.subr.bf16.mxu0 0
    %1641 = vmatpush1.bf16.msra.mxu0 0
    %1642 = vmatprep.subr.bf16.mxu0 0
    %1643 = vmatpush1.bf16.msra.mxu0 0
    %1644 = vmatprep.subr.bf16.mxu0 0
    %1645 = vmatpush1.bf16.msra.mxu0 0
    %1646 = vmatprep.subr.bf16.mxu0 0
    %1647 = vmatpush1.bf16.msra.mxu0 0
    %1648 = vmatprep.subr.bf16.mxu0 0
    %1649 = vmatpush1.bf16.msra.mxu0 0
    %1650 = vmatprep.subr.bf16.mxu0 0
    %1651 = vmatpush1.bf16.msra.mxu0 0
    %1652 = vmatprep.subr.bf16.mxu0 0
    %1653 = vmatpush1.bf16.msra.mxu0 0
    %1654 = vmatprep.subr.bf16.mxu0 0
    %1655 = vmatpush1.bf16.msra.mxu0 0
    %1656 = vmatprep.subr.bf16.mxu0 0
    %1657 = vmatpush1.bf16.msra.mxu0 0
    %1658 = vmatprep.subr.bf16.mxu0 0
    %1659 = vmatpush1.bf16.msra.mxu0 0
    %1660 = vmatprep.subr.bf16.mxu0 0
    %1661 = vmatpush1.bf16.msra.mxu0 0
    %1662 = vmatprep.subr.bf16.mxu0 0
    %1663 = vmatpush1.bf16.msra.mxu0 0
    %1664 = vmatprep.subr.bf16.mxu0 0
    %1665 = vmatpush1.bf16.msra.mxu0 0
    %1666 = vmatprep.mubr.bf16.mxu0 0
    %1667 = vmatmul.mubr.bf16.gmra.mrb[0].mxu0 %v1008
    %v1668 = vpop.f32.mrb[0].mxu0
    %v1669 = vadd.f32 %v1476, %v1668
    %v1670 = vpop.f32.mrb[0].mxu0
    %v1671 = vadd.f32 %v1478, %v1670
    %v1672 = vpop.f32.mrb[0].mxu0
    %v1673 = vadd.f32 %v1480, %v1672
    %v1674 = vpop.f32.mrb[0].mxu0
    %v1675 = vadd.f32 %v1482, %v1674
    %1676 = vmatprep.mubr.bf16.mxu0 0
    %1677 = vmatmul.mubr.bf16.gmra.mrb[0].mxu0 %v1011
    %v1678 = vpop.f32.mrb[0].mxu0
    %v1679 = vadd.f32 %v1486, %v1678
    %v1680 = vpop.f32.mrb[0].mxu0
    %v1681 = vadd.f32 %v1488, %v1680
    %v1682 = vpop.f32.mrb[0].mxu0
    %v1683 = vadd.f32 %v1490, %v1682
    %v1684 = vpop.f32.mrb[0].mxu0
    %v1685 = vadd.f32 %v1492, %v1684
    %1686 = vmatprep.mubr.bf16.mxu0 0
    %1687 = vmatmul.mubr.bf16.gmra.mrb[0].mxu0 %v1014
    %v1688 = vpop.f32.mrb[0].mxu0
    %v1689 = vadd.f32 %v1496, %v1688
    %v1690 = vpop.f32.mrb[0].mxu0
    %v1691 = vadd.f32 %v1498, %v1690
    %v1692 = vpop.f32.mrb[0].mxu0
    %v1693 = vadd.f32 %v1500, %v1692
    %v1694 = vpop.f32.mrb[0].mxu0
    %v1695 = vadd.f32 %v1502, %v1694
    %1696 = vmatprep.mubr.bf16.mxu0 0
    %1697 = vmatmul.mubr.bf16.gmra.mrb[0].mxu0 %v1017
    %v1698 = vpop.f32.mrb[0].mxu0
    %v1699 = vadd.f32 %v1506, %v1698
    %v1700 = vpop.f32.mrb[0].mxu0
    %v1701 = vadd.f32 %v1508, %v1700
    %v1702 = vpop.f32.mrb[0].mxu0
    %v1703 = vadd.f32 %v1510, %v1702
    %v1704 = vpop.f32.mrb[0].mxu0
    %v1705 = vadd.f32 %v1512, %v1704
    %1706 = vmatprep.mubr.bf16.mxu0 0
    %1707 = vmatmul.mubr.bf16.gmra.mrb[0].mxu0 %v1020
    %v1708 = vpop.f32.mrb[0].mxu0
    %v1709 = vadd.f32 %v1516, %v1708
    %v1710 = vpop.f32.mrb[0].mxu0
    %v1711 = vadd.f32 %v1518, %v1710
    %v1712 = vpop.f32.mrb[0].mxu0
    %v1713 = vadd.f32 %v1520, %v1712
    %v1714 = vpop.f32.mrb[0].mxu0
    %v1715 = vadd.f32 %v1522, %v1714
    %1716 = vmatprep.mubr.bf16.mxu0 0
    %1717 = vmatmul.mubr.bf16.gmra.mrb[0].mxu0 %v1023
    %v1718 = vpop.f32.mrb[0].mxu0
    %v1719 = vadd.f32 %v1526, %v1718
    %v1720 = vpop.f32.mrb[0].mxu0
    %v1721 = vadd.f32 %v1528, %v1720
    %v1722 = vpop.f32.mrb[0].mxu0
    %v1723 = vadd.f32 %v1530, %v1722
    %v1724 = vpop.f32.mrb[0].mxu0
    %v1725 = vadd.f32 %v1532, %v1724
    %1726 = vmatprep.mubr.bf16.mxu0 0
    %1727 = vmatmul.mubr.bf16.gmra.mrb[0].mxu0 %v1026
    %v1728 = vpop.f32.mrb[0].mxu0
    %v1729 = vadd.f32 %v1536, %v1728
    %v1730 = vpop.f32.mrb[0].mxu0
    %v1731 = vadd.f32 %v1538, %v1730
    %v1732 = vpop.f32.mrb[0].mxu0
    %v1733 = vadd.f32 %v1540, %v1732
    %v1734 = vpop.f32.mrb[0].mxu0
    %v1735 = vadd.f32 %v1542, %v1734
    %1736 = vmatprep.mubr.bf16.mxu0 0
    %1737 = vmatmul.mubr.bf16.gmra.mrb[0].mxu0 %v1029
    %v1738 = vpop.f32.mrb[0].mxu0
    %v1739 = vadd.f32 %v1546, %v1738
    %v1740 = vpop.f32.mrb[0].mxu0
    %v1741 = vadd.f32 %v1548, %v1740
    %v1742 = vpop.f32.mrb[0].mxu0
    %v1743 = vadd.f32 %v1550, %v1742
    %v1744 = vpop.f32.mrb[0].mxu0
    %v1745 = vadd.f32 %v1552, %v1744
    %1746 = vmatprep.mubr.bf16.mxu0 0
    %1747 = vmatmul.mubr.bf16.gmra.mrb[0].mxu0 %v1032
    %v1748 = vpop.f32.mrb[0].mxu0
    %v1749 = vadd.f32 %v1556, %v1748
    %v1750 = vpop.f32.mrb[0].mxu0
    %v1751 = vadd.f32 %v1558, %v1750
    %v1752 = vpop.f32.mrb[0].mxu0
    %v1753 = vadd.f32 %v1560, %v1752
    %v1754 = vpop.f32.mrb[0].mxu0
    %v1755 = vadd.f32 %v1562, %v1754
    %1756 = vmatprep.mubr.bf16.mxu0 0
    %1757 = vmatmul.mubr.bf16.gmra.mrb[0].mxu0 %v1035
    %v1758 = vpop.f32.mrb[0].mxu0
    %v1759 = vadd.f32 %v1566, %v1758
    %v1760 = vpop.f32.mrb[0].mxu0
    %v1761 = vadd.f32 %v1568, %v1760
    %v1762 = vpop.f32.mrb[0].mxu0
    %v1763 = vadd.f32 %v1570, %v1762
    %v1764 = vpop.f32.mrb[0].mxu0
    %v1765 = vadd.f32 %v1572, %v1764
    %1766 = vmatprep.mubr.bf16.mxu0 0
    %1767 = vmatmul.mubr.bf16.gmra.mrb[0].mxu0 %v1038
    %v1768 = vpop.f32.mrb[0].mxu0
    %v1769 = vadd.f32 %v1576, %v1768
    %v1770 = vpop.f32.mrb[0].mxu0
    %v1771 = vadd.f32 %v1578, %v1770
    %v1772 = vpop.f32.mrb[0].mxu0
    %v1773 = vadd.f32 %v1580, %v1772
    %v1774 = vpop.f32.mrb[0].mxu0
    %v1775 = vadd.f32 %v1582, %v1774
    %1776 = vmatprep.mubr.bf16.mxu0 0
    %1777 = vmatmul.mubr.bf16.gmra.mrb[0].mxu0 %v1041
    %v1778 = vpop.f32.mrb[0].mxu0
    %v1779 = vadd.f32 %v1586, %v1778
    %v1780 = vpop.f32.mrb[0].mxu0
    %v1781 = vadd.f32 %v1588, %v1780
    %v1782 = vpop.f32.mrb[0].mxu0
    %v1783 = vadd.f32 %v1590, %v1782
    %v1784 = vpop.f32.mrb[0].mxu0
    %v1785 = vadd.f32 %v1592, %v1784
    %1786 = vmatprep.mubr.bf16.mxu0 0
    %1787 = vmatmul.mubr.bf16.gmra.mrb[0].mxu0 %v1044
    %v1788 = vpop.f32.mrb[0].mxu0
    %v1789 = vadd.f32 %v1596, %v1788
    %v1790 = vpop.f32.mrb[0].mxu0
    %v1791 = vadd.f32 %v1598, %v1790
    %v1792 = vpop.f32.mrb[0].mxu0
    %v1793 = vadd.f32 %v1600, %v1792
    %v1794 = vpop.f32.mrb[0].mxu0
    %v1795 = vadd.f32 %v1602, %v1794
    %1796 = vmatprep.mubr.bf16.mxu0 0
    %1797 = vmatmul.mubr.bf16.gmra.mrb[0].mxu0 %v1047
    %v1798 = vpop.f32.mrb[0].mxu0
    %v1799 = vadd.f32 %v1606, %v1798
    %v1800 = vpop.f32.mrb[0].mxu0
    %v1801 = vadd.f32 %v1608, %v1800
    %v1802 = vpop.f32.mrb[0].mxu0
    %v1803 = vadd.f32 %v1610, %v1802
    %v1804 = vpop.f32.mrb[0].mxu0
    %v1805 = vadd.f32 %v1612, %v1804
    %1806 = vmatprep.mubr.bf16.mxu0 0
    %1807 = vmatmul.mubr.bf16.gmra.mrb[0].mxu0 %v1050
    %v1808 = vpop.f32.mrb[0].mxu0
    %v1809 = vadd.f32 %v1616, %v1808
    %v1810 = vpop.f32.mrb[0].mxu0
    %v1811 = vadd.f32 %v1618, %v1810
    %v1812 = vpop.f32.mrb[0].mxu0
    %v1813 = vadd.f32 %v1620, %v1812
    %v1814 = vpop.f32.mrb[0].mxu0
    %v1815 = vadd.f32 %v1622, %v1814
    %1816 = vmatprep.mubr.bf16.mxu0 0
    %1817 = vmatmul.mubr.bf16.gmra.mrb[0].mxu0 %v1053
    %v1818 = vpop.f32.mrb[0].mxu0
    %v1819 = vadd.f32 %v1626, %v1818
    %v1820 = vpop.f32.mrb[0].mxu0
    %v1821 = vadd.f32 %v1628, %v1820
    %v1822 = vpop.f32.mrb[0].mxu0
    %v1823 = vadd.f32 %v1630, %v1822
    %v1824 = vpop.f32.mrb[0].mxu0
    %v1825 = vadd.f32 %v1632, %v1824
    %1826 = vdwg.mxu0
    %v1827 = vmax.f32 %v1669, 0.0
    %v1828 = vmax.f32 %v1671, 0.0
    %v1829 = vmax.f32 %v1673, 0.0
    %v1830 = vmax.f32 %v1675, 0.0
    %v1831 = vmax.f32 %v1679, 0.0
    %v1832 = vmax.f32 %v1681, 0.0
    %v1833 = vmax.f32 %v1683, 0.0
    %v1834 = vmax.f32 %v1685, 0.0
    %v1835 = vmax.f32 %v1689, 0.0
    %v1836 = vmax.f32 %v1691, 0.0
    %v1837 = vmax.f32 %v1693, 0.0
    %v1838 = vmax.f32 %v1695, 0.0
    %v1839 = vmax.f32 %v1699, 0.0
    %v1840 = vmax.f32 %v1701, 0.0
    %v1841 = vmax.f32 %v1703, 0.0
    %v1842 = vmax.f32 %v1705, 0.0
    %v1843 = vmax.f32 %v1709, 0.0
    %v1844 = vmax.f32 %v1711, 0.0
    %v1845 = vmax.f32 %v1713, 0.0
    %v1846 = vmax.f32 %v1715, 0.0
    %v1847 = vmax.f32 %v1719, 0.0
    %v1848 = vmax.f32 %v1721, 0.0
    %v1849 = vmax.f32 %v1723, 0.0
    %v1850 = vmax.f32 %v1725, 0.0
    %v1851 = vmax.f32 %v1729, 0.0
    %v1852 = vmax.f32 %v1731, 0.0
    %v1853 = vmax.f32 %v1733, 0.0
    %v1854 = vmax.f32 %v1735, 0.0
    %v1855 = vmax.f32 %v1739, 0.0
    %v1856 = vmax.f32 %v1741, 0.0
    %v1857 = vmax.f32 %v1743, 0.0
    %v1858 = vmax.f32 %v1745, 0.0
    %v1859 = vmax.f32 %v1749, 0.0
    %v1860 = vmax.f32 %v1751, 0.0
    %v1861 = vmax.f32 %v1753, 0.0
    %v1862 = vmax.f32 %v1755, 0.0
    %v1863 = vmax.f32 %v1759, 0.0
    %v1864 = vmax.f32 %v1761, 0.0
    %v1865 = vmax.f32 %v1763, 0.0
    %v1866 = vmax.f32 %v1765, 0.0
    %v1867 = vmax.f32 %v1769, 0.0
    %v1868 = vmax.f32 %v1771, 0.0
    %v1869 = vmax.f32 %v1773, 0.0
    %v1870 = vmax.f32 %v1775, 0.0
    %v1871 = vmax.f32 %v1779, 0.0
    %v1872 = vmax.f32 %v1781, 0.0
    %v1873 = vmax.f32 %v1783, 0.0
    %v1874 = vmax.f32 %v1785, 0.0
    %v1875 = vmax.f32 %v1789, 0.0
    %v1876 = vmax.f32 %v1791, 0.0
    %v1877 = vmax.f32 %v1793, 0.0
    %v1878 = vmax.f32 %v1795, 0.0
    %v1879 = vmax.f32 %v1799, 0.0
    %v1880 = vmax.f32 %v1801, 0.0
    %v1881 = vmax.f32 %v1803, 0.0
    %v1882 = vmax.f32 %v1805, 0.0
    %v1883 = vmax.f32 %v1809, 0.0
    %v1884 = vmax.f32 %v1811, 0.0
    %v1885 = vmax.f32 %v1813, 0.0
    %v1886 = vmax.f32 %v1815, 0.0
    %v1887 = vmax.f32 %v1819, 0.0
    %v1888 = vmax.f32 %v1821, 0.0
    %v1889 = vmax.f32 %v1823, 0.0
    %v1890 = vmax.f32 %v1825, 0.0
    %v1891 = vpack.c.bf16 %v1829, %v1827
    %v1892 = vpack.c.bf16 %v1830, %v1828
    %v1893 = vpack.c.bf16 %v1833, %v1831
    %v1894 = vpack.c.bf16 %v1834, %v1832
    %v1895 = vpack.c.bf16 %v1837, %v1835
    %v1896 = vpack.c.bf16 %v1838, %v1836
    %v1897 = vpack.c.bf16 %v1841, %v1839
    %v1898 = vpack.c.bf16 %v1842, %v1840
    %v1899 = vpack.c.bf16 %v1845, %v1843
    %v1900 = vpack.c.bf16 %v1846, %v1844
    %v1901 = vpack.c.bf16 %v1849, %v1847
    %v1902 = vpack.c.bf16 %v1850, %v1848
    %v1903 = vpack.c.bf16 %v1853, %v1851
    %v1904 = vpack.c.bf16 %v1854, %v1852
    %v1905 = vpack.c.bf16 %v1857, %v1855
    %v1906 = vpack.c.bf16 %v1858, %v1856
    %v1907 = vpack.c.bf16 %v1861, %v1859
    %v1908 = vpack.c.bf16 %v1862, %v1860
    %v1909 = vpack.c.bf16 %v1865, %v1863
    %v1910 = vpack.c.bf16 %v1866, %v1864
    %v1911 = vpack.c.bf16 %v1869, %v1867
    %v1912 = vpack.c.bf16 %v1870, %v1868
    %v1913 = vpack.c.bf16 %v1873, %v1871
    %v1914 = vpack.c.bf16 %v1874, %v1872
    %v1915 = vpack.c.bf16 %v1877, %v1875
    %v1916 = vpack.c.bf16 %v1878, %v1876
    %v1917 = vpack.c.bf16 %v1881, %v1879
    %v1918 = vpack.c.bf16 %v1882, %v1880
    %v1919 = vpack.c.bf16 %v1885, %v1883
    %v1920 = vpack.c.bf16 %v1886, %v1884
    %v1921 = vpack.c.bf16 %v1889, %v1887
    %v1922 = vpack.c.bf16 %v1890, %v1888
    %v1923 = vld [vmem:[%s2] sm:$0xf]
    %v1924 = vld [vmem:[%s2 + $0x4] sm:$0xf]
    %v1925 = vld [vmem:[%s2 + $0x8] sm:$0xf]
    %v1926 = vld [vmem:[%s2 + $0xc] sm:$0xf]
    %v1927 = vld [vmem:[%s2 + $0x10] sm:$0xf]
    %v1928 = vld [vmem:[%s2 + $0x14] sm:$0xf]
    %v1929 = vld [vmem:[%s2 + $0x18] sm:$0xf]
    %v1930 = vld [vmem:[%s2 + $0x1c] sm:$0xf]
    %v1931 = vld [vmem:[%s2 + $0x20] sm:$0xf]
    %v1932 = vld [vmem:[%s2 + $0x24] sm:$0xf]
    %v1933 = vld [vmem:[%s2 + $0x28] sm:$0xf]
    %v1934 = vld [vmem:[%s2 + $0x2c] sm:$0xf]
    %v1935 = vld [vmem:[%s2 + $0x30] sm:$0xf]
    %v1936 = vld [vmem:[%s2 + $0x34] sm:$0xf]
    %v1937 = vld [vmem:[%s2 + $0x38] sm:$0xf]
    %v1938 = vld [vmem:[%s2 + $0x3c] sm:$0xf]
    %v1939 = vld [vmem:[%s2 + $0x40] sm:$0xf]
    %v1940 = vld [vmem:[%s2 + $0x44] sm:$0xf]
    %v1941 = vld [vmem:[%s2 + $0x48] sm:$0xf]
    %v1942 = vld [vmem:[%s2 + $0x4c] sm:$0xf]
    %v1943 = vld [vmem:[%s2 + $0x50] sm:$0xf]
    %v1944 = vld [vmem:[%s2 + $0x54] sm:$0xf]
    %v1945 = vld [vmem:[%s2 + $0x58] sm:$0xf]
    %v1946 = vld [vmem:[%s2 + $0x5c] sm:$0xf]
    %v1947 = vld [vmem:[%s2 + $0x60] sm:$0xf]
    %v1948 = vld [vmem:[%s2 + $0x64] sm:$0xf]
    %v1949 = vld [vmem:[%s2 + $0x68] sm:$0xf]
    %v1950 = vld [vmem:[%s2 + $0x6c] sm:$0xf]
    %v1951 = vld [vmem:[%s2 + $0x70] sm:$0xf]
    %v1952 = vld [vmem:[%s2 + $0x74] sm:$0xf]
    %v1953 = vld [vmem:[%s2 + $0x78] sm:$0xf]
    %v1954 = vld [vmem:[%s2 + $0x7c] sm:$0xf]
    %v1955 = vld [vmem:[%s12] sm:$0x1]
    %v1957 = vlaneseq
    %v1958 = vshrl.u32 %v1957, 7
    %v1959 = vsub.s32 0, %v1958
    %v1960 = vrot.slane %v1955, %v1959
    %v1994 = vunpack.c.l.b16 %v1923
    %v1995 = vunpack.c.l.b16 %v1924
    %v1996 = vunpack.c.l.b16 %v1925
    %v1997 = vunpack.c.l.b16 %v1926
    %v1998 = vunpack.c.l.b16 %v1927
    %v1999 = vunpack.c.l.b16 %v1928
    %v2000 = vunpack.c.l.b16 %v1929
    %v2001 = vunpack.c.l.b16 %v1930
    %v2002 = vunpack.c.l.b16 %v1931
    %v2003 = vunpack.c.l.b16 %v1932
    %v2004 = vunpack.c.l.b16 %v1933
    %v2005 = vunpack.c.l.b16 %v1934
    %v2006 = vunpack.c.l.b16 %v1935
    %v2007 = vunpack.c.l.b16 %v1936
    %v2008 = vunpack.c.l.b16 %v1937
    %v2009 = vunpack.c.l.b16 %v1938
    %v2010 = vunpack.c.l.b16 %v1939
    %v2011 = vunpack.c.l.b16 %v1940
    %v2012 = vunpack.c.l.b16 %v1941
    %v2013 = vunpack.c.l.b16 %v1942
    %v2014 = vunpack.c.l.b16 %v1943
    %v2015 = vunpack.c.l.b16 %v1944
    %v2016 = vunpack.c.l.b16 %v1945
    %v2017 = vunpack.c.l.b16 %v1946
    %v2018 = vunpack.c.l.b16 %v1947
    %v2019 = vunpack.c.l.b16 %v1948
    %v2020 = vunpack.c.l.b16 %v1949
    %v2021 = vunpack.c.l.b16 %v1950
    %v2022 = vunpack.c.l.b16 %v1951
    %v2023 = vunpack.c.l.b16 %v1952
    %v2024 = vunpack.c.l.b16 %v1953
    %v2025 = vunpack.c.l.b16 %v1954
    %v2026 = vpack.c.b16 %v1995, %v1994
    %v2027 = vpack.c.b16 %v1997, %v1996
    %v2028 = vpack.c.b16 %v1999, %v1998
    %v2029 = vpack.c.b16 %v2001, %v2000
    %v2030 = vpack.c.b16 %v2003, %v2002
    %v2031 = vpack.c.b16 %v2005, %v2004
    %v2032 = vpack.c.b16 %v2007, %v2006
    %v2033 = vpack.c.b16 %v2009, %v2008
    %v2034 = vpack.c.b16 %v2011, %v2010
    %v2035 = vpack.c.b16 %v2013, %v2012
    %v2036 = vpack.c.b16 %v2015, %v2014
    %v2037 = vpack.c.b16 %v2017, %v2016
    %v2038 = vpack.c.b16 %v2019, %v2018
    %v2039 = vpack.c.b16 %v2021, %v2020
    %v2040 = vpack.c.b16 %v2023, %v2022
    %v2041 = vpack.c.b16 %v2025, %v2024
    %2058 = vmatprep.subr.bf16.mxu0 0
    %2059 = vmatpush1.bf16.msra.mxu0 %v2026
    %2060 = vmatprep.subr.bf16.mxu0 0
    %2061 = vmatpush1.bf16.msra.mxu0 %v2027
    %2062 = vmatprep.subr.bf16.mxu0 0
    %2063 = vmatpush1.bf16.msra.mxu0 %v2028
    %2064 = vmatprep.subr.bf16.mxu0 0
    %2065 = vmatpush1.bf16.msra.mxu0 %v2029
    %2066 = vmatprep.subr.bf16.mxu0 0
    %2067 = vmatpush1.bf16.msra.mxu0 %v2030
    %2068 = vmatprep.subr.bf16.mxu0 0
    %2069 = vmatpush1.bf16.msra.mxu0 %v2031
    %2070 = vmatprep.subr.bf16.mxu0 0
    %2071 = vmatpush1.bf16.msra.mxu0 %v2032
    %2072 = vmatprep.subr.bf16.mxu0 0
    %2073 = vmatpush1.bf16.msra.mxu0 %v2033
    %2074 = vmatprep.subr.bf16.mxu0 0
    %2075 = vmatpush1.bf16.msra.mxu0 %v2034
    %2076 = vmatprep.subr.bf16.mxu0 0
    %2077 = vmatpush1.bf16.msra.mxu0 %v2035
    %2078 = vmatprep.subr.bf16.mxu0 0
    %2079 = vmatpush1.bf16.msra.mxu0 %v2036
    %2080 = vmatprep.subr.bf16.mxu0 0
    %2081 = vmatpush1.bf16.msra.mxu0 %v2037
    %2082 = vmatprep.subr.bf16.mxu0 0
    %2083 = vmatpush1.bf16.msra.mxu0 %v2038
    %2084 = vmatprep.subr.bf16.mxu0 0
    %2085 = vmatpush1.bf16.msra.mxu0 %v2039
    %2086 = vmatprep.subr.bf16.mxu0 0
    %2087 = vmatpush1.bf16.msra.mxu0 %v2040
    %2088 = vmatprep.subr.bf16.mxu0 0
    %2089 = vmatpush1.bf16.msra.mxu0 %v2041
    %2090 = vmatprep.mubr.bf16.mxu0 %v1892
    %2091 = vmatmul.mubr.bf16.gmra.mrb[0].mxu0 %v1891
    %v2092 = vpop.f32.mrb[0].mxu0
    %v2093 = vadd.f32 %v1960, %v2092
    %v2094 = vpop.f32.mrb[0].mxu0
    %v2095 = vpop.f32.mrb[0].mxu0
    %v2096 = vadd.f32 %v1960, %v2095
    %v2097 = vpop.f32.mrb[0].mxu0
    %2098 = vmatprep.mubr.bf16.mxu0 %v1894
    %2099 = vmatmul.mubr.bf16.gmra.mrb[0].mxu0 %v1893
    %v2100 = vpop.f32.mrb[0].mxu0
    %v2101 = vadd.f32 %v1960, %v2100
    %v2102 = vpop.f32.mrb[0].mxu0
    %v2103 = vpop.f32.mrb[0].mxu0
    %v2104 = vadd.f32 %v1960, %v2103
    %v2105 = vpop.f32.mrb[0].mxu0
    %2106 = vmatprep.mubr.bf16.mxu0 %v1896
    %2107 = vmatmul.mubr.bf16.gmra.mrb[0].mxu0 %v1895
    %v2108 = vpop.f32.mrb[0].mxu0
    %v2109 = vadd.f32 %v1960, %v2108
    %v2110 = vpop.f32.mrb[0].mxu0
    %v2111 = vpop.f32.mrb[0].mxu0
    %v2112 = vadd.f32 %v1960, %v2111
    %v2113 = vpop.f32.mrb[0].mxu0
    %2114 = vmatprep.mubr.bf16.mxu0 %v1898
    %2115 = vmatmul.mubr.bf16.gmra.mrb[0].mxu0 %v1897
    %v2116 = vpop.f32.mrb[0].mxu0
    %v2117 = vadd.f32 %v1960, %v2116
    %v2118 = vpop.f32.mrb[0].mxu0
    %v2119 = vpop.f32.mrb[0].mxu0
    %v2120 = vadd.f32 %v1960, %v2119
    %v2121 = vpop.f32.mrb[0].mxu0
    %2122 = vmatprep.mubr.bf16.mxu0 %v1900
    %2123 = vmatmul.mubr.bf16.gmra.mrb[0].mxu0 %v1899
    %v2124 = vpop.f32.mrb[0].mxu0
    %v2125 = vadd.f32 %v1960, %v2124
    %v2126 = vpop.f32.mrb[0].mxu0
    %v2127 = vpop.f32.mrb[0].mxu0
    %v2128 = vadd.f32 %v1960, %v2127
    %v2129 = vpop.f32.mrb[0].mxu0
    %2130 = vmatprep.mubr.bf16.mxu0 %v1902
    %2131 = vmatmul.mubr.bf16.gmra.mrb[0].mxu0 %v1901
    %v2132 = vpop.f32.mrb[0].mxu0
    %v2133 = vadd.f32 %v1960, %v2132
    %v2134 = vpop.f32.mrb[0].mxu0
    %v2135 = vpop.f32.mrb[0].mxu0
    %v2136 = vadd.f32 %v1960, %v2135
    %v2137 = vpop.f32.mrb[0].mxu0
    %2138 = vmatprep.mubr.bf16.mxu0 %v1904
    %2139 = vmatmul.mubr.bf16.gmra.mrb[0].mxu0 %v1903
    %v2140 = vpop.f32.mrb[0].mxu0
    %v2141 = vadd.f32 %v1960, %v2140
    %v2142 = vpop.f32.mrb[0].mxu0
    %v2143 = vpop.f32.mrb[0].mxu0
    %v2144 = vadd.f32 %v1960, %v2143
    %v2145 = vpop.f32.mrb[0].mxu0
    %2146 = vmatprep.mubr.bf16.mxu0 %v1906
    %2147 = vmatmul.mubr.bf16.gmra.mrb[0].mxu0 %v1905
    %v2148 = vpop.f32.mrb[0].mxu0
    %v2149 = vadd.f32 %v1960, %v2148
    %v2150 = vpop.f32.mrb[0].mxu0
    %v2151 = vpop.f32.mrb[0].mxu0
    %v2152 = vadd.f32 %v1960, %v2151
    %v2153 = vpop.f32.mrb[0].mxu0
    %2154 = vmatprep.mubr.bf16.mxu0 %v1908
    %2155 = vmatmul.mubr.bf16.gmra.mrb[0].mxu0 %v1907
    %v2156 = vpop.f32.mrb[0].mxu0
    %v2157 = vadd.f32 %v1960, %v2156
    %v2158 = vpop.f32.mrb[0].mxu0
    %v2159 = vpop.f32.mrb[0].mxu0
    %v2160 = vadd.f32 %v1960, %v2159
    %v2161 = vpop.f32.mrb[0].mxu0
    %2162 = vmatprep.mubr.bf16.mxu0 %v1910
    %2163 = vmatmul.mubr.bf16.gmra.mrb[0].mxu0 %v1909
    %v2164 = vpop.f32.mrb[0].mxu0
    %v2165 = vadd.f32 %v1960, %v2164
    %v2166 = vpop.f32.mrb[0].mxu0
    %v2167 = vpop.f32.mrb[0].mxu0
    %v2168 = vadd.f32 %v1960, %v2167
    %v2169 = vpop.f32.mrb[0].mxu0
    %2170 = vmatprep.mubr.bf16.mxu0 %v1912
    %2171 = vmatmul.mubr.bf16.gmra.mrb[0].mxu0 %v1911
    %v2172 = vpop.f32.mrb[0].mxu0
    %v2173 = vadd.f32 %v1960, %v2172
    %v2174 = vpop.f32.mrb[0].mxu0
    %v2175 = vpop.f32.mrb[0].mxu0
    %v2176 = vadd.f32 %v1960, %v2175
    %v2177 = vpop.f32.mrb[0].mxu0
    %2178 = vmatprep.mubr.bf16.mxu0 %v1914
    %2179 = vmatmul.mubr.bf16.gmra.mrb[0].mxu0 %v1913
    %v2180 = vpop.f32.mrb[0].mxu0
    %v2181 = vadd.f32 %v1960, %v2180
    %v2182 = vpop.f32.mrb[0].mxu0
    %v2183 = vpop.f32.mrb[0].mxu0
    %v2184 = vadd.f32 %v1960, %v2183
    %v2185 = vpop.f32.mrb[0].mxu0
    %2186 = vmatprep.mubr.bf16.mxu0 %v1916
    %2187 = vmatmul.mubr.bf16.gmra.mrb[0].mxu0 %v1915
    %v2188 = vpop.f32.mrb[0].mxu0
    %v2189 = vadd.f32 %v1960, %v2188
    %v2190 = vpop.f32.mrb[0].mxu0
    %v2191 = vpop.f32.mrb[0].mxu0
    %v2192 = vadd.f32 %v1960, %v2191
    %v2193 = vpop.f32.mrb[0].mxu0
    %2194 = vmatprep.mubr.bf16.mxu0 %v1918
    %2195 = vmatmul.mubr.bf16.gmra.mrb[0].mxu0 %v1917
    %v2196 = vpop.f32.mrb[0].mxu0
    %v2197 = vadd.f32 %v1960, %v2196
    %v2198 = vpop.f32.mrb[0].mxu0
    %v2199 = vpop.f32.mrb[0].mxu0
    %v2200 = vadd.f32 %v1960, %v2199
    %v2201 = vpop.f32.mrb[0].mxu0
    %2202 = vmatprep.mubr.bf16.mxu0 %v1920
    %2203 = vmatmul.mubr.bf16.gmra.mrb[0].mxu0 %v1919
    %v2204 = vpop.f32.mrb[0].mxu0
    %v2205 = vadd.f32 %v1960, %v2204
    %v2206 = vpop.f32.mrb[0].mxu0
    %v2207 = vpop.f32.mrb[0].mxu0
    %v2208 = vadd.f32 %v1960, %v2207
    %v2209 = vpop.f32.mrb[0].mxu0
    %2210 = vmatprep.mubr.bf16.mxu0 %v1922
    %2211 = vmatmul.mubr.bf16.gmra.mrb[0].mxu0 %v1921
    %v2212 = vpop.f32.mrb[0].mxu0
    %v2213 = vadd.f32 %v1960, %v2212
    %v2214 = vpop.f32.mrb[0].mxu0
    %v2215 = vpop.f32.mrb[0].mxu0
    %v2216 = vadd.f32 %v1960, %v2215
    %v2217 = vpop.f32.mrb[0].mxu0
    %2218 = vdwg.mxu0
    %v2219 = vmax.f32 %v2093, 0.0
    %v2220 = vmax.f32 %v2096, 0.0
    %v2221 = vmax.f32 %v2101, 0.0
    %v2222 = vmax.f32 %v2104, 0.0
    %v2223 = vmax.f32 %v2109, 0.0
    %v2224 = vmax.f32 %v2112, 0.0
    %v2225 = vmax.f32 %v2117, 0.0
    %v2226 = vmax.f32 %v2120, 0.0
    %v2227 = vmax.f32 %v2125, 0.0
    %v2228 = vmax.f32 %v2128, 0.0
    %v2229 = vmax.f32 %v2133, 0.0
    %v2230 = vmax.f32 %v2136, 0.0
    %v2231 = vmax.f32 %v2141, 0.0
    %v2232 = vmax.f32 %v2144, 0.0
    %v2233 = vmax.f32 %v2149, 0.0
    %v2234 = vmax.f32 %v2152, 0.0
    %v2235 = vmax.f32 %v2157, 0.0
    %v2236 = vmax.f32 %v2160, 0.0
    %v2237 = vmax.f32 %v2165, 0.0
    %v2238 = vmax.f32 %v2168, 0.0
    %v2239 = vmax.f32 %v2173, 0.0
    %v2240 = vmax.f32 %v2176, 0.0
    %v2241 = vmax.f32 %v2181, 0.0
    %v2242 = vmax.f32 %v2184, 0.0
    %v2243 = vmax.f32 %v2189, 0.0
    %v2244 = vmax.f32 %v2192, 0.0
    %v2245 = vmax.f32 %v2197, 0.0
    %v2246 = vmax.f32 %v2200, 0.0
    %v2247 = vmax.f32 %v2205, 0.0
    %v2248 = vmax.f32 %v2208, 0.0
    %v2249 = vmax.f32 %v2213, 0.0
    %v2250 = vmax.f32 %v2216, 0.0
    %v2251 = vpack.c.bf16 %v2220, %v2219
    %v2252 = vpack.c.bf16 %v2222, %v2221
    %v2253 = vpack.c.bf16 %v2224, %v2223
    %v2254 = vpack.c.bf16 %v2226, %v2225
    %v2255 = vpack.c.bf16 %v2228, %v2227
    %v2256 = vpack.c.bf16 %v2230, %v2229
    %v2257 = vpack.c.bf16 %v2232, %v2231
    %v2258 = vpack.c.bf16 %v2234, %v2233
    %v2259 = vpack.c.bf16 %v2236, %v2235
    %v2260 = vpack.c.bf16 %v2238, %v2237
    %v2261 = vpack.c.bf16 %v2240, %v2239
    %v2262 = vpack.c.bf16 %v2242, %v2241
    %v2263 = vpack.c.bf16 %v2244, %v2243
    %v2264 = vpack.c.bf16 %v2246, %v2245
    %v2265 = vpack.c.bf16 %v2248, %v2247
    %v2266 = vpack.c.bf16 %v2250, %v2249
    %v2267 = vld [vmem:[%s3] sm:$0xf]
    %v2268 = vld [vmem:[%s3 + $0x4] sm:$0xf]
    %v2269 = vld [vmem:[%s3 + $0x8] sm:$0xf]
    %v2270 = vld [vmem:[%s3 + $0xc] sm:$0xf]
    %v2271 = vld [vmem:[%s3 + $0x10] sm:$0xf]
    %v2272 = vld [vmem:[%s3 + $0x14] sm:$0xf]
    %v2273 = vld [vmem:[%s3 + $0x18] sm:$0xf]
    %v2274 = vld [vmem:[%s3 + $0x1c] sm:$0xf]
    %v2275 = vld [vmem:[%s3 + $0x20] sm:$0xf]
    %v2276 = vld [vmem:[%s3 + $0x24] sm:$0xf]
    %v2277 = vld [vmem:[%s3 + $0x28] sm:$0xf]
    %v2278 = vld [vmem:[%s3 + $0x2c] sm:$0xf]
    %v2279 = vld [vmem:[%s3 + $0x30] sm:$0xf]
    %v2280 = vld [vmem:[%s3 + $0x34] sm:$0xf]
    %v2281 = vld [vmem:[%s3 + $0x38] sm:$0xf]
    %v2282 = vld [vmem:[%s3 + $0x3c] sm:$0xf]
    %v2283 = vld [vmem:[%s13] sm:$0x1]
    %v2285 = vlaneseq
    %v2286 = vshrl.u32 %v2285, 7
    %v2287 = vsub.s32 0, %v2286
    %v2288 = vrot.slane %v2283, %v2287
    %v2306 = vunpack.c.l.b16 %v2267
    %v2307 = vunpack.c.l.b16 %v2268
    %v2308 = vunpack.c.l.b16 %v2269
    %v2309 = vunpack.c.l.b16 %v2270
    %v2310 = vunpack.c.l.b16 %v2271
    %v2311 = vunpack.c.l.b16 %v2272
    %v2312 = vunpack.c.l.b16 %v2273
    %v2313 = vunpack.c.l.b16 %v2274
    %v2314 = vunpack.c.l.b16 %v2275
    %v2315 = vunpack.c.l.b16 %v2276
    %v2316 = vunpack.c.l.b16 %v2277
    %v2317 = vunpack.c.l.b16 %v2278
    %v2318 = vunpack.c.l.b16 %v2279
    %v2319 = vunpack.c.l.b16 %v2280
    %v2320 = vunpack.c.l.b16 %v2281
    %v2321 = vunpack.c.l.b16 %v2282
    %v2322 = vpack.c.b16 %v2307, %v2306
    %v2323 = vpack.c.b16 %v2309, %v2308
    %v2324 = vpack.c.b16 %v2311, %v2310
    %v2325 = vpack.c.b16 %v2313, %v2312
    %v2326 = vpack.c.b16 %v2315, %v2314
    %v2327 = vpack.c.b16 %v2317, %v2316
    %v2328 = vpack.c.b16 %v2319, %v2318
    %v2329 = vpack.c.b16 %v2321, %v2320
    %2338 = vmatprep.subr.bf16.mxu0 0
    %2339 = vmatpush1.bf16.msra.mxu0 %v2322
    %2340 = vmatprep.subr.bf16.mxu0 0
    %2341 = vmatpush1.bf16.msra.mxu0 %v2323
    %2342 = vmatprep.subr.bf16.mxu0 0
    %2343 = vmatpush1.bf16.msra.mxu0 %v2324
    %2344 = vmatprep.subr.bf16.mxu0 0
    %2345 = vmatpush1.bf16.msra.mxu0 %v2325
    %2346 = vmatprep.subr.bf16.mxu0 0
    %2347 = vmatpush1.bf16.msra.mxu0 %v2326
    %2348 = vmatprep.subr.bf16.mxu0 0
    %2349 = vmatpush1.bf16.msra.mxu0 %v2327
    %2350 = vmatprep.subr.bf16.mxu0 0
    %2351 = vmatpush1.bf16.msra.mxu0 %v2328
    %2352 = vmatprep.subr.bf16.mxu0 0
    %2353 = vmatpush1.bf16.msra.mxu0 %v2329
    %2354 = vmatprep.subr.bf16.mxu0 0
    %2355 = vmatpush1.bf16.msra.mxu0 0
    %2356 = vmatprep.subr.bf16.mxu0 0
    %2357 = vmatpush1.bf16.msra.mxu0 0
    %2358 = vmatprep.subr.bf16.mxu0 0
    %2359 = vmatpush1.bf16.msra.mxu0 0
    %2360 = vmatprep.subr.bf16.mxu0 0
    %2361 = vmatpush1.bf16.msra.mxu0 0
    %2362 = vmatprep.subr.bf16.mxu0 0
    %2363 = vmatpush1.bf16.msra.mxu0 0
    %2364 = vmatprep.subr.bf16.mxu0 0
    %2365 = vmatpush1.bf16.msra.mxu0 0
    %2366 = vmatprep.subr.bf16.mxu0 0
    %2367 = vmatpush1.bf16.msra.mxu0 0
    %2368 = vmatprep.subr.bf16.mxu0 0
    %2369 = vmatpush1.bf16.msra.mxu0 0
    %2370 = vmatprep.mubr.bf16.mxu0 0
    %2371 = vmatmul.mubr.bf16.gmra.mrb[0].mxu0 %v2251
    %v2372 = vpop.f32.mrb[0].mxu0
    %v2373 = vadd.f32 %v2288, %v2372
    %v2374 = vpop.f32.mrb[0].mxu0
    %v2375 = vpop.f32.mrb[0].mxu0
    %v2376 = vadd.f32 %v2288, %v2375
    %v2377 = vpop.f32.mrb[0].mxu0
    %2378 = vmatprep.mubr.bf16.mxu0 0
    %2379 = vmatmul.mubr.bf16.gmra.mrb[0].mxu0 %v2252
    %v2380 = vpop.f32.mrb[0].mxu0
    %v2381 = vadd.f32 %v2288, %v2380
    %v2382 = vpop.f32.mrb[0].mxu0
    %v2383 = vpop.f32.mrb[0].mxu0
    %v2384 = vadd.f32 %v2288, %v2383
    %v2385 = vpop.f32.mrb[0].mxu0
    %2386 = vmatprep.mubr.bf16.mxu0 0
    %2387 = vmatmul.mubr.bf16.gmra.mrb[0].mxu0 %v2253
    %v2388 = vpop.f32.mrb[0].mxu0
    %v2389 = vadd.f32 %v2288, %v2388
    %v2390 = vpop.f32.mrb[0].mxu0
    %v2391 = vpop.f32.mrb[0].mxu0
    %v2392 = vadd.f32 %v2288, %v2391
    %v2393 = vpop.f32.mrb[0].mxu0
    %2394 = vmatprep.mubr.bf16.mxu0 0
    %2395 = vmatmul.mubr.bf16.gmra.mrb[0].mxu0 %v2254
    %v2396 = vpop.f32.mrb[0].mxu0
    %v2397 = vadd.f32 %v2288, %v2396
    %v2398 = vpop.f32.mrb[0].mxu0
    %v2399 = vpop.f32.mrb[0].mxu0
    %v2400 = vadd.f32 %v2288, %v2399
    %v2401 = vpop.f32.mrb[0].mxu0
    %2402 = vmatprep.mubr.bf16.mxu0 0
    %2403 = vmatmul.mubr.bf16.gmra.mrb[0].mxu0 %v2255
    %v2404 = vpop.f32.mrb[0].mxu0
    %v2405 = vadd.f32 %v2288, %v2404
    %v2406 = vpop.f32.mrb[0].mxu0
    %v2407 = vpop.f32.mrb[0].mxu0
    %v2408 = vadd.f32 %v2288, %v2407
    %v2409 = vpop.f32.mrb[0].mxu0
    %2410 = vmatprep.mubr.bf16.mxu0 0
    %2411 = vmatmul.mubr.bf16.gmra.mrb[0].mxu0 %v2256
    %v2412 = vpop.f32.mrb[0].mxu0
    %v2413 = vadd.f32 %v2288, %v2412
    %v2414 = vpop.f32.mrb[0].mxu0
    %v2415 = vpop.f32.mrb[0].mxu0
    %v2416 = vadd.f32 %v2288, %v2415
    %v2417 = vpop.f32.mrb[0].mxu0
    %2418 = vmatprep.mubr.bf16.mxu0 0
    %2419 = vmatmul.mubr.bf16.gmra.mrb[0].mxu0 %v2257
    %v2420 = vpop.f32.mrb[0].mxu0
    %v2421 = vadd.f32 %v2288, %v2420
    %v2422 = vpop.f32.mrb[0].mxu0
    %v2423 = vpop.f32.mrb[0].mxu0
    %v2424 = vadd.f32 %v2288, %v2423
    %v2425 = vpop.f32.mrb[0].mxu0
    %2426 = vmatprep.mubr.bf16.mxu0 0
    %2427 = vmatmul.mubr.bf16.gmra.mrb[0].mxu0 %v2258
    %v2428 = vpop.f32.mrb[0].mxu0
    %v2429 = vadd.f32 %v2288, %v2428
    %v2430 = vpop.f32.mrb[0].mxu0
    %v2431 = vpop.f32.mrb[0].mxu0
    %v2432 = vadd.f32 %v2288, %v2431
    %v2433 = vpop.f32.mrb[0].mxu0
    %2434 = vmatprep.mubr.bf16.mxu0 0
    %2435 = vmatmul.mubr.bf16.gmra.mrb[0].mxu0 %v2259
    %v2436 = vpop.f32.mrb[0].mxu0
    %v2437 = vadd.f32 %v2288, %v2436
    %v2438 = vpop.f32.mrb[0].mxu0
    %v2439 = vpop.f32.mrb[0].mxu0
    %v2440 = vadd.f32 %v2288, %v2439
    %v2441 = vpop.f32.mrb[0].mxu0
    %2442 = vmatprep.mubr.bf16.mxu0 0
    %2443 = vmatmul.mubr.bf16.gmra.mrb[0].mxu0 %v2260
    %v2444 = vpop.f32.mrb[0].mxu0
    %v2445 = vadd.f32 %v2288, %v2444
    %v2446 = vpop.f32.mrb[0].mxu0
    %v2447 = vpop.f32.mrb[0].mxu0
    %v2448 = vadd.f32 %v2288, %v2447
    %v2449 = vpop.f32.mrb[0].mxu0
    %2450 = vmatprep.mubr.bf16.mxu0 0
    %2451 = vmatmul.mubr.bf16.gmra.mrb[0].mxu0 %v2261
    %v2452 = vpop.f32.mrb[0].mxu0
    %v2453 = vadd.f32 %v2288, %v2452
    %v2454 = vpop.f32.mrb[0].mxu0
    %v2455 = vpop.f32.mrb[0].mxu0
    %v2456 = vadd.f32 %v2288, %v2455
    %v2457 = vpop.f32.mrb[0].mxu0
    %2458 = vmatprep.mubr.bf16.mxu0 0
    %2459 = vmatmul.mubr.bf16.gmra.mrb[0].mxu0 %v2262
    %v2460 = vpop.f32.mrb[0].mxu0
    %v2461 = vadd.f32 %v2288, %v2460
    %v2462 = vpop.f32.mrb[0].mxu0
    %v2463 = vpop.f32.mrb[0].mxu0
    %v2464 = vadd.f32 %v2288, %v2463
    %v2465 = vpop.f32.mrb[0].mxu0
    %2466 = vmatprep.mubr.bf16.mxu0 0
    %2467 = vmatmul.mubr.bf16.gmra.mrb[0].mxu0 %v2263
    %v2468 = vpop.f32.mrb[0].mxu0
    %v2469 = vadd.f32 %v2288, %v2468
    %v2470 = vpop.f32.mrb[0].mxu0
    %v2471 = vpop.f32.mrb[0].mxu0
    %v2472 = vadd.f32 %v2288, %v2471
    %v2473 = vpop.f32.mrb[0].mxu0
    %2474 = vmatprep.mubr.bf16.mxu0 0
    %2475 = vmatmul.mubr.bf16.gmra.mrb[0].mxu0 %v2264
    %v2476 = vpop.f32.mrb[0].mxu0
    %v2477 = vadd.f32 %v2288, %v2476
    %v2478 = vpop.f32.mrb[0].mxu0
    %v2479 = vpop.f32.mrb[0].mxu0
    %v2480 = vadd.f32 %v2288, %v2479
    %v2481 = vpop.f32.mrb[0].mxu0
    %2482 = vmatprep.mubr.bf16.mxu0 0
    %2483 = vmatmul.mubr.bf16.gmra.mrb[0].mxu0 %v2265
    %v2484 = vpop.f32.mrb[0].mxu0
    %v2485 = vadd.f32 %v2288, %v2484
    %v2486 = vpop.f32.mrb[0].mxu0
    %v2487 = vpop.f32.mrb[0].mxu0
    %v2488 = vadd.f32 %v2288, %v2487
    %v2489 = vpop.f32.mrb[0].mxu0
    %2490 = vmatprep.mubr.bf16.mxu0 0
    %2491 = vmatmul.mubr.bf16.gmra.mrb[0].mxu0 %v2266
    %v2492 = vpop.f32.mrb[0].mxu0
    %v2493 = vadd.f32 %v2288, %v2492
    %v2494 = vpop.f32.mrb[0].mxu0
    %v2495 = vpop.f32.mrb[0].mxu0
    %v2496 = vadd.f32 %v2288, %v2495
    %v2497 = vpop.f32.mrb[0].mxu0
    %2498 = vdwg.mxu0
    %v2499 = vmax.f32 %v2373, 0.0
    %v2500 = vmax.f32 %v2376, 0.0
    %v2501 = vmax.f32 %v2381, 0.0
    %v2502 = vmax.f32 %v2384, 0.0
    %v2503 = vmax.f32 %v2389, 0.0
    %v2504 = vmax.f32 %v2392, 0.0
    %v2505 = vmax.f32 %v2397, 0.0
    %v2506 = vmax.f32 %v2400, 0.0
    %v2507 = vmax.f32 %v2405, 0.0
    %v2508 = vmax.f32 %v2408, 0.0
    %v2509 = vmax.f32 %v2413, 0.0
    %v2510 = vmax.f32 %v2416, 0.0
    %v2511 = vmax.f32 %v2421, 0.0
    %v2512 = vmax.f32 %v2424, 0.0
    %v2513 = vmax.f32 %v2429, 0.0
    %v2514 = vmax.f32 %v2432, 0.0
    %v2515 = vmax.f32 %v2437, 0.0
    %v2516 = vmax.f32 %v2440, 0.0
    %v2517 = vmax.f32 %v2445, 0.0
    %v2518 = vmax.f32 %v2448, 0.0
    %v2519 = vmax.f32 %v2453, 0.0
    %v2520 = vmax.f32 %v2456, 0.0
    %v2521 = vmax.f32 %v2461, 0.0
    %v2522 = vmax.f32 %v2464, 0.0
    %v2523 = vmax.f32 %v2469, 0.0
    %v2524 = vmax.f32 %v2472, 0.0
    %v2525 = vmax.f32 %v2477, 0.0
    %v2526 = vmax.f32 %v2480, 0.0
    %v2527 = vmax.f32 %v2485, 0.0
    %v2528 = vmax.f32 %v2488, 0.0
    %v2529 = vmax.f32 %v2493, 0.0
    %v2530 = vmax.f32 %v2496, 0.0
    %v2531 = vpack.c.bf16 %v2500, %v2499
    %v2532 = vpack.c.bf16 %v2502, %v2501
    %v2533 = vpack.c.bf16 %v2504, %v2503
    %v2534 = vpack.c.bf16 %v2506, %v2505
    %v2535 = vpack.c.bf16 %v2508, %v2507
    %v2536 = vpack.c.bf16 %v2510, %v2509
    %v2537 = vpack.c.bf16 %v2512, %v2511
    %v2538 = vpack.c.bf16 %v2514, %v2513
    %v2539 = vpack.c.bf16 %v2516, %v2515
    %v2540 = vpack.c.bf16 %v2518, %v2517
    %v2541 = vpack.c.bf16 %v2520, %v2519
    %v2542 = vpack.c.bf16 %v2522, %v2521
    %v2543 = vpack.c.bf16 %v2524, %v2523
    %v2544 = vpack.c.bf16 %v2526, %v2525
    %v2545 = vpack.c.bf16 %v2528, %v2527
    %v2546 = vpack.c.bf16 %v2530, %v2529
    %v2547 = vld [vmem:[%s4] sm:$0xf]
    %v2548 = vld [vmem:[%s4 + $0x4] sm:$0xf]
    %v2549 = vld [vmem:[%s4 + $0x8] sm:$0xf]
    %v2550 = vld [vmem:[%s4 + $0xc] sm:$0xf]
    %v2551 = vld [vmem:[%s4 + $0x10] sm:$0xf]
    %v2552 = vld [vmem:[%s4 + $0x14] sm:$0xf]
    %v2553 = vld [vmem:[%s4 + $0x18] sm:$0xf]
    %v2554 = vld [vmem:[%s4 + $0x1c] sm:$0xf]
    %v2555 = vld [vmem:[%s14] sm:$0x1]
    %v2557 = vlaneseq
    %v2558 = vshrl.u32 %v2557, 7
    %v2559 = vsub.s32 0, %v2558
    %v2560 = vrot.slane %v2555, %v2559
    %v2570 = vunpack.c.l.b16 %v2547
    %v2571 = vunpack.c.l.b16 %v2548
    %v2572 = vunpack.c.l.b16 %v2549
    %v2573 = vunpack.c.l.b16 %v2550
    %v2574 = vunpack.c.l.b16 %v2551
    %v2575 = vunpack.c.l.b16 %v2552
    %v2576 = vunpack.c.l.b16 %v2553
    %v2577 = vunpack.c.l.b16 %v2554
    %v2578 = vpack.c.b16 %v2571, %v2570
    %v2579 = vpack.c.b16 %v2573, %v2572
    %v2580 = vpack.c.b16 %v2575, %v2574
    %v2581 = vpack.c.b16 %v2577, %v2576
    %vm2586 = vcmask 523264
    %v2588 = vsel %vm2586, %v2531, 0
    %v2591 = vsel %vm2586, %v2532, 0
    %v2594 = vsel %vm2586, %v2533, 0
    %v2597 = vsel %vm2586, %v2534, 0
    %v2600 = vsel %vm2586, %v2535, 0
    %v2603 = vsel %vm2586, %v2536, 0
    %v2606 = vsel %vm2586, %v2537, 0
    %v2609 = vsel %vm2586, %v2538, 0
    %v2612 = vsel %vm2586, %v2539, 0
    %v2615 = vsel %vm2586, %v2540, 0
    %v2618 = vsel %vm2586, %v2541, 0
    %v2621 = vsel %vm2586, %v2542, 0
    %v2624 = vsel %vm2586, %v2543, 0
    %v2627 = vsel %vm2586, %v2544, 0
    %v2630 = vsel %vm2586, %v2545, 0
    %v2633 = vsel %vm2586, %v2546, 0
    %2635 = vmatprep.subr.bf16.mxu0 0
    %2636 = vmatpush1.bf16.msra.mxu0 %v2578
    %2637 = vmatprep.subr.bf16.mxu0 0
    %2638 = vmatpush1.bf16.msra.mxu0 %v2579
    %2639 = vmatprep.subr.bf16.mxu0 0
    %2640 = vmatpush1.bf16.msra.mxu0 %v2580
    %2641 = vmatprep.subr.bf16.mxu0 0
    %2642 = vmatpush1.bf16.msra.mxu0 %v2581
    %2643 = vmatprep.subr.bf16.mxu0 0
    %2644 = vmatpush1.bf16.msra.mxu0 0
    %2645 = vmatprep.subr.bf16.mxu0 0
    %2646 = vmatpush1.bf16.msra.mxu0 0
    %2647 = vmatprep.subr.bf16.mxu0 0
    %2648 = vmatpush1.bf16.msra.mxu0 0
    %2649 = vmatprep.subr.bf16.mxu0 0
    %2650 = vmatpush1.bf16.msra.mxu0 0
    %2651 = vmatprep.subr.bf16.mxu0 0
    %2652 = vmatpush1.bf16.msra.mxu0 0
    %2653 = vmatprep.subr.bf16.mxu0 0
    %2654 = vmatpush1.bf16.msra.mxu0 0
    %2655 = vmatprep.subr.bf16.mxu0 0
    %2656 = vmatpush1.bf16.msra.mxu0 0
    %2657 = vmatprep.subr.bf16.mxu0 0
    %2658 = vmatpush1.bf16.msra.mxu0 0
    %2659 = vmatprep.subr.bf16.mxu0 0
    %2660 = vmatpush1.bf16.msra.mxu0 0
    %2661 = vmatprep.subr.bf16.mxu0 0
    %2662 = vmatpush1.bf16.msra.mxu0 0
    %2663 = vmatprep.subr.bf16.mxu0 0
    %2664 = vmatpush1.bf16.msra.mxu0 0
    %2665 = vmatprep.subr.bf16.mxu0 0
    %2666 = vmatpush1.bf16.msra.mxu0 0
    %2667 = vmatprep.mubr.bf16.mxu0 0
    %2668 = vmatmul.mubr.bf16.gmra.mrb[0].mxu0 %v2588
    %v2669 = vpop.f32.mrb[0].mxu0
    %v2670 = vadd.f32 %v2560, %v2669
    %v2671 = vpop.f32.mrb[0].mxu0
    %v2672 = vpop.f32.mrb[0].mxu0
    %v2673 = vadd.f32 %v2560, %v2672
    %v2674 = vpop.f32.mrb[0].mxu0
    %2675 = vmatprep.mubr.bf16.mxu0 0
    %2676 = vmatmul.mubr.bf16.gmra.mrb[0].mxu0 %v2591
    %v2677 = vpop.f32.mrb[0].mxu0
    %v2678 = vadd.f32 %v2560, %v2677
    %v2679 = vpop.f32.mrb[0].mxu0
    %v2680 = vpop.f32.mrb[0].mxu0
    %v2681 = vadd.f32 %v2560, %v2680
    %v2682 = vpop.f32.mrb[0].mxu0
    %2683 = vmatprep.mubr.bf16.mxu0 0
    %2684 = vmatmul.mubr.bf16.gmra.mrb[0].mxu0 %v2594
    %v2685 = vpop.f32.mrb[0].mxu0
    %v2686 = vadd.f32 %v2560, %v2685
    %v2687 = vpop.f32.mrb[0].mxu0
    %v2688 = vpop.f32.mrb[0].mxu0
    %v2689 = vadd.f32 %v2560, %v2688
    %v2690 = vpop.f32.mrb[0].mxu0
    %2691 = vmatprep.mubr.bf16.mxu0 0
    %2692 = vmatmul.mubr.bf16.gmra.mrb[0].mxu0 %v2597
    %v2693 = vpop.f32.mrb[0].mxu0
    %v2694 = vadd.f32 %v2560, %v2693
    %v2695 = vpop.f32.mrb[0].mxu0
    %v2696 = vpop.f32.mrb[0].mxu0
    %v2697 = vadd.f32 %v2560, %v2696
    %v2698 = vpop.f32.mrb[0].mxu0
    %2699 = vmatprep.mubr.bf16.mxu0 0
    %2700 = vmatmul.mubr.bf16.gmra.mrb[0].mxu0 %v2600
    %v2701 = vpop.f32.mrb[0].mxu0
    %v2702 = vadd.f32 %v2560, %v2701
    %v2703 = vpop.f32.mrb[0].mxu0
    %v2704 = vpop.f32.mrb[0].mxu0
    %v2705 = vadd.f32 %v2560, %v2704
    %v2706 = vpop.f32.mrb[0].mxu0
    %2707 = vmatprep.mubr.bf16.mxu0 0
    %2708 = vmatmul.mubr.bf16.gmra.mrb[0].mxu0 %v2603
    %v2709 = vpop.f32.mrb[0].mxu0
    %v2710 = vadd.f32 %v2560, %v2709
    %v2711 = vpop.f32.mrb[0].mxu0
    %v2712 = vpop.f32.mrb[0].mxu0
    %v2713 = vadd.f32 %v2560, %v2712
    %v2714 = vpop.f32.mrb[0].mxu0
    %2715 = vmatprep.mubr.bf16.mxu0 0
    %2716 = vmatmul.mubr.bf16.gmra.mrb[0].mxu0 %v2606
    %v2717 = vpop.f32.mrb[0].mxu0
    %v2718 = vadd.f32 %v2560, %v2717
    %v2719 = vpop.f32.mrb[0].mxu0
    %v2720 = vpop.f32.mrb[0].mxu0
    %v2721 = vadd.f32 %v2560, %v2720
    %v2722 = vpop.f32.mrb[0].mxu0
    %2723 = vmatprep.mubr.bf16.mxu0 0
    %2724 = vmatmul.mubr.bf16.gmra.mrb[0].mxu0 %v2609
    %v2725 = vpop.f32.mrb[0].mxu0
    %v2726 = vadd.f32 %v2560, %v2725
    %v2727 = vpop.f32.mrb[0].mxu0
    %v2728 = vpop.f32.mrb[0].mxu0
    %v2729 = vadd.f32 %v2560, %v2728
    %v2730 = vpop.f32.mrb[0].mxu0
    %2731 = vmatprep.mubr.bf16.mxu0 0
    %2732 = vmatmul.mubr.bf16.gmra.mrb[0].mxu0 %v2612
    %v2733 = vpop.f32.mrb[0].mxu0
    %v2734 = vadd.f32 %v2560, %v2733
    %v2735 = vpop.f32.mrb[0].mxu0
    %v2736 = vpop.f32.mrb[0].mxu0
    %v2737 = vadd.f32 %v2560, %v2736
    %v2738 = vpop.f32.mrb[0].mxu0
    %2739 = vmatprep.mubr.bf16.mxu0 0
    %2740 = vmatmul.mubr.bf16.gmra.mrb[0].mxu0 %v2615
    %v2741 = vpop.f32.mrb[0].mxu0
    %v2742 = vadd.f32 %v2560, %v2741
    %v2743 = vpop.f32.mrb[0].mxu0
    %v2744 = vpop.f32.mrb[0].mxu0
    %v2745 = vadd.f32 %v2560, %v2744
    %v2746 = vpop.f32.mrb[0].mxu0
    %2747 = vmatprep.mubr.bf16.mxu0 0
    %2748 = vmatmul.mubr.bf16.gmra.mrb[0].mxu0 %v2618
    %v2749 = vpop.f32.mrb[0].mxu0
    %v2750 = vadd.f32 %v2560, %v2749
    %v2751 = vpop.f32.mrb[0].mxu0
    %v2752 = vpop.f32.mrb[0].mxu0
    %v2753 = vadd.f32 %v2560, %v2752
    %v2754 = vpop.f32.mrb[0].mxu0
    %2755 = vmatprep.mubr.bf16.mxu0 0
    %2756 = vmatmul.mubr.bf16.gmra.mrb[0].mxu0 %v2621
    %v2757 = vpop.f32.mrb[0].mxu0
    %v2758 = vadd.f32 %v2560, %v2757
    %v2759 = vpop.f32.mrb[0].mxu0
    %v2760 = vpop.f32.mrb[0].mxu0
    %v2761 = vadd.f32 %v2560, %v2760
    %v2762 = vpop.f32.mrb[0].mxu0
    %2763 = vmatprep.mubr.bf16.mxu0 0
    %2764 = vmatmul.mubr.bf16.gmra.mrb[0].mxu0 %v2624
    %v2765 = vpop.f32.mrb[0].mxu0
    %v2766 = vadd.f32 %v2560, %v2765
    %v2767 = vpop.f32.mrb[0].mxu0
    %v2768 = vpop.f32.mrb[0].mxu0
    %v2769 = vadd.f32 %v2560, %v2768
    %v2770 = vpop.f32.mrb[0].mxu0
    %2771 = vmatprep.mubr.bf16.mxu0 0
    %2772 = vmatmul.mubr.bf16.gmra.mrb[0].mxu0 %v2627
    %v2773 = vpop.f32.mrb[0].mxu0
    %v2774 = vadd.f32 %v2560, %v2773
    %v2775 = vpop.f32.mrb[0].mxu0
    %v2776 = vpop.f32.mrb[0].mxu0
    %v2777 = vadd.f32 %v2560, %v2776
    %v2778 = vpop.f32.mrb[0].mxu0
    %2779 = vmatprep.mubr.bf16.mxu0 0
    %2780 = vmatmul.mubr.bf16.gmra.mrb[0].mxu0 %v2630
    %v2781 = vpop.f32.mrb[0].mxu0
    %v2782 = vadd.f32 %v2560, %v2781
    %v2783 = vpop.f32.mrb[0].mxu0
    %v2784 = vpop.f32.mrb[0].mxu0
    %v2785 = vadd.f32 %v2560, %v2784
    %v2786 = vpop.f32.mrb[0].mxu0
    %2787 = vmatprep.mubr.bf16.mxu0 0
    %2788 = vmatmul.mubr.bf16.gmra.mrb[0].mxu0 %v2633
    %v2789 = vpop.f32.mrb[0].mxu0
    %v2790 = vadd.f32 %v2560, %v2789
    %v2791 = vpop.f32.mrb[0].mxu0
    %v2792 = vpop.f32.mrb[0].mxu0
    %v2793 = vadd.f32 %v2560, %v2792
    %v2794 = vpop.f32.mrb[0].mxu0
    %2795 = vdwg.mxu0
    %v2796 = vmax.f32 %v2670, 0.0
    %v2797 = vmax.f32 %v2673, 0.0
    %v2798 = vmax.f32 %v2678, 0.0
    %v2799 = vmax.f32 %v2681, 0.0
    %v2800 = vmax.f32 %v2686, 0.0
    %v2801 = vmax.f32 %v2689, 0.0
    %v2802 = vmax.f32 %v2694, 0.0
    %v2803 = vmax.f32 %v2697, 0.0
    %v2804 = vmax.f32 %v2702, 0.0
    %v2805 = vmax.f32 %v2705, 0.0
    %v2806 = vmax.f32 %v2710, 0.0
    %v2807 = vmax.f32 %v2713, 0.0
    %v2808 = vmax.f32 %v2718, 0.0
    %v2809 = vmax.f32 %v2721, 0.0
    %v2810 = vmax.f32 %v2726, 0.0
    %v2811 = vmax.f32 %v2729, 0.0
    %v2812 = vmax.f32 %v2734, 0.0
    %v2813 = vmax.f32 %v2737, 0.0
    %v2814 = vmax.f32 %v2742, 0.0
    %v2815 = vmax.f32 %v2745, 0.0
    %v2816 = vmax.f32 %v2750, 0.0
    %v2817 = vmax.f32 %v2753, 0.0
    %v2818 = vmax.f32 %v2758, 0.0
    %v2819 = vmax.f32 %v2761, 0.0
    %v2820 = vmax.f32 %v2766, 0.0
    %v2821 = vmax.f32 %v2769, 0.0
    %v2822 = vmax.f32 %v2774, 0.0
    %v2823 = vmax.f32 %v2777, 0.0
    %v2824 = vmax.f32 %v2782, 0.0
    %v2825 = vmax.f32 %v2785, 0.0
    %v2826 = vmax.f32 %v2790, 0.0
    %v2827 = vmax.f32 %v2793, 0.0
    %v2828 = vpack.c.bf16 %v2797, %v2796
    %v2829 = vpack.c.bf16 %v2799, %v2798
    %v2830 = vpack.c.bf16 %v2801, %v2800
    %v2831 = vpack.c.bf16 %v2803, %v2802
    %v2832 = vpack.c.bf16 %v2805, %v2804
    %v2833 = vpack.c.bf16 %v2807, %v2806
    %v2834 = vpack.c.bf16 %v2809, %v2808
    %v2835 = vpack.c.bf16 %v2811, %v2810
    %v2836 = vpack.c.bf16 %v2813, %v2812
    %v2837 = vpack.c.bf16 %v2815, %v2814
    %v2838 = vpack.c.bf16 %v2817, %v2816
    %v2839 = vpack.c.bf16 %v2819, %v2818
    %v2840 = vpack.c.bf16 %v2821, %v2820
    %v2841 = vpack.c.bf16 %v2823, %v2822
    %v2842 = vpack.c.bf16 %v2825, %v2824
    %v2843 = vpack.c.bf16 %v2827, %v2826
    %v2844 = vld [vmem:[%s5] sm:$0xf]
    %v2845 = vld [vmem:[%s5 + $0x4] sm:$0xf]
    %v2846 = vld [vmem:[%s5 + $0x8] sm:$0xf]
    %v2847 = vld [vmem:[%s5 + $0xc] sm:$0xf]
    %v2848 = vld [vmem:[%s15] sm:$0x1]
    %v2850 = vlaneseq
    %v2851 = vshrl.u32 %v2850, 7
    %v2852 = vsub.s32 0, %v2851
    %v2853 = vrot.slane %v2848, %v2852
    %v2859 = vunpack.c.l.b16 %v2844
    %v2860 = vunpack.c.l.b16 %v2845
    %v2861 = vunpack.c.l.b16 %v2846
    %v2862 = vunpack.c.l.b16 %v2847
    %v2863 = vpack.c.b16 %v2860, %v2859
    %v2864 = vpack.c.b16 %v2862, %v2861
    %vm2867 = vcmask 261120
    %v2869 = vsel %vm2867, %v2828, 0
    %v2872 = vsel %vm2867, %v2829, 0
    %v2875 = vsel %vm2867, %v2830, 0
    %v2878 = vsel %vm2867, %v2831, 0
    %v2881 = vsel %vm2867, %v2832, 0
    %v2884 = vsel %vm2867, %v2833, 0
    %v2887 = vsel %vm2867, %v2834, 0
    %v2890 = vsel %vm2867, %v2835, 0
    %v2893 = vsel %vm2867, %v2836, 0
    %v2896 = vsel %vm2867, %v2837, 0
    %v2899 = vsel %vm2867, %v2838, 0
    %v2902 = vsel %vm2867, %v2839, 0
    %v2905 = vsel %vm2867, %v2840, 0
    %v2908 = vsel %vm2867, %v2841, 0
    %v2911 = vsel %vm2867, %v2842, 0
    %v2914 = vsel %vm2867, %v2843, 0
    %2916 = vmatprep.subr.bf16.mxu0 0
    %2917 = vmatpush1.bf16.msra.mxu0 %v2863
    %2918 = vmatprep.subr.bf16.mxu0 0
    %2919 = vmatpush1.bf16.msra.mxu0 %v2864
    %2920 = vmatprep.subr.bf16.mxu0 0
    %2921 = vmatpush1.bf16.msra.mxu0 0
    %2922 = vmatprep.subr.bf16.mxu0 0
    %2923 = vmatpush1.bf16.msra.mxu0 0
    %2924 = vmatprep.subr.bf16.mxu0 0
    %2925 = vmatpush1.bf16.msra.mxu0 0
    %2926 = vmatprep.subr.bf16.mxu0 0
    %2927 = vmatpush1.bf16.msra.mxu0 0
    %2928 = vmatprep.subr.bf16.mxu0 0
    %2929 = vmatpush1.bf16.msra.mxu0 0
    %2930 = vmatprep.subr.bf16.mxu0 0
    %2931 = vmatpush1.bf16.msra.mxu0 0
    %2932 = vmatprep.subr.bf16.mxu0 0
    %2933 = vmatpush1.bf16.msra.mxu0 0
    %2934 = vmatprep.subr.bf16.mxu0 0
    %2935 = vmatpush1.bf16.msra.mxu0 0
    %2936 = vmatprep.subr.bf16.mxu0 0
    %2937 = vmatpush1.bf16.msra.mxu0 0
    %2938 = vmatprep.subr.bf16.mxu0 0
    %2939 = vmatpush1.bf16.msra.mxu0 0
    %2940 = vmatprep.subr.bf16.mxu0 0
    %2941 = vmatpush1.bf16.msra.mxu0 0
    %2942 = vmatprep.subr.bf16.mxu0 0
    %2943 = vmatpush1.bf16.msra.mxu0 0
    %2944 = vmatprep.subr.bf16.mxu0 0
    %2945 = vmatpush1.bf16.msra.mxu0 0
    %2946 = vmatprep.subr.bf16.mxu0 0
    %2947 = vmatpush1.bf16.msra.mxu0 0
    %2948 = vmatprep.mubr.bf16.mxu0 0
    %2949 = vmatmul.mubr.bf16.gmra.mrb[0].mxu0 %v2869
    %v2950 = vpop.f32.mrb[0].mxu0
    %v2951 = vadd.f32 %v2853, %v2950
    %v2952 = vpop.f32.mrb[0].mxu0
    %v2953 = vpop.f32.mrb[0].mxu0
    %v2954 = vadd.f32 %v2853, %v2953
    %v2955 = vpop.f32.mrb[0].mxu0
    %2956 = vmatprep.mubr.bf16.mxu0 0
    %2957 = vmatmul.mubr.bf16.gmra.mrb[0].mxu0 %v2872
    %v2958 = vpop.f32.mrb[0].mxu0
    %v2959 = vadd.f32 %v2853, %v2958
    %v2960 = vpop.f32.mrb[0].mxu0
    %v2961 = vpop.f32.mrb[0].mxu0
    %v2962 = vadd.f32 %v2853, %v2961
    %v2963 = vpop.f32.mrb[0].mxu0
    %2964 = vmatprep.mubr.bf16.mxu0 0
    %2965 = vmatmul.mubr.bf16.gmra.mrb[0].mxu0 %v2875
    %v2966 = vpop.f32.mrb[0].mxu0
    %v2967 = vadd.f32 %v2853, %v2966
    %v2968 = vpop.f32.mrb[0].mxu0
    %v2969 = vpop.f32.mrb[0].mxu0
    %v2970 = vadd.f32 %v2853, %v2969
    %v2971 = vpop.f32.mrb[0].mxu0
    %2972 = vmatprep.mubr.bf16.mxu0 0
    %2973 = vmatmul.mubr.bf16.gmra.mrb[0].mxu0 %v2878
    %v2974 = vpop.f32.mrb[0].mxu0
    %v2975 = vadd.f32 %v2853, %v2974
    %v2976 = vpop.f32.mrb[0].mxu0
    %v2977 = vpop.f32.mrb[0].mxu0
    %v2978 = vadd.f32 %v2853, %v2977
    %v2979 = vpop.f32.mrb[0].mxu0
    %2980 = vmatprep.mubr.bf16.mxu0 0
    %2981 = vmatmul.mubr.bf16.gmra.mrb[0].mxu0 %v2881
    %v2982 = vpop.f32.mrb[0].mxu0
    %v2983 = vadd.f32 %v2853, %v2982
    %v2984 = vpop.f32.mrb[0].mxu0
    %v2985 = vpop.f32.mrb[0].mxu0
    %v2986 = vadd.f32 %v2853, %v2985
    %v2987 = vpop.f32.mrb[0].mxu0
    %2988 = vmatprep.mubr.bf16.mxu0 0
    %2989 = vmatmul.mubr.bf16.gmra.mrb[0].mxu0 %v2884
    %v2990 = vpop.f32.mrb[0].mxu0
    %v2991 = vadd.f32 %v2853, %v2990
    %v2992 = vpop.f32.mrb[0].mxu0
    %v2993 = vpop.f32.mrb[0].mxu0
    %v2994 = vadd.f32 %v2853, %v2993
    %v2995 = vpop.f32.mrb[0].mxu0
    %2996 = vmatprep.mubr.bf16.mxu0 0
    %2997 = vmatmul.mubr.bf16.gmra.mrb[0].mxu0 %v2887
    %v2998 = vpop.f32.mrb[0].mxu0
    %v2999 = vadd.f32 %v2853, %v2998
    %v3000 = vpop.f32.mrb[0].mxu0
    %v3001 = vpop.f32.mrb[0].mxu0
    %v3002 = vadd.f32 %v2853, %v3001
    %v3003 = vpop.f32.mrb[0].mxu0
    %3004 = vmatprep.mubr.bf16.mxu0 0
    %3005 = vmatmul.mubr.bf16.gmra.mrb[0].mxu0 %v2890
    %v3006 = vpop.f32.mrb[0].mxu0
    %v3007 = vadd.f32 %v2853, %v3006
    %v3008 = vpop.f32.mrb[0].mxu0
    %v3009 = vpop.f32.mrb[0].mxu0
    %v3010 = vadd.f32 %v2853, %v3009
    %v3011 = vpop.f32.mrb[0].mxu0
    %3012 = vmatprep.mubr.bf16.mxu0 0
    %3013 = vmatmul.mubr.bf16.gmra.mrb[0].mxu0 %v2893
    %v3014 = vpop.f32.mrb[0].mxu0
    %v3015 = vadd.f32 %v2853, %v3014
    %v3016 = vpop.f32.mrb[0].mxu0
    %v3017 = vpop.f32.mrb[0].mxu0
    %v3018 = vadd.f32 %v2853, %v3017
    %v3019 = vpop.f32.mrb[0].mxu0
    %3020 = vmatprep.mubr.bf16.mxu0 0
    %3021 = vmatmul.mubr.bf16.gmra.mrb[0].mxu0 %v2896
    %v3022 = vpop.f32.mrb[0].mxu0
    %v3023 = vadd.f32 %v2853, %v3022
    %v3024 = vpop.f32.mrb[0].mxu0
    %v3025 = vpop.f32.mrb[0].mxu0
    %v3026 = vadd.f32 %v2853, %v3025
    %v3027 = vpop.f32.mrb[0].mxu0
    %3028 = vmatprep.mubr.bf16.mxu0 0
    %3029 = vmatmul.mubr.bf16.gmra.mrb[0].mxu0 %v2899
    %v3030 = vpop.f32.mrb[0].mxu0
    %v3031 = vadd.f32 %v2853, %v3030
    %v3032 = vpop.f32.mrb[0].mxu0
    %v3033 = vpop.f32.mrb[0].mxu0
    %v3034 = vadd.f32 %v2853, %v3033
    %v3035 = vpop.f32.mrb[0].mxu0
    %3036 = vmatprep.mubr.bf16.mxu0 0
    %3037 = vmatmul.mubr.bf16.gmra.mrb[0].mxu0 %v2902
    %v3038 = vpop.f32.mrb[0].mxu0
    %v3039 = vadd.f32 %v2853, %v3038
    %v3040 = vpop.f32.mrb[0].mxu0
    %v3041 = vpop.f32.mrb[0].mxu0
    %v3042 = vadd.f32 %v2853, %v3041
    %v3043 = vpop.f32.mrb[0].mxu0
    %3044 = vmatprep.mubr.bf16.mxu0 0
    %3045 = vmatmul.mubr.bf16.gmra.mrb[0].mxu0 %v2905
    %v3046 = vpop.f32.mrb[0].mxu0
    %v3047 = vadd.f32 %v2853, %v3046
    %v3048 = vpop.f32.mrb[0].mxu0
    %v3049 = vpop.f32.mrb[0].mxu0
    %v3050 = vadd.f32 %v2853, %v3049
    %v3051 = vpop.f32.mrb[0].mxu0
    %3052 = vmatprep.mubr.bf16.mxu0 0
    %3053 = vmatmul.mubr.bf16.gmra.mrb[0].mxu0 %v2908
    %v3054 = vpop.f32.mrb[0].mxu0
    %v3055 = vadd.f32 %v2853, %v3054
    %v3056 = vpop.f32.mrb[0].mxu0
    %v3057 = vpop.f32.mrb[0].mxu0
    %v3058 = vadd.f32 %v2853, %v3057
    %v3059 = vpop.f32.mrb[0].mxu0
    %3060 = vmatprep.mubr.bf16.mxu0 0
    %3061 = vmatmul.mubr.bf16.gmra.mrb[0].mxu0 %v2911
    %v3062 = vpop.f32.mrb[0].mxu0
    %v3063 = vadd.f32 %v2853, %v3062
    %v3064 = vpop.f32.mrb[0].mxu0
    %v3065 = vpop.f32.mrb[0].mxu0
    %v3066 = vadd.f32 %v2853, %v3065
    %v3067 = vpop.f32.mrb[0].mxu0
    %3068 = vmatprep.mubr.bf16.mxu0 0
    %3069 = vmatmul.mubr.bf16.gmra.mrb[0].mxu0 %v2914
    %v3070 = vpop.f32.mrb[0].mxu0
    %v3071 = vadd.f32 %v2853, %v3070
    %v3072 = vpop.f32.mrb[0].mxu0
    %v3073 = vpop.f32.mrb[0].mxu0
    %v3074 = vadd.f32 %v2853, %v3073
    %v3075 = vpop.f32.mrb[0].mxu0
    %3076 = vdwg.mxu0
    %v3077 = vmax.f32 %v2951, 0.0
    %v3078 = vmax.f32 %v2954, 0.0
    %v3079 = vmax.f32 %v2959, 0.0
    %v3080 = vmax.f32 %v2962, 0.0
    %v3081 = vmax.f32 %v2967, 0.0
    %v3082 = vmax.f32 %v2970, 0.0
    %v3083 = vmax.f32 %v2975, 0.0
    %v3084 = vmax.f32 %v2978, 0.0
    %v3085 = vmax.f32 %v2983, 0.0
    %v3086 = vmax.f32 %v2986, 0.0
    %v3087 = vmax.f32 %v2991, 0.0
    %v3088 = vmax.f32 %v2994, 0.0
    %v3089 = vmax.f32 %v2999, 0.0
    %v3090 = vmax.f32 %v3002, 0.0
    %v3091 = vmax.f32 %v3007, 0.0
    %v3092 = vmax.f32 %v3010, 0.0
    %v3093 = vmax.f32 %v3015, 0.0
    %v3094 = vmax.f32 %v3018, 0.0
    %v3095 = vmax.f32 %v3023, 0.0
    %v3096 = vmax.f32 %v3026, 0.0
    %v3097 = vmax.f32 %v3031, 0.0
    %v3098 = vmax.f32 %v3034, 0.0
    %v3099 = vmax.f32 %v3039, 0.0
    %v3100 = vmax.f32 %v3042, 0.0
    %v3101 = vmax.f32 %v3047, 0.0
    %v3102 = vmax.f32 %v3050, 0.0
    %v3103 = vmax.f32 %v3055, 0.0
    %v3104 = vmax.f32 %v3058, 0.0
    %v3105 = vmax.f32 %v3063, 0.0
    %v3106 = vmax.f32 %v3066, 0.0
    %v3107 = vmax.f32 %v3071, 0.0
    %v3108 = vmax.f32 %v3074, 0.0
    %v3109 = vpack.c.bf16 %v3078, %v3077
    %v3110 = vpack.c.bf16 %v3080, %v3079
    %v3111 = vpack.c.bf16 %v3082, %v3081
    %v3112 = vpack.c.bf16 %v3084, %v3083
    %v3113 = vpack.c.bf16 %v3086, %v3085
    %v3114 = vpack.c.bf16 %v3088, %v3087
    %v3115 = vpack.c.bf16 %v3090, %v3089
    %v3116 = vpack.c.bf16 %v3092, %v3091
    %v3117 = vpack.c.bf16 %v3094, %v3093
    %v3118 = vpack.c.bf16 %v3096, %v3095
    %v3119 = vpack.c.bf16 %v3098, %v3097
    %v3120 = vpack.c.bf16 %v3100, %v3099
    %v3121 = vpack.c.bf16 %v3102, %v3101
    %v3122 = vpack.c.bf16 %v3104, %v3103
    %v3123 = vpack.c.bf16 %v3106, %v3105
    %v3124 = vpack.c.bf16 %v3108, %v3107
    %v3125 = vld [vmem:[%s6] sm:$0xf]
    %v3126 = vld [vmem:[%s6 + $0x4] sm:$0xf]
    %v3127 = vld [vmem:[%s16] sm:$0x1]
    %v3129 = vlaneseq
    %v3130 = vshrl.u32 %v3129, 7
    %v3131 = vsub.s32 0, %v3130
    %v3132 = vrot.slane %v3127, %v3131
    %v3136 = vunpack.c.l.b16 %v3125
    %v3137 = vunpack.c.l.b16 %v3126
    %v3138 = vpack.c.b16 %v3137, %v3136
    %v3141 = vsel %vm1006, %v3109, 0
    %v3144 = vsel %vm1006, %v3110, 0
    %v3147 = vsel %vm1006, %v3111, 0
    %v3150 = vsel %vm1006, %v3112, 0
    %v3153 = vsel %vm1006, %v3113, 0
    %v3156 = vsel %vm1006, %v3114, 0
    %v3159 = vsel %vm1006, %v3115, 0
    %v3162 = vsel %vm1006, %v3116, 0
    %v3165 = vsel %vm1006, %v3117, 0
    %v3168 = vsel %vm1006, %v3118, 0
    %v3171 = vsel %vm1006, %v3119, 0
    %v3174 = vsel %vm1006, %v3120, 0
    %v3177 = vsel %vm1006, %v3121, 0
    %v3180 = vsel %vm1006, %v3122, 0
    %v3183 = vsel %vm1006, %v3123, 0
    %v3186 = vsel %vm1006, %v3124, 0
    %3188 = vmatprep.subr.bf16.mxu0 0
    %3189 = vmatpush1.bf16.msra.mxu0 %v3138
    %3190 = vmatprep.subr.bf16.mxu0 0
    %3191 = vmatpush1.bf16.msra.mxu0 0
    %3192 = vmatprep.subr.bf16.mxu0 0
    %3193 = vmatpush1.bf16.msra.mxu0 0
    %3194 = vmatprep.subr.bf16.mxu0 0
    %3195 = vmatpush1.bf16.msra.mxu0 0
    %3196 = vmatprep.subr.bf16.mxu0 0
    %3197 = vmatpush1.bf16.msra.mxu0 0
    %3198 = vmatprep.subr.bf16.mxu0 0
    %3199 = vmatpush1.bf16.msra.mxu0 0
    %3200 = vmatprep.subr.bf16.mxu0 0
    %3201 = vmatpush1.bf16.msra.mxu0 0
    %3202 = vmatprep.subr.bf16.mxu0 0
    %3203 = vmatpush1.bf16.msra.mxu0 0
    %3204 = vmatprep.subr.bf16.mxu0 0
    %3205 = vmatpush1.bf16.msra.mxu0 0
    %3206 = vmatprep.subr.bf16.mxu0 0
    %3207 = vmatpush1.bf16.msra.mxu0 0
    %3208 = vmatprep.subr.bf16.mxu0 0
    %3209 = vmatpush1.bf16.msra.mxu0 0
    %3210 = vmatprep.subr.bf16.mxu0 0
    %3211 = vmatpush1.bf16.msra.mxu0 0
    %3212 = vmatprep.subr.bf16.mxu0 0
    %3213 = vmatpush1.bf16.msra.mxu0 0
    %3214 = vmatprep.subr.bf16.mxu0 0
    %3215 = vmatpush1.bf16.msra.mxu0 0
    %3216 = vmatprep.subr.bf16.mxu0 0
    %3217 = vmatpush1.bf16.msra.mxu0 0
    %3218 = vmatprep.subr.bf16.mxu0 0
    %3219 = vmatpush1.bf16.msra.mxu0 0
    %3220 = vmatprep.mubr.bf16.mxu0 0
    %3221 = vmatmul.mubr.bf16.gmra.mrb[0].mxu0 %v3141
    %v3222 = vpop.f32.mrb[0].mxu0
    %v3223 = vadd.f32 %v3132, %v3222
    %v3224 = vpop.f32.mrb[0].mxu0
    %v3225 = vpop.f32.mrb[0].mxu0
    %v3226 = vadd.f32 %v3132, %v3225
    %v3227 = vpop.f32.mrb[0].mxu0
    %3228 = vmatprep.mubr.bf16.mxu0 0
    %3229 = vmatmul.mubr.bf16.gmra.mrb[0].mxu0 %v3144
    %v3230 = vpop.f32.mrb[0].mxu0
    %v3231 = vadd.f32 %v3132, %v3230
    %v3232 = vpop.f32.mrb[0].mxu0
    %v3233 = vpop.f32.mrb[0].mxu0
    %v3234 = vadd.f32 %v3132, %v3233
    %v3235 = vpop.f32.mrb[0].mxu0
    %3236 = vmatprep.mubr.bf16.mxu0 0
    %3237 = vmatmul.mubr.bf16.gmra.mrb[0].mxu0 %v3147
    %v3238 = vpop.f32.mrb[0].mxu0
    %v3239 = vadd.f32 %v3132, %v3238
    %v3240 = vpop.f32.mrb[0].mxu0
    %v3241 = vpop.f32.mrb[0].mxu0
    %v3242 = vadd.f32 %v3132, %v3241
    %v3243 = vpop.f32.mrb[0].mxu0
    %3244 = vmatprep.mubr.bf16.mxu0 0
    %3245 = vmatmul.mubr.bf16.gmra.mrb[0].mxu0 %v3150
    %v3246 = vpop.f32.mrb[0].mxu0
    %v3247 = vadd.f32 %v3132, %v3246
    %v3248 = vpop.f32.mrb[0].mxu0
    %v3249 = vpop.f32.mrb[0].mxu0
    %v3250 = vadd.f32 %v3132, %v3249
    %v3251 = vpop.f32.mrb[0].mxu0
    %3252 = vmatprep.mubr.bf16.mxu0 0
    %3253 = vmatmul.mubr.bf16.gmra.mrb[0].mxu0 %v3153
    %v3254 = vpop.f32.mrb[0].mxu0
    %v3255 = vadd.f32 %v3132, %v3254
    %v3256 = vpop.f32.mrb[0].mxu0
    %v3257 = vpop.f32.mrb[0].mxu0
    %v3258 = vadd.f32 %v3132, %v3257
    %v3259 = vpop.f32.mrb[0].mxu0
    %3260 = vmatprep.mubr.bf16.mxu0 0
    %3261 = vmatmul.mubr.bf16.gmra.mrb[0].mxu0 %v3156
    %v3262 = vpop.f32.mrb[0].mxu0
    %v3263 = vadd.f32 %v3132, %v3262
    %v3264 = vpop.f32.mrb[0].mxu0
    %v3265 = vpop.f32.mrb[0].mxu0
    %v3266 = vadd.f32 %v3132, %v3265
    %v3267 = vpop.f32.mrb[0].mxu0
    %3268 = vmatprep.mubr.bf16.mxu0 0
    %3269 = vmatmul.mubr.bf16.gmra.mrb[0].mxu0 %v3159
    %v3270 = vpop.f32.mrb[0].mxu0
    %v3271 = vadd.f32 %v3132, %v3270
    %v3272 = vpop.f32.mrb[0].mxu0
    %v3273 = vpop.f32.mrb[0].mxu0
    %v3274 = vadd.f32 %v3132, %v3273
    %v3275 = vpop.f32.mrb[0].mxu0
    %3276 = vmatprep.mubr.bf16.mxu0 0
    %3277 = vmatmul.mubr.bf16.gmra.mrb[0].mxu0 %v3162
    %v3278 = vpop.f32.mrb[0].mxu0
    %v3279 = vadd.f32 %v3132, %v3278
    %v3280 = vpop.f32.mrb[0].mxu0
    %v3281 = vpop.f32.mrb[0].mxu0
    %v3282 = vadd.f32 %v3132, %v3281
    %v3283 = vpop.f32.mrb[0].mxu0
    %3284 = vmatprep.mubr.bf16.mxu0 0
    %3285 = vmatmul.mubr.bf16.gmra.mrb[0].mxu0 %v3165
    %v3286 = vpop.f32.mrb[0].mxu0
    %v3287 = vadd.f32 %v3132, %v3286
    %v3288 = vpop.f32.mrb[0].mxu0
    %v3289 = vpop.f32.mrb[0].mxu0
    %v3290 = vadd.f32 %v3132, %v3289
    %v3291 = vpop.f32.mrb[0].mxu0
    %3292 = vmatprep.mubr.bf16.mxu0 0
    %3293 = vmatmul.mubr.bf16.gmra.mrb[0].mxu0 %v3168
    %v3294 = vpop.f32.mrb[0].mxu0
    %v3295 = vadd.f32 %v3132, %v3294
    %v3296 = vpop.f32.mrb[0].mxu0
    %v3297 = vpop.f32.mrb[0].mxu0
    %v3298 = vadd.f32 %v3132, %v3297
    %v3299 = vpop.f32.mrb[0].mxu0
    %3300 = vmatprep.mubr.bf16.mxu0 0
    %3301 = vmatmul.mubr.bf16.gmra.mrb[0].mxu0 %v3171
    %v3302 = vpop.f32.mrb[0].mxu0
    %v3303 = vadd.f32 %v3132, %v3302
    %v3304 = vpop.f32.mrb[0].mxu0
    %v3305 = vpop.f32.mrb[0].mxu0
    %v3306 = vadd.f32 %v3132, %v3305
    %v3307 = vpop.f32.mrb[0].mxu0
    %3308 = vmatprep.mubr.bf16.mxu0 0
    %3309 = vmatmul.mubr.bf16.gmra.mrb[0].mxu0 %v3174
    %v3310 = vpop.f32.mrb[0].mxu0
    %v3311 = vadd.f32 %v3132, %v3310
    %v3312 = vpop.f32.mrb[0].mxu0
    %v3313 = vpop.f32.mrb[0].mxu0
    %v3314 = vadd.f32 %v3132, %v3313
    %v3315 = vpop.f32.mrb[0].mxu0
    %3316 = vmatprep.mubr.bf16.mxu0 0
    %3317 = vmatmul.mubr.bf16.gmra.mrb[0].mxu0 %v3177
    %v3318 = vpop.f32.mrb[0].mxu0
    %v3319 = vadd.f32 %v3132, %v3318
    %v3320 = vpop.f32.mrb[0].mxu0
    %v3321 = vpop.f32.mrb[0].mxu0
    %v3322 = vadd.f32 %v3132, %v3321
    %v3323 = vpop.f32.mrb[0].mxu0
    %3324 = vmatprep.mubr.bf16.mxu0 0
    %3325 = vmatmul.mubr.bf16.gmra.mrb[0].mxu0 %v3180
    %v3326 = vpop.f32.mrb[0].mxu0
    %v3327 = vadd.f32 %v3132, %v3326
    %v3328 = vpop.f32.mrb[0].mxu0
    %v3329 = vpop.f32.mrb[0].mxu0
    %v3330 = vadd.f32 %v3132, %v3329
    %v3331 = vpop.f32.mrb[0].mxu0
    %3332 = vmatprep.mubr.bf16.mxu0 0
    %3333 = vmatmul.mubr.bf16.gmra.mrb[0].mxu0 %v3183
    %v3334 = vpop.f32.mrb[0].mxu0
    %v3335 = vadd.f32 %v3132, %v3334
    %v3336 = vpop.f32.mrb[0].mxu0
    %v3337 = vpop.f32.mrb[0].mxu0
    %v3338 = vadd.f32 %v3132, %v3337
    %v3339 = vpop.f32.mrb[0].mxu0
    %3340 = vmatprep.mubr.bf16.mxu0 0
    %3341 = vmatmul.mubr.bf16.gmra.mrb[0].mxu0 %v3186
    %v3342 = vpop.f32.mrb[0].mxu0
    %v3343 = vadd.f32 %v3132, %v3342
    %v3344 = vpop.f32.mrb[0].mxu0
    %v3345 = vpop.f32.mrb[0].mxu0
    %v3346 = vadd.f32 %v3132, %v3345
    %v3347 = vpop.f32.mrb[0].mxu0
    %3348 = vdwg.mxu0
    %v3349 = vmax.f32 %v3223, 0.0
    %v3350 = vmax.f32 %v3226, 0.0
    %v3351 = vmax.f32 %v3231, 0.0
    %v3352 = vmax.f32 %v3234, 0.0
    %v3353 = vmax.f32 %v3239, 0.0
    %v3354 = vmax.f32 %v3242, 0.0
    %v3355 = vmax.f32 %v3247, 0.0
    %v3356 = vmax.f32 %v3250, 0.0
    %v3357 = vmax.f32 %v3255, 0.0
    %v3358 = vmax.f32 %v3258, 0.0
    %v3359 = vmax.f32 %v3263, 0.0
    %v3360 = vmax.f32 %v3266, 0.0
    %v3361 = vmax.f32 %v3271, 0.0
    %v3362 = vmax.f32 %v3274, 0.0
    %v3363 = vmax.f32 %v3279, 0.0
    %v3364 = vmax.f32 %v3282, 0.0
    %v3365 = vmax.f32 %v3287, 0.0
    %v3366 = vmax.f32 %v3290, 0.0
    %v3367 = vmax.f32 %v3295, 0.0
    %v3368 = vmax.f32 %v3298, 0.0
    %v3369 = vmax.f32 %v3303, 0.0
    %v3370 = vmax.f32 %v3306, 0.0
    %v3371 = vmax.f32 %v3311, 0.0
    %v3372 = vmax.f32 %v3314, 0.0
    %v3373 = vmax.f32 %v3319, 0.0
    %v3374 = vmax.f32 %v3322, 0.0
    %v3375 = vmax.f32 %v3327, 0.0
    %v3376 = vmax.f32 %v3330, 0.0
    %v3377 = vmax.f32 %v3335, 0.0
    %v3378 = vmax.f32 %v3338, 0.0
    %v3379 = vmax.f32 %v3343, 0.0
    %v3380 = vmax.f32 %v3346, 0.0
    %v3381 = vpack.c.bf16 %v3350, %v3349
    %v3382 = vpack.c.bf16 %v3352, %v3351
    %v3383 = vpack.c.bf16 %v3354, %v3353
    %v3384 = vpack.c.bf16 %v3356, %v3355
    %v3385 = vpack.c.bf16 %v3358, %v3357
    %v3386 = vpack.c.bf16 %v3360, %v3359
    %v3387 = vpack.c.bf16 %v3362, %v3361
    %v3388 = vpack.c.bf16 %v3364, %v3363
    %v3389 = vpack.c.bf16 %v3366, %v3365
    %v3390 = vpack.c.bf16 %v3368, %v3367
    %v3391 = vpack.c.bf16 %v3370, %v3369
    %v3392 = vpack.c.bf16 %v3372, %v3371
    %v3393 = vpack.c.bf16 %v3374, %v3373
    %v3394 = vpack.c.bf16 %v3376, %v3375
    %v3395 = vpack.c.bf16 %v3378, %v3377
    %v3396 = vpack.c.bf16 %v3380, %v3379
    %v3397 = vld [vmem:[%s7] sm:$0xf]
    %v3398 = vld [vmem:[%s7 + $0x4] sm:$0xf]
    %v3399 = vld [vmem:[%s7 + $0x8] sm:$0xf]
    %v3400 = vld [vmem:[%s7 + $0xc] sm:$0xf]
    %v3401 = vld [vmem:[%s17] sm:$0x1]
    %v3403 = vlaneseq
    %v3404 = vshrl.u32 %v3403, 7
    %v3405 = vsub.s32 0, %v3404
    %v3406 = vrot.slane %v3401, %v3405
    %v3412 = vunpack.c.l.b16 %v3397
    %v3413 = vunpack.c.l.b16 %v3398
    %v3414 = vunpack.c.l.b16 %v3399
    %v3415 = vunpack.c.l.b16 %v3400
    %v3416 = vpack.c.b16 %v3413, %v3412
    %v3417 = vpack.c.b16 %v3415, %v3414
    %v3421 = vsel %vm2867, %v3381, 0
    %v3424 = vsel %vm2867, %v3382, 0
    %v3427 = vsel %vm2867, %v3383, 0
    %v3430 = vsel %vm2867, %v3384, 0
    %v3433 = vsel %vm2867, %v3385, 0
    %v3436 = vsel %vm2867, %v3386, 0
    %v3439 = vsel %vm2867, %v3387, 0
    %v3442 = vsel %vm2867, %v3388, 0
    %v3445 = vsel %vm2867, %v3389, 0
    %v3448 = vsel %vm2867, %v3390, 0
    %v3451 = vsel %vm2867, %v3391, 0
    %v3454 = vsel %vm2867, %v3392, 0
    %v3457 = vsel %vm2867, %v3393, 0
    %v3460 = vsel %vm2867, %v3394, 0
    %v3463 = vsel %vm2867, %v3395, 0
    %v3466 = vsel %vm2867, %v3396, 0
    %3468 = vmatprep.subr.bf16.mxu0 0
    %3469 = vmatpush1.bf16.msra.mxu0 %v3416
    %3470 = vmatprep.subr.bf16.mxu0 0
    %3471 = vmatpush1.bf16.msra.mxu0 %v3417
    %3472 = vmatprep.subr.bf16.mxu0 0
    %3473 = vmatpush1.bf16.msra.mxu0 0
    %3474 = vmatprep.subr.bf16.mxu0 0
    %3475 = vmatpush1.bf16.msra.mxu0 0
    %3476 = vmatprep.subr.bf16.mxu0 0
    %3477 = vmatpush1.bf16.msra.mxu0 0
    %3478 = vmatprep.subr.bf16.mxu0 0
    %3479 = vmatpush1.bf16.msra.mxu0 0
    %3480 = vmatprep.subr.bf16.mxu0 0
    %3481 = vmatpush1.bf16.msra.mxu0 0
    %3482 = vmatprep.subr.bf16.mxu0 0
    %3483 = vmatpush1.bf16.msra.mxu0 0
    %3484 = vmatprep.subr.bf16.mxu0 0
    %3485 = vmatpush1.bf16.msra.mxu0 0
    %3486 = vmatprep.subr.bf16.mxu0 0
    %3487 = vmatpush1.bf16.msra.mxu0 0
    %3488 = vmatprep.subr.bf16.mxu0 0
    %3489 = vmatpush1.bf16.msra.mxu0 0
    %3490 = vmatprep.subr.bf16.mxu0 0
    %3491 = vmatpush1.bf16.msra.mxu0 0
    %3492 = vmatprep.subr.bf16.mxu0 0
    %3493 = vmatpush1.bf16.msra.mxu0 0
    %3494 = vmatprep.subr.bf16.mxu0 0
    %3495 = vmatpush1.bf16.msra.mxu0 0
    %3496 = vmatprep.subr.bf16.mxu0 0
    %3497 = vmatpush1.bf16.msra.mxu0 0
    %3498 = vmatprep.subr.bf16.mxu0 0
    %3499 = vmatpush1.bf16.msra.mxu0 0
    %3500 = vmatprep.mubr.bf16.mxu0 0
    %3501 = vmatmul.mubr.bf16.gmra.mrb[0].mxu0 %v3421
    %v3502 = vpop.f32.mrb[0].mxu0
    %v3503 = vadd.f32 %v3406, %v3502
    %v3504 = vpop.f32.mrb[0].mxu0
    %v3505 = vpop.f32.mrb[0].mxu0
    %v3506 = vadd.f32 %v3406, %v3505
    %v3507 = vpop.f32.mrb[0].mxu0
    %3508 = vmatprep.mubr.bf16.mxu0 0
    %3509 = vmatmul.mubr.bf16.gmra.mrb[0].mxu0 %v3424
    %v3510 = vpop.f32.mrb[0].mxu0
    %v3511 = vadd.f32 %v3406, %v3510
    %v3512 = vpop.f32.mrb[0].mxu0
    %v3513 = vpop.f32.mrb[0].mxu0
    %v3514 = vadd.f32 %v3406, %v3513
    %v3515 = vpop.f32.mrb[0].mxu0
    %3516 = vmatprep.mubr.bf16.mxu0 0
    %3517 = vmatmul.mubr.bf16.gmra.mrb[0].mxu0 %v3427
    %v3518 = vpop.f32.mrb[0].mxu0
    %v3519 = vadd.f32 %v3406, %v3518
    %v3520 = vpop.f32.mrb[0].mxu0
    %v3521 = vpop.f32.mrb[0].mxu0
    %v3522 = vadd.f32 %v3406, %v3521
    %v3523 = vpop.f32.mrb[0].mxu0
    %3524 = vmatprep.mubr.bf16.mxu0 0
    %3525 = vmatmul.mubr.bf16.gmra.mrb[0].mxu0 %v3430
    %v3526 = vpop.f32.mrb[0].mxu0
    %v3527 = vadd.f32 %v3406, %v3526
    %v3528 = vpop.f32.mrb[0].mxu0
    %v3529 = vpop.f32.mrb[0].mxu0
    %v3530 = vadd.f32 %v3406, %v3529
    %v3531 = vpop.f32.mrb[0].mxu0
    %3532 = vmatprep.mubr.bf16.mxu0 0
    %3533 = vmatmul.mubr.bf16.gmra.mrb[0].mxu0 %v3433
    %v3534 = vpop.f32.mrb[0].mxu0
    %v3535 = vadd.f32 %v3406, %v3534
    %v3536 = vpop.f32.mrb[0].mxu0
    %v3537 = vpop.f32.mrb[0].mxu0
    %v3538 = vadd.f32 %v3406, %v3537
    %v3539 = vpop.f32.mrb[0].mxu0
    %3540 = vmatprep.mubr.bf16.mxu0 0
    %3541 = vmatmul.mubr.bf16.gmra.mrb[0].mxu0 %v3436
    %v3542 = vpop.f32.mrb[0].mxu0
    %v3543 = vadd.f32 %v3406, %v3542
    %v3544 = vpop.f32.mrb[0].mxu0
    %v3545 = vpop.f32.mrb[0].mxu0
    %v3546 = vadd.f32 %v3406, %v3545
    %v3547 = vpop.f32.mrb[0].mxu0
    %3548 = vmatprep.mubr.bf16.mxu0 0
    %3549 = vmatmul.mubr.bf16.gmra.mrb[0].mxu0 %v3439
    %v3550 = vpop.f32.mrb[0].mxu0
    %v3551 = vadd.f32 %v3406, %v3550
    %v3552 = vpop.f32.mrb[0].mxu0
    %v3553 = vpop.f32.mrb[0].mxu0
    %v3554 = vadd.f32 %v3406, %v3553
    %v3555 = vpop.f32.mrb[0].mxu0
    %3556 = vmatprep.mubr.bf16.mxu0 0
    %3557 = vmatmul.mubr.bf16.gmra.mrb[0].mxu0 %v3442
    %v3558 = vpop.f32.mrb[0].mxu0
    %v3559 = vadd.f32 %v3406, %v3558
    %v3560 = vpop.f32.mrb[0].mxu0
    %v3561 = vpop.f32.mrb[0].mxu0
    %v3562 = vadd.f32 %v3406, %v3561
    %v3563 = vpop.f32.mrb[0].mxu0
    %3564 = vmatprep.mubr.bf16.mxu0 0
    %3565 = vmatmul.mubr.bf16.gmra.mrb[0].mxu0 %v3445
    %v3566 = vpop.f32.mrb[0].mxu0
    %v3567 = vadd.f32 %v3406, %v3566
    %v3568 = vpop.f32.mrb[0].mxu0
    %v3569 = vpop.f32.mrb[0].mxu0
    %v3570 = vadd.f32 %v3406, %v3569
    %v3571 = vpop.f32.mrb[0].mxu0
    %3572 = vmatprep.mubr.bf16.mxu0 0
    %3573 = vmatmul.mubr.bf16.gmra.mrb[0].mxu0 %v3448
    %v3574 = vpop.f32.mrb[0].mxu0
    %v3575 = vadd.f32 %v3406, %v3574
    %v3576 = vpop.f32.mrb[0].mxu0
    %v3577 = vpop.f32.mrb[0].mxu0
    %v3578 = vadd.f32 %v3406, %v3577
    %v3579 = vpop.f32.mrb[0].mxu0
    %3580 = vmatprep.mubr.bf16.mxu0 0
    %3581 = vmatmul.mubr.bf16.gmra.mrb[0].mxu0 %v3451
    %v3582 = vpop.f32.mrb[0].mxu0
    %v3583 = vadd.f32 %v3406, %v3582
    %v3584 = vpop.f32.mrb[0].mxu0
    %v3585 = vpop.f32.mrb[0].mxu0
    %v3586 = vadd.f32 %v3406, %v3585
    %v3587 = vpop.f32.mrb[0].mxu0
    %3588 = vmatprep.mubr.bf16.mxu0 0
    %3589 = vmatmul.mubr.bf16.gmra.mrb[0].mxu0 %v3454
    %v3590 = vpop.f32.mrb[0].mxu0
    %v3591 = vadd.f32 %v3406, %v3590
    %v3592 = vpop.f32.mrb[0].mxu0
    %v3593 = vpop.f32.mrb[0].mxu0
    %v3594 = vadd.f32 %v3406, %v3593
    %v3595 = vpop.f32.mrb[0].mxu0
    %3596 = vmatprep.mubr.bf16.mxu0 0
    %3597 = vmatmul.mubr.bf16.gmra.mrb[0].mxu0 %v3457
    %v3598 = vpop.f32.mrb[0].mxu0
    %v3599 = vadd.f32 %v3406, %v3598
    %v3600 = vpop.f32.mrb[0].mxu0
    %v3601 = vpop.f32.mrb[0].mxu0
    %v3602 = vadd.f32 %v3406, %v3601
    %v3603 = vpop.f32.mrb[0].mxu0
    %3604 = vmatprep.mubr.bf16.mxu0 0
    %3605 = vmatmul.mubr.bf16.gmra.mrb[0].mxu0 %v3460
    %v3606 = vpop.f32.mrb[0].mxu0
    %v3607 = vadd.f32 %v3406, %v3606
    %v3608 = vpop.f32.mrb[0].mxu0
    %v3609 = vpop.f32.mrb[0].mxu0
    %v3610 = vadd.f32 %v3406, %v3609
    %v3611 = vpop.f32.mrb[0].mxu0
    %3612 = vmatprep.mubr.bf16.mxu0 0
    %3613 = vmatmul.mubr.bf16.gmra.mrb[0].mxu0 %v3463
    %v3614 = vpop.f32.mrb[0].mxu0
    %v3615 = vadd.f32 %v3406, %v3614
    %v3616 = vpop.f32.mrb[0].mxu0
    %v3617 = vpop.f32.mrb[0].mxu0
    %v3618 = vadd.f32 %v3406, %v3617
    %v3619 = vpop.f32.mrb[0].mxu0
    %3620 = vmatprep.mubr.bf16.mxu0 0
    %3621 = vmatmul.mubr.bf16.gmra.mrb[0].mxu0 %v3466
    %v3622 = vpop.f32.mrb[0].mxu0
    %v3623 = vadd.f32 %v3406, %v3622
    %v3624 = vpop.f32.mrb[0].mxu0
    %v3625 = vpop.f32.mrb[0].mxu0
    %v3626 = vadd.f32 %v3406, %v3625
    %v3627 = vpop.f32.mrb[0].mxu0
    %3628 = vdwg.mxu0
    %v3629 = vmax.f32 %v3503, 0.0
    %v3630 = vmax.f32 %v3506, 0.0
    %v3631 = vmax.f32 %v3511, 0.0
    %v3632 = vmax.f32 %v3514, 0.0
    %v3633 = vmax.f32 %v3519, 0.0
    %v3634 = vmax.f32 %v3522, 0.0
    %v3635 = vmax.f32 %v3527, 0.0
    %v3636 = vmax.f32 %v3530, 0.0
    %v3637 = vmax.f32 %v3535, 0.0
    %v3638 = vmax.f32 %v3538, 0.0
    %v3639 = vmax.f32 %v3543, 0.0
    %v3640 = vmax.f32 %v3546, 0.0
    %v3641 = vmax.f32 %v3551, 0.0
    %v3642 = vmax.f32 %v3554, 0.0
    %v3643 = vmax.f32 %v3559, 0.0
    %v3644 = vmax.f32 %v3562, 0.0
    %v3645 = vmax.f32 %v3567, 0.0
    %v3646 = vmax.f32 %v3570, 0.0
    %v3647 = vmax.f32 %v3575, 0.0
    %v3648 = vmax.f32 %v3578, 0.0
    %v3649 = vmax.f32 %v3583, 0.0
    %v3650 = vmax.f32 %v3586, 0.0
    %v3651 = vmax.f32 %v3591, 0.0
    %v3652 = vmax.f32 %v3594, 0.0
    %v3653 = vmax.f32 %v3599, 0.0
    %v3654 = vmax.f32 %v3602, 0.0
    %v3655 = vmax.f32 %v3607, 0.0
    %v3656 = vmax.f32 %v3610, 0.0
    %v3657 = vmax.f32 %v3615, 0.0
    %v3658 = vmax.f32 %v3618, 0.0
    %v3659 = vmax.f32 %v3623, 0.0
    %v3660 = vmax.f32 %v3626, 0.0
    %v3661 = vpack.c.bf16 %v3630, %v3629
    %v3662 = vpack.c.bf16 %v3632, %v3631
    %v3663 = vpack.c.bf16 %v3634, %v3633
    %v3664 = vpack.c.bf16 %v3636, %v3635
    %v3665 = vpack.c.bf16 %v3638, %v3637
    %v3666 = vpack.c.bf16 %v3640, %v3639
    %v3667 = vpack.c.bf16 %v3642, %v3641
    %v3668 = vpack.c.bf16 %v3644, %v3643
    %v3669 = vpack.c.bf16 %v3646, %v3645
    %v3670 = vpack.c.bf16 %v3648, %v3647
    %v3671 = vpack.c.bf16 %v3650, %v3649
    %v3672 = vpack.c.bf16 %v3652, %v3651
    %v3673 = vpack.c.bf16 %v3654, %v3653
    %v3674 = vpack.c.bf16 %v3656, %v3655
    %v3675 = vpack.c.bf16 %v3658, %v3657
    %v3676 = vpack.c.bf16 %v3660, %v3659
    %v3677 = vld [vmem:[%s8] sm:$0xf]
    %v3678 = vld [vmem:[%s8 + $0x4] sm:$0xf]
    %v3679 = vld [vmem:[%s8 + $0x8] sm:$0xf]
    %v3680 = vld [vmem:[%s8 + $0xc] sm:$0xf]
    %v3681 = vld [vmem:[%s8 + $0x10] sm:$0xf]
    %v3682 = vld [vmem:[%s8 + $0x14] sm:$0xf]
    %v3683 = vld [vmem:[%s8 + $0x18] sm:$0xf]
    %v3684 = vld [vmem:[%s8 + $0x1c] sm:$0xf]
    %v3685 = vld [vmem:[%s18] sm:$0x1]
    %v3687 = vlaneseq
    %v3688 = vshrl.u32 %v3687, 7
    %v3689 = vsub.s32 0, %v3688
    %v3690 = vrot.slane %v3685, %v3689
    %v3700 = vunpack.c.l.b16 %v3677
    %v3701 = vunpack.c.l.b16 %v3678
    %v3702 = vunpack.c.l.b16 %v3679
    %v3703 = vunpack.c.l.b16 %v3680
    %v3704 = vunpack.c.l.b16 %v3681
    %v3705 = vunpack.c.l.b16 %v3682
    %v3706 = vunpack.c.l.b16 %v3683
    %v3707 = vunpack.c.l.b16 %v3684
    %v3708 = vpack.c.b16 %v3701, %v3700
    %v3709 = vpack.c.b16 %v3703, %v3702
    %v3710 = vpack.c.b16 %v3705, %v3704
    %v3711 = vpack.c.b16 %v3707, %v3706
    %v3717 = vsel %vm2586, %v3661, 0
    %v3720 = vsel %vm2586, %v3662, 0
    %v3723 = vsel %vm2586, %v3663, 0
    %v3726 = vsel %vm2586, %v3664, 0
    %v3729 = vsel %vm2586, %v3665, 0
    %v3732 = vsel %vm2586, %v3666, 0
    %v3735 = vsel %vm2586, %v3667, 0
    %v3738 = vsel %vm2586, %v3668, 0
    %v3741 = vsel %vm2586, %v3669, 0
    %v3744 = vsel %vm2586, %v3670, 0
    %v3747 = vsel %vm2586, %v3671, 0
    %v3750 = vsel %vm2586, %v3672, 0
    %v3753 = vsel %vm2586, %v3673, 0
    %v3756 = vsel %vm2586, %v3674, 0
    %v3759 = vsel %vm2586, %v3675, 0
    %v3762 = vsel %vm2586, %v3676, 0
    %3764 = vmatprep.subr.bf16.mxu0 0
    %3765 = vmatpush1.bf16.msra.mxu0 %v3708
    %3766 = vmatprep.subr.bf16.mxu0 0
    %3767 = vmatpush1.bf16.msra.mxu0 %v3709
    %3768 = vmatprep.subr.bf16.mxu0 0
    %3769 = vmatpush1.bf16.msra.mxu0 %v3710
    %3770 = vmatprep.subr.bf16.mxu0 0
    %3771 = vmatpush1.bf16.msra.mxu0 %v3711
    %3772 = vmatprep.subr.bf16.mxu0 0
    %3773 = vmatpush1.bf16.msra.mxu0 0
    %3774 = vmatprep.subr.bf16.mxu0 0
    %3775 = vmatpush1.bf16.msra.mxu0 0
    %3776 = vmatprep.subr.bf16.mxu0 0
    %3777 = vmatpush1.bf16.msra.mxu0 0
    %3778 = vmatprep.subr.bf16.mxu0 0
    %3779 = vmatpush1.bf16.msra.mxu0 0
    %3780 = vmatprep.subr.bf16.mxu0 0
    %3781 = vmatpush1.bf16.msra.mxu0 0
    %3782 = vmatprep.subr.bf16.mxu0 0
    %3783 = vmatpush1.bf16.msra.mxu0 0
    %3784 = vmatprep.subr.bf16.mxu0 0
    %3785 = vmatpush1.bf16.msra.mxu0 0
    %3786 = vmatprep.subr.bf16.mxu0 0
    %3787 = vmatpush1.bf16.msra.mxu0 0
    %3788 = vmatprep.subr.bf16.mxu0 0
    %3789 = vmatpush1.bf16.msra.mxu0 0
    %3790 = vmatprep.subr.bf16.mxu0 0
    %3791 = vmatpush1.bf16.msra.mxu0 0
    %3792 = vmatprep.subr.bf16.mxu0 0
    %3793 = vmatpush1.bf16.msra.mxu0 0
    %3794 = vmatprep.subr.bf16.mxu0 0
    %3795 = vmatpush1.bf16.msra.mxu0 0
    %3796 = vmatprep.mubr.bf16.mxu0 0
    %3797 = vmatmul.mubr.bf16.gmra.mrb[0].mxu0 %v3717
    %v3798 = vpop.f32.mrb[0].mxu0
    %v3799 = vadd.f32 %v3690, %v3798
    %v3800 = vpop.f32.mrb[0].mxu0
    %v3801 = vpop.f32.mrb[0].mxu0
    %v3802 = vadd.f32 %v3690, %v3801
    %v3803 = vpop.f32.mrb[0].mxu0
    %3804 = vmatprep.mubr.bf16.mxu0 0
    %3805 = vmatmul.mubr.bf16.gmra.mrb[0].mxu0 %v3720
    %v3806 = vpop.f32.mrb[0].mxu0
    %v3807 = vadd.f32 %v3690, %v3806
    %v3808 = vpop.f32.mrb[0].mxu0
    %v3809 = vpop.f32.mrb[0].mxu0
    %v3810 = vadd.f32 %v3690, %v3809
    %v3811 = vpop.f32.mrb[0].mxu0
    %3812 = vmatprep.mubr.bf16.mxu0 0
    %3813 = vmatmul.mubr.bf16.gmra.mrb[0].mxu0 %v3723
    %v3814 = vpop.f32.mrb[0].mxu0
    %v3815 = vadd.f32 %v3690, %v3814
    %v3816 = vpop.f32.mrb[0].mxu0
    %v3817 = vpop.f32.mrb[0].mxu0
    %v3818 = vadd.f32 %v3690, %v3817
    %v3819 = vpop.f32.mrb[0].mxu0
    %3820 = vmatprep.mubr.bf16.mxu0 0
    %3821 = vmatmul.mubr.bf16.gmra.mrb[0].mxu0 %v3726
    %v3822 = vpop.f32.mrb[0].mxu0
    %v3823 = vadd.f32 %v3690, %v3822
    %v3824 = vpop.f32.mrb[0].mxu0
    %v3825 = vpop.f32.mrb[0].mxu0
    %v3826 = vadd.f32 %v3690, %v3825
    %v3827 = vpop.f32.mrb[0].mxu0
    %3828 = vmatprep.mubr.bf16.mxu0 0
    %3829 = vmatmul.mubr.bf16.gmra.mrb[0].mxu0 %v3729
    %v3830 = vpop.f32.mrb[0].mxu0
    %v3831 = vadd.f32 %v3690, %v3830
    %v3832 = vpop.f32.mrb[0].mxu0
    %v3833 = vpop.f32.mrb[0].mxu0
    %v3834 = vadd.f32 %v3690, %v3833
    %v3835 = vpop.f32.mrb[0].mxu0
    %3836 = vmatprep.mubr.bf16.mxu0 0
    %3837 = vmatmul.mubr.bf16.gmra.mrb[0].mxu0 %v3732
    %v3838 = vpop.f32.mrb[0].mxu0
    %v3839 = vadd.f32 %v3690, %v3838
    %v3840 = vpop.f32.mrb[0].mxu0
    %v3841 = vpop.f32.mrb[0].mxu0
    %v3842 = vadd.f32 %v3690, %v3841
    %v3843 = vpop.f32.mrb[0].mxu0
    %3844 = vmatprep.mubr.bf16.mxu0 0
    %3845 = vmatmul.mubr.bf16.gmra.mrb[0].mxu0 %v3735
    %v3846 = vpop.f32.mrb[0].mxu0
    %v3847 = vadd.f32 %v3690, %v3846
    %v3848 = vpop.f32.mrb[0].mxu0
    %v3849 = vpop.f32.mrb[0].mxu0
    %v3850 = vadd.f32 %v3690, %v3849
    %v3851 = vpop.f32.mrb[0].mxu0
    %3852 = vmatprep.mubr.bf16.mxu0 0
    %3853 = vmatmul.mubr.bf16.gmra.mrb[0].mxu0 %v3738
    %v3854 = vpop.f32.mrb[0].mxu0
    %v3855 = vadd.f32 %v3690, %v3854
    %v3856 = vpop.f32.mrb[0].mxu0
    %v3857 = vpop.f32.mrb[0].mxu0
    %v3858 = vadd.f32 %v3690, %v3857
    %v3859 = vpop.f32.mrb[0].mxu0
    %3860 = vmatprep.mubr.bf16.mxu0 0
    %3861 = vmatmul.mubr.bf16.gmra.mrb[0].mxu0 %v3741
    %v3862 = vpop.f32.mrb[0].mxu0
    %v3863 = vadd.f32 %v3690, %v3862
    %v3864 = vpop.f32.mrb[0].mxu0
    %v3865 = vpop.f32.mrb[0].mxu0
    %v3866 = vadd.f32 %v3690, %v3865
    %v3867 = vpop.f32.mrb[0].mxu0
    %3868 = vmatprep.mubr.bf16.mxu0 0
    %3869 = vmatmul.mubr.bf16.gmra.mrb[0].mxu0 %v3744
    %v3870 = vpop.f32.mrb[0].mxu0
    %v3871 = vadd.f32 %v3690, %v3870
    %v3872 = vpop.f32.mrb[0].mxu0
    %v3873 = vpop.f32.mrb[0].mxu0
    %v3874 = vadd.f32 %v3690, %v3873
    %v3875 = vpop.f32.mrb[0].mxu0
    %3876 = vmatprep.mubr.bf16.mxu0 0
    %3877 = vmatmul.mubr.bf16.gmra.mrb[0].mxu0 %v3747
    %v3878 = vpop.f32.mrb[0].mxu0
    %v3879 = vadd.f32 %v3690, %v3878
    %v3880 = vpop.f32.mrb[0].mxu0
    %v3881 = vpop.f32.mrb[0].mxu0
    %v3882 = vadd.f32 %v3690, %v3881
    %v3883 = vpop.f32.mrb[0].mxu0
    %3884 = vmatprep.mubr.bf16.mxu0 0
    %3885 = vmatmul.mubr.bf16.gmra.mrb[0].mxu0 %v3750
    %v3886 = vpop.f32.mrb[0].mxu0
    %v3887 = vadd.f32 %v3690, %v3886
    %v3888 = vpop.f32.mrb[0].mxu0
    %v3889 = vpop.f32.mrb[0].mxu0
    %v3890 = vadd.f32 %v3690, %v3889
    %v3891 = vpop.f32.mrb[0].mxu0
    %3892 = vmatprep.mubr.bf16.mxu0 0
    %3893 = vmatmul.mubr.bf16.gmra.mrb[0].mxu0 %v3753
    %v3894 = vpop.f32.mrb[0].mxu0
    %v3895 = vadd.f32 %v3690, %v3894
    %v3896 = vpop.f32.mrb[0].mxu0
    %v3897 = vpop.f32.mrb[0].mxu0
    %v3898 = vadd.f32 %v3690, %v3897
    %v3899 = vpop.f32.mrb[0].mxu0
    %3900 = vmatprep.mubr.bf16.mxu0 0
    %3901 = vmatmul.mubr.bf16.gmra.mrb[0].mxu0 %v3756
    %v3902 = vpop.f32.mrb[0].mxu0
    %v3903 = vadd.f32 %v3690, %v3902
    %v3904 = vpop.f32.mrb[0].mxu0
    %v3905 = vpop.f32.mrb[0].mxu0
    %v3906 = vadd.f32 %v3690, %v3905
    %v3907 = vpop.f32.mrb[0].mxu0
    %3908 = vmatprep.mubr.bf16.mxu0 0
    %3909 = vmatmul.mubr.bf16.gmra.mrb[0].mxu0 %v3759
    %v3910 = vpop.f32.mrb[0].mxu0
    %v3911 = vadd.f32 %v3690, %v3910
    %v3912 = vpop.f32.mrb[0].mxu0
    %v3913 = vpop.f32.mrb[0].mxu0
    %v3914 = vadd.f32 %v3690, %v3913
    %v3915 = vpop.f32.mrb[0].mxu0
    %3916 = vmatprep.mubr.bf16.mxu0 0
    %3917 = vmatmul.mubr.bf16.gmra.mrb[0].mxu0 %v3762
    %v3918 = vpop.f32.mrb[0].mxu0
    %v3919 = vadd.f32 %v3690, %v3918
    %v3920 = vpop.f32.mrb[0].mxu0
    %v3921 = vpop.f32.mrb[0].mxu0
    %v3922 = vadd.f32 %v3690, %v3921
    %v3923 = vpop.f32.mrb[0].mxu0
    %3924 = vdwg.mxu0
    %v3925 = vmax.f32 %v3799, 0.0
    %v3926 = vmax.f32 %v3802, 0.0
    %v3927 = vmax.f32 %v3807, 0.0
    %v3928 = vmax.f32 %v3810, 0.0
    %v3929 = vmax.f32 %v3815, 0.0
    %v3930 = vmax.f32 %v3818, 0.0
    %v3931 = vmax.f32 %v3823, 0.0
    %v3932 = vmax.f32 %v3826, 0.0
    %v3933 = vmax.f32 %v3831, 0.0
    %v3934 = vmax.f32 %v3834, 0.0
    %v3935 = vmax.f32 %v3839, 0.0
    %v3936 = vmax.f32 %v3842, 0.0
    %v3937 = vmax.f32 %v3847, 0.0
    %v3938 = vmax.f32 %v3850, 0.0
    %v3939 = vmax.f32 %v3855, 0.0
    %v3940 = vmax.f32 %v3858, 0.0
    %v3941 = vmax.f32 %v3863, 0.0
    %v3942 = vmax.f32 %v3866, 0.0
    %v3943 = vmax.f32 %v3871, 0.0
    %v3944 = vmax.f32 %v3874, 0.0
    %v3945 = vmax.f32 %v3879, 0.0
    %v3946 = vmax.f32 %v3882, 0.0
    %v3947 = vmax.f32 %v3887, 0.0
    %v3948 = vmax.f32 %v3890, 0.0
    %v3949 = vmax.f32 %v3895, 0.0
    %v3950 = vmax.f32 %v3898, 0.0
    %v3951 = vmax.f32 %v3903, 0.0
    %v3952 = vmax.f32 %v3906, 0.0
    %v3953 = vmax.f32 %v3911, 0.0
    %v3954 = vmax.f32 %v3914, 0.0
    %v3955 = vmax.f32 %v3919, 0.0
    %v3956 = vmax.f32 %v3922, 0.0
    %v3957 = vpack.c.bf16 %v3926, %v3925
    %v3958 = vpack.c.bf16 %v3928, %v3927
    %v3959 = vpack.c.bf16 %v3930, %v3929
    %v3960 = vpack.c.bf16 %v3932, %v3931
    %v3961 = vpack.c.bf16 %v3934, %v3933
    %v3962 = vpack.c.bf16 %v3936, %v3935
    %v3963 = vpack.c.bf16 %v3938, %v3937
    %v3964 = vpack.c.bf16 %v3940, %v3939
    %v3965 = vpack.c.bf16 %v3942, %v3941
    %v3966 = vpack.c.bf16 %v3944, %v3943
    %v3967 = vpack.c.bf16 %v3946, %v3945
    %v3968 = vpack.c.bf16 %v3948, %v3947
    %v3969 = vpack.c.bf16 %v3950, %v3949
    %v3970 = vpack.c.bf16 %v3952, %v3951
    %v3971 = vpack.c.bf16 %v3954, %v3953
    %v3972 = vpack.c.bf16 %v3956, %v3955
    %v3973 = vld [vmem:[%s9] sm:$0xff]
    %v3974 = vld [vmem:[%s9 + $0x8] sm:$0xff]
    %v3975 = vld [vmem:[%s9 + $0x10] sm:$0xff]
    %v3976 = vld [vmem:[%s9 + $0x18] sm:$0xff]
    %v3977 = vld [vmem:[%s9 + $0x20] sm:$0xff]
    %v3978 = vld [vmem:[%s9 + $0x28] sm:$0xff]
    %v3979 = vld [vmem:[%s9 + $0x30] sm:$0xff]
    %v3980 = vld [vmem:[%s9 + $0x38] sm:$0xff]
    %v3981 = vld [vmem:[%s9 + $0x40] sm:$0xff]
    %v3982 = vld [vmem:[%s9 + $0x48] sm:$0xff]
    %v3983 = vld [vmem:[%s9 + $0x50] sm:$0xff]
    %v3984 = vld [vmem:[%s9 + $0x58] sm:$0xff]
    %v3985 = vld [vmem:[%s9 + $0x60] sm:$0xff]
    %v3986 = vld [vmem:[%s9 + $0x68] sm:$0xff]
    %v3987 = vld [vmem:[%s9 + $0x70] sm:$0xff]
    %v3988 = vld [vmem:[%s9 + $0x78] sm:$0xff]
    %v3989 = vld [vmem:[%s19] sm:$0x3]
    %v3991 = vlaneseq
    %v3992 = vshrl.u32 %v3991, 7
    %v3993 = vsub.s32 0, %v3992
    %v3994 = vrot.slane %v3989, %v3993
    %v3995 = vlaneseq
    %v3996 = vshrl.u32 %v3995, 7
    %v3997 = vsub.s32 1, %v3996
    %v3998 = vrot.slane %v3989, %v3997
    %v4017 = vunpack.c.l.b16 %v3973
    %v4018 = vunpack.c.h.b16 %v3973
    %v4019 = vunpack.c.l.b16 %v3974
    %v4020 = vunpack.c.h.b16 %v3974
    %v4021 = vunpack.c.l.b16 %v3975
    %v4022 = vunpack.c.h.b16 %v3975
    %v4023 = vunpack.c.l.b16 %v3976
    %v4024 = vunpack.c.h.b16 %v3976
    %v4025 = vunpack.c.l.b16 %v3977
    %v4026 = vunpack.c.h.b16 %v3977
    %v4027 = vunpack.c.l.b16 %v3978
    %v4028 = vunpack.c.h.b16 %v3978
    %v4029 = vunpack.c.l.b16 %v3979
    %v4030 = vunpack.c.h.b16 %v3979
    %v4031 = vunpack.c.l.b16 %v3980
    %v4032 = vunpack.c.h.b16 %v3980
    %v4033 = vunpack.c.l.b16 %v3981
    %v4034 = vunpack.c.h.b16 %v3981
    %v4035 = vunpack.c.l.b16 %v3982
    %v4036 = vunpack.c.h.b16 %v3982
    %v4037 = vunpack.c.l.b16 %v3983
    %v4038 = vunpack.c.h.b16 %v3983
    %v4039 = vunpack.c.l.b16 %v3984
    %v4040 = vunpack.c.h.b16 %v3984
    %v4041 = vunpack.c.l.b16 %v3985
    %v4042 = vunpack.c.h.b16 %v3985
    %v4043 = vunpack.c.l.b16 %v3986
    %v4044 = vunpack.c.h.b16 %v3986
    %v4045 = vunpack.c.l.b16 %v3987
    %v4046 = vunpack.c.h.b16 %v3987
    %v4047 = vunpack.c.l.b16 %v3988
    %v4048 = vunpack.c.h.b16 %v3988
    %v4049 = vpack.c.b16 %v4019, %v4017
    %v4050 = vpack.c.b16 %v4020, %v4018
    %v4051 = vpack.c.b16 %v4023, %v4021
    %v4052 = vpack.c.b16 %v4024, %v4022
    %v4053 = vpack.c.b16 %v4027, %v4025
    %v4054 = vpack.c.b16 %v4028, %v4026
    %v4055 = vpack.c.b16 %v4031, %v4029
    %v4056 = vpack.c.b16 %v4032, %v4030
    %v4057 = vpack.c.b16 %v4035, %v4033
    %v4058 = vpack.c.b16 %v4036, %v4034
    %v4059 = vpack.c.b16 %v4039, %v4037
    %v4060 = vpack.c.b16 %v4040, %v4038
    %v4061 = vpack.c.b16 %v4043, %v4041
    %v4062 = vpack.c.b16 %v4044, %v4042
    %v4063 = vpack.c.b16 %v4047, %v4045
    %v4064 = vpack.c.b16 %v4048, %v4046
    %4081 = vmatprep.subr.bf16.mxu0 %v4050
    %4082 = vmatpush1.bf16.msra.mxu0 %v4049
    %4083 = vmatprep.subr.bf16.mxu0 %v4052
    %4084 = vmatpush1.bf16.msra.mxu0 %v4051
    %4085 = vmatprep.subr.bf16.mxu0 %v4054
    %4086 = vmatpush1.bf16.msra.mxu0 %v4053
    %4087 = vmatprep.subr.bf16.mxu0 %v4056
    %4088 = vmatpush1.bf16.msra.mxu0 %v4055
    %4089 = vmatprep.subr.bf16.mxu0 %v4058
    %4090 = vmatpush1.bf16.msra.mxu0 %v4057
    %4091 = vmatprep.subr.bf16.mxu0 %v4060
    %4092 = vmatpush1.bf16.msra.mxu0 %v4059
    %4093 = vmatprep.subr.bf16.mxu0 %v4062
    %4094 = vmatpush1.bf16.msra.mxu0 %v4061
    %4095 = vmatprep.subr.bf16.mxu0 %v4064
    %4096 = vmatpush1.bf16.msra.mxu0 %v4063
    %4097 = vmatprep.subr.bf16.mxu0 0
    %4098 = vmatpush1.bf16.msra.mxu0 0
    %4099 = vmatprep.subr.bf16.mxu0 0
    %4100 = vmatpush1.bf16.msra.mxu0 0
    %4101 = vmatprep.subr.bf16.mxu0 0
    %4102 = vmatpush1.bf16.msra.mxu0 0
    %4103 = vmatprep.subr.bf16.mxu0 0
    %4104 = vmatpush1.bf16.msra.mxu0 0
    %4105 = vmatprep.subr.bf16.mxu0 0
    %4106 = vmatpush1.bf16.msra.mxu0 0
    %4107 = vmatprep.subr.bf16.mxu0 0
    %4108 = vmatpush1.bf16.msra.mxu0 0
    %4109 = vmatprep.subr.bf16.mxu0 0
    %4110 = vmatpush1.bf16.msra.mxu0 0
    %4111 = vmatprep.subr.bf16.mxu0 0
    %4112 = vmatpush1.bf16.msra.mxu0 0
    %4113 = vmatprep.mubr.bf16.mxu0 0
    %4114 = vmatmul.mubr.bf16.gmra.mrb[0].mxu0 %v3957
    %v4115 = vpop.f32.mrb[0].mxu0
    %v4116 = vadd.f32 %v3994, %v4115
    %v4117 = vpop.f32.mrb[0].mxu0
    %v4118 = vadd.f32 %v3998, %v4117
    %v4119 = vpop.f32.mrb[0].mxu0
    %v4120 = vadd.f32 %v3994, %v4119
    %v4121 = vpop.f32.mrb[0].mxu0
    %v4122 = vadd.f32 %v3998, %v4121
    %4123 = vmatprep.mubr.bf16.mxu0 0
    %4124 = vmatmul.mubr.bf16.gmra.mrb[0].mxu0 %v3958
    %v4125 = vpop.f32.mrb[0].mxu0
    %v4126 = vadd.f32 %v3994, %v4125
    %v4127 = vpop.f32.mrb[0].mxu0
    %v4128 = vadd.f32 %v3998, %v4127
    %v4129 = vpop.f32.mrb[0].mxu0
    %v4130 = vadd.f32 %v3994, %v4129
    %v4131 = vpop.f32.mrb[0].mxu0
    %v4132 = vadd.f32 %v3998, %v4131
    %4133 = vmatprep.mubr.bf16.mxu0 0
    %4134 = vmatmul.mubr.bf16.gmra.mrb[0].mxu0 %v3959
    %v4135 = vpop.f32.mrb[0].mxu0
    %v4136 = vadd.f32 %v3994, %v4135
    %v4137 = vpop.f32.mrb[0].mxu0
    %v4138 = vadd.f32 %v3998, %v4137
    %v4139 = vpop.f32.mrb[0].mxu0
    %v4140 = vadd.f32 %v3994, %v4139
    %v4141 = vpop.f32.mrb[0].mxu0
    %v4142 = vadd.f32 %v3998, %v4141
    %4143 = vmatprep.mubr.bf16.mxu0 0
    %4144 = vmatmul.mubr.bf16.gmra.mrb[0].mxu0 %v3960
    %v4145 = vpop.f32.mrb[0].mxu0
    %v4146 = vadd.f32 %v3994, %v4145
    %v4147 = vpop.f32.mrb[0].mxu0
    %v4148 = vadd.f32 %v3998, %v4147
    %v4149 = vpop.f32.mrb[0].mxu0
    %v4150 = vadd.f32 %v3994, %v4149
    %v4151 = vpop.f32.mrb[0].mxu0
    %v4152 = vadd.f32 %v3998, %v4151
    %4153 = vmatprep.mubr.bf16.mxu0 0
    %4154 = vmatmul.mubr.bf16.gmra.mrb[0].mxu0 %v3961
    %v4155 = vpop.f32.mrb[0].mxu0
    %v4156 = vadd.f32 %v3994, %v4155
    %v4157 = vpop.f32.mrb[0].mxu0
    %v4158 = vadd.f32 %v3998, %v4157
    %v4159 = vpop.f32.mrb[0].mxu0
    %v4160 = vadd.f32 %v3994, %v4159
    %v4161 = vpop.f32.mrb[0].mxu0
    %v4162 = vadd.f32 %v3998, %v4161
    %4163 = vmatprep.mubr.bf16.mxu0 0
    %4164 = vmatmul.mubr.bf16.gmra.mrb[0].mxu0 %v3962
    %v4165 = vpop.f32.mrb[0].mxu0
    %v4166 = vadd.f32 %v3994, %v4165
    %v4167 = vpop.f32.mrb[0].mxu0
    %v4168 = vadd.f32 %v3998, %v4167
    %v4169 = vpop.f32.mrb[0].mxu0
    %v4170 = vadd.f32 %v3994, %v4169
    %v4171 = vpop.f32.mrb[0].mxu0
    %v4172 = vadd.f32 %v3998, %v4171
    %4173 = vmatprep.mubr.bf16.mxu0 0
    %4174 = vmatmul.mubr.bf16.gmra.mrb[0].mxu0 %v3963
    %v4175 = vpop.f32.mrb[0].mxu0
    %v4176 = vadd.f32 %v3994, %v4175
    %v4177 = vpop.f32.mrb[0].mxu0
    %v4178 = vadd.f32 %v3998, %v4177
    %v4179 = vpop.f32.mrb[0].mxu0
    %v4180 = vadd.f32 %v3994, %v4179
    %v4181 = vpop.f32.mrb[0].mxu0
    %v4182 = vadd.f32 %v3998, %v4181
    %4183 = vmatprep.mubr.bf16.mxu0 0
    %4184 = vmatmul.mubr.bf16.gmra.mrb[0].mxu0 %v3964
    %v4185 = vpop.f32.mrb[0].mxu0
    %v4186 = vadd.f32 %v3994, %v4185
    %v4187 = vpop.f32.mrb[0].mxu0
    %v4188 = vadd.f32 %v3998, %v4187
    %v4189 = vpop.f32.mrb[0].mxu0
    %v4190 = vadd.f32 %v3994, %v4189
    %v4191 = vpop.f32.mrb[0].mxu0
    %v4192 = vadd.f32 %v3998, %v4191
    %4193 = vmatprep.mubr.bf16.mxu0 0
    %4194 = vmatmul.mubr.bf16.gmra.mrb[0].mxu0 %v3965
    %v4195 = vpop.f32.mrb[0].mxu0
    %v4196 = vadd.f32 %v3994, %v4195
    %v4197 = vpop.f32.mrb[0].mxu0
    %v4198 = vadd.f32 %v3998, %v4197
    %v4199 = vpop.f32.mrb[0].mxu0
    %v4200 = vadd.f32 %v3994, %v4199
    %v4201 = vpop.f32.mrb[0].mxu0
    %v4202 = vadd.f32 %v3998, %v4201
    %4203 = vmatprep.mubr.bf16.mxu0 0
    %4204 = vmatmul.mubr.bf16.gmra.mrb[0].mxu0 %v3966
    %v4205 = vpop.f32.mrb[0].mxu0
    %v4206 = vadd.f32 %v3994, %v4205
    %v4207 = vpop.f32.mrb[0].mxu0
    %v4208 = vadd.f32 %v3998, %v4207
    %v4209 = vpop.f32.mrb[0].mxu0
    %v4210 = vadd.f32 %v3994, %v4209
    %v4211 = vpop.f32.mrb[0].mxu0
    %v4212 = vadd.f32 %v3998, %v4211
    %4213 = vmatprep.mubr.bf16.mxu0 0
    %4214 = vmatmul.mubr.bf16.gmra.mrb[0].mxu0 %v3967
    %v4215 = vpop.f32.mrb[0].mxu0
    %v4216 = vadd.f32 %v3994, %v4215
    %v4217 = vpop.f32.mrb[0].mxu0
    %v4218 = vadd.f32 %v3998, %v4217
    %v4219 = vpop.f32.mrb[0].mxu0
    %v4220 = vadd.f32 %v3994, %v4219
    %v4221 = vpop.f32.mrb[0].mxu0
    %v4222 = vadd.f32 %v3998, %v4221
    %4223 = vmatprep.mubr.bf16.mxu0 0
    %4224 = vmatmul.mubr.bf16.gmra.mrb[0].mxu0 %v3968
    %v4225 = vpop.f32.mrb[0].mxu0
    %v4226 = vadd.f32 %v3994, %v4225
    %v4227 = vpop.f32.mrb[0].mxu0
    %v4228 = vadd.f32 %v3998, %v4227
    %v4229 = vpop.f32.mrb[0].mxu0
    %v4230 = vadd.f32 %v3994, %v4229
    %v4231 = vpop.f32.mrb[0].mxu0
    %v4232 = vadd.f32 %v3998, %v4231
    %4233 = vmatprep.mubr.bf16.mxu0 0
    %4234 = vmatmul.mubr.bf16.gmra.mrb[0].mxu0 %v3969
    %v4235 = vpop.f32.mrb[0].mxu0
    %v4236 = vadd.f32 %v3994, %v4235
    %v4237 = vpop.f32.mrb[0].mxu0
    %v4238 = vadd.f32 %v3998, %v4237
    %v4239 = vpop.f32.mrb[0].mxu0
    %v4240 = vadd.f32 %v3994, %v4239
    %v4241 = vpop.f32.mrb[0].mxu0
    %v4242 = vadd.f32 %v3998, %v4241
    %4243 = vmatprep.mubr.bf16.mxu0 0
    %4244 = vmatmul.mubr.bf16.gmra.mrb[0].mxu0 %v3970
    %v4245 = vpop.f32.mrb[0].mxu0
    %v4246 = vadd.f32 %v3994, %v4245
    %v4247 = vpop.f32.mrb[0].mxu0
    %v4248 = vadd.f32 %v3998, %v4247
    %v4249 = vpop.f32.mrb[0].mxu0
    %v4250 = vadd.f32 %v3994, %v4249
    %v4251 = vpop.f32.mrb[0].mxu0
    %v4252 = vadd.f32 %v3998, %v4251
    %4253 = vmatprep.mubr.bf16.mxu0 0
    %4254 = vmatmul.mubr.bf16.gmra.mrb[0].mxu0 %v3971
    %v4255 = vpop.f32.mrb[0].mxu0
    %v4256 = vadd.f32 %v3994, %v4255
    %v4257 = vpop.f32.mrb[0].mxu0
    %v4258 = vadd.f32 %v3998, %v4257
    %v4259 = vpop.f32.mrb[0].mxu0
    %v4260 = vadd.f32 %v3994, %v4259
    %v4261 = vpop.f32.mrb[0].mxu0
    %v4262 = vadd.f32 %v3998, %v4261
    %4263 = vmatprep.mubr.bf16.mxu0 0
    %4264 = vmatmul.mubr.bf16.gmra.mrb[0].mxu0 %v3972
    %v4265 = vpop.f32.mrb[0].mxu0
    %v4266 = vadd.f32 %v3994, %v4265
    %v4267 = vpop.f32.mrb[0].mxu0
    %v4268 = vadd.f32 %v3998, %v4267
    %v4269 = vpop.f32.mrb[0].mxu0
    %v4270 = vadd.f32 %v3994, %v4269
    %v4271 = vpop.f32.mrb[0].mxu0
    %v4272 = vadd.f32 %v3998, %v4271
    %4273 = vdwg.mxu0
    %v4274 = vmax.f32 %v4116, 0.0
    %v4275 = vmax.f32 %v4118, 0.0
    %v4276 = vmax.f32 %v4120, 0.0
    %v4277 = vmax.f32 %v4122, 0.0
    %v4278 = vmax.f32 %v4126, 0.0
    %v4279 = vmax.f32 %v4128, 0.0
    %v4280 = vmax.f32 %v4130, 0.0
    %v4281 = vmax.f32 %v4132, 0.0
    %v4282 = vmax.f32 %v4136, 0.0
    %v4283 = vmax.f32 %v4138, 0.0
    %v4284 = vmax.f32 %v4140, 0.0
    %v4285 = vmax.f32 %v4142, 0.0
    %v4286 = vmax.f32 %v4146, 0.0
    %v4287 = vmax.f32 %v4148, 0.0
    %v4288 = vmax.f32 %v4150, 0.0
    %v4289 = vmax.f32 %v4152, 0.0
    %v4290 = vmax.f32 %v4156, 0.0
    %v4291 = vmax.f32 %v4158, 0.0
    %v4292 = vmax.f32 %v4160, 0.0
    %v4293 = vmax.f32 %v4162, 0.0
    %v4294 = vmax.f32 %v4166, 0.0
    %v4295 = vmax.f32 %v4168, 0.0
    %v4296 = vmax.f32 %v4170, 0.0
    %v4297 = vmax.f32 %v4172, 0.0
    %v4298 = vmax.f32 %v4176, 0.0
    %v4299 = vmax.f32 %v4178, 0.0
    %v4300 = vmax.f32 %v4180, 0.0
    %v4301 = vmax.f32 %v4182, 0.0
    %v4302 = vmax.f32 %v4186, 0.0
    %v4303 = vmax.f32 %v4188, 0.0
    %v4304 = vmax.f32 %v4190, 0.0
    %v4305 = vmax.f32 %v4192, 0.0
    %v4306 = vmax.f32 %v4196, 0.0
    %v4307 = vmax.f32 %v4198, 0.0
    %v4308 = vmax.f32 %v4200, 0.0
    %v4309 = vmax.f32 %v4202, 0.0
    %v4310 = vmax.f32 %v4206, 0.0
    %v4311 = vmax.f32 %v4208, 0.0
    %v4312 = vmax.f32 %v4210, 0.0
    %v4313 = vmax.f32 %v4212, 0.0
    %v4314 = vmax.f32 %v4216, 0.0
    %v4315 = vmax.f32 %v4218, 0.0
    %v4316 = vmax.f32 %v4220, 0.0
    %v4317 = vmax.f32 %v4222, 0.0
    %v4318 = vmax.f32 %v4226, 0.0
    %v4319 = vmax.f32 %v4228, 0.0
    %v4320 = vmax.f32 %v4230, 0.0
    %v4321 = vmax.f32 %v4232, 0.0
    %v4322 = vmax.f32 %v4236, 0.0
    %v4323 = vmax.f32 %v4238, 0.0
    %v4324 = vmax.f32 %v4240, 0.0
    %v4325 = vmax.f32 %v4242, 0.0
    %v4326 = vmax.f32 %v4246, 0.0
    %v4327 = vmax.f32 %v4248, 0.0
    %v4328 = vmax.f32 %v4250, 0.0
    %v4329 = vmax.f32 %v4252, 0.0
    %v4330 = vmax.f32 %v4256, 0.0
    %v4331 = vmax.f32 %v4258, 0.0
    %v4332 = vmax.f32 %v4260, 0.0
    %v4333 = vmax.f32 %v4262, 0.0
    %v4334 = vmax.f32 %v4266, 0.0
    %v4335 = vmax.f32 %v4268, 0.0
    %v4336 = vmax.f32 %v4270, 0.0
    %v4337 = vmax.f32 %v4272, 0.0
    %v4338 = vpack.c.bf16 %v4276, %v4274
    %v4339 = vpack.c.bf16 %v4277, %v4275
    %v4340 = vpack.c.bf16 %v4280, %v4278
    %v4341 = vpack.c.bf16 %v4281, %v4279
    %v4342 = vpack.c.bf16 %v4284, %v4282
    %v4343 = vpack.c.bf16 %v4285, %v4283
    %v4344 = vpack.c.bf16 %v4288, %v4286
    %v4345 = vpack.c.bf16 %v4289, %v4287
    %v4346 = vpack.c.bf16 %v4292, %v4290
    %v4347 = vpack.c.bf16 %v4293, %v4291
    %v4348 = vpack.c.bf16 %v4296, %v4294
    %v4349 = vpack.c.bf16 %v4297, %v4295
    %v4350 = vpack.c.bf16 %v4300, %v4298
    %v4351 = vpack.c.bf16 %v4301, %v4299
    %v4352 = vpack.c.bf16 %v4304, %v4302
    %v4353 = vpack.c.bf16 %v4305, %v4303
    %v4354 = vpack.c.bf16 %v4308, %v4306
    %v4355 = vpack.c.bf16 %v4309, %v4307
    %v4356 = vpack.c.bf16 %v4312, %v4310
    %v4357 = vpack.c.bf16 %v4313, %v4311
    %v4358 = vpack.c.bf16 %v4316, %v4314
    %v4359 = vpack.c.bf16 %v4317, %v4315
    %v4360 = vpack.c.bf16 %v4320, %v4318
    %v4361 = vpack.c.bf16 %v4321, %v4319
    %v4362 = vpack.c.bf16 %v4324, %v4322
    %v4363 = vpack.c.bf16 %v4325, %v4323
    %v4364 = vpack.c.bf16 %v4328, %v4326
    %v4365 = vpack.c.bf16 %v4329, %v4327
    %v4366 = vpack.c.bf16 %v4332, %v4330
    %v4367 = vpack.c.bf16 %v4333, %v4331
    %v4368 = vpack.c.bf16 %v4336, %v4334
    %v4369 = vpack.c.bf16 %v4337, %v4335
    %v4370 = vld [vmem:[%s10] sm:$0xff]
    %v4371 = vld [vmem:[%s10 + $0x8] sm:$0xff]
    %v4372 = vld [vmem:[%s10 + $0x10] sm:$0xff]
    %v4373 = vld [vmem:[%s10 + $0x18] sm:$0xf]
    %v4374 = vld [vmem:[%s10 + $0x1c] sm:$0xff]
    %v4375 = vld [vmem:[%s10 + $0x24] sm:$0xff]
    %v4376 = vld [vmem:[%s10 + $0x2c] sm:$0xff]
    %v4377 = vld [vmem:[%s10 + $0x34] sm:$0xf]
    %v4378 = vld [vmem:[%s10 + $0x38] sm:$0xff]
    %v4379 = vld [vmem:[%s10 + $0x40] sm:$0xff]
    %v4380 = vld [vmem:[%s10 + $0x48] sm:$0xff]
    %v4381 = vld [vmem:[%s10 + $0x50] sm:$0xf]
    %v4382 = vld [vmem:[%s10 + $0x54] sm:$0xff]
    %v4383 = vld [vmem:[%s10 + $0x5c] sm:$0xff]
    %v4384 = vld [vmem:[%s10 + $0x64] sm:$0xff]
    %v4385 = vld [vmem:[%s10 + $0x6c] sm:$0xf]
    %v4386 = vld [vmem:[%s10 + $0x70] sm:$0xff]
    %v4387 = vld [vmem:[%s10 + $0x78] sm:$0xff]
    %v4388 = vld [vmem:[%s10 + $0x80] sm:$0xff]
    %v4389 = vld [vmem:[%s10 + $0x88] sm:$0xf]
    %v4390 = vld [vmem:[%s10 + $0x8c] sm:$0xff]
    %v4391 = vld [vmem:[%s10 + $0x94] sm:$0xff]
    %v4392 = vld [vmem:[%s10 + $0x9c] sm:$0xff]
    %v4393 = vld [vmem:[%s10 + $0xa4] sm:$0xf]
    %v4394 = vld [vmem:[%s10 + $0xa8] sm:$0xff]
    %v4395 = vld [vmem:[%s10 + $0xb0] sm:$0xff]
    %v4396 = vld [vmem:[%s10 + $0xb8] sm:$0xff]
    %v4397 = vld [vmem:[%s10 + $0xc0] sm:$0xf]
    %v4398 = vld [vmem:[%s10 + $0xc4] sm:$0xff]
    %v4399 = vld [vmem:[%s10 + $0xcc] sm:$0xff]
    %v4400 = vld [vmem:[%s10 + $0xd4] sm:$0xff]
    %v4401 = vld [vmem:[%s10 + $0xdc] sm:$0xf]
    %v4402 = vld [vmem:[%s10 + $0xe0] sm:$0xff]
    %v4403 = vld [vmem:[%s10 + $0xe8] sm:$0xff]
    %v4404 = vld [vmem:[%s10 + $0xf0] sm:$0xff]
    %v4405 = vld [vmem:[%s10 + $0xf8] sm:$0xf]
    %v4406 = vld [vmem:[%s10 + $0xfc] sm:$0xff]
    %v4407 = vld [vmem:[%s10 + $0x104] sm:$0xff]
    %v4408 = vld [vmem:[%s10 + $0x10c] sm:$0xff]
    %v4409 = vld [vmem:[%s10 + $0x114] sm:$0xf]
    %v4410 = vld [vmem:[%s10 + $0x118] sm:$0xff]
    %v4411 = vld [vmem:[%s10 + $0x120] sm:$0xff]
    %v4412 = vld [vmem:[%s10 + $0x128] sm:$0xff]
    %v4413 = vld [vmem:[%s10 + $0x130] sm:$0xf]
    %v4414 = vld [vmem:[%s10 + $0x134] sm:$0xff]
    %v4415 = vld [vmem:[%s10 + $0x13c] sm:$0xff]
    %v4416 = vld [vmem:[%s10 + $0x144] sm:$0xff]
    %v4417 = vld [vmem:[%s10 + $0x14c] sm:$0xf]
    %v4418 = vld [vmem:[%s10 + $0x150] sm:$0xff]
    %v4419 = vld [vmem:[%s10 + $0x158] sm:$0xff]
    %v4420 = vld [vmem:[%s10 + $0x160] sm:$0xff]
    %v4421 = vld [vmem:[%s10 + $0x168] sm:$0xf]
    %v4422 = vld [vmem:[%s10 + $0x16c] sm:$0xff]
    %v4423 = vld [vmem:[%s10 + $0x174] sm:$0xff]
    %v4424 = vld [vmem:[%s10 + $0x17c] sm:$0xff]
    %v4425 = vld [vmem:[%s10 + $0x184] sm:$0xf]
    %v4426 = vld [vmem:[%s10 + $0x188] sm:$0xff]
    %v4427 = vld [vmem:[%s10 + $0x190] sm:$0xff]
    %v4428 = vld [vmem:[%s10 + $0x198] sm:$0xff]
    %v4429 = vld [vmem:[%s10 + $0x1a0] sm:$0xf]
    %v4430 = vld [vmem:[%s10 + $0x1a4] sm:$0xff]
    %v4431 = vld [vmem:[%s10 + $0x1ac] sm:$0xff]
    %v4432 = vld [vmem:[%s10 + $0x1b4] sm:$0xff]
    %v4433 = vld [vmem:[%s10 + $0x1bc] sm:$0xf]
    %v4434 = vld [vmem:[%s10 + $0x1c0] sm:$0xff]
    %v4435 = vld [vmem:[%s10 + $0x1c8] sm:$0xff]
    %v4436 = vld [vmem:[%s10 + $0x1d0] sm:$0xff]
    %v4437 = vld [vmem:[%s10 + $0x1d8] sm:$0xf]
    %v4438 = vld [vmem:[%s10 + $0x1dc] sm:$0xff]
    %v4439 = vld [vmem:[%s10 + $0x1e4] sm:$0xff]
    %v4440 = vld [vmem:[%s10 + $0x1ec] sm:$0xff]
    %v4441 = vld [vmem:[%s10 + $0x1f4] sm:$0xf]
    %v4442 = vld [vmem:[%s10 + $0x1f8] sm:$0xff]
    %v4443 = vld [vmem:[%s10 + $0x200] sm:$0xff]
    %v4444 = vld [vmem:[%s10 + $0x208] sm:$0xff]
    %v4445 = vld [vmem:[%s10 + $0x210] sm:$0xf]
    %v4446 = vld [vmem:[%s10 + $0x214] sm:$0xff]
    %v4447 = vld [vmem:[%s10 + $0x21c] sm:$0xff]
    %v4448 = vld [vmem:[%s10 + $0x224] sm:$0xff]
    %v4449 = vld [vmem:[%s10 + $0x22c] sm:$0xf]
    %v4450 = vld [vmem:[%s10 + $0x230] sm:$0xff]
    %v4451 = vld [vmem:[%s10 + $0x238] sm:$0xff]
    %v4452 = vld [vmem:[%s10 + $0x240] sm:$0xff]
    %v4453 = vld [vmem:[%s10 + $0x248] sm:$0xf]
    %v4454 = vld [vmem:[%s10 + $0x24c] sm:$0xff]
    %v4455 = vld [vmem:[%s10 + $0x254] sm:$0xff]
    %v4456 = vld [vmem:[%s10 + $0x25c] sm:$0xff]
    %v4457 = vld [vmem:[%s10 + $0x264] sm:$0xf]
    %v4458 = vld [vmem:[%s10 + $0x268] sm:$0xff]
    %v4459 = vld [vmem:[%s10 + $0x270] sm:$0xff]
    %v4460 = vld [vmem:[%s10 + $0x278] sm:$0xff]
    %v4461 = vld [vmem:[%s10 + $0x280] sm:$0xf]
    %v4462 = vld [vmem:[%s10 + $0x284] sm:$0xff]
    %v4463 = vld [vmem:[%s10 + $0x28c] sm:$0xff]
    %v4464 = vld [vmem:[%s10 + $0x294] sm:$0xff]
    %v4465 = vld [vmem:[%s10 + $0x29c] sm:$0xf]
    %v4466 = vld [vmem:[%s10 + $0x2a0] sm:$0xff]
    %v4467 = vld [vmem:[%s10 + $0x2a8] sm:$0xff]
    %v4468 = vld [vmem:[%s10 + $0x2b0] sm:$0xff]
    %v4469 = vld [vmem:[%s10 + $0x2b8] sm:$0xf]
    %v4470 = vld [vmem:[%s10 + $0x2bc] sm:$0xff]
    %v4471 = vld [vmem:[%s10 + $0x2c4] sm:$0xff]
    %v4472 = vld [vmem:[%s10 + $0x2cc] sm:$0xff]
    %v4473 = vld [vmem:[%s10 + $0x2d4] sm:$0xf]
    %v4474 = vld [vmem:[%s10 + $0x2d8] sm:$0xff]
    %v4475 = vld [vmem:[%s10 + $0x2e0] sm:$0xff]
    %v4476 = vld [vmem:[%s10 + $0x2e8] sm:$0xff]
    %v4477 = vld [vmem:[%s10 + $0x2f0] sm:$0xf]
    %v4478 = vld [vmem:[%s10 + $0x2f4] sm:$0xff]
    %v4479 = vld [vmem:[%s10 + $0x2fc] sm:$0xff]
    %v4480 = vld [vmem:[%s10 + $0x304] sm:$0xff]
    %v4481 = vld [vmem:[%s10 + $0x30c] sm:$0xf]
    %v4482 = vld [vmem:[%s10 + $0x310] sm:$0xff]
    %v4483 = vld [vmem:[%s10 + $0x318] sm:$0xff]
    %v4484 = vld [vmem:[%s10 + $0x320] sm:$0xff]
    %v4485 = vld [vmem:[%s10 + $0x328] sm:$0xf]
    %v4486 = vld [vmem:[%s10 + $0x32c] sm:$0xff]
    %v4487 = vld [vmem:[%s10 + $0x334] sm:$0xff]
    %v4488 = vld [vmem:[%s10 + $0x33c] sm:$0xff]
    %v4489 = vld [vmem:[%s10 + $0x344] sm:$0xf]
    %v4490 = vld [vmem:[%s10 + $0x348] sm:$0xff]
    %v4491 = vld [vmem:[%s10 + $0x350] sm:$0xff]
    %v4492 = vld [vmem:[%s10 + $0x358] sm:$0xff]
    %v4493 = vld [vmem:[%s10 + $0x360] sm:$0xf]
    %v4494 = vld [vmem:[%s10 + $0x364] sm:$0xff]
    %v4495 = vld [vmem:[%s10 + $0x36c] sm:$0xff]
    %v4496 = vld [vmem:[%s10 + $0x374] sm:$0xff]
    %v4497 = vld [vmem:[%s10 + $0x37c] sm:$0xf]
    %v4498 = vld [vmem:[%s20] sm:$0x7f]
    %v4500 = vlaneseq
    %v4501 = vshrl.u32 %v4500, 7
    %v4502 = vsub.s32 0, %v4501
    %v4503 = vrot.slane %v4498, %v4502
    %v4504 = vlaneseq
    %v4505 = vshrl.u32 %v4504, 7
    %v4506 = vsub.s32 1, %v4505
    %v4507 = vrot.slane %v4498, %v4506
    %v4508 = vlaneseq
    %v4509 = vshrl.u32 %v4508, 7
    %v4510 = vsub.s32 2, %v4509
    %v4511 = vrot.slane %v4498, %v4510
    %v4512 = vlaneseq
    %v4513 = vshrl.u32 %v4512, 7
    %v4514 = vsub.s32 3, %v4513
    %v4515 = vrot.slane %v4498, %v4514
    %v4516 = vlaneseq
    %v4517 = vshrl.u32 %v4516, 7
    %v4518 = vsub.s32 4, %v4517
    %v4519 = vrot.slane %v4498, %v4518
    %v4520 = vlaneseq
    %v4521 = vshrl.u32 %v4520, 7
    %v4522 = vsub.s32 5, %v4521
    %v4523 = vrot.slane %v4498, %v4522
    %v4524 = vlaneseq
    %v4525 = vshrl.u32 %v4524, 7
    %v4526 = vsub.s32 6, %v4525
    %v4527 = vrot.slane %v4498, %v4526
    %v4663 = vunpack.c.l.b16 %v4370
    %v4664 = vunpack.c.h.b16 %v4370
    %v4665 = vunpack.c.l.b16 %v4371
    %v4666 = vunpack.c.h.b16 %v4371
    %v4667 = vunpack.c.l.b16 %v4372
    %v4668 = vunpack.c.h.b16 %v4372
    %v4669 = vunpack.c.l.b16 %v4373
    %v4670 = vunpack.c.l.b16 %v4374
    %v4671 = vunpack.c.h.b16 %v4374
    %v4672 = vunpack.c.l.b16 %v4375
    %v4673 = vunpack.c.h.b16 %v4375
    %v4674 = vunpack.c.l.b16 %v4376
    %v4675 = vunpack.c.h.b16 %v4376
    %v4676 = vunpack.c.l.b16 %v4377
    %v4677 = vunpack.c.l.b16 %v4378
    %v4678 = vunpack.c.h.b16 %v4378
    %v4679 = vunpack.c.l.b16 %v4379
    %v4680 = vunpack.c.h.b16 %v4379
    %v4681 = vunpack.c.l.b16 %v4380
    %v4682 = vunpack.c.h.b16 %v4380
    %v4683 = vunpack.c.l.b16 %v4381
    %v4684 = vunpack.c.l.b16 %v4382
    %v4685 = vunpack.c.h.b16 %v4382
    %v4686 = vunpack.c.l.b16 %v4383
    %v4687 = vunpack.c.h.b16 %v4383
    %v4688 = vunpack.c.l.b16 %v4384
    %v4689 = vunpack.c.h.b16 %v4384
    %v4690 = vunpack.c.l.b16 %v4385
    %v4691 = vunpack.c.l.b16 %v4386
    %v4692 = vunpack.c.h.b16 %v4386
    %v4693 = vunpack.c.l.b16 %v4387
    %v4694 = vunpack.c.h.b16 %v4387
    %v4695 = vunpack.c.l.b16 %v4388
    %v4696 = vunpack.c.h.b16 %v4388
    %v4697 = vunpack.c.l.b16 %v4389
    %v4698 = vunpack.c.l.b16 %v4390
    %v4699 = vunpack.c.h.b16 %v4390
    %v4700 = vunpack.c.l.b16 %v4391
    %v4701 = vunpack.c.h.b16 %v4391
    %v4702 = vunpack.c.l.b16 %v4392
    %v4703 = vunpack.c.h.b16 %v4392
    %v4704 = vunpack.c.l.b16 %v4393
    %v4705 = vunpack.c.l.b16 %v4394
    %v4706 = vunpack.c.h.b16 %v4394
    %v4707 = vunpack.c.l.b16 %v4395
    %v4708 = vunpack.c.h.b16 %v4395
    %v4709 = vunpack.c.l.b16 %v4396
    %v4710 = vunpack.c.h.b16 %v4396
    %v4711 = vunpack.c.l.b16 %v4397
    %v4712 = vunpack.c.l.b16 %v4398
    %v4713 = vunpack.c.h.b16 %v4398
    %v4714 = vunpack.c.l.b16 %v4399
    %v4715 = vunpack.c.h.b16 %v4399
    %v4716 = vunpack.c.l.b16 %v4400
    %v4717 = vunpack.c.h.b16 %v4400
    %v4718 = vunpack.c.l.b16 %v4401
    %v4719 = vunpack.c.l.b16 %v4402
    %v4720 = vunpack.c.h.b16 %v4402
    %v4721 = vunpack.c.l.b16 %v4403
    %v4722 = vunpack.c.h.b16 %v4403
    %v4723 = vunpack.c.l.b16 %v4404
    %v4724 = vunpack.c.h.b16 %v4404
    %v4725 = vunpack.c.l.b16 %v4405
    %v4726 = vunpack.c.l.b16 %v4406
    %v4727 = vunpack.c.h.b16 %v4406
    %v4728 = vunpack.c.l.b16 %v4407
    %v4729 = vunpack.c.h.b16 %v4407
    %v4730 = vunpack.c.l.b16 %v4408
    %v4731 = vunpack.c.h.b16 %v4408
    %v4732 = vunpack.c.l.b16 %v4409
    %v4733 = vunpack.c.l.b16 %v4410
    %v4734 = vunpack.c.h.b16 %v4410
    %v4735 = vunpack.c.l.b16 %v4411
    %v4736 = vunpack.c.h.b16 %v4411
    %v4737 = vunpack.c.l.b16 %v4412
    %v4738 = vunpack.c.h.b16 %v4412
    %v4739 = vunpack.c.l.b16 %v4413
    %v4740 = vunpack.c.l.b16 %v4414
    %v4741 = vunpack.c.h.b16 %v4414
    %v4742 = vunpack.c.l.b16 %v4415
    %v4743 = vunpack.c.h.b16 %v4415
    %v4744 = vunpack.c.l.b16 %v4416
    %v4745 = vunpack.c.h.b16 %v4416
    %v4746 = vunpack.c.l.b16 %v4417
    %v4747 = vunpack.c.l.b16 %v4418
    %v4748 = vunpack.c.h.b16 %v4418
    %v4749 = vunpack.c.l.b16 %v4419
    %v4750 = vunpack.c.h.b16 %v4419
    %v4751 = vunpack.c.l.b16 %v4420
    %v4752 = vunpack.c.h.b16 %v4420
    %v4753 = vunpack.c.l.b16 %v4421
    %v4754 = vunpack.c.l.b16 %v4422
    %v4755 = vunpack.c.h.b16 %v4422
    %v4756 = vunpack.c.l.b16 %v4423
    %v4757 = vunpack.c.h.b16 %v4423
    %v4758 = vunpack.c.l.b16 %v4424
    %v4759 = vunpack.c.h.b16 %v4424
    %v4760 = vunpack.c.l.b16 %v4425
    %v4761 = vunpack.c.l.b16 %v4426
    %v4762 = vunpack.c.h.b16 %v4426
    %v4763 = vunpack.c.l.b16 %v4427
    %v4764 = vunpack.c.h.b16 %v4427
    %v4765 = vunpack.c.l.b16 %v4428
    %v4766 = vunpack.c.h.b16 %v4428
    %v4767 = vunpack.c.l.b16 %v4429
    %v4768 = vunpack.c.l.b16 %v4430
    %v4769 = vunpack.c.h.b16 %v4430
    %v4770 = vunpack.c.l.b16 %v4431
    %v4771 = vunpack.c.h.b16 %v4431
    %v4772 = vunpack.c.l.b16 %v4432
    %v4773 = vunpack.c.h.b16 %v4432
    %v4774 = vunpack.c.l.b16 %v4433
    %v4775 = vunpack.c.l.b16 %v4434
    %v4776 = vunpack.c.h.b16 %v4434
    %v4777 = vunpack.c.l.b16 %v4435
    %v4778 = vunpack.c.h.b16 %v4435
    %v4779 = vunpack.c.l.b16 %v4436
    %v4780 = vunpack.c.h.b16 %v4436
    %v4781 = vunpack.c.l.b16 %v4437
    %v4782 = vunpack.c.l.b16 %v4438
    %v4783 = vunpack.c.h.b16 %v4438
    %v4784 = vunpack.c.l.b16 %v4439
    %v4785 = vunpack.c.h.b16 %v4439
    %v4786 = vunpack.c.l.b16 %v4440
    %v4787 = vunpack.c.h.b16 %v4440
    %v4788 = vunpack.c.l.b16 %v4441
    %v4789 = vunpack.c.l.b16 %v4442
    %v4790 = vunpack.c.h.b16 %v4442
    %v4791 = vunpack.c.l.b16 %v4443
    %v4792 = vunpack.c.h.b16 %v4443
    %v4793 = vunpack.c.l.b16 %v4444
    %v4794 = vunpack.c.h.b16 %v4444
    %v4795 = vunpack.c.l.b16 %v4445
    %v4796 = vunpack.c.l.b16 %v4446
    %v4797 = vunpack.c.h.b16 %v4446
    %v4798 = vunpack.c.l.b16 %v4447
    %v4799 = vunpack.c.h.b16 %v4447
    %v4800 = vunpack.c.l.b16 %v4448
    %v4801 = vunpack.c.h.b16 %v4448
    %v4802 = vunpack.c.l.b16 %v4449
    %v4803 = vunpack.c.l.b16 %v4450
    %v4804 = vunpack.c.h.b16 %v4450
    %v4805 = vunpack.c.l.b16 %v4451
    %v4806 = vunpack.c.h.b16 %v4451
    %v4807 = vunpack.c.l.b16 %v4452
    %v4808 = vunpack.c.h.b16 %v4452
    %v4809 = vunpack.c.l.b16 %v4453
    %v4810 = vunpack.c.l.b16 %v4454
    %v4811 = vunpack.c.h.b16 %v4454
    %v4812 = vunpack.c.l.b16 %v4455
    %v4813 = vunpack.c.h.b16 %v4455
    %v4814 = vunpack.c.l.b16 %v4456
    %v4815 = vunpack.c.h.b16 %v4456
    %v4816 = vunpack.c.l.b16 %v4457
    %v4817 = vunpack.c.l.b16 %v4458
    %v4818 = vunpack.c.h.b16 %v4458
    %v4819 = vunpack.c.l.b16 %v4459
    %v4820 = vunpack.c.h.b16 %v4459
    %v4821 = vunpack.c.l.b16 %v4460
    %v4822 = vunpack.c.h.b16 %v4460
    %v4823 = vunpack.c.l.b16 %v4461
    %v4824 = vunpack.c.l.b16 %v4462
    %v4825 = vunpack.c.h.b16 %v4462
    %v4826 = vunpack.c.l.b16 %v4463
    %v4827 = vunpack.c.h.b16 %v4463
    %v4828 = vunpack.c.l.b16 %v4464
    %v4829 = vunpack.c.h.b16 %v4464
    %v4830 = vunpack.c.l.b16 %v4465
    %v4831 = vunpack.c.l.b16 %v4466
    %v4832 = vunpack.c.h.b16 %v4466
    %v4833 = vunpack.c.l.b16 %v4467
    %v4834 = vunpack.c.h.b16 %v4467
    %v4835 = vunpack.c.l.b16 %v4468
    %v4836 = vunpack.c.h.b16 %v4468
    %v4837 = vunpack.c.l.b16 %v4469
    %v4838 = vunpack.c.l.b16 %v4470
    %v4839 = vunpack.c.h.b16 %v4470
    %v4840 = vunpack.c.l.b16 %v4471
    %v4841 = vunpack.c.h.b16 %v4471
    %v4842 = vunpack.c.l.b16 %v4472
    %v4843 = vunpack.c.h.b16 %v4472
    %v4844 = vunpack.c.l.b16 %v4473
    %v4845 = vunpack.c.l.b16 %v4474
    %v4846 = vunpack.c.h.b16 %v4474
    %v4847 = vunpack.c.l.b16 %v4475
    %v4848 = vunpack.c.h.b16 %v4475
    %v4849 = vunpack.c.l.b16 %v4476
    %v4850 = vunpack.c.h.b16 %v4476
    %v4851 = vunpack.c.l.b16 %v4477
    %v4852 = vunpack.c.l.b16 %v4478
    %v4853 = vunpack.c.h.b16 %v4478
    %v4854 = vunpack.c.l.b16 %v4479
    %v4855 = vunpack.c.h.b16 %v4479
    %v4856 = vunpack.c.l.b16 %v4480
    %v4857 = vunpack.c.h.b16 %v4480
    %v4858 = vunpack.c.l.b16 %v4481
    %v4859 = vunpack.c.l.b16 %v4482
    %v4860 = vunpack.c.h.b16 %v4482
    %v4861 = vunpack.c.l.b16 %v4483
    %v4862 = vunpack.c.h.b16 %v4483
    %v4863 = vunpack.c.l.b16 %v4484
    %v4864 = vunpack.c.h.b16 %v4484
    %v4865 = vunpack.c.l.b16 %v4485
    %v4866 = vunpack.c.l.b16 %v4486
    %v4867 = vunpack.c.h.b16 %v4486
    %v4868 = vunpack.c.l.b16 %v4487
    %v4869 = vunpack.c.h.b16 %v4487
    %v4870 = vunpack.c.l.b16 %v4488
    %v4871 = vunpack.c.h.b16 %v4488
    %v4872 = vunpack.c.l.b16 %v4489
    %v4873 = vunpack.c.l.b16 %v4490
    %v4874 = vunpack.c.h.b16 %v4490
    %v4875 = vunpack.c.l.b16 %v4491
    %v4876 = vunpack.c.h.b16 %v4491
    %v4877 = vunpack.c.l.b16 %v4492
    %v4878 = vunpack.c.h.b16 %v4492
    %v4879 = vunpack.c.l.b16 %v4493
    %v4880 = vunpack.c.l.b16 %v4494
    %v4881 = vunpack.c.h.b16 %v4494
    %v4882 = vunpack.c.l.b16 %v4495
    %v4883 = vunpack.c.h.b16 %v4495
    %v4884 = vunpack.c.l.b16 %v4496
    %v4885 = vunpack.c.h.b16 %v4496
    %v4886 = vunpack.c.l.b16 %v4497
    %v4887 = vpack.c.b16 %v4670, %v4663
    %v4888 = vpack.c.b16 %v4671, %v4664
    %v4889 = vpack.c.b16 %v4672, %v4665
    %v4890 = vpack.c.b16 %v4673, %v4666
    %v4891 = vpack.c.b16 %v4674, %v4667
    %v4892 = vpack.c.b16 %v4675, %v4668
    %v4893 = vpack.c.b16 %v4676, %v4669
    %v4894 = vpack.c.b16 %v4684, %v4677
    %v4895 = vpack.c.b16 %v4685, %v4678
    %v4896 = vpack.c.b16 %v4686, %v4679
    %v4897 = vpack.c.b16 %v4687, %v4680
    %v4898 = vpack.c.b16 %v4688, %v4681
    %v4899 = vpack.c.b16 %v4689, %v4682
    %v4900 = vpack.c.b16 %v4690, %v4683
    %v4901 = vpack.c.b16 %v4698, %v4691
    %v4902 = vpack.c.b16 %v4699, %v4692
    %v4903 = vpack.c.b16 %v4700, %v4693
    %v4904 = vpack.c.b16 %v4701, %v4694
    %v4905 = vpack.c.b16 %v4702, %v4695
    %v4906 = vpack.c.b16 %v4703, %v4696
    %v4907 = vpack.c.b16 %v4704, %v4697
    %v4908 = vpack.c.b16 %v4712, %v4705
    %v4909 = vpack.c.b16 %v4713, %v4706
    %v4910 = vpack.c.b16 %v4714, %v4707
    %v4911 = vpack.c.b16 %v4715, %v4708
    %v4912 = vpack.c.b16 %v4716, %v4709
    %v4913 = vpack.c.b16 %v4717, %v4710
    %v4914 = vpack.c.b16 %v4718, %v4711
    %v4915 = vpack.c.b16 %v4726, %v4719
    %v4916 = vpack.c.b16 %v4727, %v4720
    %v4917 = vpack.c.b16 %v4728, %v4721
    %v4918 = vpack.c.b16 %v4729, %v4722
    %v4919 = vpack.c.b16 %v4730, %v4723
    %v4920 = vpack.c.b16 %v4731, %v4724
    %v4921 = vpack.c.b16 %v4732, %v4725
    %v4922 = vpack.c.b16 %v4740, %v4733
    %v4923 = vpack.c.b16 %v4741, %v4734
    %v4924 = vpack.c.b16 %v4742, %v4735
    %v4925 = vpack.c.b16 %v4743, %v4736
    %v4926 = vpack.c.b16 %v4744, %v4737
    %v4927 = vpack.c.b16 %v4745, %v4738
    %v4928 = vpack.c.b16 %v4746, %v4739
    %v4929 = vpack.c.b16 %v4754, %v4747
    %v4930 = vpack.c.b16 %v4755, %v4748
    %v4931 = vpack.c.b16 %v4756, %v4749
    %v4932 = vpack.c.b16 %v4757, %v4750
    %v4933 = vpack.c.b16 %v4758, %v4751
    %v4934 = vpack.c.b16 %v4759, %v4752
    %v4935 = vpack.c.b16 %v4760, %v4753
    %v4936 = vpack.c.b16 %v4768, %v4761
    %v4937 = vpack.c.b16 %v4769, %v4762
    %v4938 = vpack.c.b16 %v4770, %v4763
    %v4939 = vpack.c.b16 %v4771, %v4764
    %v4940 = vpack.c.b16 %v4772, %v4765
    %v4941 = vpack.c.b16 %v4773, %v4766
    %v4942 = vpack.c.b16 %v4774, %v4767
    %v4943 = vpack.c.b16 %v4782, %v4775
    %v4944 = vpack.c.b16 %v4783, %v4776
    %v4945 = vpack.c.b16 %v4784, %v4777
    %v4946 = vpack.c.b16 %v4785, %v4778
    %v4947 = vpack.c.b16 %v4786, %v4779
    %v4948 = vpack.c.b16 %v4787, %v4780
    %v4949 = vpack.c.b16 %v4788, %v4781
    %v4950 = vpack.c.b16 %v4796, %v4789
    %v4951 = vpack.c.b16 %v4797, %v4790
    %v4952 = vpack.c.b16 %v4798, %v4791
    %v4953 = vpack.c.b16 %v4799, %v4792
    %v4954 = vpack.c.b16 %v4800, %v4793
    %v4955 = vpack.c.b16 %v4801, %v4794
    %v4956 = vpack.c.b16 %v4802, %v4795
    %v4957 = vpack.c.b16 %v4810, %v4803
    %v4958 = vpack.c.b16 %v4811, %v4804
    %v4959 = vpack.c.b16 %v4812, %v4805
    %v4960 = vpack.c.b16 %v4813, %v4806
    %v4961 = vpack.c.b16 %v4814, %v4807
    %v4962 = vpack.c.b16 %v4815, %v4808
    %v4963 = vpack.c.b16 %v4816, %v4809
    %v4964 = vpack.c.b16 %v4824, %v4817
    %v4965 = vpack.c.b16 %v4825, %v4818
    %v4966 = vpack.c.b16 %v4826, %v4819
    %v4967 = vpack.c.b16 %v4827, %v4820
    %v4968 = vpack.c.b16 %v4828, %v4821
    %v4969 = vpack.c.b16 %v4829, %v4822
    %v4970 = vpack.c.b16 %v4830, %v4823
    %v4971 = vpack.c.b16 %v4838, %v4831
    %v4972 = vpack.c.b16 %v4839, %v4832
    %v4973 = vpack.c.b16 %v4840, %v4833
    %v4974 = vpack.c.b16 %v4841, %v4834
    %v4975 = vpack.c.b16 %v4842, %v4835
    %v4976 = vpack.c.b16 %v4843, %v4836
    %v4977 = vpack.c.b16 %v4844, %v4837
    %v4978 = vpack.c.b16 %v4852, %v4845
    %v4979 = vpack.c.b16 %v4853, %v4846
    %v4980 = vpack.c.b16 %v4854, %v4847
    %v4981 = vpack.c.b16 %v4855, %v4848
    %v4982 = vpack.c.b16 %v4856, %v4849
    %v4983 = vpack.c.b16 %v4857, %v4850
    %v4984 = vpack.c.b16 %v4858, %v4851
    %v4985 = vpack.c.b16 %v4866, %v4859
    %v4986 = vpack.c.b16 %v4867, %v4860
    %v4987 = vpack.c.b16 %v4868, %v4861
    %v4988 = vpack.c.b16 %v4869, %v4862
    %v4989 = vpack.c.b16 %v4870, %v4863
    %v4990 = vpack.c.b16 %v4871, %v4864
    %v4991 = vpack.c.b16 %v4872, %v4865
    %v4992 = vpack.c.b16 %v4880, %v4873
    %v4993 = vpack.c.b16 %v4881, %v4874
    %v4994 = vpack.c.b16 %v4882, %v4875
    %v4995 = vpack.c.b16 %v4883, %v4876
    %v4996 = vpack.c.b16 %v4884, %v4877
    %v4997 = vpack.c.b16 %v4885, %v4878
    %v4998 = vpack.c.b16 %v4886, %v4879
    %5111 = vmatprep.subr.bf16.mxu0 %v4888
    %5112 = vmatpush1.bf16.msra.mxu0 %v4887
    %5113 = vmatprep.subr.bf16.mxu0 %v4895
    %5114 = vmatpush1.bf16.msra.mxu0 %v4894
    %5115 = vmatprep.subr.bf16.mxu0 %v4902
    %5116 = vmatpush1.bf16.msra.mxu0 %v4901
    %5117 = vmatprep.subr.bf16.mxu0 %v4909
    %5118 = vmatpush1.bf16.msra.mxu0 %v4908
    %5119 = vmatprep.subr.bf16.mxu0 %v4916
    %5120 = vmatpush1.bf16.msra.mxu0 %v4915
    %5121 = vmatprep.subr.bf16.mxu0 %v4923
    %5122 = vmatpush1.bf16.msra.mxu0 %v4922
    %5123 = vmatprep.subr.bf16.mxu0 %v4930
    %5124 = vmatpush1.bf16.msra.mxu0 %v4929
    %5125 = vmatprep.subr.bf16.mxu0 %v4937
    %5126 = vmatpush1.bf16.msra.mxu0 %v4936
    %5127 = vmatprep.subr.bf16.mxu0 %v4944
    %5128 = vmatpush1.bf16.msra.mxu0 %v4943
    %5129 = vmatprep.subr.bf16.mxu0 %v4951
    %5130 = vmatpush1.bf16.msra.mxu0 %v4950
    %5131 = vmatprep.subr.bf16.mxu0 %v4958
    %5132 = vmatpush1.bf16.msra.mxu0 %v4957
    %5133 = vmatprep.subr.bf16.mxu0 %v4965
    %5134 = vmatpush1.bf16.msra.mxu0 %v4964
    %5135 = vmatprep.subr.bf16.mxu0 %v4972
    %5136 = vmatpush1.bf16.msra.mxu0 %v4971
    %5137 = vmatprep.subr.bf16.mxu0 %v4979
    %5138 = vmatpush1.bf16.msra.mxu0 %v4978
    %5139 = vmatprep.subr.bf16.mxu0 %v4986
    %5140 = vmatpush1.bf16.msra.mxu0 %v4985
    %5141 = vmatprep.subr.bf16.mxu0 %v4993
    %5142 = vmatpush1.bf16.msra.mxu0 %v4992
    %5143 = vmatprep.mubr.bf16.mxu0 %v4339
    %5144 = vmatmul.mubr.bf16.gmra.mrb[0].mxu0 %v4338
    %v5145 = vpop.f32.mrb[0].mxu0
    %v5146 = vadd.f32 %v4503, %v5145
    %v5147 = vpop.f32.mrb[0].mxu0
    %v5148 = vadd.f32 %v4507, %v5147
    %v5149 = vpop.f32.mrb[0].mxu0
    %v5150 = vadd.f32 %v4503, %v5149
    %v5151 = vpop.f32.mrb[0].mxu0
    %v5152 = vadd.f32 %v4507, %v5151
    %5153 = vmatprep.mubr.bf16.mxu0 %v4341
    %5154 = vmatmul.mubr.bf16.gmra.mrb[0].mxu0 %v4340
    %v5155 = vpop.f32.mrb[0].mxu0
    %v5156 = vadd.f32 %v4503, %v5155
    %v5157 = vpop.f32.mrb[0].mxu0
    %v5158 = vadd.f32 %v4507, %v5157
    %v5159 = vpop.f32.mrb[0].mxu0
    %v5160 = vadd.f32 %v4503, %v5159
    %v5161 = vpop.f32.mrb[0].mxu0
    %v5162 = vadd.f32 %v4507, %v5161
    %5163 = vmatprep.mubr.bf16.mxu0 %v4343
    %5164 = vmatmul.mubr.bf16.gmra.mrb[0].mxu0 %v4342
    %v5165 = vpop.f32.mrb[0].mxu0
    %v5166 = vadd.f32 %v4503, %v5165
    %v5167 = vpop.f32.mrb[0].mxu0
    %v5168 = vadd.f32 %v4507, %v5167
    %v5169 = vpop.f32.mrb[0].mxu0
    %v5170 = vadd.f32 %v4503, %v5169
    %v5171 = vpop.f32.mrb[0].mxu0
    %v5172 = vadd.f32 %v4507, %v5171
    %5173 = vmatprep.mubr.bf16.mxu0 %v4345
    %5174 = vmatmul.mubr.bf16.gmra.mrb[0].mxu0 %v4344
    %v5175 = vpop.f32.mrb[0].mxu0
    %v5176 = vadd.f32 %v4503, %v5175
    %v5177 = vpop.f32.mrb[0].mxu0
    %v5178 = vadd.f32 %v4507, %v5177
    %v5179 = vpop.f32.mrb[0].mxu0
    %v5180 = vadd.f32 %v4503, %v5179
    %v5181 = vpop.f32.mrb[0].mxu0
    %v5182 = vadd.f32 %v4507, %v5181
    %5183 = vmatprep.mubr.bf16.mxu0 %v4347
    %5184 = vmatmul.mubr.bf16.gmra.mrb[0].mxu0 %v4346
    %v5185 = vpop.f32.mrb[0].mxu0
    %v5186 = vadd.f32 %v4503, %v5185
    %v5187 = vpop.f32.mrb[0].mxu0
    %v5188 = vadd.f32 %v4507, %v5187
    %v5189 = vpop.f32.mrb[0].mxu0
    %v5190 = vadd.f32 %v4503, %v5189
    %v5191 = vpop.f32.mrb[0].mxu0
    %v5192 = vadd.f32 %v4507, %v5191
    %5193 = vmatprep.mubr.bf16.mxu0 %v4349
    %5194 = vmatmul.mubr.bf16.gmra.mrb[0].mxu0 %v4348
    %v5195 = vpop.f32.mrb[0].mxu0
    %v5196 = vadd.f32 %v4503, %v5195
    %v5197 = vpop.f32.mrb[0].mxu0
    %v5198 = vadd.f32 %v4507, %v5197
    %v5199 = vpop.f32.mrb[0].mxu0
    %v5200 = vadd.f32 %v4503, %v5199
    %v5201 = vpop.f32.mrb[0].mxu0
    %v5202 = vadd.f32 %v4507, %v5201
    %5203 = vmatprep.mubr.bf16.mxu0 %v4351
    %5204 = vmatmul.mubr.bf16.gmra.mrb[0].mxu0 %v4350
    %v5205 = vpop.f32.mrb[0].mxu0
    %v5206 = vadd.f32 %v4503, %v5205
    %v5207 = vpop.f32.mrb[0].mxu0
    %v5208 = vadd.f32 %v4507, %v5207
    %v5209 = vpop.f32.mrb[0].mxu0
    %v5210 = vadd.f32 %v4503, %v5209
    %v5211 = vpop.f32.mrb[0].mxu0
    %v5212 = vadd.f32 %v4507, %v5211
    %5213 = vmatprep.mubr.bf16.mxu0 %v4353
    %5214 = vmatmul.mubr.bf16.gmra.mrb[0].mxu0 %v4352
    %v5215 = vpop.f32.mrb[0].mxu0
    %v5216 = vadd.f32 %v4503, %v5215
    %v5217 = vpop.f32.mrb[0].mxu0
    %v5218 = vadd.f32 %v4507, %v5217
    %v5219 = vpop.f32.mrb[0].mxu0
    %v5220 = vadd.f32 %v4503, %v5219
    %v5221 = vpop.f32.mrb[0].mxu0
    %v5222 = vadd.f32 %v4507, %v5221
    %5223 = vmatprep.mubr.bf16.mxu0 %v4355
    %5224 = vmatmul.mubr.bf16.gmra.mrb[0].mxu0 %v4354
    %v5225 = vpop.f32.mrb[0].mxu0
    %v5226 = vadd.f32 %v4503, %v5225
    %v5227 = vpop.f32.mrb[0].mxu0
    %v5228 = vadd.f32 %v4507, %v5227
    %v5229 = vpop.f32.mrb[0].mxu0
    %v5230 = vadd.f32 %v4503, %v5229
    %v5231 = vpop.f32.mrb[0].mxu0
    %v5232 = vadd.f32 %v4507, %v5231
    %5233 = vmatprep.mubr.bf16.mxu0 %v4357
    %5234 = vmatmul.mubr.bf16.gmra.mrb[0].mxu0 %v4356
    %v5235 = vpop.f32.mrb[0].mxu0
    %v5236 = vadd.f32 %v4503, %v5235
    %v5237 = vpop.f32.mrb[0].mxu0
    %v5238 = vadd.f32 %v4507, %v5237
    %v5239 = vpop.f32.mrb[0].mxu0
    %v5240 = vadd.f32 %v4503, %v5239
    %v5241 = vpop.f32.mrb[0].mxu0
    %v5242 = vadd.f32 %v4507, %v5241
    %5243 = vmatprep.mubr.bf16.mxu0 %v4359
    %5244 = vmatmul.mubr.bf16.gmra.mrb[0].mxu0 %v4358
    %v5245 = vpop.f32.mrb[0].mxu0
    %v5246 = vadd.f32 %v4503, %v5245
    %v5247 = vpop.f32.mrb[0].mxu0
    %v5248 = vadd.f32 %v4507, %v5247
    %v5249 = vpop.f32.mrb[0].mxu0
    %v5250 = vadd.f32 %v4503, %v5249
    %v5251 = vpop.f32.mrb[0].mxu0
    %v5252 = vadd.f32 %v4507, %v5251
    %5253 = vmatprep.mubr.bf16.mxu0 %v4361
    %5254 = vmatmul.mubr.bf16.gmra.mrb[0].mxu0 %v4360
    %v5255 = vpop.f32.mrb[0].mxu0
    %v5256 = vadd.f32 %v4503, %v5255
    %v5257 = vpop.f32.mrb[0].mxu0
    %v5258 = vadd.f32 %v4507, %v5257
    %v5259 = vpop.f32.mrb[0].mxu0
    %v5260 = vadd.f32 %v4503, %v5259
    %v5261 = vpop.f32.mrb[0].mxu0
    %v5262 = vadd.f32 %v4507, %v5261
    %5263 = vmatprep.mubr.bf16.mxu0 %v4363
    %5264 = vmatmul.mubr.bf16.gmra.mrb[0].mxu0 %v4362
    %v5265 = vpop.f32.mrb[0].mxu0
    %v5266 = vadd.f32 %v4503, %v5265
    %v5267 = vpop.f32.mrb[0].mxu0
    %v5268 = vadd.f32 %v4507, %v5267
    %v5269 = vpop.f32.mrb[0].mxu0
    %v5270 = vadd.f32 %v4503, %v5269
    %v5271 = vpop.f32.mrb[0].mxu0
    %v5272 = vadd.f32 %v4507, %v5271
    %5273 = vmatprep.mubr.bf16.mxu0 %v4365
    %5274 = vmatmul.mubr.bf16.gmra.mrb[0].mxu0 %v4364
    %v5275 = vpop.f32.mrb[0].mxu0
    %v5276 = vadd.f32 %v4503, %v5275
    %v5277 = vpop.f32.mrb[0].mxu0
    %v5278 = vadd.f32 %v4507, %v5277
    %v5279 = vpop.f32.mrb[0].mxu0
    %v5280 = vadd.f32 %v4503, %v5279
    %v5281 = vpop.f32.mrb[0].mxu0
    %v5282 = vadd.f32 %v4507, %v5281
    %5283 = vmatprep.mubr.bf16.mxu0 %v4367
    %5284 = vmatmul.mubr.bf16.gmra.mrb[0].mxu0 %v4366
    %v5285 = vpop.f32.mrb[0].mxu0
    %v5286 = vadd.f32 %v4503, %v5285
    %v5287 = vpop.f32.mrb[0].mxu0
    %v5288 = vadd.f32 %v4507, %v5287
    %v5289 = vpop.f32.mrb[0].mxu0
    %v5290 = vadd.f32 %v4503, %v5289
    %v5291 = vpop.f32.mrb[0].mxu0
    %v5292 = vadd.f32 %v4507, %v5291
    %5293 = vmatprep.mubr.bf16.mxu0 %v4369
    %5294 = vmatmul.mubr.bf16.gmra.mrb[0].mxu0 %v4368
    %v5295 = vpop.f32.mrb[0].mxu0
    %v5296 = vadd.f32 %v4503, %v5295
    %v5297 = vpop.f32.mrb[0].mxu0
    %v5298 = vadd.f32 %v4507, %v5297
    %v5299 = vpop.f32.mrb[0].mxu0
    %v5300 = vadd.f32 %v4503, %v5299
    %v5301 = vpop.f32.mrb[0].mxu0
    %v5302 = vadd.f32 %v4507, %v5301
    %5303 = vdwg.mxu0
    %5304 = vmatprep.subr.bf16.mxu0 %v4890
    %5305 = vmatpush1.bf16.msra.mxu0 %v4889
    %5306 = vmatprep.subr.bf16.mxu0 %v4897
    %5307 = vmatpush1.bf16.msra.mxu0 %v4896
    %5308 = vmatprep.subr.bf16.mxu0 %v4904
    %5309 = vmatpush1.bf16.msra.mxu0 %v4903
    %5310 = vmatprep.subr.bf16.mxu0 %v4911
    %5311 = vmatpush1.bf16.msra.mxu0 %v4910
    %5312 = vmatprep.subr.bf16.mxu0 %v4918
    %5313 = vmatpush1.bf16.msra.mxu0 %v4917
    %5314 = vmatprep.subr.bf16.mxu0 %v4925
    %5315 = vmatpush1.bf16.msra.mxu0 %v4924
    %5316 = vmatprep.subr.bf16.mxu0 %v4932
    %5317 = vmatpush1.bf16.msra.mxu0 %v4931
    %5318 = vmatprep.subr.bf16.mxu0 %v4939
    %5319 = vmatpush1.bf16.msra.mxu0 %v4938
    %5320 = vmatprep.subr.bf16.mxu0 %v4946
    %5321 = vmatpush1.bf16.msra.mxu0 %v4945
    %5322 = vmatprep.subr.bf16.mxu0 %v4953
    %5323 = vmatpush1.bf16.msra.mxu0 %v4952
    %5324 = vmatprep.subr.bf16.mxu0 %v4960
    %5325 = vmatpush1.bf16.msra.mxu0 %v4959
    %5326 = vmatprep.subr.bf16.mxu0 %v4967
    %5327 = vmatpush1.bf16.msra.mxu0 %v4966
    %5328 = vmatprep.subr.bf16.mxu0 %v4974
    %5329 = vmatpush1.bf16.msra.mxu0 %v4973
    %5330 = vmatprep.subr.bf16.mxu0 %v4981
    %5331 = vmatpush1.bf16.msra.mxu0 %v4980
    %5332 = vmatprep.subr.bf16.mxu0 %v4988
    %5333 = vmatpush1.bf16.msra.mxu0 %v4987
    %5334 = vmatprep.subr.bf16.mxu0 %v4995
    %5335 = vmatpush1.bf16.msra.mxu0 %v4994
    %5336 = vmatprep.mubr.bf16.mxu0 %v4339
    %5337 = vmatmul.mubr.bf16.gmra.mrb[0].mxu0 %v4338
    %v5338 = vpop.f32.mrb[0].mxu0
    %v5339 = vadd.f32 %v4511, %v5338
    %v5340 = vpop.f32.mrb[0].mxu0
    %v5341 = vadd.f32 %v4515, %v5340
    %v5342 = vpop.f32.mrb[0].mxu0
    %v5343 = vadd.f32 %v4511, %v5342
    %v5344 = vpop.f32.mrb[0].mxu0
    %v5345 = vadd.f32 %v4515, %v5344
    %5346 = vmatprep.mubr.bf16.mxu0 %v4341
    %5347 = vmatmul.mubr.bf16.gmra.mrb[0].mxu0 %v4340
    %v5348 = vpop.f32.mrb[0].mxu0
    %v5349 = vadd.f32 %v4511, %v5348
    %v5350 = vpop.f32.mrb[0].mxu0
    %v5351 = vadd.f32 %v4515, %v5350
    %v5352 = vpop.f32.mrb[0].mxu0
    %v5353 = vadd.f32 %v4511, %v5352
    %v5354 = vpop.f32.mrb[0].mxu0
    %v5355 = vadd.f32 %v4515, %v5354
    %5356 = vmatprep.mubr.bf16.mxu0 %v4343
    %5357 = vmatmul.mubr.bf16.gmra.mrb[0].mxu0 %v4342
    %v5358 = vpop.f32.mrb[0].mxu0
    %v5359 = vadd.f32 %v4511, %v5358
    %v5360 = vpop.f32.mrb[0].mxu0
    %v5361 = vadd.f32 %v4515, %v5360
    %v5362 = vpop.f32.mrb[0].mxu0
    %v5363 = vadd.f32 %v4511, %v5362
    %v5364 = vpop.f32.mrb[0].mxu0
    %v5365 = vadd.f32 %v4515, %v5364
    %5366 = vmatprep.mubr.bf16.mxu0 %v4345
    %5367 = vmatmul.mubr.bf16.gmra.mrb[0].mxu0 %v4344
    %v5368 = vpop.f32.mrb[0].mxu0
    %v5369 = vadd.f32 %v4511, %v5368
    %v5370 = vpop.f32.mrb[0].mxu0
    %v5371 = vadd.f32 %v4515, %v5370
    %v5372 = vpop.f32.mrb[0].mxu0
    %v5373 = vadd.f32 %v4511, %v5372
    %v5374 = vpop.f32.mrb[0].mxu0
    %v5375 = vadd.f32 %v4515, %v5374
    %5376 = vmatprep.mubr.bf16.mxu0 %v4347
    %5377 = vmatmul.mubr.bf16.gmra.mrb[0].mxu0 %v4346
    %v5378 = vpop.f32.mrb[0].mxu0
    %v5379 = vadd.f32 %v4511, %v5378
    %v5380 = vpop.f32.mrb[0].mxu0
    %v5381 = vadd.f32 %v4515, %v5380
    %v5382 = vpop.f32.mrb[0].mxu0
    %v5383 = vadd.f32 %v4511, %v5382
    %v5384 = vpop.f32.mrb[0].mxu0
    %v5385 = vadd.f32 %v4515, %v5384
    %5386 = vmatprep.mubr.bf16.mxu0 %v4349
    %5387 = vmatmul.mubr.bf16.gmra.mrb[0].mxu0 %v4348
    %v5388 = vpop.f32.mrb[0].mxu0
    %v5389 = vadd.f32 %v4511, %v5388
    %v5390 = vpop.f32.mrb[0].mxu0
    %v5391 = vadd.f32 %v4515, %v5390
    %v5392 = vpop.f32.mrb[0].mxu0
    %v5393 = vadd.f32 %v4511, %v5392
    %v5394 = vpop.f32.mrb[0].mxu0
    %v5395 = vadd.f32 %v4515, %v5394
    %5396 = vmatprep.mubr.bf16.mxu0 %v4351
    %5397 = vmatmul.mubr.bf16.gmra.mrb[0].mxu0 %v4350
    %v5398 = vpop.f32.mrb[0].mxu0
    %v5399 = vadd.f32 %v4511, %v5398
    %v5400 = vpop.f32.mrb[0].mxu0
    %v5401 = vadd.f32 %v4515, %v5400
    %v5402 = vpop.f32.mrb[0].mxu0
    %v5403 = vadd.f32 %v4511, %v5402
    %v5404 = vpop.f32.mrb[0].mxu0
    %v5405 = vadd.f32 %v4515, %v5404
    %5406 = vmatprep.mubr.bf16.mxu0 %v4353
    %5407 = vmatmul.mubr.bf16.gmra.mrb[0].mxu0 %v4352
    %v5408 = vpop.f32.mrb[0].mxu0
    %v5409 = vadd.f32 %v4511, %v5408
    %v5410 = vpop.f32.mrb[0].mxu0
    %v5411 = vadd.f32 %v4515, %v5410
    %v5412 = vpop.f32.mrb[0].mxu0
    %v5413 = vadd.f32 %v4511, %v5412
    %v5414 = vpop.f32.mrb[0].mxu0
    %v5415 = vadd.f32 %v4515, %v5414
    %5416 = vmatprep.mubr.bf16.mxu0 %v4355
    %5417 = vmatmul.mubr.bf16.gmra.mrb[0].mxu0 %v4354
    %v5418 = vpop.f32.mrb[0].mxu0
    %v5419 = vadd.f32 %v4511, %v5418
    %v5420 = vpop.f32.mrb[0].mxu0
    %v5421 = vadd.f32 %v4515, %v5420
    %v5422 = vpop.f32.mrb[0].mxu0
    %v5423 = vadd.f32 %v4511, %v5422
    %v5424 = vpop.f32.mrb[0].mxu0
    %v5425 = vadd.f32 %v4515, %v5424
    %5426 = vmatprep.mubr.bf16.mxu0 %v4357
    %5427 = vmatmul.mubr.bf16.gmra.mrb[0].mxu0 %v4356
    %v5428 = vpop.f32.mrb[0].mxu0
    %v5429 = vadd.f32 %v4511, %v5428
    %v5430 = vpop.f32.mrb[0].mxu0
    %v5431 = vadd.f32 %v4515, %v5430
    %v5432 = vpop.f32.mrb[0].mxu0
    %v5433 = vadd.f32 %v4511, %v5432
    %v5434 = vpop.f32.mrb[0].mxu0
    %v5435 = vadd.f32 %v4515, %v5434
    %5436 = vmatprep.mubr.bf16.mxu0 %v4359
    %5437 = vmatmul.mubr.bf16.gmra.mrb[0].mxu0 %v4358
    %v5438 = vpop.f32.mrb[0].mxu0
    %v5439 = vadd.f32 %v4511, %v5438
    %v5440 = vpop.f32.mrb[0].mxu0
    %v5441 = vadd.f32 %v4515, %v5440
    %v5442 = vpop.f32.mrb[0].mxu0
    %v5443 = vadd.f32 %v4511, %v5442
    %v5444 = vpop.f32.mrb[0].mxu0
    %v5445 = vadd.f32 %v4515, %v5444
    %5446 = vmatprep.mubr.bf16.mxu0 %v4361
    %5447 = vmatmul.mubr.bf16.gmra.mrb[0].mxu0 %v4360
    %v5448 = vpop.f32.mrb[0].mxu0
    %v5449 = vadd.f32 %v4511, %v5448
    %v5450 = vpop.f32.mrb[0].mxu0
    %v5451 = vadd.f32 %v4515, %v5450
    %v5452 = vpop.f32.mrb[0].mxu0
    %v5453 = vadd.f32 %v4511, %v5452
    %v5454 = vpop.f32.mrb[0].mxu0
    %v5455 = vadd.f32 %v4515, %v5454
    %5456 = vmatprep.mubr.bf16.mxu0 %v4363
    %5457 = vmatmul.mubr.bf16.gmra.mrb[0].mxu0 %v4362
    %v5458 = vpop.f32.mrb[0].mxu0
    %v5459 = vadd.f32 %v4511, %v5458
    %v5460 = vpop.f32.mrb[0].mxu0
    %v5461 = vadd.f32 %v4515, %v5460
    %v5462 = vpop.f32.mrb[0].mxu0
    %v5463 = vadd.f32 %v4511, %v5462
    %v5464 = vpop.f32.mrb[0].mxu0
    %v5465 = vadd.f32 %v4515, %v5464
    %5466 = vmatprep.mubr.bf16.mxu0 %v4365
    %5467 = vmatmul.mubr.bf16.gmra.mrb[0].mxu0 %v4364
    %v5468 = vpop.f32.mrb[0].mxu0
    %v5469 = vadd.f32 %v4511, %v5468
    %v5470 = vpop.f32.mrb[0].mxu0
    %v5471 = vadd.f32 %v4515, %v5470
    %v5472 = vpop.f32.mrb[0].mxu0
    %v5473 = vadd.f32 %v4511, %v5472
    %v5474 = vpop.f32.mrb[0].mxu0
    %v5475 = vadd.f32 %v4515, %v5474
    %5476 = vmatprep.mubr.bf16.mxu0 %v4367
    %5477 = vmatmul.mubr.bf16.gmra.mrb[0].mxu0 %v4366
    %v5478 = vpop.f32.mrb[0].mxu0
    %v5479 = vadd.f32 %v4511, %v5478
    %v5480 = vpop.f32.mrb[0].mxu0
    %v5481 = vadd.f32 %v4515, %v5480
    %v5482 = vpop.f32.mrb[0].mxu0
    %v5483 = vadd.f32 %v4511, %v5482
    %v5484 = vpop.f32.mrb[0].mxu0
    %v5485 = vadd.f32 %v4515, %v5484
    %5486 = vmatprep.mubr.bf16.mxu0 %v4369
    %5487 = vmatmul.mubr.bf16.gmra.mrb[0].mxu0 %v4368
    %v5488 = vpop.f32.mrb[0].mxu0
    %v5489 = vadd.f32 %v4511, %v5488
    %v5490 = vpop.f32.mrb[0].mxu0
    %v5491 = vadd.f32 %v4515, %v5490
    %v5492 = vpop.f32.mrb[0].mxu0
    %v5493 = vadd.f32 %v4511, %v5492
    %v5494 = vpop.f32.mrb[0].mxu0
    %v5495 = vadd.f32 %v4515, %v5494
    %5496 = vdwg.mxu0
    %5497 = vmatprep.subr.bf16.mxu0 %v4892
    %5498 = vmatpush1.bf16.msra.mxu0 %v4891
    %5499 = vmatprep.subr.bf16.mxu0 %v4899
    %5500 = vmatpush1.bf16.msra.mxu0 %v4898
    %5501 = vmatprep.subr.bf16.mxu0 %v4906
    %5502 = vmatpush1.bf16.msra.mxu0 %v4905
    %5503 = vmatprep.subr.bf16.mxu0 %v4913
    %5504 = vmatpush1.bf16.msra.mxu0 %v4912
    %5505 = vmatprep.subr.bf16.mxu0 %v4920
    %5506 = vmatpush1.bf16.msra.mxu0 %v4919
    %5507 = vmatprep.subr.bf16.mxu0 %v4927
    %5508 = vmatpush1.bf16.msra.mxu0 %v4926
    %5509 = vmatprep.subr.bf16.mxu0 %v4934
    %5510 = vmatpush1.bf16.msra.mxu0 %v4933
    %5511 = vmatprep.subr.bf16.mxu0 %v4941
    %5512 = vmatpush1.bf16.msra.mxu0 %v4940
    %5513 = vmatprep.subr.bf16.mxu0 %v4948
    %5514 = vmatpush1.bf16.msra.mxu0 %v4947
    %5515 = vmatprep.subr.bf16.mxu0 %v4955
    %5516 = vmatpush1.bf16.msra.mxu0 %v4954
    %5517 = vmatprep.subr.bf16.mxu0 %v4962
    %5518 = vmatpush1.bf16.msra.mxu0 %v4961
    %5519 = vmatprep.subr.bf16.mxu0 %v4969
    %5520 = vmatpush1.bf16.msra.mxu0 %v4968
    %5521 = vmatprep.subr.bf16.mxu0 %v4976
    %5522 = vmatpush1.bf16.msra.mxu0 %v4975
    %5523 = vmatprep.subr.bf16.mxu0 %v4983
    %5524 = vmatpush1.bf16.msra.mxu0 %v4982
    %5525 = vmatprep.subr.bf16.mxu0 %v4990
    %5526 = vmatpush1.bf16.msra.mxu0 %v4989
    %5527 = vmatprep.subr.bf16.mxu0 %v4997
    %5528 = vmatpush1.bf16.msra.mxu0 %v4996
    %5529 = vmatprep.mubr.bf16.mxu0 %v4339
    %5530 = vmatmul.mubr.bf16.gmra.mrb[0].mxu0 %v4338
    %v5531 = vpop.f32.mrb[0].mxu0
    %v5532 = vadd.f32 %v4519, %v5531
    %v5533 = vpop.f32.mrb[0].mxu0
    %v5534 = vadd.f32 %v4523, %v5533
    %v5535 = vpop.f32.mrb[0].mxu0
    %v5536 = vadd.f32 %v4519, %v5535
    %v5537 = vpop.f32.mrb[0].mxu0
    %v5538 = vadd.f32 %v4523, %v5537
    %5539 = vmatprep.mubr.bf16.mxu0 %v4341
    %5540 = vmatmul.mubr.bf16.gmra.mrb[0].mxu0 %v4340
    %v5541 = vpop.f32.mrb[0].mxu0
    %v5542 = vadd.f32 %v4519, %v5541
    %v5543 = vpop.f32.mrb[0].mxu0
    %v5544 = vadd.f32 %v4523, %v5543
    %v5545 = vpop.f32.mrb[0].mxu0
    %v5546 = vadd.f32 %v4519, %v5545
    %v5547 = vpop.f32.mrb[0].mxu0
    %v5548 = vadd.f32 %v4523, %v5547
    %5549 = vmatprep.mubr.bf16.mxu0 %v4343
    %5550 = vmatmul.mubr.bf16.gmra.mrb[0].mxu0 %v4342
    %v5551 = vpop.f32.mrb[0].mxu0
    %v5552 = vadd.f32 %v4519, %v5551
    %v5553 = vpop.f32.mrb[0].mxu0
    %v5554 = vadd.f32 %v4523, %v5553
    %v5555 = vpop.f32.mrb[0].mxu0
    %v5556 = vadd.f32 %v4519, %v5555
    %v5557 = vpop.f32.mrb[0].mxu0
    %v5558 = vadd.f32 %v4523, %v5557
    %5559 = vmatprep.mubr.bf16.mxu0 %v4345
    %5560 = vmatmul.mubr.bf16.gmra.mrb[0].mxu0 %v4344
    %v5561 = vpop.f32.mrb[0].mxu0
    %v5562 = vadd.f32 %v4519, %v5561
    %v5563 = vpop.f32.mrb[0].mxu0
    %v5564 = vadd.f32 %v4523, %v5563
    %v5565 = vpop.f32.mrb[0].mxu0
    %v5566 = vadd.f32 %v4519, %v5565
    %v5567 = vpop.f32.mrb[0].mxu0
    %v5568 = vadd.f32 %v4523, %v5567
    %5569 = vmatprep.mubr.bf16.mxu0 %v4347
    %5570 = vmatmul.mubr.bf16.gmra.mrb[0].mxu0 %v4346
    %v5571 = vpop.f32.mrb[0].mxu0
    %v5572 = vadd.f32 %v4519, %v5571
    %v5573 = vpop.f32.mrb[0].mxu0
    %v5574 = vadd.f32 %v4523, %v5573
    %v5575 = vpop.f32.mrb[0].mxu0
    %v5576 = vadd.f32 %v4519, %v5575
    %v5577 = vpop.f32.mrb[0].mxu0
    %v5578 = vadd.f32 %v4523, %v5577
    %5579 = vmatprep.mubr.bf16.mxu0 %v4349
    %5580 = vmatmul.mubr.bf16.gmra.mrb[0].mxu0 %v4348
    %v5581 = vpop.f32.mrb[0].mxu0
    %v5582 = vadd.f32 %v4519, %v5581
    %v5583 = vpop.f32.mrb[0].mxu0
    %v5584 = vadd.f32 %v4523, %v5583
    %v5585 = vpop.f32.mrb[0].mxu0
    %v5586 = vadd.f32 %v4519, %v5585
    %v5587 = vpop.f32.mrb[0].mxu0
    %v5588 = vadd.f32 %v4523, %v5587
    %5589 = vmatprep.mubr.bf16.mxu0 %v4351
    %5590 = vmatmul.mubr.bf16.gmra.mrb[0].mxu0 %v4350
    %v5591 = vpop.f32.mrb[0].mxu0
    %v5592 = vadd.f32 %v4519, %v5591
    %v5593 = vpop.f32.mrb[0].mxu0
    %v5594 = vadd.f32 %v4523, %v5593
    %v5595 = vpop.f32.mrb[0].mxu0
    %v5596 = vadd.f32 %v4519, %v5595
    %v5597 = vpop.f32.mrb[0].mxu0
    %v5598 = vadd.f32 %v4523, %v5597
    %5599 = vmatprep.mubr.bf16.mxu0 %v4353
    %5600 = vmatmul.mubr.bf16.gmra.mrb[0].mxu0 %v4352
    %v5601 = vpop.f32.mrb[0].mxu0
    %v5602 = vadd.f32 %v4519, %v5601
    %v5603 = vpop.f32.mrb[0].mxu0
    %v5604 = vadd.f32 %v4523, %v5603
    %v5605 = vpop.f32.mrb[0].mxu0
    %v5606 = vadd.f32 %v4519, %v5605
    %v5607 = vpop.f32.mrb[0].mxu0
    %v5608 = vadd.f32 %v4523, %v5607
    %5609 = vmatprep.mubr.bf16.mxu0 %v4355
    %5610 = vmatmul.mubr.bf16.gmra.mrb[0].mxu0 %v4354
    %v5611 = vpop.f32.mrb[0].mxu0
    %v5612 = vadd.f32 %v4519, %v5611
    %v5613 = vpop.f32.mrb[0].mxu0
    %v5614 = vadd.f32 %v4523, %v5613
    %v5615 = vpop.f32.mrb[0].mxu0
    %v5616 = vadd.f32 %v4519, %v5615
    %v5617 = vpop.f32.mrb[0].mxu0
    %v5618 = vadd.f32 %v4523, %v5617
    %5619 = vmatprep.mubr.bf16.mxu0 %v4357
    %5620 = vmatmul.mubr.bf16.gmra.mrb[0].mxu0 %v4356
    %v5621 = vpop.f32.mrb[0].mxu0
    %v5622 = vadd.f32 %v4519, %v5621
    %v5623 = vpop.f32.mrb[0].mxu0
    %v5624 = vadd.f32 %v4523, %v5623
    %v5625 = vpop.f32.mrb[0].mxu0
    %v5626 = vadd.f32 %v4519, %v5625
    %v5627 = vpop.f32.mrb[0].mxu0
    %v5628 = vadd.f32 %v4523, %v5627
    %5629 = vmatprep.mubr.bf16.mxu0 %v4359
    %5630 = vmatmul.mubr.bf16.gmra.mrb[0].mxu0 %v4358
    %v5631 = vpop.f32.mrb[0].mxu0
    %v5632 = vadd.f32 %v4519, %v5631
    %v5633 = vpop.f32.mrb[0].mxu0
    %v5634 = vadd.f32 %v4523, %v5633
    %v5635 = vpop.f32.mrb[0].mxu0
    %v5636 = vadd.f32 %v4519, %v5635
    %v5637 = vpop.f32.mrb[0].mxu0
    %v5638 = vadd.f32 %v4523, %v5637
    %5639 = vmatprep.mubr.bf16.mxu0 %v4361
    %5640 = vmatmul.mubr.bf16.gmra.mrb[0].mxu0 %v4360
    %v5641 = vpop.f32.mrb[0].mxu0
    %v5642 = vadd.f32 %v4519, %v5641
    %v5643 = vpop.f32.mrb[0].mxu0
    %v5644 = vadd.f32 %v4523, %v5643
    %v5645 = vpop.f32.mrb[0].mxu0
    %v5646 = vadd.f32 %v4519, %v5645
    %v5647 = vpop.f32.mrb[0].mxu0
    %v5648 = vadd.f32 %v4523, %v5647
    %5649 = vmatprep.mubr.bf16.mxu0 %v4363
    %5650 = vmatmul.mubr.bf16.gmra.mrb[0].mxu0 %v4362
    %v5651 = vpop.f32.mrb[0].mxu0
    %v5652 = vadd.f32 %v4519, %v5651
    %v5653 = vpop.f32.mrb[0].mxu0
    %v5654 = vadd.f32 %v4523, %v5653
    %v5655 = vpop.f32.mrb[0].mxu0
    %v5656 = vadd.f32 %v4519, %v5655
    %v5657 = vpop.f32.mrb[0].mxu0
    %v5658 = vadd.f32 %v4523, %v5657
    %5659 = vmatprep.mubr.bf16.mxu0 %v4365
    %5660 = vmatmul.mubr.bf16.gmra.mrb[0].mxu0 %v4364
    %v5661 = vpop.f32.mrb[0].mxu0
    %v5662 = vadd.f32 %v4519, %v5661
    %v5663 = vpop.f32.mrb[0].mxu0
    %v5664 = vadd.f32 %v4523, %v5663
    %v5665 = vpop.f32.mrb[0].mxu0
    %v5666 = vadd.f32 %v4519, %v5665
    %v5667 = vpop.f32.mrb[0].mxu0
    %v5668 = vadd.f32 %v4523, %v5667
    %5669 = vmatprep.mubr.bf16.mxu0 %v4367
    %5670 = vmatmul.mubr.bf16.gmra.mrb[0].mxu0 %v4366
    %v5671 = vpop.f32.mrb[0].mxu0
    %v5672 = vadd.f32 %v4519, %v5671
    %v5673 = vpop.f32.mrb[0].mxu0
    %v5674 = vadd.f32 %v4523, %v5673
    %v5675 = vpop.f32.mrb[0].mxu0
    %v5676 = vadd.f32 %v4519, %v5675
    %v5677 = vpop.f32.mrb[0].mxu0
    %v5678 = vadd.f32 %v4523, %v5677
    %5679 = vmatprep.mubr.bf16.mxu0 %v4369
    %5680 = vmatmul.mubr.bf16.gmra.mrb[0].mxu0 %v4368
    %v5681 = vpop.f32.mrb[0].mxu0
    %v5682 = vadd.f32 %v4519, %v5681
    %v5683 = vpop.f32.mrb[0].mxu0
    %v5684 = vadd.f32 %v4523, %v5683
    %v5685 = vpop.f32.mrb[0].mxu0
    %v5686 = vadd.f32 %v4519, %v5685
    %v5687 = vpop.f32.mrb[0].mxu0
    %v5688 = vadd.f32 %v4523, %v5687
    %5689 = vdwg.mxu0
    %5690 = vmatprep.subr.bf16.mxu0 0
    %5691 = vmatpush1.bf16.msra.mxu0 %v4893
    %5692 = vmatprep.subr.bf16.mxu0 0
    %5693 = vmatpush1.bf16.msra.mxu0 %v4900
    %5694 = vmatprep.subr.bf16.mxu0 0
    %5695 = vmatpush1.bf16.msra.mxu0 %v4907
    %5696 = vmatprep.subr.bf16.mxu0 0
    %5697 = vmatpush1.bf16.msra.mxu0 %v4914
    %5698 = vmatprep.subr.bf16.mxu0 0
    %5699 = vmatpush1.bf16.msra.mxu0 %v4921
    %5700 = vmatprep.subr.bf16.mxu0 0
    %5701 = vmatpush1.bf16.msra.mxu0 %v4928
    %5702 = vmatprep.subr.bf16.mxu0 0
    %5703 = vmatpush1.bf16.msra.mxu0 %v4935
    %5704 = vmatprep.subr.bf16.mxu0 0
    %5705 = vmatpush1.bf16.msra.mxu0 %v4942
    %5706 = vmatprep.subr.bf16.mxu0 0
    %5707 = vmatpush1.bf16.msra.mxu0 %v4949
    %5708 = vmatprep.subr.bf16.mxu0 0
    %5709 = vmatpush1.bf16.msra.mxu0 %v4956
    %5710 = vmatprep.subr.bf16.mxu0 0
    %5711 = vmatpush1.bf16.msra.mxu0 %v4963
    %5712 = vmatprep.subr.bf16.mxu0 0
    %5713 = vmatpush1.bf16.msra.mxu0 %v4970
    %5714 = vmatprep.subr.bf16.mxu0 0
    %5715 = vmatpush1.bf16.msra.mxu0 %v4977
    %5716 = vmatprep.subr.bf16.mxu0 0
    %5717 = vmatpush1.bf16.msra.mxu0 %v4984
    %5718 = vmatprep.subr.bf16.mxu0 0
    %5719 = vmatpush1.bf16.msra.mxu0 %v4991
    %5720 = vmatprep.subr.bf16.mxu0 0
    %5721 = vmatpush1.bf16.msra.mxu0 %v4998
    %5722 = vmatprep.mubr.bf16.mxu0 %v4339
    %5723 = vmatmul.mubr.bf16.gmra.mrb[0].mxu0 %v4338
    %v5724 = vpop.f32.mrb[0].mxu0
    %v5725 = vadd.f32 %v4527, %v5724
    %v5726 = vpop.f32.mrb[0].mxu0
    %v5727 = vpop.f32.mrb[0].mxu0
    %v5728 = vadd.f32 %v4527, %v5727
    %v5729 = vpop.f32.mrb[0].mxu0
    %5730 = vmatprep.mubr.bf16.mxu0 %v4341
    %5731 = vmatmul.mubr.bf16.gmra.mrb[0].mxu0 %v4340
    %v5732 = vpop.f32.mrb[0].mxu0
    %v5733 = vadd.f32 %v4527, %v5732
    %v5734 = vpop.f32.mrb[0].mxu0
    %v5735 = vpop.f32.mrb[0].mxu0
    %v5736 = vadd.f32 %v4527, %v5735
    %v5737 = vpop.f32.mrb[0].mxu0
    %5738 = vmatprep.mubr.bf16.mxu0 %v4343
    %5739 = vmatmul.mubr.bf16.gmra.mrb[0].mxu0 %v4342
    %v5740 = vpop.f32.mrb[0].mxu0
    %v5741 = vadd.f32 %v4527, %v5740
    %v5742 = vpop.f32.mrb[0].mxu0
    %v5743 = vpop.f32.mrb[0].mxu0
    %v5744 = vadd.f32 %v4527, %v5743
    %v5745 = vpop.f32.mrb[0].mxu0
    %5746 = vmatprep.mubr.bf16.mxu0 %v4345
    %5747 = vmatmul.mubr.bf16.gmra.mrb[0].mxu0 %v4344
    %v5748 = vpop.f32.mrb[0].mxu0
    %v5749 = vadd.f32 %v4527, %v5748
    %v5750 = vpop.f32.mrb[0].mxu0
    %v5751 = vpop.f32.mrb[0].mxu0
    %v5752 = vadd.f32 %v4527, %v5751
    %v5753 = vpop.f32.mrb[0].mxu0
    %5754 = vmatprep.mubr.bf16.mxu0 %v4347
    %5755 = vmatmul.mubr.bf16.gmra.mrb[0].mxu0 %v4346
    %v5756 = vpop.f32.mrb[0].mxu0
    %v5757 = vadd.f32 %v4527, %v5756
    %v5758 = vpop.f32.mrb[0].mxu0
    %v5759 = vpop.f32.mrb[0].mxu0
    %v5760 = vadd.f32 %v4527, %v5759
    %v5761 = vpop.f32.mrb[0].mxu0
    %5762 = vmatprep.mubr.bf16.mxu0 %v4349
    %5763 = vmatmul.mubr.bf16.gmra.mrb[0].mxu0 %v4348
    %v5764 = vpop.f32.mrb[0].mxu0
    %v5765 = vadd.f32 %v4527, %v5764
    %v5766 = vpop.f32.mrb[0].mxu0
    %v5767 = vpop.f32.mrb[0].mxu0
    %v5768 = vadd.f32 %v4527, %v5767
    %v5769 = vpop.f32.mrb[0].mxu0
    %5770 = vmatprep.mubr.bf16.mxu0 %v4351
    %5771 = vmatmul.mubr.bf16.gmra.mrb[0].mxu0 %v4350
    %v5772 = vpop.f32.mrb[0].mxu0
    %v5773 = vadd.f32 %v4527, %v5772
    %v5774 = vpop.f32.mrb[0].mxu0
    %v5775 = vpop.f32.mrb[0].mxu0
    %v5776 = vadd.f32 %v4527, %v5775
    %v5777 = vpop.f32.mrb[0].mxu0
    %5778 = vmatprep.mubr.bf16.mxu0 %v4353
    %5779 = vmatmul.mubr.bf16.gmra.mrb[0].mxu0 %v4352
    %v5780 = vpop.f32.mrb[0].mxu0
    %v5781 = vadd.f32 %v4527, %v5780
    %v5782 = vpop.f32.mrb[0].mxu0
    %v5783 = vpop.f32.mrb[0].mxu0
    %v5784 = vadd.f32 %v4527, %v5783
    %v5785 = vpop.f32.mrb[0].mxu0
    %5786 = vmatprep.mubr.bf16.mxu0 %v4355
    %5787 = vmatmul.mubr.bf16.gmra.mrb[0].mxu0 %v4354
    %v5788 = vpop.f32.mrb[0].mxu0
    %v5789 = vadd.f32 %v4527, %v5788
    %v5790 = vpop.f32.mrb[0].mxu0
    %v5791 = vpop.f32.mrb[0].mxu0
    %v5792 = vadd.f32 %v4527, %v5791
    %v5793 = vpop.f32.mrb[0].mxu0
    %5794 = vmatprep.mubr.bf16.mxu0 %v4357
    %5795 = vmatmul.mubr.bf16.gmra.mrb[0].mxu0 %v4356
    %v5796 = vpop.f32.mrb[0].mxu0
    %v5797 = vadd.f32 %v4527, %v5796
    %v5798 = vpop.f32.mrb[0].mxu0
    %v5799 = vpop.f32.mrb[0].mxu0
    %v5800 = vadd.f32 %v4527, %v5799
    %v5801 = vpop.f32.mrb[0].mxu0
    %5802 = vmatprep.mubr.bf16.mxu0 %v4359
    %5803 = vmatmul.mubr.bf16.gmra.mrb[0].mxu0 %v4358
    %v5804 = vpop.f32.mrb[0].mxu0
    %v5805 = vadd.f32 %v4527, %v5804
    %v5806 = vpop.f32.mrb[0].mxu0
    %v5807 = vpop.f32.mrb[0].mxu0
    %v5808 = vadd.f32 %v4527, %v5807
    %v5809 = vpop.f32.mrb[0].mxu0
    %5810 = vmatprep.mubr.bf16.mxu0 %v4361
    %5811 = vmatmul.mubr.bf16.gmra.mrb[0].mxu0 %v4360
    %v5812 = vpop.f32.mrb[0].mxu0
    %v5813 = vadd.f32 %v4527, %v5812
    %v5814 = vpop.f32.mrb[0].mxu0
    %v5815 = vpop.f32.mrb[0].mxu0
    %v5816 = vadd.f32 %v4527, %v5815
    %v5817 = vpop.f32.mrb[0].mxu0
    %5818 = vmatprep.mubr.bf16.mxu0 %v4363
    %5819 = vmatmul.mubr.bf16.gmra.mrb[0].mxu0 %v4362
    %v5820 = vpop.f32.mrb[0].mxu0
    %v5821 = vadd.f32 %v4527, %v5820
    %v5822 = vpop.f32.mrb[0].mxu0
    %v5823 = vpop.f32.mrb[0].mxu0
    %v5824 = vadd.f32 %v4527, %v5823
    %v5825 = vpop.f32.mrb[0].mxu0
    %5826 = vmatprep.mubr.bf16.mxu0 %v4365
    %5827 = vmatmul.mubr.bf16.gmra.mrb[0].mxu0 %v4364
    %v5828 = vpop.f32.mrb[0].mxu0
    %v5829 = vadd.f32 %v4527, %v5828
    %v5830 = vpop.f32.mrb[0].mxu0
    %v5831 = vpop.f32.mrb[0].mxu0
    %v5832 = vadd.f32 %v4527, %v5831
    %v5833 = vpop.f32.mrb[0].mxu0
    %5834 = vmatprep.mubr.bf16.mxu0 %v4367
    %5835 = vmatmul.mubr.bf16.gmra.mrb[0].mxu0 %v4366
    %v5836 = vpop.f32.mrb[0].mxu0
    %v5837 = vadd.f32 %v4527, %v5836
    %v5838 = vpop.f32.mrb[0].mxu0
    %v5839 = vpop.f32.mrb[0].mxu0
    %v5840 = vadd.f32 %v4527, %v5839
    %v5841 = vpop.f32.mrb[0].mxu0
    %5842 = vmatprep.mubr.bf16.mxu0 %v4369
    %5843 = vmatmul.mubr.bf16.gmra.mrb[0].mxu0 %v4368
    %v5844 = vpop.f32.mrb[0].mxu0
    %v5845 = vadd.f32 %v4527, %v5844
    %v5846 = vpop.f32.mrb[0].mxu0
    %v5847 = vpop.f32.mrb[0].mxu0
    %v5848 = vadd.f32 %v4527, %v5847
    %v5849 = vpop.f32.mrb[0].mxu0
    %5850 = vdwg.mxu0
    %v5851 = vmax.f32 %v5146, 0.0
    %v5852 = vmax.f32 %v5148, 0.0
    %v5853 = vmax.f32 %v5339, 0.0
    %v5854 = vmax.f32 %v5341, 0.0
    %v5855 = vmax.f32 %v5532, 0.0
    %v5856 = vmax.f32 %v5534, 0.0
    %v5857 = vmax.f32 %v5725, 0.0
    %v5858 = vmax.f32 %v5150, 0.0
    %v5859 = vmax.f32 %v5152, 0.0
    %v5860 = vmax.f32 %v5343, 0.0
    %v5861 = vmax.f32 %v5345, 0.0
    %v5862 = vmax.f32 %v5536, 0.0
    %v5863 = vmax.f32 %v5538, 0.0
    %v5864 = vmax.f32 %v5728, 0.0
    %v5865 = vmax.f32 %v5156, 0.0
    %v5866 = vmax.f32 %v5158, 0.0
    %v5867 = vmax.f32 %v5349, 0.0
    %v5868 = vmax.f32 %v5351, 0.0
    %v5869 = vmax.f32 %v5542, 0.0
    %v5870 = vmax.f32 %v5544, 0.0
    %v5871 = vmax.f32 %v5733, 0.0
    %v5872 = vmax.f32 %v5160, 0.0
    %v5873 = vmax.f32 %v5162, 0.0
    %v5874 = vmax.f32 %v5353, 0.0
    %v5875 = vmax.f32 %v5355, 0.0
    %v5876 = vmax.f32 %v5546, 0.0
    %v5877 = vmax.f32 %v5548, 0.0
    %v5878 = vmax.f32 %v5736, 0.0
    %v5879 = vmax.f32 %v5166, 0.0
    %v5880 = vmax.f32 %v5168, 0.0
    %v5881 = vmax.f32 %v5359, 0.0
    %v5882 = vmax.f32 %v5361, 0.0
    %v5883 = vmax.f32 %v5552, 0.0
    %v5884 = vmax.f32 %v5554, 0.0
    %v5885 = vmax.f32 %v5741, 0.0
    %v5886 = vmax.f32 %v5170, 0.0
    %v5887 = vmax.f32 %v5172, 0.0
    %v5888 = vmax.f32 %v5363, 0.0
    %v5889 = vmax.f32 %v5365, 0.0
    %v5890 = vmax.f32 %v5556, 0.0
    %v5891 = vmax.f32 %v5558, 0.0
    %v5892 = vmax.f32 %v5744, 0.0
    %v5893 = vmax.f32 %v5176, 0.0
    %v5894 = vmax.f32 %v5178, 0.0
    %v5895 = vmax.f32 %v5369, 0.0
    %v5896 = vmax.f32 %v5371, 0.0
    %v5897 = vmax.f32 %v5562, 0.0
    %v5898 = vmax.f32 %v5564, 0.0
    %v5899 = vmax.f32 %v5749, 0.0
    %v5900 = vmax.f32 %v5180, 0.0
    %v5901 = vmax.f32 %v5182, 0.0
    %v5902 = vmax.f32 %v5373, 0.0
    %v5903 = vmax.f32 %v5375, 0.0
    %v5904 = vmax.f32 %v5566, 0.0
    %v5905 = vmax.f32 %v5568, 0.0
    %v5906 = vmax.f32 %v5752, 0.0
    %v5907 = vmax.f32 %v5186, 0.0
    %v5908 = vmax.f32 %v5188, 0.0
    %v5909 = vmax.f32 %v5379, 0.0
    %v5910 = vmax.f32 %v5381, 0.0
    %v5911 = vmax.f32 %v5572, 0.0
    %v5912 = vmax.f32 %v5574, 0.0
    %v5913 = vmax.f32 %v5757, 0.0
    %v5914 = vmax.f32 %v5190, 0.0
    %v5915 = vmax.f32 %v5192, 0.0
    %v5916 = vmax.f32 %v5383, 0.0
    %v5917 = vmax.f32 %v5385, 0.0
    %v5918 = vmax.f32 %v5576, 0.0
    %v5919 = vmax.f32 %v5578, 0.0
    %v5920 = vmax.f32 %v5760, 0.0
    %v5921 = vmax.f32 %v5196, 0.0
    %v5922 = vmax.f32 %v5198, 0.0
    %v5923 = vmax.f32 %v5389, 0.0
    %v5924 = vmax.f32 %v5391, 0.0
    %v5925 = vmax.f32 %v5582, 0.0
    %v5926 = vmax.f32 %v5584, 0.0
    %v5927 = vmax.f32 %v5765, 0.0
    %v5928 = vmax.f32 %v5200, 0.0
    %v5929 = vmax.f32 %v5202, 0.0
    %v5930 = vmax.f32 %v5393, 0.0
    %v5931 = vmax.f32 %v5395, 0.0
    %v5932 = vmax.f32 %v5586, 0.0
    %v5933 = vmax.f32 %v5588, 0.0
    %v5934 = vmax.f32 %v5768, 0.0
    %v5935 = vmax.f32 %v5206, 0.0
    %v5936 = vmax.f32 %v5208, 0.0
    %v5937 = vmax.f32 %v5399, 0.0
    %v5938 = vmax.f32 %v5401, 0.0
    %v5939 = vmax.f32 %v5592, 0.0
    %v5940 = vmax.f32 %v5594, 0.0
    %v5941 = vmax.f32 %v5773, 0.0
    %v5942 = vmax.f32 %v5210, 0.0
    %v5943 = vmax.f32 %v5212, 0.0
    %v5944 = vmax.f32 %v5403, 0.0
    %v5945 = vmax.f32 %v5405, 0.0
    %v5946 = vmax.f32 %v5596, 0.0
    %v5947 = vmax.f32 %v5598, 0.0
    %v5948 = vmax.f32 %v5776, 0.0
    %v5949 = vmax.f32 %v5216, 0.0
    %v5950 = vmax.f32 %v5218, 0.0
    %v5951 = vmax.f32 %v5409, 0.0
    %v5952 = vmax.f32 %v5411, 0.0
    %v5953 = vmax.f32 %v5602, 0.0
    %v5954 = vmax.f32 %v5604, 0.0
    %v5955 = vmax.f32 %v5781, 0.0
    %v5956 = vmax.f32 %v5220, 0.0
    %v5957 = vmax.f32 %v5222, 0.0
    %v5958 = vmax.f32 %v5413, 0.0
    %v5959 = vmax.f32 %v5415, 0.0
    %v5960 = vmax.f32 %v5606, 0.0
    %v5961 = vmax.f32 %v5608, 0.0
    %v5962 = vmax.f32 %v5784, 0.0
    %v5963 = vmax.f32 %v5226, 0.0
    %v5964 = vmax.f32 %v5228, 0.0
    %v5965 = vmax.f32 %v5419, 0.0
    %v5966 = vmax.f32 %v5421, 0.0
    %v5967 = vmax.f32 %v5612, 0.0
    %v5968 = vmax.f32 %v5614, 0.0
    %v5969 = vmax.f32 %v5789, 0.0
    %v5970 = vmax.f32 %v5230, 0.0
    %v5971 = vmax.f32 %v5232, 0.0
    %v5972 = vmax.f32 %v5423, 0.0
    %v5973 = vmax.f32 %v5425, 0.0
    %v5974 = vmax.f32 %v5616, 0.0
    %v5975 = vmax.f32 %v5618, 0.0
    %v5976 = vmax.f32 %v5792, 0.0
    %v5977 = vmax.f32 %v5236, 0.0
    %v5978 = vmax.f32 %v5238, 0.0
    %v5979 = vmax.f32 %v5429, 0.0
    %v5980 = vmax.f32 %v5431, 0.0
    %v5981 = vmax.f32 %v5622, 0.0
    %v5982 = vmax.f32 %v5624, 0.0
    %v5983 = vmax.f32 %v5797, 0.0
    %v5984 = vmax.f32 %v5240, 0.0
    %v5985 = vmax.f32 %v5242, 0.0
    %v5986 = vmax.f32 %v5433, 0.0
    %v5987 = vmax.f32 %v5435, 0.0
    %v5988 = vmax.f32 %v5626, 0.0
    %v5989 = vmax.f32 %v5628, 0.0
    %v5990 = vmax.f32 %v5800, 0.0
    %v5991 = vmax.f32 %v5246, 0.0
    %v5992 = vmax.f32 %v5248, 0.0
    %v5993 = vmax.f32 %v5439, 0.0
    %v5994 = vmax.f32 %v5441, 0.0
    %v5995 = vmax.f32 %v5632, 0.0
    %v5996 = vmax.f32 %v5634, 0.0
    %v5997 = vmax.f32 %v5805, 0.0
    %v5998 = vmax.f32 %v5250, 0.0
    %v5999 = vmax.f32 %v5252, 0.0
    %v6000 = vmax.f32 %v5443, 0.0
    %v6001 = vmax.f32 %v5445, 0.0
    %v6002 = vmax.f32 %v5636, 0.0
    %v6003 = vmax.f32 %v5638, 0.0
    %v6004 = vmax.f32 %v5808, 0.0
    %v6005 = vmax.f32 %v5256, 0.0
    %v6006 = vmax.f32 %v5258, 0.0
    %v6007 = vmax.f32 %v5449, 0.0
    %v6008 = vmax.f32 %v5451, 0.0
    %v6009 = vmax.f32 %v5642, 0.0
    %v6010 = vmax.f32 %v5644, 0.0
    %v6011 = vmax.f32 %v5813, 0.0
    %v6012 = vmax.f32 %v5260, 0.0
    %v6013 = vmax.f32 %v5262, 0.0
    %v6014 = vmax.f32 %v5453, 0.0
    %v6015 = vmax.f32 %v5455, 0.0
    %v6016 = vmax.f32 %v5646, 0.0
    %v6017 = vmax.f32 %v5648, 0.0
    %v6018 = vmax.f32 %v5816, 0.0
    %v6019 = vmax.f32 %v5266, 0.0
    %v6020 = vmax.f32 %v5268, 0.0
    %v6021 = vmax.f32 %v5459, 0.0
    %v6022 = vmax.f32 %v5461, 0.0
    %v6023 = vmax.f32 %v5652, 0.0
    %v6024 = vmax.f32 %v5654, 0.0
    %v6025 = vmax.f32 %v5821, 0.0
    %v6026 = vmax.f32 %v5270, 0.0
    %v6027 = vmax.f32 %v5272, 0.0
    %v6028 = vmax.f32 %v5463, 0.0
    %v6029 = vmax.f32 %v5465, 0.0
    %v6030 = vmax.f32 %v5656, 0.0
    %v6031 = vmax.f32 %v5658, 0.0
    %v6032 = vmax.f32 %v5824, 0.0
    %v6033 = vmax.f32 %v5276, 0.0
    %v6034 = vmax.f32 %v5278, 0.0
    %v6035 = vmax.f32 %v5469, 0.0
    %v6036 = vmax.f32 %v5471, 0.0
    %v6037 = vmax.f32 %v5662, 0.0
    %v6038 = vmax.f32 %v5664, 0.0
    %v6039 = vmax.f32 %v5829, 0.0
    %v6040 = vmax.f32 %v5280, 0.0
    %v6041 = vmax.f32 %v5282, 0.0
    %v6042 = vmax.f32 %v5473, 0.0
    %v6043 = vmax.f32 %v5475, 0.0
    %v6044 = vmax.f32 %v5666, 0.0
    %v6045 = vmax.f32 %v5668, 0.0
    %v6046 = vmax.f32 %v5832, 0.0
    %v6047 = vmax.f32 %v5286, 0.0
    %v6048 = vmax.f32 %v5288, 0.0
    %v6049 = vmax.f32 %v5479, 0.0
    %v6050 = vmax.f32 %v5481, 0.0
    %v6051 = vmax.f32 %v5672, 0.0
    %v6052 = vmax.f32 %v5674, 0.0
    %v6053 = vmax.f32 %v5837, 0.0
    %v6054 = vmax.f32 %v5290, 0.0
    %v6055 = vmax.f32 %v5292, 0.0
    %v6056 = vmax.f32 %v5483, 0.0
    %v6057 = vmax.f32 %v5485, 0.0
    %v6058 = vmax.f32 %v5676, 0.0
    %v6059 = vmax.f32 %v5678, 0.0
    %v6060 = vmax.f32 %v5840, 0.0
    %v6061 = vmax.f32 %v5296, 0.0
    %v6062 = vmax.f32 %v5298, 0.0
    %v6063 = vmax.f32 %v5489, 0.0
    %v6064 = vmax.f32 %v5491, 0.0
    %v6065 = vmax.f32 %v5682, 0.0
    %v6066 = vmax.f32 %v5684, 0.0
    %v6067 = vmax.f32 %v5845, 0.0
    %v6068 = vmax.f32 %v5300, 0.0
    %v6069 = vmax.f32 %v5302, 0.0
    %v6070 = vmax.f32 %v5493, 0.0
    %v6071 = vmax.f32 %v5495, 0.0
    %v6072 = vmax.f32 %v5686, 0.0
    %v6073 = vmax.f32 %v5688, 0.0
    %v6074 = vmax.f32 %v5848, 0.0
    %v6075 = vpack.c.bf16 %v5858, %v5851
    %v6076 = vpack.c.bf16 %v5859, %v5852
    %v6077 = vpack.c.bf16 %v5860, %v5853
    %v6078 = vpack.c.bf16 %v5861, %v5854
    %v6079 = vpack.c.bf16 %v5862, %v5855
    %v6080 = vpack.c.bf16 %v5863, %v5856
    %v6081 = vpack.c.bf16 %v5864, %v5857
    %v6082 = vpack.c.bf16 %v5872, %v5865
    %v6083 = vpack.c.bf16 %v5873, %v5866
    %v6084 = vpack.c.bf16 %v5874, %v5867
    %v6085 = vpack.c.bf16 %v5875, %v5868
    %v6086 = vpack.c.bf16 %v5876, %v5869
    %v6087 = vpack.c.bf16 %v5877, %v5870
    %v6088 = vpack.c.bf16 %v5878, %v5871
    %v6089 = vpack.c.bf16 %v5886, %v5879
    %v6090 = vpack.c.bf16 %v5887, %v5880
    %v6091 = vpack.c.bf16 %v5888, %v5881
    %v6092 = vpack.c.bf16 %v5889, %v5882
    %v6093 = vpack.c.bf16 %v5890, %v5883
    %v6094 = vpack.c.bf16 %v5891, %v5884
    %v6095 = vpack.c.bf16 %v5892, %v5885
    %v6096 = vpack.c.bf16 %v5900, %v5893
    %v6097 = vpack.c.bf16 %v5901, %v5894
    %v6098 = vpack.c.bf16 %v5902, %v5895
    %v6099 = vpack.c.bf16 %v5903, %v5896
    %v6100 = vpack.c.bf16 %v5904, %v5897
    %v6101 = vpack.c.bf16 %v5905, %v5898
    %v6102 = vpack.c.bf16 %v5906, %v5899
    %v6103 = vpack.c.bf16 %v5914, %v5907
    %v6104 = vpack.c.bf16 %v5915, %v5908
    %v6105 = vpack.c.bf16 %v5916, %v5909
    %v6106 = vpack.c.bf16 %v5917, %v5910
    %v6107 = vpack.c.bf16 %v5918, %v5911
    %v6108 = vpack.c.bf16 %v5919, %v5912
    %v6109 = vpack.c.bf16 %v5920, %v5913
    %v6110 = vpack.c.bf16 %v5928, %v5921
    %v6111 = vpack.c.bf16 %v5929, %v5922
    %v6112 = vpack.c.bf16 %v5930, %v5923
    %v6113 = vpack.c.bf16 %v5931, %v5924
    %v6114 = vpack.c.bf16 %v5932, %v5925
    %v6115 = vpack.c.bf16 %v5933, %v5926
    %v6116 = vpack.c.bf16 %v5934, %v5927
    %v6117 = vpack.c.bf16 %v5942, %v5935
    %v6118 = vpack.c.bf16 %v5943, %v5936
    %v6119 = vpack.c.bf16 %v5944, %v5937
    %v6120 = vpack.c.bf16 %v5945, %v5938
    %v6121 = vpack.c.bf16 %v5946, %v5939
    %v6122 = vpack.c.bf16 %v5947, %v5940
    %v6123 = vpack.c.bf16 %v5948, %v5941
    %v6124 = vpack.c.bf16 %v5956, %v5949
    %v6125 = vpack.c.bf16 %v5957, %v5950
    %v6126 = vpack.c.bf16 %v5958, %v5951
    %v6127 = vpack.c.bf16 %v5959, %v5952
    %v6128 = vpack.c.bf16 %v5960, %v5953
    %v6129 = vpack.c.bf16 %v5961, %v5954
    %v6130 = vpack.c.bf16 %v5962, %v5955
    %v6131 = vpack.c.bf16 %v5970, %v5963
    %v6132 = vpack.c.bf16 %v5971, %v5964
    %v6133 = vpack.c.bf16 %v5972, %v5965
    %v6134 = vpack.c.bf16 %v5973, %v5966
    %v6135 = vpack.c.bf16 %v5974, %v5967
    %v6136 = vpack.c.bf16 %v5975, %v5968
    %v6137 = vpack.c.bf16 %v5976, %v5969
    %v6138 = vpack.c.bf16 %v5984, %v5977
    %v6139 = vpack.c.bf16 %v5985, %v5978
    %v6140 = vpack.c.bf16 %v5986, %v5979
    %v6141 = vpack.c.bf16 %v5987, %v5980
    %v6142 = vpack.c.bf16 %v5988, %v5981
    %v6143 = vpack.c.bf16 %v5989, %v5982
    %v6144 = vpack.c.bf16 %v5990, %v5983
    %v6145 = vpack.c.bf16 %v5998, %v5991
    %v6146 = vpack.c.bf16 %v5999, %v5992
    %v6147 = vpack.c.bf16 %v6000, %v5993
    %v6148 = vpack.c.bf16 %v6001, %v5994
    %v6149 = vpack.c.bf16 %v6002, %v5995
    %v6150 = vpack.c.bf16 %v6003, %v5996
    %v6151 = vpack.c.bf16 %v6004, %v5997
    %v6152 = vpack.c.bf16 %v6012, %v6005
    %v6153 = vpack.c.bf16 %v6013, %v6006
    %v6154 = vpack.c.bf16 %v6014, %v6007
    %v6155 = vpack.c.bf16 %v6015, %v6008
    %v6156 = vpack.c.bf16 %v6016, %v6009
    %v6157 = vpack.c.bf16 %v6017, %v6010
    %v6158 = vpack.c.bf16 %v6018, %v6011
    %v6159 = vpack.c.bf16 %v6026, %v6019
    %v6160 = vpack.c.bf16 %v6027, %v6020
    %v6161 = vpack.c.bf16 %v6028, %v6021
    %v6162 = vpack.c.bf16 %v6029, %v6022
    %v6163 = vpack.c.bf16 %v6030, %v6023
    %v6164 = vpack.c.bf16 %v6031, %v6024
    %v6165 = vpack.c.bf16 %v6032, %v6025
    %v6166 = vpack.c.bf16 %v6040, %v6033
    %v6167 = vpack.c.bf16 %v6041, %v6034
    %v6168 = vpack.c.bf16 %v6042, %v6035
    %v6169 = vpack.c.bf16 %v6043, %v6036
    %v6170 = vpack.c.bf16 %v6044, %v6037
    %v6171 = vpack.c.bf16 %v6045, %v6038
    %v6172 = vpack.c.bf16 %v6046, %v6039
    %v6173 = vpack.c.bf16 %v6054, %v6047
    %v6174 = vpack.c.bf16 %v6055, %v6048
    %v6175 = vpack.c.bf16 %v6056, %v6049
    %v6176 = vpack.c.bf16 %v6057, %v6050
    %v6177 = vpack.c.bf16 %v6058, %v6051
    %v6178 = vpack.c.bf16 %v6059, %v6052
    %v6179 = vpack.c.bf16 %v6060, %v6053
    %v6180 = vpack.c.bf16 %v6068, %v6061
    %v6181 = vpack.c.bf16 %v6069, %v6062
    %v6182 = vpack.c.bf16 %v6070, %v6063
    %v6183 = vpack.c.bf16 %v6071, %v6064
    %v6184 = vpack.c.bf16 %v6072, %v6065
    %v6185 = vpack.c.bf16 %v6073, %v6066
    %v6186 = vpack.c.bf16 %v6074, %v6067
    %v6299 = vunpack.c.l.b16 %v6075
    %v6300 = vunpack.c.l.b16 %v6076
    %v6301 = vunpack.c.l.b16 %v6077
    %v6302 = vunpack.c.l.b16 %v6078
    %v6303 = vunpack.c.l.b16 %v6079
    %v6304 = vunpack.c.l.b16 %v6080
    %v6305 = vunpack.c.l.b16 %v6081
    %v6306 = vunpack.c.h.b16 %v6075
    %v6307 = vunpack.c.h.b16 %v6076
    %v6308 = vunpack.c.h.b16 %v6077
    %v6309 = vunpack.c.h.b16 %v6078
    %v6310 = vunpack.c.h.b16 %v6079
    %v6311 = vunpack.c.h.b16 %v6080
    %v6312 = vunpack.c.h.b16 %v6081
    %v6313 = vunpack.c.l.b16 %v6082
    %v6314 = vunpack.c.l.b16 %v6083
    %v6315 = vunpack.c.l.b16 %v6084
    %v6316 = vunpack.c.l.b16 %v6085
    %v6317 = vunpack.c.l.b16 %v6086
    %v6318 = vunpack.c.l.b16 %v6087
    %v6319 = vunpack.c.l.b16 %v6088
    %v6320 = vunpack.c.h.b16 %v6082
    %v6321 = vunpack.c.h.b16 %v6083
    %v6322 = vunpack.c.h.b16 %v6084
    %v6323 = vunpack.c.h.b16 %v6085
    %v6324 = vunpack.c.h.b16 %v6086
    %v6325 = vunpack.c.h.b16 %v6087
    %v6326 = vunpack.c.h.b16 %v6088
    %v6327 = vunpack.c.l.b16 %v6089
    %v6328 = vunpack.c.l.b16 %v6090
    %v6329 = vunpack.c.l.b16 %v6091
    %v6330 = vunpack.c.l.b16 %v6092
    %v6331 = vunpack.c.l.b16 %v6093
    %v6332 = vunpack.c.l.b16 %v6094
    %v6333 = vunpack.c.l.b16 %v6095
    %v6334 = vunpack.c.h.b16 %v6089
    %v6335 = vunpack.c.h.b16 %v6090
    %v6336 = vunpack.c.h.b16 %v6091
    %v6337 = vunpack.c.h.b16 %v6092
    %v6338 = vunpack.c.h.b16 %v6093
    %v6339 = vunpack.c.h.b16 %v6094
    %v6340 = vunpack.c.h.b16 %v6095
    %v6341 = vunpack.c.l.b16 %v6096
    %v6342 = vunpack.c.l.b16 %v6097
    %v6343 = vunpack.c.l.b16 %v6098
    %v6344 = vunpack.c.l.b16 %v6099
    %v6345 = vunpack.c.l.b16 %v6100
    %v6346 = vunpack.c.l.b16 %v6101
    %v6347 = vunpack.c.l.b16 %v6102
    %v6348 = vunpack.c.h.b16 %v6096
    %v6349 = vunpack.c.h.b16 %v6097
    %v6350 = vunpack.c.h.b16 %v6098
    %v6351 = vunpack.c.h.b16 %v6099
    %v6352 = vunpack.c.h.b16 %v6100
    %v6353 = vunpack.c.h.b16 %v6101
    %v6354 = vunpack.c.h.b16 %v6102
    %v6355 = vunpack.c.l.b16 %v6103
    %v6356 = vunpack.c.l.b16 %v6104
    %v6357 = vunpack.c.l.b16 %v6105
    %v6358 = vunpack.c.l.b16 %v6106
    %v6359 = vunpack.c.l.b16 %v6107
    %v6360 = vunpack.c.l.b16 %v6108
    %v6361 = vunpack.c.l.b16 %v6109
    %v6362 = vunpack.c.h.b16 %v6103
    %v6363 = vunpack.c.h.b16 %v6104
    %v6364 = vunpack.c.h.b16 %v6105
    %v6365 = vunpack.c.h.b16 %v6106
    %v6366 = vunpack.c.h.b16 %v6107
    %v6367 = vunpack.c.h.b16 %v6108
    %v6368 = vunpack.c.h.b16 %v6109
    %v6369 = vunpack.c.l.b16 %v6110
    %v6370 = vunpack.c.l.b16 %v6111
    %v6371 = vunpack.c.l.b16 %v6112
    %v6372 = vunpack.c.l.b16 %v6113
    %v6373 = vunpack.c.l.b16 %v6114
    %v6374 = vunpack.c.l.b16 %v6115
    %v6375 = vunpack.c.l.b16 %v6116
    %v6376 = vunpack.c.h.b16 %v6110
    %v6377 = vunpack.c.h.b16 %v6111
    %v6378 = vunpack.c.h.b16 %v6112
    %v6379 = vunpack.c.h.b16 %v6113
    %v6380 = vunpack.c.h.b16 %v6114
    %v6381 = vunpack.c.h.b16 %v6115
    %v6382 = vunpack.c.h.b16 %v6116
    %v6383 = vunpack.c.l.b16 %v6117
    %v6384 = vunpack.c.l.b16 %v6118
    %v6385 = vunpack.c.l.b16 %v6119
    %v6386 = vunpack.c.l.b16 %v6120
    %v6387 = vunpack.c.l.b16 %v6121
    %v6388 = vunpack.c.l.b16 %v6122
    %v6389 = vunpack.c.l.b16 %v6123
    %v6390 = vunpack.c.h.b16 %v6117
    %v6391 = vunpack.c.h.b16 %v6118
    %v6392 = vunpack.c.h.b16 %v6119
    %v6393 = vunpack.c.h.b16 %v6120
    %v6394 = vunpack.c.h.b16 %v6121
    %v6395 = vunpack.c.h.b16 %v6122
    %v6396 = vunpack.c.h.b16 %v6123
    %v6397 = vunpack.c.l.b16 %v6124
    %v6398 = vunpack.c.l.b16 %v6125
    %v6399 = vunpack.c.l.b16 %v6126
    %v6400 = vunpack.c.l.b16 %v6127
    %v6401 = vunpack.c.l.b16 %v6128
    %v6402 = vunpack.c.l.b16 %v6129
    %v6403 = vunpack.c.l.b16 %v6130
    %v6404 = vunpack.c.h.b16 %v6124
    %v6405 = vunpack.c.h.b16 %v6125
    %v6406 = vunpack.c.h.b16 %v6126
    %v6407 = vunpack.c.h.b16 %v6127
    %v6408 = vunpack.c.h.b16 %v6128
    %v6409 = vunpack.c.h.b16 %v6129
    %v6410 = vunpack.c.h.b16 %v6130
    %v6411 = vunpack.c.l.b16 %v6131
    %v6412 = vunpack.c.l.b16 %v6132
    %v6413 = vunpack.c.l.b16 %v6133
    %v6414 = vunpack.c.l.b16 %v6134
    %v6415 = vunpack.c.l.b16 %v6135
    %v6416 = vunpack.c.l.b16 %v6136
    %v6417 = vunpack.c.l.b16 %v6137
    %v6418 = vunpack.c.h.b16 %v6131
    %v6419 = vunpack.c.h.b16 %v6132
    %v6420 = vunpack.c.h.b16 %v6133
    %v6421 = vunpack.c.h.b16 %v6134
    %v6422 = vunpack.c.h.b16 %v6135
    %v6423 = vunpack.c.h.b16 %v6136
    %v6424 = vunpack.c.h.b16 %v6137
    %v6425 = vunpack.c.l.b16 %v6138
    %v6426 = vunpack.c.l.b16 %v6139
    %v6427 = vunpack.c.l.b16 %v6140
    %v6428 = vunpack.c.l.b16 %v6141
    %v6429 = vunpack.c.l.b16 %v6142
    %v6430 = vunpack.c.l.b16 %v6143
    %v6431 = vunpack.c.l.b16 %v6144
    %v6432 = vunpack.c.h.b16 %v6138
    %v6433 = vunpack.c.h.b16 %v6139
    %v6434 = vunpack.c.h.b16 %v6140
    %v6435 = vunpack.c.h.b16 %v6141
    %v6436 = vunpack.c.h.b16 %v6142
    %v6437 = vunpack.c.h.b16 %v6143
    %v6438 = vunpack.c.h.b16 %v6144
    %v6439 = vunpack.c.l.b16 %v6145
    %v6440 = vunpack.c.l.b16 %v6146
    %v6441 = vunpack.c.l.b16 %v6147
    %v6442 = vunpack.c.l.b16 %v6148
    %v6443 = vunpack.c.l.b16 %v6149
    %v6444 = vunpack.c.l.b16 %v6150
    %v6445 = vunpack.c.l.b16 %v6151
    %v6446 = vunpack.c.h.b16 %v6145
    %v6447 = vunpack.c.h.b16 %v6146
    %v6448 = vunpack.c.h.b16 %v6147
    %v6449 = vunpack.c.h.b16 %v6148
    %v6450 = vunpack.c.h.b16 %v6149
    %v6451 = vunpack.c.h.b16 %v6150
    %v6452 = vunpack.c.h.b16 %v6151
    %v6453 = vunpack.c.l.b16 %v6152
    %v6454 = vunpack.c.l.b16 %v6153
    %v6455 = vunpack.c.l.b16 %v6154
    %v6456 = vunpack.c.l.b16 %v6155
    %v6457 = vunpack.c.l.b16 %v6156
    %v6458 = vunpack.c.l.b16 %v6157
    %v6459 = vunpack.c.l.b16 %v6158
    %v6460 = vunpack.c.h.b16 %v6152
    %v6461 = vunpack.c.h.b16 %v6153
    %v6462 = vunpack.c.h.b16 %v6154
    %v6463 = vunpack.c.h.b16 %v6155
    %v6464 = vunpack.c.h.b16 %v6156
    %v6465 = vunpack.c.h.b16 %v6157
    %v6466 = vunpack.c.h.b16 %v6158
    %v6467 = vunpack.c.l.b16 %v6159
    %v6468 = vunpack.c.l.b16 %v6160
    %v6469 = vunpack.c.l.b16 %v6161
    %v6470 = vunpack.c.l.b16 %v6162
    %v6471 = vunpack.c.l.b16 %v6163
    %v6472 = vunpack.c.l.b16 %v6164
    %v6473 = vunpack.c.l.b16 %v6165
    %v6474 = vunpack.c.h.b16 %v6159
    %v6475 = vunpack.c.h.b16 %v6160
    %v6476 = vunpack.c.h.b16 %v6161
    %v6477 = vunpack.c.h.b16 %v6162
    %v6478 = vunpack.c.h.b16 %v6163
    %v6479 = vunpack.c.h.b16 %v6164
    %v6480 = vunpack.c.h.b16 %v6165
    %v6481 = vunpack.c.l.b16 %v6166
    %v6482 = vunpack.c.l.b16 %v6167
    %v6483 = vunpack.c.l.b16 %v6168
    %v6484 = vunpack.c.l.b16 %v6169
    %v6485 = vunpack.c.l.b16 %v6170
    %v6486 = vunpack.c.l.b16 %v6171
    %v6487 = vunpack.c.l.b16 %v6172
    %v6488 = vunpack.c.h.b16 %v6166
    %v6489 = vunpack.c.h.b16 %v6167
    %v6490 = vunpack.c.h.b16 %v6168
    %v6491 = vunpack.c.h.b16 %v6169
    %v6492 = vunpack.c.h.b16 %v6170
    %v6493 = vunpack.c.h.b16 %v6171
    %v6494 = vunpack.c.h.b16 %v6172
    %v6495 = vunpack.c.l.b16 %v6173
    %v6496 = vunpack.c.l.b16 %v6174
    %v6497 = vunpack.c.l.b16 %v6175
    %v6498 = vunpack.c.l.b16 %v6176
    %v6499 = vunpack.c.l.b16 %v6177
    %v6500 = vunpack.c.l.b16 %v6178
    %v6501 = vunpack.c.l.b16 %v6179
    %v6502 = vunpack.c.h.b16 %v6173
    %v6503 = vunpack.c.h.b16 %v6174
    %v6504 = vunpack.c.h.b16 %v6175
    %v6505 = vunpack.c.h.b16 %v6176
    %v6506 = vunpack.c.h.b16 %v6177
    %v6507 = vunpack.c.h.b16 %v6178
    %v6508 = vunpack.c.h.b16 %v6179
    %v6509 = vunpack.c.l.b16 %v6180
    %v6510 = vunpack.c.l.b16 %v6181
    %v6511 = vunpack.c.l.b16 %v6182
    %v6512 = vunpack.c.l.b16 %v6183
    %v6513 = vunpack.c.l.b16 %v6184
    %v6514 = vunpack.c.l.b16 %v6185
    %v6515 = vunpack.c.l.b16 %v6186
    %v6516 = vunpack.c.h.b16 %v6180
    %v6517 = vunpack.c.h.b16 %v6181
    %v6518 = vunpack.c.h.b16 %v6182
    %v6519 = vunpack.c.h.b16 %v6183
    %v6520 = vunpack.c.h.b16 %v6184
    %v6521 = vunpack.c.h.b16 %v6185
    %v6522 = vunpack.c.h.b16 %v6186
    %v6523 = vpack.c.b16 %v6300, %v6299
    %v6524 = vpack.c.b16 %v6302, %v6301
    %v6525 = vpack.c.b16 %v6304, %v6303
    %v6526 = vpack.c.b16 %v6305, %v6305
    %v6527 = vpack.c.b16 %v6307, %v6306
    %v6528 = vpack.c.b16 %v6309, %v6308
    %v6529 = vpack.c.b16 %v6311, %v6310
    %v6530 = vpack.c.b16 %v6312, %v6312
    %v6531 = vpack.c.b16 %v6314, %v6313
    %v6532 = vpack.c.b16 %v6316, %v6315
    %v6533 = vpack.c.b16 %v6318, %v6317
    %v6534 = vpack.c.b16 %v6319, %v6319
    %v6535 = vpack.c.b16 %v6321, %v6320
    %v6536 = vpack.c.b16 %v6323, %v6322
    %v6537 = vpack.c.b16 %v6325, %v6324
    %v6538 = vpack.c.b16 %v6326, %v6326
    %v6539 = vpack.c.b16 %v6328, %v6327
    %v6540 = vpack.c.b16 %v6330, %v6329
    %v6541 = vpack.c.b16 %v6332, %v6331
    %v6542 = vpack.c.b16 %v6333, %v6333
    %v6543 = vpack.c.b16 %v6335, %v6334
    %v6544 = vpack.c.b16 %v6337, %v6336
    %v6545 = vpack.c.b16 %v6339, %v6338
    %v6546 = vpack.c.b16 %v6340, %v6340
    %v6547 = vpack.c.b16 %v6342, %v6341
    %v6548 = vpack.c.b16 %v6344, %v6343
    %v6549 = vpack.c.b16 %v6346, %v6345
    %v6550 = vpack.c.b16 %v6347, %v6347
    %v6551 = vpack.c.b16 %v6349, %v6348
    %v6552 = vpack.c.b16 %v6351, %v6350
    %v6553 = vpack.c.b16 %v6353, %v6352
    %v6554 = vpack.c.b16 %v6354, %v6354
    %v6555 = vpack.c.b16 %v6356, %v6355
    %v6556 = vpack.c.b16 %v6358, %v6357
    %v6557 = vpack.c.b16 %v6360, %v6359
    %v6558 = vpack.c.b16 %v6361, %v6361
    %v6559 = vpack.c.b16 %v6363, %v6362
    %v6560 = vpack.c.b16 %v6365, %v6364
    %v6561 = vpack.c.b16 %v6367, %v6366
    %v6562 = vpack.c.b16 %v6368, %v6368
    %v6563 = vpack.c.b16 %v6370, %v6369
    %v6564 = vpack.c.b16 %v6372, %v6371
    %v6565 = vpack.c.b16 %v6374, %v6373
    %v6566 = vpack.c.b16 %v6375, %v6375
    %v6567 = vpack.c.b16 %v6377, %v6376
    %v6568 = vpack.c.b16 %v6379, %v6378
    %v6569 = vpack.c.b16 %v6381, %v6380
    %v6570 = vpack.c.b16 %v6382, %v6382
    %v6571 = vpack.c.b16 %v6384, %v6383
    %v6572 = vpack.c.b16 %v6386, %v6385
    %v6573 = vpack.c.b16 %v6388, %v6387
    %v6574 = vpack.c.b16 %v6389, %v6389
    %v6575 = vpack.c.b16 %v6391, %v6390
    %v6576 = vpack.c.b16 %v6393, %v6392
    %v6577 = vpack.c.b16 %v6395, %v6394
    %v6578 = vpack.c.b16 %v6396, %v6396
    %v6579 = vpack.c.b16 %v6398, %v6397
    %v6580 = vpack.c.b16 %v6400, %v6399
    %v6581 = vpack.c.b16 %v6402, %v6401
    %v6582 = vpack.c.b16 %v6403, %v6403
    %v6583 = vpack.c.b16 %v6405, %v6404
    %v6584 = vpack.c.b16 %v6407, %v6406
    %v6585 = vpack.c.b16 %v6409, %v6408
    %v6586 = vpack.c.b16 %v6410, %v6410
    %v6587 = vpack.c.b16 %v6412, %v6411
    %v6588 = vpack.c.b16 %v6414, %v6413
    %v6589 = vpack.c.b16 %v6416, %v6415
    %v6590 = vpack.c.b16 %v6417, %v6417
    %v6591 = vpack.c.b16 %v6419, %v6418
    %v6592 = vpack.c.b16 %v6421, %v6420
    %v6593 = vpack.c.b16 %v6423, %v6422
    %v6594 = vpack.c.b16 %v6424, %v6424
    %v6595 = vpack.c.b16 %v6426, %v6425
    %v6596 = vpack.c.b16 %v6428, %v6427
    %v6597 = vpack.c.b16 %v6430, %v6429
    %v6598 = vpack.c.b16 %v6431, %v6431
    %v6599 = vpack.c.b16 %v6433, %v6432
    %v6600 = vpack.c.b16 %v6435, %v6434
    %v6601 = vpack.c.b16 %v6437, %v6436
    %v6602 = vpack.c.b16 %v6438, %v6438
    %v6603 = vpack.c.b16 %v6440, %v6439
    %v6604 = vpack.c.b16 %v6442, %v6441
    %v6605 = vpack.c.b16 %v6444, %v6443
    %v6606 = vpack.c.b16 %v6445, %v6445
    %v6607 = vpack.c.b16 %v6447, %v6446
    %v6608 = vpack.c.b16 %v6449, %v6448
    %v6609 = vpack.c.b16 %v6451, %v6450
    %v6610 = vpack.c.b16 %v6452, %v6452
    %v6611 = vpack.c.b16 %v6454, %v6453
    %v6612 = vpack.c.b16 %v6456, %v6455
    %v6613 = vpack.c.b16 %v6458, %v6457
    %v6614 = vpack.c.b16 %v6459, %v6459
    %v6615 = vpack.c.b16 %v6461, %v6460
    %v6616 = vpack.c.b16 %v6463, %v6462
    %v6617 = vpack.c.b16 %v6465, %v6464
    %v6618 = vpack.c.b16 %v6466, %v6466
    %v6619 = vpack.c.b16 %v6468, %v6467
    %v6620 = vpack.c.b16 %v6470, %v6469
    %v6621 = vpack.c.b16 %v6472, %v6471
    %v6622 = vpack.c.b16 %v6473, %v6473
    %v6623 = vpack.c.b16 %v6475, %v6474
    %v6624 = vpack.c.b16 %v6477, %v6476
    %v6625 = vpack.c.b16 %v6479, %v6478
    %v6626 = vpack.c.b16 %v6480, %v6480
    %v6627 = vpack.c.b16 %v6482, %v6481
    %v6628 = vpack.c.b16 %v6484, %v6483
    %v6629 = vpack.c.b16 %v6486, %v6485
    %v6630 = vpack.c.b16 %v6487, %v6487
    %v6631 = vpack.c.b16 %v6489, %v6488
    %v6632 = vpack.c.b16 %v6491, %v6490
    %v6633 = vpack.c.b16 %v6493, %v6492
    %v6634 = vpack.c.b16 %v6494, %v6494
    %v6635 = vpack.c.b16 %v6496, %v6495
    %v6636 = vpack.c.b16 %v6498, %v6497
    %v6637 = vpack.c.b16 %v6500, %v6499
    %v6638 = vpack.c.b16 %v6501, %v6501
    %v6639 = vpack.c.b16 %v6503, %v6502
    %v6640 = vpack.c.b16 %v6505, %v6504
    %v6641 = vpack.c.b16 %v6507, %v6506
    %v6642 = vpack.c.b16 %v6508, %v6508
    %v6643 = vpack.c.b16 %v6510, %v6509
    %v6644 = vpack.c.b16 %v6512, %v6511
    %v6645 = vpack.c.b16 %v6514, %v6513
    %v6646 = vpack.c.b16 %v6515, %v6515
    %v6647 = vpack.c.b16 %v6517, %v6516
    %v6648 = vpack.c.b16 %v6519, %v6518
    %v6649 = vpack.c.b16 %v6521, %v6520
    %v6650 = vpack.c.b16 %v6522, %v6522
    %6779 = vst [vmem:[#allocation2] sm:$0xff] %v6523
    %6780 = vst [vmem:[#allocation2 + $0x8] sm:$0xff] %v6524
    %6781 = vst [vmem:[#allocation2 + $0x10] sm:$0xff] %v6525
    %vm6782 = vcmask 125952
    %6783 = vst.msk [vmem:[#allocation2 + $0x18] sm:$0xf] %vm6782, %v6526
    %6784 = vst [vmem:[#allocation2 + $0x1c] sm:$0xff] %v6527
    %6785 = vst [vmem:[#allocation2 + $0x24] sm:$0xff] %v6528
    %6786 = vst [vmem:[#allocation2 + $0x2c] sm:$0xff] %v6529
    %6787 = vst.msk [vmem:[#allocation2 + $0x34] sm:$0xf] %vm6782, %v6530
    %6788 = vst [vmem:[#allocation2 + $0x38] sm:$0xff] %v6531
    %6789 = vst [vmem:[#allocation2 + $0x40] sm:$0xff] %v6532
    %6790 = vst [vmem:[#allocation2 + $0x48] sm:$0xff] %v6533
    %6791 = vst.msk [vmem:[#allocation2 + $0x50] sm:$0xf] %vm6782, %v6534
    %6792 = vst [vmem:[#allocation2 + $0x54] sm:$0xff] %v6535
    %6793 = vst [vmem:[#allocation2 + $0x5c] sm:$0xff] %v6536
    %6794 = vst [vmem:[#allocation2 + $0x64] sm:$0xff] %v6537
    %6795 = vst.msk [vmem:[#allocation2 + $0x6c] sm:$0xf] %vm6782, %v6538
    %6796 = vst [vmem:[#allocation2 + $0x70] sm:$0xff] %v6539
    %6797 = vst [vmem:[#allocation2 + $0x78] sm:$0xff] %v6540
    %6798 = vst [vmem:[#allocation2 + $0x80] sm:$0xff] %v6541
    %6799 = vst.msk [vmem:[#allocation2 + $0x88] sm:$0xf] %vm6782, %v6542
    %6800 = vst [vmem:[#allocation2 + $0x8c] sm:$0xff] %v6543
    %6801 = vst [vmem:[#allocation2 + $0x94] sm:$0xff] %v6544
    %6802 = vst [vmem:[#allocation2 + $0x9c] sm:$0xff] %v6545
    %6803 = vst.msk [vmem:[#allocation2 + $0xa4] sm:$0xf] %vm6782, %v6546
    %6804 = vst [vmem:[#allocation2 + $0xa8] sm:$0xff] %v6547
    %6805 = vst [vmem:[#allocation2 + $0xb0] sm:$0xff] %v6548
    %6806 = vst [vmem:[#allocation2 + $0xb8] sm:$0xff] %v6549
    %6807 = vst.msk [vmem:[#allocation2 + $0xc0] sm:$0xf] %vm6782, %v6550
    %6808 = vst [vmem:[#allocation2 + $0xc4] sm:$0xff] %v6551
    %6809 = vst [vmem:[#allocation2 + $0xcc] sm:$0xff] %v6552
    %6810 = vst [vmem:[#allocation2 + $0xd4] sm:$0xff] %v6553
    %6811 = vst.msk [vmem:[#allocation2 + $0xdc] sm:$0xf] %vm6782, %v6554
    %6812 = vst [vmem:[#allocation2 + $0xe0] sm:$0xff] %v6555
    %6813 = vst [vmem:[#allocation2 + $0xe8] sm:$0xff] %v6556
    %6814 = vst [vmem:[#allocation2 + $0xf0] sm:$0xff] %v6557
    %6815 = vst.msk [vmem:[#allocation2 + $0xf8] sm:$0xf] %vm6782, %v6558
    %6816 = vst [vmem:[#allocation2 + $0xfc] sm:$0xff] %v6559
    %6817 = vst [vmem:[#allocation2 + $0x104] sm:$0xff] %v6560
    %6818 = vst [vmem:[#allocation2 + $0x10c] sm:$0xff] %v6561
    %6819 = vst.msk [vmem:[#allocation2 + $0x114] sm:$0xf] %vm6782, %v6562
    %6820 = vst [vmem:[#allocation2 + $0x118] sm:$0xff] %v6563
    %6821 = vst [vmem:[#allocation2 + $0x120] sm:$0xff] %v6564
    %6822 = vst [vmem:[#allocation2 + $0x128] sm:$0xff] %v6565
    %6823 = vst.msk [vmem:[#allocation2 + $0x130] sm:$0xf] %vm6782, %v6566
    %6824 = vst [vmem:[#allocation2 + $0x134] sm:$0xff] %v6567
    %6825 = vst [vmem:[#allocation2 + $0x13c] sm:$0xff] %v6568
    %6826 = vst [vmem:[#allocation2 + $0x144] sm:$0xff] %v6569
    %6827 = vst.msk [vmem:[#allocation2 + $0x14c] sm:$0xf] %vm6782, %v6570
    %6828 = vst [vmem:[#allocation2 + $0x150] sm:$0xff] %v6571
    %6829 = vst [vmem:[#allocation2 + $0x158] sm:$0xff] %v6572
    %6830 = vst [vmem:[#allocation2 + $0x160] sm:$0xff] %v6573
    %6831 = vst.msk [vmem:[#allocation2 + $0x168] sm:$0xf] %vm6782, %v6574
    %6832 = vst [vmem:[#allocation2 + $0x16c] sm:$0xff] %v6575
    %6833 = vst [vmem:[#allocation2 + $0x174] sm:$0xff] %v6576
    %6834 = vst [vmem:[#allocation2 + $0x17c] sm:$0xff] %v6577
    %6835 = vst.msk [vmem:[#allocation2 + $0x184] sm:$0xf] %vm6782, %v6578
    %6836 = vst [vmem:[#allocation2 + $0x188] sm:$0xff] %v6579
    %6837 = vst [vmem:[#allocation2 + $0x190] sm:$0xff] %v6580
    %6838 = vst [vmem:[#allocation2 + $0x198] sm:$0xff] %v6581
    %6839 = vst.msk [vmem:[#allocation2 + $0x1a0] sm:$0xf] %vm6782, %v6582
    %6840 = vst [vmem:[#allocation2 + $0x1a4] sm:$0xff] %v6583
    %6841 = vst [vmem:[#allocation2 + $0x1ac] sm:$0xff] %v6584
    %6842 = vst [vmem:[#allocation2 + $0x1b4] sm:$0xff] %v6585
    %6843 = vst.msk [vmem:[#allocation2 + $0x1bc] sm:$0xf] %vm6782, %v6586
    %6844 = vst [vmem:[#allocation2 + $0x1c0] sm:$0xff] %v6587
    %6845 = vst [vmem:[#allocation2 + $0x1c8] sm:$0xff] %v6588
    %6846 = vst [vmem:[#allocation2 + $0x1d0] sm:$0xff] %v6589
    %6847 = vst.msk [vmem:[#allocation2 + $0x1d8] sm:$0xf] %vm6782, %v6590
    %6848 = vst [vmem:[#allocation2 + $0x1dc] sm:$0xff] %v6591
    %6849 = vst [vmem:[#allocation2 + $0x1e4] sm:$0xff] %v6592
    %6850 = vst [vmem:[#allocation2 + $0x1ec] sm:$0xff] %v6593
    %6851 = vst.msk [vmem:[#allocation2 + $0x1f4] sm:$0xf] %vm6782, %v6594
    %6852 = vst [vmem:[#allocation2 + $0x1f8] sm:$0xff] %v6595
    %6853 = vst [vmem:[#allocation2 + $0x200] sm:$0xff] %v6596
    %6854 = vst [vmem:[#allocation2 + $0x208] sm:$0xff] %v6597
    %6855 = vst.msk [vmem:[#allocation2 + $0x210] sm:$0xf] %vm6782, %v6598
    %6856 = vst [vmem:[#allocation2 + $0x214] sm:$0xff] %v6599
    %6857 = vst [vmem:[#allocation2 + $0x21c] sm:$0xff] %v6600
    %6858 = vst [vmem:[#allocation2 + $0x224] sm:$0xff] %v6601
    %6859 = vst.msk [vmem:[#allocation2 + $0x22c] sm:$0xf] %vm6782, %v6602
    %6860 = vst [vmem:[#allocation2 + $0x230] sm:$0xff] %v6603
    %6861 = vst [vmem:[#allocation2 + $0x238] sm:$0xff] %v6604
    %6862 = vst [vmem:[#allocation2 + $0x240] sm:$0xff] %v6605
    %6863 = vst.msk [vmem:[#allocation2 + $0x248] sm:$0xf] %vm6782, %v6606
    %6864 = vst [vmem:[#allocation2 + $0x24c] sm:$0xff] %v6607
    %6865 = vst [vmem:[#allocation2 + $0x254] sm:$0xff] %v6608
    %6866 = vst [vmem:[#allocation2 + $0x25c] sm:$0xff] %v6609
    %6867 = vst.msk [vmem:[#allocation2 + $0x264] sm:$0xf] %vm6782, %v6610
    %6868 = vst [vmem:[#allocation2 + $0x268] sm:$0xff] %v6611
    %6869 = vst [vmem:[#allocation2 + $0x270] sm:$0xff] %v6612
    %6870 = vst [vmem:[#allocation2 + $0x278] sm:$0xff] %v6613
    %6871 = vst.msk [vmem:[#allocation2 + $0x280] sm:$0xf] %vm6782, %v6614
    %6872 = vst [vmem:[#allocation2 + $0x284] sm:$0xff] %v6615
    %6873 = vst [vmem:[#allocation2 + $0x28c] sm:$0xff] %v6616
    %6874 = vst [vmem:[#allocation2 + $0x294] sm:$0xff] %v6617
    %6875 = vst.msk [vmem:[#allocation2 + $0x29c] sm:$0xf] %vm6782, %v6618
    %6876 = vst [vmem:[#allocation2 + $0x2a0] sm:$0xff] %v6619
    %6877 = vst [vmem:[#allocation2 + $0x2a8] sm:$0xff] %v6620
    %6878 = vst [vmem:[#allocation2 + $0x2b0] sm:$0xff] %v6621
    %6879 = vst.msk [vmem:[#allocation2 + $0x2b8] sm:$0xf] %vm6782, %v6622
    %6880 = vst [vmem:[#allocation2 + $0x2bc] sm:$0xff] %v6623
    %6881 = vst [vmem:[#allocation2 + $0x2c4] sm:$0xff] %v6624
    %6882 = vst [vmem:[#allocation2 + $0x2cc] sm:$0xff] %v6625
    %6883 = vst.msk [vmem:[#allocation2 + $0x2d4] sm:$0xf] %vm6782, %v6626
    %6884 = vst [vmem:[#allocation2 + $0x2d8] sm:$0xff] %v6627
    %6885 = vst [vmem:[#allocation2 + $0x2e0] sm:$0xff] %v6628
    %6886 = vst [vmem:[#allocation2 + $0x2e8] sm:$0xff] %v6629
    %6887 = vst.msk [vmem:[#allocation2 + $0x2f0] sm:$0xf] %vm6782, %v6630
    %6888 = vst [vmem:[#allocation2 + $0x2f4] sm:$0xff] %v6631
    %6889 = vst [vmem:[#allocation2 + $0x2fc] sm:$0xff] %v6632
    %6890 = vst [vmem:[#allocation2 + $0x304] sm:$0xff] %v6633
    %6891 = vst.msk [vmem:[#allocation2 + $0x30c] sm:$0xf] %vm6782, %v6634
    %6892 = vst [vmem:[#allocation2 + $0x310] sm:$0xff] %v6635
    %6893 = vst [vmem:[#allocation2 + $0x318] sm:$0xff] %v6636
    %6894 = vst [vmem:[#allocation2 + $0x320] sm:$0xff] %v6637
    %6895 = vst.msk [vmem:[#allocation2 + $0x328] sm:$0xf] %vm6782, %v6638
    %6896 = vst [vmem:[#allocation2 + $0x32c] sm:$0xff] %v6639
    %6897 = vst [vmem:[#allocation2 + $0x334] sm:$0xff] %v6640
    %6898 = vst [vmem:[#allocation2 + $0x33c] sm:$0xff] %v6641
    %6899 = vst.msk [vmem:[#allocation2 + $0x344] sm:$0xf] %vm6782, %v6642
    %6900 = vst [vmem:[#allocation2 + $0x348] sm:$0xff] %v6643
    %6901 = vst [vmem:[#allocation2 + $0x350] sm:$0xff] %v6644
    %6902 = vst [vmem:[#allocation2 + $0x358] sm:$0xff] %v6645
    %6903 = vst.msk [vmem:[#allocation2 + $0x360] sm:$0xf] %vm6782, %v6646
    %6904 = vst [vmem:[#allocation2 + $0x364] sm:$0xff] %v6647
    %6905 = vst [vmem:[#allocation2 + $0x36c] sm:$0xff] %v6648
    %6906 = vst [vmem:[#allocation2 + $0x374] sm:$0xff] %v6649
    %6907 = vst.msk [vmem:[#allocation2 + $0x37c] sm:$0xf] %vm6782, %v6650
    // Predicated region
    $region86: #{autoencoder_forward.1} parent=1 // pred_check
      _
    $region87: #{autoencoder_forward.1} parent=1 // pred_check_branch
      %6909 = sbr.rel (0) target = $region89
    $region88: #{autoencoder_forward.1} parent=1 // pred_region
      %s6911 = ssub.s32 14336, 448
      %6912 = vsyncadd [#allocation3], %s6911
      %s6913 = sshll.u32 [#allocation2], 4
      %s6914 = int_to_ptr.vmem [resolvable:$true] %s6913
      %6919 = dma.vmem_to_hbm [thread:$0]  %s6914, 448, %s21, [#allocation3], 448, 448, 28
    $region89: #{autoencoder_forward.1} parent=1 // pred_fallthru
      _
    // Predicated region
    $region90: #{autoencoder_forward.1} parent=1 // pred_check
      _
    $region91: #{autoencoder_forward.1} parent=1 // pred_check_branch
      %6921 = sbr.rel (0) target = $region93
    $region92: #{autoencoder_forward.1} parent=1 // pred_region
      %6922 = dma.done [#allocation3], 14336
    $region93: #{autoencoder_forward.1} parent=1 // pred_fallthru
      _
    %6923 = vsyncpa [#allocation3], 1

</llo_original>
